<compile_context>
chip_gen: v7x
topology: tpu7x:2x2x1
jax: 0.10.0
libtpu: 0.0.40
codegen_flags: <defaults>
</compile_context>

<pallas_src>
import jax
import jax.numpy as jnp
import numpy as np
from jax.experimental import pallas as pl
from jax.experimental.pallas import tpu as pltpu

D = 8          # depth of feature_out
W = 256        # hidden width
TN = 512       # tile over the gaussian/point dimension (multiple of 256 fills the MXU)
HEADS = 4      # pos / scales / rotations / opacity
OUT_W = 16     # lane-padded fused output: [pts(3) | scales(3) | rot(4) | opa(1) | pad(5)]


def _deform_kernel(h0_ref, res_ref,
                   w1_ref, b1_ref, wstack_ref, bstack_ref,
                   wh_ref, bh_ref, wf_ref, bf_ref,
                   out_ref):
    # ---- feature_out: Linear(4, W) then (D-1) x [ReLU, Linear(W, W)] ----
    h = jnp.dot(h0_ref[...].astype(jnp.bfloat16), w1_ref[...],
                preferred_element_type=jnp.float32) + b1_ref[...]
    for i in range(D - 1):
        h = jnp.dot(jax.nn.relu(h).astype(jnp.bfloat16), wstack_ref[i],
                    preferred_element_type=jnp.float32) + bstack_ref[i]

    # ---- four deform heads, fused ----
    # hidden layers of all heads -> one (TN, W) x (W, 4W) matmul
    rh = jax.nn.relu(h).astype(jnp.bfloat16)
    hh = jnp.dot(rh, wh_ref[...],
                 preferred_element_type=jnp.float32) + bh_ref[...]        # (TN, 4W)
    # output layers of all heads -> one block-diagonal (4W, 16) matmul (zero-padded lanes)
    rhh = jax.nn.relu(hh).astype(jnp.bfloat16)
    d = jnp.dot(rhh, wf_ref[...],
                preferred_element_type=jnp.float32) + bf_ref[...]         # (TN, 16)

    # mask == 1 (static_mlp / empty_voxel disabled) -> x * mask + d == x + d
    out_ref[...] = res_ref[...] + d


def _row_spec(cols):
    return pl.BlockSpec((TN, cols), lambda i: (i, 0))


def _const_spec(shape):
    if len(shape) == 2:
        return pl.BlockSpec(shape, lambda i: (0, 0))
    return pl.BlockSpec(shape, lambda i: (0, 0, 0))


def gaussian_deformation_forward(params, rays_pts_emb, scales_emb, rotations_emb,
                                 opacity_emb, time_emb):
    """forward_dynamic. Returns (pts, scales, rotations, opacity, shs=None)."""
    N = rays_pts_emb.shape[0]
    n_pad = pl.cdiv(N, TN) * TN

    xyz = rays_pts_emb[:, :3].astype(jnp.float32)
    t = time_emb[:, :1].astype(jnp.float32)
    h0 = jnp.concatenate([xyz, t], axis=-1)                         # (N, 4)  no_grid path

    # Residual slab in the fused output layout: [xyz | scales | rot | opa | zero-pad]
    res = jnp.concatenate([
        xyz,
        scales_emb[:, :3].astype(jnp.float32),
        rotations_emb[:, :4].astype(jnp.float32),
        opacity_emb[:, :1].astype(jnp.float32),
        jnp.zeros((N, OUT_W - 11), jnp.float32)], axis=-1)          # (N, 16)

    if n_pad != N:
        h0 = jnp.pad(h0, ((0, n_pad - N), (0, 0)))
        res = jnp.pad(res, ((0, n_pad - N), (0, 0)))

    # bf16 weights for the MXU; f32 biases (dot accumulation stays f32).
    w1 = params["w1"].astype(jnp.bfloat16)
    b1 = params["b1"]
    wstack = params["wstack"].astype(jnp.bfloat16)
    bstack = params["bstack"]
    # Fused head hidden layers: (W, 4W)
    wh = jnp.concatenate([params["wh"][i] for i in range(HEADS)],
                         axis=-1).astype(jnp.bfloat16)
    bh = jnp.concatenate([params["bh"][i] for i in range(HEADS)], axis=-1)   # (1, 4W)
    # Fused, block-diagonal, lane-padded head output layer: (4W, 16)
    wf = jnp.zeros((HEADS * W, OUT_W), jnp.float32)
    wf = wf.at[0 * W:1 * W, 0:3].set(params["wp"])
    wf = wf.at[1 * W:2 * W, 3:6].set(params["ws"])
    wf = wf.at[2 * W:3 * W, 6:10].set(params["wr"])
    wf = wf.at[3 * W:4 * W, 10:11].set(params["wo"])
    wf = wf.astype(jnp.bfloat16)
    bf = jnp.zeros((1, OUT_W), jnp.float32)
    bf = bf.at[:, 0:3].set(params["bp"])
    bf = bf.at[:, 3:6].set(params["bs"])
    bf = bf.at[:, 6:10].set(params["br"])
    bf = bf.at[:, 10:11].set(params["bo"])

    in_specs = [
        _row_spec(4), _row_spec(OUT_W),
        _const_spec((4, W)), _const_spec((1, W)),
        _const_spec((D - 1, W, W)), _const_spec((D - 1, 1, W)),
        _const_spec((W, HEADS * W)), _const_spec((1, HEADS * W)),
        _const_spec((HEADS * W, OUT_W)), _const_spec((1, OUT_W)),
    ]
    out_specs = _row_spec(OUT_W)
    out_shape = jax.ShapeDtypeStruct((n_pad, OUT_W), jnp.float32)

    f = pl.pallas_call(
        _deform_kernel,
        out_shape=out_shape,
        grid_spec=pltpu.PrefetchScalarGridSpec(
            num_scalar_prefetch=0,
            grid=(n_pad // TN,),
            in_specs=in_specs,
            out_specs=out_specs),
        compiler_params=pltpu.CompilerParams(
            dimension_semantics=("parallel",),
            vmem_limit_bytes=48 * 1024 * 1024),
    )
    out = f(h0, res, w1, b1, wstack, bstack, wh, bh, wf, bf)

    pts = out[:N, 0:3]
    scales = out[:N, 3:6]
    rotations = out[:N, 6:10]
    opacity = out[:N, 10:11]
    return pts, scales, rotations, opacity, None


def init_params(key):
    """Deterministic synthetic weights (JAX layout: (in, out)), stored in f32."""
    ks = list(jax.random.split(key, 16))
    std = 0.05

    def w(k, shape):
        return std * jax.random.normal(k, shape, jnp.float32)

    params = {
        "w1": w(ks[0], (4, W)),
        "b1": w(ks[1], (1, W)),
        "wstack": w(ks[2], (D - 1, W, W)),
        "bstack": w(ks[3], (D - 1, 1, W)),
        # head hidden layers, stacked: [pos, scales, rotations, opacity]
        "wh": w(ks[4], (4, W, W)),
        "bh": w(ks[5], (4, 1, W)),
        # head output layers
        "wp": w(ks[6], (W, 3)), "bp": w(ks[7], (1, 3)),
        "ws": w(ks[8], (W, 3)), "bs": w(ks[9], (1, 3)),
        "wr": w(ks[10], (W, 4)), "br": w(ks[11], (1, 4)),
        "wo": w(ks[12], (W, 1)), "bo": w(ks[13], (1, 1)),
    }
    return params


def _reference(params, rays_pts_emb, scales_emb, rotations_emb, opacity_emb, time_emb):
    """Pure-JAX f32 reference of forward_dynamic (default flags)."""
    xyz = rays_pts_emb[:, :3]
    h = jnp.concatenate([xyz, time_emb[:, :1]], axis=-1)
    h = h @ params["w1"] + params["b1"]
    for i in range(D - 1):
        h = jax.nn.relu(h) @ params["wstack"][i] + params["bstack"][i]

    def head(idx, wf, bf):
        hh = jax.nn.relu(h) @ params["wh"][idx] + params["bh"][idx]
        return jax.nn.relu(hh) @ wf + bf

    pts = xyz + head(0, params["wp"], params["bp"])
    scales = scales_emb[:, :3] + head(1, params["ws"], params["bs"])
    rotations = rotations_emb[:, :4] + head(2, params["wr"], params["br"])
    opacity = opacity_emb[:, :1] + head(3, params["wo"], params["bo"])
    return pts, scales, rotations, opacity


if __name__ == "__main__":
    key = jax.random.PRNGKey(0)
    N = 1000  # number of gaussians (not a multiple of TN -> exercises padding path)
    k = jax.random.split(key, 8)
    rays_pts_emb = jax.random.normal(k[0], (N, 27), jnp.float32)   # input_ch = 27
    scales_emb = jax.random.normal(k[1], (N, 6), jnp.float32)
    rotations_emb = jax.random.normal(k[2], (N, 8), jnp.float32)
    opacity_emb = jax.random.normal(k[3], (N, 1), jnp.float32)
    time_emb = jax.random.normal(k[4], (N, 9), jnp.float32)        # input_ch_time = 9
    params = init_params(k[5])

    fwd = jax.jit(gaussian_deformation_forward)
    pts, scales, rotations, opacity, shs = fwd(
        params, rays_pts_emb, scales_emb, rotations_emb, opacity_emb, time_emb)
    jax.block_until_ready((pts, scales, rotations, opacity))

    r_pts, r_scl, r_rot, r_opa = _reference(
        params, rays_pts_emb, scales_emb, rotations_emb, opacity_emb, time_emb)
    # bf16 matmul inputs (f32 accumulation) -> tolerances loosened vs. pure-f32.
    tol = dict(rtol=2e-2, atol=2e-2)
    np.testing.assert_allclose(np.asarray(pts), np.asarray(r_pts), **tol)
    np.testing.assert_allclose(np.asarray(scales), np.asarray(r_scl), **tol)
    np.testing.assert_allclose(np.asarray(rotations), np.asarray(r_rot), **tol)
    np.testing.assert_allclose(np.asarray(opacity), np.asarray(r_opa), **tol)
    assert shs is None
    assert pts.shape == (N, 3) and scales.shape == (N, 3)
    assert rotations.shape == (N, 4) and opacity.shape == (N, 1)

    print("KERNEL_OK")
</pallas_src>

<mosaic_0001>
module attributes {stable_mosaic.version = 11 : i64} {
  func.func @_deform_kernel(%arg0: i32, %arg1: memref<512x4xf32, #tpu.memory_space<vmem>>, %arg2: memref<512x16xf32, #tpu.memory_space<vmem>>, %arg3: memref<4x256xbf16, #tpu.memory_space<vmem>>, %arg4: memref<1x256xf32, #tpu.memory_space<vmem>>, %arg5: memref<7x256x256xbf16, #tpu.memory_space<vmem>>, %arg6: memref<7x1x256xf32, #tpu.memory_space<vmem>>, %arg7: memref<256x1024xbf16, #tpu.memory_space<vmem>>, %arg8: memref<1x1024xf32, #tpu.memory_space<vmem>>, %arg9: memref<1024x16xbf16, #tpu.memory_space<vmem>>, %arg10: memref<1x16xf32, #tpu.memory_space<vmem>>, %arg11: memref<512x16xf32, #tpu.memory_space<vmem>>) attributes {dimension_semantics = [#tpu.dimension_semantics<parallel>], iteration_bounds = array<i64: 2>, scalar_prefetch = 0 : i64, scratch_operands = 0 : i64, tpu.core_type = #tpu.core_type<tc>, window_params = [{transform_indices = @transform_0, window_bounds = array<i64: 512, 4>}, {transform_indices = @transform_1, window_bounds = array<i64: 512, 16>}, {pipeline_mode = #tpu.pipeline_mode<synchronous>, transform_indices = @transform_2, window_bounds = array<i64: 4, 256>}, {pipeline_mode = #tpu.pipeline_mode<synchronous>, transform_indices = @transform_3, window_bounds = array<i64: 1, 256>}, {pipeline_mode = #tpu.pipeline_mode<synchronous>, transform_indices = @transform_4, window_bounds = array<i64: 7, 256, 256>}, {pipeline_mode = #tpu.pipeline_mode<synchronous>, transform_indices = @transform_5, window_bounds = array<i64: 7, 1, 256>}, {pipeline_mode = #tpu.pipeline_mode<synchronous>, transform_indices = @transform_6, window_bounds = array<i64: 256, 1024>}, {pipeline_mode = #tpu.pipeline_mode<synchronous>, transform_indices = @transform_7, window_bounds = array<i64: 1, 1024>}, {pipeline_mode = #tpu.pipeline_mode<synchronous>, transform_indices = @transform_8, window_bounds = array<i64: 1024, 16>}, {pipeline_mode = #tpu.pipeline_mode<synchronous>, transform_indices = @transform_9, window_bounds = array<i64: 1, 16>}, {transform_indices = @transform_10, window_bounds = array<i64: 512, 16>}]} {
    %c0 = arith.constant 0 : index
    %c0_0 = arith.constant 0 : index
    %0 = vector.load %arg1[%c0, %c0_0] : memref<512x4xf32, #tpu.memory_space<vmem>>, vector<512x4xf32>
    %1 = arith.truncf %0 : vector<512x4xf32> to vector<512x4xbf16>
    %c0_1 = arith.constant 0 : index
    %c0_2 = arith.constant 0 : index
    %2 = vector.load %arg3[%c0_1, %c0_2] : memref<4x256xbf16, #tpu.memory_space<vmem>>, vector<4x256xbf16>
    %cst = arith.constant dense<0.000000e+00> : vector<512x256xf32>
    %3 = tpu.matmul %1, %2, %cst {dimension_numbers = #tpu.dot_dimension_numbers<[1], [0], [0], [1], [0, 0, 1, 1], [], []>} : vector<512x4xbf16>, vector<4x256xbf16>, vector<512x256xf32> -> vector<512x256xf32>
    %c0_3 = arith.constant 0 : index
    %c0_4 = arith.constant 0 : index
    %4 = vector.load %arg4[%c0_3, %c0_4] : memref<1x256xf32, #tpu.memory_space<vmem>>, vector<1x256xf32>
    %5 = vector.broadcast %4 : vector<1x256xf32> to vector<512x256xf32>
    %6 = arith.addf %3, %5 : vector<512x256xf32>
    %cst_5 = arith.constant 0.000000e+00 : f32
    %7 = vector.broadcast %cst_5 : f32 to vector<512x256xf32>
    %8 = arith.maximumf %6, %7 : vector<512x256xf32>
    %9 = arith.truncf %8 : vector<512x256xf32> to vector<512x256xbf16>
    %c0_6 = arith.constant 0 : index
    %c0_7 = arith.constant 0 : index
    %c0_8 = arith.constant 0 : index
    %10 = vector.load %arg5[%c0_6, %c0_7, %c0_8] : memref<7x256x256xbf16, #tpu.memory_space<vmem>>, vector<1x256x256xbf16>
    %11 = vector.shape_cast %10 : vector<1x256x256xbf16> to vector<256x256xbf16>
    %cst_9 = arith.constant dense<0.000000e+00> : vector<512x256xf32>
    %12 = tpu.matmul %9, %11, %cst_9 {dimension_numbers = #tpu.dot_dimension_numbers<[1], [0], [0], [1], [0, 0, 1, 1], [], []>} : vector<512x256xbf16>, vector<256x256xbf16>, vector<512x256xf32> -> vector<512x256xf32>
    %c0_10 = arith.constant 0 : index
    %c0_11 = arith.constant 0 : index
    %c0_12 = arith.constant 0 : index
    %13 = vector.load %arg6[%c0_10, %c0_11, %c0_12] : memref<7x1x256xf32, #tpu.memory_space<vmem>>, vector<1x1x256xf32>
    %14 = vector.shape_cast %13 : vector<1x1x256xf32> to vector<1x256xf32>
    %15 = vector.broadcast %14 : vector<1x256xf32> to vector<512x256xf32>
    %16 = arith.addf %12, %15 : vector<512x256xf32>
    %cst_13 = arith.constant 0.000000e+00 : f32
    %17 = vector.broadcast %cst_13 : f32 to vector<512x256xf32>
    %18 = arith.maximumf %16, %17 : vector<512x256xf32>
    %19 = arith.truncf %18 : vector<512x256xf32> to vector<512x256xbf16>
    %c1 = arith.constant 1 : index
    %c0_14 = arith.constant 0 : index
    %c0_15 = arith.constant 0 : index
    %20 = vector.load %arg5[%c1, %c0_14, %c0_15] : memref<7x256x256xbf16, #tpu.memory_space<vmem>>, vector<1x256x256xbf16>
    %21 = vector.shape_cast %20 : vector<1x256x256xbf16> to vector<256x256xbf16>
    %cst_16 = arith.constant dense<0.000000e+00> : vector<512x256xf32>
    %22 = tpu.matmul %19, %21, %cst_16 {dimension_numbers = #tpu.dot_dimension_numbers<[1], [0], [0], [1], [0, 0, 1, 1], [], []>} : vector<512x256xbf16>, vector<256x256xbf16>, vector<512x256xf32> -> vector<512x256xf32>
    %c1_17 = arith.constant 1 : index
    %c0_18 = arith.constant 0 : index
    %c0_19 = arith.constant 0 : index
    %23 = vector.load %arg6[%c1_17, %c0_18, %c0_19] : memref<7x1x256xf32, #tpu.memory_space<vmem>>, vector<1x1x256xf32>
    %24 = vector.shape_cast %23 : vector<1x1x256xf32> to vector<1x256xf32>
    %25 = vector.broadcast %24 : vector<1x256xf32> to vector<512x256xf32>
    %26 = arith.addf %22, %25 : vector<512x256xf32>
    %cst_20 = arith.constant 0.000000e+00 : f32
    %27 = vector.broadcast %cst_20 : f32 to vector<512x256xf32>
    %28 = arith.maximumf %26, %27 : vector<512x256xf32>
    %29 = arith.truncf %28 : vector<512x256xf32> to vector<512x256xbf16>
    %c2 = arith.constant 2 : index
    %c0_21 = arith.constant 0 : index
    %c0_22 = arith.constant 0 : index
    %30 = vector.load %arg5[%c2, %c0_21, %c0_22] : memref<7x256x256xbf16, #tpu.memory_space<vmem>>, vector<1x256x256xbf16>
    %31 = vector.shape_cast %30 : vector<1x256x256xbf16> to vector<256x256xbf16>
    %cst_23 = arith.constant dense<0.000000e+00> : vector<512x256xf32>
    %32 = tpu.matmul %29, %31, %cst_23 {dimension_numbers = #tpu.dot_dimension_numbers<[1], [0], [0], [1], [0, 0, 1, 1], [], []>} : vector<512x256xbf16>, vector<256x256xbf16>, vector<512x256xf32> -> vector<512x256xf32>
    %c2_24 = arith.constant 2 : index
    %c0_25 = arith.constant 0 : index
    %c0_26 = arith.constant 0 : index
    %33 = vector.load %arg6[%c2_24, %c0_25, %c0_26] : memref<7x1x256xf32, #tpu.memory_space<vmem>>, vector<1x1x256xf32>
    %34 = vector.shape_cast %33 : vector<1x1x256xf32> to vector<1x256xf32>
    %35 = vector.broadcast %34 : vector<1x256xf32> to vector<512x256xf32>
    %36 = arith.addf %32, %35 : vector<512x256xf32>
    %cst_27 = arith.constant 0.000000e+00 : f32
    %37 = vector.broadcast %cst_27 : f32 to vector<512x256xf32>
    %38 = arith.maximumf %36, %37 : vector<512x256xf32>
    %39 = arith.truncf %38 : vector<512x256xf32> to vector<512x256xbf16>
    %c3 = arith.constant 3 : index
    %c0_28 = arith.constant 0 : index
    %c0_29 = arith.constant 0 : index
    %40 = vector.load %arg5[%c3, %c0_28, %c0_29] : memref<7x256x256xbf16, #tpu.memory_space<vmem>>, vector<1x256x256xbf16>
    %41 = vector.shape_cast %40 : vector<1x256x256xbf16> to vector<256x256xbf16>
    %cst_30 = arith.constant dense<0.000000e+00> : vector<512x256xf32>
    %42 = tpu.matmul %39, %41, %cst_30 {dimension_numbers = #tpu.dot_dimension_numbers<[1], [0], [0], [1], [0, 0, 1, 1], [], []>} : vector<512x256xbf16>, vector<256x256xbf16>, vector<512x256xf32> -> vector<512x256xf32>
    %c3_31 = arith.constant 3 : index
    %c0_32 = arith.constant 0 : index
    %c0_33 = arith.constant 0 : index
    %43 = vector.load %arg6[%c3_31, %c0_32, %c0_33] : memref<7x1x256xf32, #tpu.memory_space<vmem>>, vector<1x1x256xf32>
    %44 = vector.shape_cast %43 : vector<1x1x256xf32> to vector<1x256xf32>
    %45 = vector.broadcast %44 : vector<1x256xf32> to vector<512x256xf32>
    %46 = arith.addf %42, %45 : vector<512x256xf32>
    %cst_34 = arith.constant 0.000000e+00 : f32
    %47 = vector.broadcast %cst_34 : f32 to vector<512x256xf32>
    %48 = arith.maximumf %46, %47 : vector<512x256xf32>
    %49 = arith.truncf %48 : vector<512x256xf32> to vector<512x256xbf16>
    %c4 = arith.constant 4 : index
    %c0_35 = arith.constant 0 : index
    %c0_36 = arith.constant 0 : index
    %50 = vector.load %arg5[%c4, %c0_35, %c0_36] : memref<7x256x256xbf16, #tpu.memory_space<vmem>>, vector<1x256x256xbf16>
    %51 = vector.shape_cast %50 : vector<1x256x256xbf16> to vector<256x256xbf16>
    %cst_37 = arith.constant dense<0.000000e+00> : vector<512x256xf32>
    %52 = tpu.matmul %49, %51, %cst_37 {dimension_numbers = #tpu.dot_dimension_numbers<[1], [0], [0], [1], [0, 0, 1, 1], [], []>} : vector<512x256xbf16>, vector<256x256xbf16>, vector<512x256xf32> -> vector<512x256xf32>
    %c4_38 = arith.constant 4 : index
    %c0_39 = arith.constant 0 : index
    %c0_40 = arith.constant 0 : index
    %53 = vector.load %arg6[%c4_38, %c0_39, %c0_40] : memref<7x1x256xf32, #tpu.memory_space<vmem>>, vector<1x1x256xf32>
    %54 = vector.shape_cast %53 : vector<1x1x256xf32> to vector<1x256xf32>
    %55 = vector.broadcast %54 : vector<1x256xf32> to vector<512x256xf32>
    %56 = arith.addf %52, %55 : vector<512x256xf32>
    %cst_41 = arith.constant 0.000000e+00 : f32
    %57 = vector.broadcast %cst_41 : f32 to vector<512x256xf32>
    %58 = arith.maximumf %56, %57 : vector<512x256xf32>
    %59 = arith.truncf %58 : vector<512x256xf32> to vector<512x256xbf16>
    %c5 = arith.constant 5 : index
    %c0_42 = arith.constant 0 : index
    %c0_43 = arith.constant 0 : index
    %60 = vector.load %arg5[%c5, %c0_42, %c0_43] : memref<7x256x256xbf16, #tpu.memory_space<vmem>>, vector<1x256x256xbf16>
    %61 = vector.shape_cast %60 : vector<1x256x256xbf16> to vector<256x256xbf16>
    %cst_44 = arith.constant dense<0.000000e+00> : vector<512x256xf32>
    %62 = tpu.matmul %59, %61, %cst_44 {dimension_numbers = #tpu.dot_dimension_numbers<[1], [0], [0], [1], [0, 0, 1, 1], [], []>} : vector<512x256xbf16>, vector<256x256xbf16>, vector<512x256xf32> -> vector<512x256xf32>
    %c5_45 = arith.constant 5 : index
    %c0_46 = arith.constant 0 : index
    %c0_47 = arith.constant 0 : index
    %63 = vector.load %arg6[%c5_45, %c0_46, %c0_47] : memref<7x1x256xf32, #tpu.memory_space<vmem>>, vector<1x1x256xf32>
    %64 = vector.shape_cast %63 : vector<1x1x256xf32> to vector<1x256xf32>
    %65 = vector.broadcast %64 : vector<1x256xf32> to vector<512x256xf32>
    %66 = arith.addf %62, %65 : vector<512x256xf32>
    %cst_48 = arith.constant 0.000000e+00 : f32
    %67 = vector.broadcast %cst_48 : f32 to vector<512x256xf32>
    %68 = arith.maximumf %66, %67 : vector<512x256xf32>
    %69 = arith.truncf %68 : vector<512x256xf32> to vector<512x256xbf16>
    %c6 = arith.constant 6 : index
    %c0_49 = arith.constant 0 : index
    %c0_50 = arith.constant 0 : index
    %70 = vector.load %arg5[%c6, %c0_49, %c0_50] : memref<7x256x256xbf16, #tpu.memory_space<vmem>>, vector<1x256x256xbf16>
    %71 = vector.shape_cast %70 : vector<1x256x256xbf16> to vector<256x256xbf16>
    %cst_51 = arith.constant dense<0.000000e+00> : vector<512x256xf32>
    %72 = tpu.matmul %69, %71, %cst_51 {dimension_numbers = #tpu.dot_dimension_numbers<[1], [0], [0], [1], [0, 0, 1, 1], [], []>} : vector<512x256xbf16>, vector<256x256xbf16>, vector<512x256xf32> -> vector<512x256xf32>
    %c6_52 = arith.constant 6 : index
    %c0_53 = arith.constant 0 : index
    %c0_54 = arith.constant 0 : index
    %73 = vector.load %arg6[%c6_52, %c0_53, %c0_54] : memref<7x1x256xf32, #tpu.memory_space<vmem>>, vector<1x1x256xf32>
    %74 = vector.shape_cast %73 : vector<1x1x256xf32> to vector<1x256xf32>
    %75 = vector.broadcast %74 : vector<1x256xf32> to vector<512x256xf32>
    %76 = arith.addf %72, %75 : vector<512x256xf32>
    %cst_55 = arith.constant 0.000000e+00 : f32
    %77 = vector.broadcast %cst_55 : f32 to vector<512x256xf32>
    %78 = arith.maximumf %76, %77 : vector<512x256xf32>
    %79 = arith.truncf %78 : vector<512x256xf32> to vector<512x256xbf16>
    %c0_56 = arith.constant 0 : index
    %c0_57 = arith.constant 0 : index
    %80 = vector.load %arg7[%c0_56, %c0_57] : memref<256x1024xbf16, #tpu.memory_space<vmem>>, vector<256x1024xbf16>
    %cst_58 = arith.constant dense<0.000000e+00> : vector<512x1024xf32>
    %81 = tpu.matmul %79, %80, %cst_58 {dimension_numbers = #tpu.dot_dimension_numbers<[1], [0], [0], [1], [0, 0, 1, 1], [], []>} : vector<512x256xbf16>, vector<256x1024xbf16>, vector<512x1024xf32> -> vector<512x1024xf32>
    %c0_59 = arith.constant 0 : index
    %c0_60 = arith.constant 0 : index
    %82 = vector.load %arg8[%c0_59, %c0_60] : memref<1x1024xf32, #tpu.memory_space<vmem>>, vector<1x1024xf32>
    %83 = vector.broadcast %82 : vector<1x1024xf32> to vector<512x1024xf32>
    %84 = arith.addf %81, %83 : vector<512x1024xf32>
    %cst_61 = arith.constant 0.000000e+00 : f32
    %85 = vector.broadcast %cst_61 : f32 to vector<512x1024xf32>
    %86 = arith.maximumf %84, %85 : vector<512x1024xf32>
    %87 = arith.truncf %86 : vector<512x1024xf32> to vector<512x1024xbf16>
    %c0_62 = arith.constant 0 : index
    %c0_63 = arith.constant 0 : index
    %88 = vector.load %arg9[%c0_62, %c0_63] : memref<1024x16xbf16, #tpu.memory_space<vmem>>, vector<1024x16xbf16>
    %cst_64 = arith.constant dense<0.000000e+00> : vector<512x16xf32>
    %89 = tpu.matmul %87, %88, %cst_64 {dimension_numbers = #tpu.dot_dimension_numbers<[1], [0], [0], [1], [0, 0, 1, 1], [], []>} : vector<512x1024xbf16>, vector<1024x16xbf16>, vector<512x16xf32> -> vector<512x16xf32>
    %c0_65 = arith.constant 0 : index
    %c0_66 = arith.constant 0 : index
    %90 = vector.load %arg10[%c0_65, %c0_66] : memref<1x16xf32, #tpu.memory_space<vmem>>, vector<1x16xf32>
    %91 = vector.broadcast %90 : vector<1x16xf32> to vector<512x16xf32>
    %92 = arith.addf %89, %91 : vector<512x16xf32>
    %c0_67 = arith.constant 0 : index
    %c0_68 = arith.constant 0 : index
    %93 = vector.load %arg2[%c0_67, %c0_68] : memref<512x16xf32, #tpu.memory_space<vmem>>, vector<512x16xf32>
    %94 = arith.addf %93, %92 : vector<512x16xf32>
    %c0_69 = arith.constant 0 : index
    %c0_70 = arith.constant 0 : index
    %95 = vector.load %arg11[%c0_69, %c0_70] : memref<512x16xf32, #tpu.memory_space<vmem>>, vector<512x16xf32>
    tpu.vector_store %arg11[%c0_69, %c0_70], %94 {strides = array<i32>} : memref<512x16xf32, #tpu.memory_space<vmem>>, vector<512x16xf32>,
    return
  }
  func.func @transform_0(%arg0: i32) -> (i32, i32) {
    %c0_i32 = arith.constant 0 : i32
    %c0_i32_0 = arith.constant 0 : i32
    return %arg0, %c0_i32 : i32, i32
  }
  func.func @transform_1(%arg0: i32) -> (i32, i32) {
    %c0_i32 = arith.constant 0 : i32
    %c0_i32_0 = arith.constant 0 : i32
    return %arg0, %c0_i32 : i32, i32
  }
  func.func @transform_2(%arg0: i32) -> (i32, i32) {
    %c0_i32 = arith.constant 0 : i32
    %c0_i32_0 = arith.constant 0 : i32
    %c0_i32_1 = arith.constant 0 : i32
    return %c0_i32, %c0_i32_0 : i32, i32
  }
  func.func @transform_3(%arg0: i32) -> (i32, i32) {
    %c0_i32 = arith.constant 0 : i32
    %c0_i32_0 = arith.constant 0 : i32
    %c0_i32_1 = arith.constant 0 : i32
    return %c0_i32, %c0_i32_0 : i32, i32
  }
  func.func @transform_4(%arg0: i32) -> (i32, i32, i32) {
    %c0_i32 = arith.constant 0 : i32
    %c0_i32_0 = arith.constant 0 : i32
    %c0_i32_1 = arith.constant 0 : i32
    %c0_i32_2 = arith.constant 0 : i32
    return %c0_i32, %c0_i32_0, %c0_i32_1 : i32, i32, i32
  }
  func.func @transform_5(%arg0: i32) -> (i32, i32, i32) {
    %c0_i32 = arith.constant 0 : i32
    %c0_i32_0 = arith.constant 0 : i32
    %c0_i32_1 = arith.constant 0 : i32
    %c0_i32_2 = arith.constant 0 : i32
    return %c0_i32, %c0_i32_0, %c0_i32_1 : i32, i32, i32
  }
  func.func @transform_6(%arg0: i32) -> (i32, i32) {
    %c0_i32 = arith.constant 0 : i32
    %c0_i32_0 = arith.constant 0 : i32
    %c0_i32_1 = arith.constant 0 : i32
    return %c0_i32, %c0_i32_0 : i32, i32
  }
  func.func @transform_7(%arg0: i32) -> (i32, i32) {
    %c0_i32 = arith.constant 0 : i32
    %c0_i32_0 = arith.constant 0 : i32
    %c0_i32_1 = arith.constant 0 : i32
    return %c0_i32, %c0_i32_0 : i32, i32
  }
  func.func @transform_8(%arg0: i32) -> (i32, i32) {
    %c0_i32 = arith.constant 0 : i32
    %c0_i32_0 = arith.constant 0 : i32
    %c0_i32_1 = arith.constant 0 : i32
    return %c0_i32, %c0_i32_0 : i32, i32
  }
  func.func @transform_9(%arg0: i32) -> (i32, i32) {
    %c0_i32 = arith.constant 0 : i32
    %c0_i32_0 = arith.constant 0 : i32
    %c0_i32_1 = arith.constant 0 : i32
    return %c0_i32, %c0_i32_0 : i32, i32
  }
  func.func @transform_10(%arg0: i32) -> (i32, i32) {
    %c0_i32 = arith.constant 0 : i32
    %c0_i32_0 = arith.constant 0 : i32
    return %arg0, %c0_i32 : i32, i32
  }
}

</mosaic_0001>

<llo_original>
// kernel: gaussian_deformation_forward.1
$region0: #{gaussian_deformation_forward.1}
  #allocation0 [shape = 'u32[]', space=smem, size = 0x4, offset = 0x4, fixed_abs, tag = 'smem constant byte address 0x4 - core index']
  #allocation1 [shape = 'u32[144,128]{1,0:T(1,128)}', space=vmem, size = 0x12000, scoped, tag = 'internal scratch']
  %s0 = inlined_call_operand.vmem [shape: f32[1024,4], index: 0, kind: input, shape index: {}]
  %s1 = inlined_call_operand.vmem [shape: f32[1024,16], index: 1, kind: input, shape index: {}]
  %s2 = inlined_call_operand.vmem [shape: bf16[4,256], index: 2, kind: input, shape index: {}]
  %s3 = inlined_call_operand.vmem [shape: f32[1,256], index: 3, kind: input, shape index: {}]
  %s4 = inlined_call_operand.vmem [shape: bf16[7,256,256], index: 4, kind: input, shape index: {}]
  %s5 = inlined_call_operand.vmem [shape: f32[7,1,256], index: 5, kind: input, shape index: {}]
  %s6 = inlined_call_operand.vmem [shape: bf16[256,1024], index: 6, kind: input, shape index: {}]
  %s7 = inlined_call_operand.vmem [shape: f32[1,1024], index: 7, kind: input, shape index: {}]
  %s8 = inlined_call_operand.vmem [shape: bf16[1024,16], index: 8, kind: input, shape index: {}]
  %s9 = inlined_call_operand.vmem [shape: f32[1,16], index: 9, kind: input, shape index: {}]
  %s10 = inlined_call_operand.vmem [shape: f32[1024,16], index: 10, kind: output, shape index: {}]
  %s11 = sld [smem:[#allocation0]]
  $region73: #{gaussian_deformation_forward.1} parent=0
    _
  %s13 = ssub.s32 1, %s11
  %s14 = scalar_select 0, %s13, %s11
  loop: start=0, step=1, limit=4
  $region2: #{gaussian_deformation_forward.1} parent=0 // loop_pre_header
    _
  $region3: #{gaussian_deformation_forward.1} parent=0 // loop_header
    %s16 = sphi 0, %s20
    %p17 = scmp.ge.s32.totalorder %s16, 4
    %s26 = sphi 0, %s28
    %s29 = sphi 0, %s26
    %s30 = sphi 0, %s29
    %s46 = sphi 0, %s30
    %s52 = sphi 0, %s54
    %s55 = sphi 0, %s52
    %s56 = sphi 0, %s55
    %s72 = sphi 0, %s56
    %s76 = sphi 0, %s76
    %s78 = sphi 0, %s76
    %s79 = sphi 0, %s78
    %s93 = sphi 0, %s79
    %s97 = sphi 0, %s97
    %s99 = sphi 0, %s97
    %s100 = sphi 0, %s99
    %s114 = sphi 0, %s100
    %s118 = sphi 0, %s118
    %s120 = sphi 0, %s118
    %s121 = sphi 0, %s120
    %s135 = sphi 0, %s121
    %s139 = sphi 0, %s139
    %s141 = sphi 0, %s139
    %s142 = sphi 0, %s141
    %s156 = sphi 0, %s142
    %s160 = sphi 0, %s160
    %s162 = sphi 0, %s160
    %s163 = sphi 0, %s162
    %s177 = sphi 0, %s163
    %s181 = sphi 0, %s181
    %s183 = sphi 0, %s181
    %s184 = sphi 0, %s183
    %s198 = sphi 0, %s184
    %s202 = sphi 0, %s202
    %s204 = sphi 0, %s202
    %s205 = sphi 0, %s204
    %s219 = sphi 0, %s205
    %s223 = sphi 0, %s223
    %s225 = sphi 0, %s223
    %s226 = sphi 0, %s225
    %s240 = sphi 0, %s226
    %s246 = sphi 0, %s248
    %s249 = sphi 0, %s246
    %s250 = sphi 0, %s249
    %s266 = sphi 0, %s250
  $region4: #{gaussian_deformation_forward.1} parent=0 // loop_header_branch
    %19 = sbr.rel (%p17) target = $region8
  $region5: #{gaussian_deformation_forward.1} parent=0 // loop_body
    %s21 = ssub.s32 %s16, 1
    %s22 = ssub.s32 %s16, 2
    %s23 = sadd.s32 %s16, 1
    %s24 = ssub.s32 %s16, %s23
    %p25 = scmp.eq.s32.totalorder %s24, 0
    %s27 = sadd.s32 %s26, 1
    %s28 = scalar_select %p25, %s26, %s27
    %p31 = pneg %p25
    %p32 = scmp.eq.s32.totalorder %s16, 1
    %p33 = por %p31, %p32
    %p34 = scmp.ne.s32.totalorder %s26, %s29
    %p35 = scmp.eq.s32.totalorder %s16, 0
    %p36 = por %p34, %p35
    %p37 = scmp.ne.s32.totalorder %s26, %s29
    %p38 = scmp.eq.s32.totalorder %s21, 1
    %p39 = por %p37, %p38
    %p40 = scmp.ne.s32.totalorder %s29, %s30
    %p41 = scmp.eq.s32.totalorder %s21, 0
    %p42 = por %p40, %p41
    %p43 = scmp.ne.s32.totalorder %s29, %s30
    %p44 = scmp.eq.s32.totalorder %s22, 1
    %p45 = por %p43, %p44
    %p47 = scmp.ne.s32.totalorder %s30, %s46
    %p48 = scmp.eq.s32.totalorder %s22, 0
    %p49 = por %p47, %p48
    %s50 = ssub.s32 %s16, %s23
    %p51 = scmp.eq.s32.totalorder %s50, 0
    %s53 = sadd.s32 %s52, 1
    %s54 = scalar_select %p51, %s52, %s53
    %p57 = pneg %p51
    %p58 = scmp.eq.s32.totalorder %s16, 1
    %p59 = por %p57, %p58
    %p60 = scmp.ne.s32.totalorder %s52, %s55
    %p61 = scmp.eq.s32.totalorder %s16, 0
    %p62 = por %p60, %p61
    %p63 = scmp.ne.s32.totalorder %s52, %s55
    %p64 = scmp.eq.s32.totalorder %s21, 1
    %p65 = por %p63, %p64
    %p66 = scmp.ne.s32.totalorder %s55, %s56
    %p67 = scmp.eq.s32.totalorder %s21, 0
    %p68 = por %p66, %p67
    %p69 = scmp.ne.s32.totalorder %s55, %s56
    %p70 = scmp.eq.s32.totalorder %s22, 1
    %p71 = por %p69, %p70
    %p73 = scmp.ne.s32.totalorder %s56, %s72
    %p74 = scmp.eq.s32.totalorder %s22, 0
    %p75 = por %p73, %p74
    %s77 = sadd.s32 %s76, 1
    %p80 = scmp.eq.s32.totalorder %s16, 1
    %p81 = scmp.ne.s32.totalorder %s76, %s78
    %p82 = scmp.eq.s32.totalorder %s16, 0
    %p83 = por %p81, %p82
    %p84 = scmp.ne.s32.totalorder %s76, %s78
    %p85 = scmp.eq.s32.totalorder %s21, 1
    %p86 = por %p84, %p85
    %p87 = scmp.ne.s32.totalorder %s78, %s79
    %p88 = scmp.eq.s32.totalorder %s21, 0
    %p89 = por %p87, %p88
    %p90 = scmp.ne.s32.totalorder %s78, %s79
    %p91 = scmp.eq.s32.totalorder %s22, 1
    %p92 = por %p90, %p91
    %p94 = scmp.ne.s32.totalorder %s79, %s93
    %p95 = scmp.eq.s32.totalorder %s22, 0
    %p96 = por %p94, %p95
    %s98 = sadd.s32 %s97, 1
    %p101 = scmp.eq.s32.totalorder %s16, 1
    %p102 = scmp.ne.s32.totalorder %s97, %s99
    %p103 = scmp.eq.s32.totalorder %s16, 0
    %p104 = por %p102, %p103
    %p105 = scmp.ne.s32.totalorder %s97, %s99
    %p106 = scmp.eq.s32.totalorder %s21, 1
    %p107 = por %p105, %p106
    %p108 = scmp.ne.s32.totalorder %s99, %s100
    %p109 = scmp.eq.s32.totalorder %s21, 0
    %p110 = por %p108, %p109
    %p111 = scmp.ne.s32.totalorder %s99, %s100
    %p112 = scmp.eq.s32.totalorder %s22, 1
    %p113 = por %p111, %p112
    %p115 = scmp.ne.s32.totalorder %s100, %s114
    %p116 = scmp.eq.s32.totalorder %s22, 0
    %p117 = por %p115, %p116
    %s119 = sadd.s32 %s118, 1
    %p122 = scmp.eq.s32.totalorder %s16, 1
    %p123 = scmp.ne.s32.totalorder %s118, %s120
    %p124 = scmp.eq.s32.totalorder %s16, 0
    %p125 = por %p123, %p124
    %p126 = scmp.ne.s32.totalorder %s118, %s120
    %p127 = scmp.eq.s32.totalorder %s21, 1
    %p128 = por %p126, %p127
    %p129 = scmp.ne.s32.totalorder %s120, %s121
    %p130 = scmp.eq.s32.totalorder %s21, 0
    %p131 = por %p129, %p130
    %p132 = scmp.ne.s32.totalorder %s120, %s121
    %p133 = scmp.eq.s32.totalorder %s22, 1
    %p134 = por %p132, %p133
    %p136 = scmp.ne.s32.totalorder %s121, %s135
    %p137 = scmp.eq.s32.totalorder %s22, 0
    %p138 = por %p136, %p137
    %s140 = sadd.s32 %s139, 1
    %p143 = scmp.eq.s32.totalorder %s16, 1
    %p144 = scmp.ne.s32.totalorder %s139, %s141
    %p145 = scmp.eq.s32.totalorder %s16, 0
    %p146 = por %p144, %p145
    %p147 = scmp.ne.s32.totalorder %s139, %s141
    %p148 = scmp.eq.s32.totalorder %s21, 1
    %p149 = por %p147, %p148
    %p150 = scmp.ne.s32.totalorder %s141, %s142
    %p151 = scmp.eq.s32.totalorder %s21, 0
    %p152 = por %p150, %p151
    %p153 = scmp.ne.s32.totalorder %s141, %s142
    %p154 = scmp.eq.s32.totalorder %s22, 1
    %p155 = por %p153, %p154
    %p157 = scmp.ne.s32.totalorder %s142, %s156
    %p158 = scmp.eq.s32.totalorder %s22, 0
    %p159 = por %p157, %p158
    %s161 = sadd.s32 %s160, 1
    %p164 = scmp.eq.s32.totalorder %s16, 1
    %p165 = scmp.ne.s32.totalorder %s160, %s162
    %p166 = scmp.eq.s32.totalorder %s16, 0
    %p167 = por %p165, %p166
    %p168 = scmp.ne.s32.totalorder %s160, %s162
    %p169 = scmp.eq.s32.totalorder %s21, 1
    %p170 = por %p168, %p169
    %p171 = scmp.ne.s32.totalorder %s162, %s163
    %p172 = scmp.eq.s32.totalorder %s21, 0
    %p173 = por %p171, %p172
    %p174 = scmp.ne.s32.totalorder %s162, %s163
    %p175 = scmp.eq.s32.totalorder %s22, 1
    %p176 = por %p174, %p175
    %p178 = scmp.ne.s32.totalorder %s163, %s177
    %p179 = scmp.eq.s32.totalorder %s22, 0
    %p180 = por %p178, %p179
    %s182 = sadd.s32 %s181, 1
    %p185 = scmp.eq.s32.totalorder %s16, 1
    %p186 = scmp.ne.s32.totalorder %s181, %s183
    %p187 = scmp.eq.s32.totalorder %s16, 0
    %p188 = por %p186, %p187
    %p189 = scmp.ne.s32.totalorder %s181, %s183
    %p190 = scmp.eq.s32.totalorder %s21, 1
    %p191 = por %p189, %p190
    %p192 = scmp.ne.s32.totalorder %s183, %s184
    %p193 = scmp.eq.s32.totalorder %s21, 0
    %p194 = por %p192, %p193
    %p195 = scmp.ne.s32.totalorder %s183, %s184
    %p196 = scmp.eq.s32.totalorder %s22, 1
    %p197 = por %p195, %p196
    %p199 = scmp.ne.s32.totalorder %s184, %s198
    %p200 = scmp.eq.s32.totalorder %s22, 0
    %p201 = por %p199, %p200
    %s203 = sadd.s32 %s202, 1
    %p206 = scmp.eq.s32.totalorder %s16, 1
    %p207 = scmp.ne.s32.totalorder %s202, %s204
    %p208 = scmp.eq.s32.totalorder %s16, 0
    %p209 = por %p207, %p208
    %p210 = scmp.ne.s32.totalorder %s202, %s204
    %p211 = scmp.eq.s32.totalorder %s21, 1
    %p212 = por %p210, %p211
    %p213 = scmp.ne.s32.totalorder %s204, %s205
    %p214 = scmp.eq.s32.totalorder %s21, 0
    %p215 = por %p213, %p214
    %p216 = scmp.ne.s32.totalorder %s204, %s205
    %p217 = scmp.eq.s32.totalorder %s22, 1
    %p218 = por %p216, %p217
    %p220 = scmp.ne.s32.totalorder %s205, %s219
    %p221 = scmp.eq.s32.totalorder %s22, 0
    %p222 = por %p220, %p221
    %s224 = sadd.s32 %s223, 1
    %p227 = scmp.eq.s32.totalorder %s16, 1
    %p228 = scmp.ne.s32.totalorder %s223, %s225
    %p229 = scmp.eq.s32.totalorder %s16, 0
    %p230 = por %p228, %p229
    %p231 = scmp.ne.s32.totalorder %s223, %s225
    %p232 = scmp.eq.s32.totalorder %s21, 1
    %p233 = por %p231, %p232
    %p234 = scmp.ne.s32.totalorder %s225, %s226
    %p235 = scmp.eq.s32.totalorder %s21, 0
    %p236 = por %p234, %p235
    %p237 = scmp.ne.s32.totalorder %s225, %s226
    %p238 = scmp.eq.s32.totalorder %s22, 1
    %p239 = por %p237, %p238
    %p241 = scmp.ne.s32.totalorder %s226, %s240
    %p242 = scmp.eq.s32.totalorder %s22, 0
    %p243 = por %p241, %p242
    %s244 = ssub.s32 %s16, %s23
    %p245 = scmp.eq.s32.totalorder %s244, 0
    %s247 = sadd.s32 %s246, 1
    %s248 = scalar_select %p245, %s246, %s247
    %p251 = pneg %p245
    %p252 = scmp.eq.s32.totalorder %s16, 1
    %p253 = por %p251, %p252
    %p254 = scmp.ne.s32.totalorder %s246, %s249
    %p255 = scmp.eq.s32.totalorder %s16, 0
    %p256 = por %p254, %p255
    %p257 = scmp.ne.s32.totalorder %s246, %s249
    %p258 = scmp.eq.s32.totalorder %s21, 1
    %p259 = por %p257, %p258
    %p260 = scmp.ne.s32.totalorder %s249, %s250
    %p261 = scmp.eq.s32.totalorder %s21, 0
    %p262 = por %p260, %p261
    %p263 = scmp.ne.s32.totalorder %s249, %s250
    %p264 = scmp.eq.s32.totalorder %s22, 1
    %p265 = por %p263, %p264
    %p267 = scmp.ne.s32.totalorder %s250, %s266
    %p268 = scmp.eq.s32.totalorder %s22, 0
    %p269 = por %p267, %p268
    %p270 = scmp.le.s32.totalorder 1, %s16
    %p271 = scmp.lt.s32.totalorder %s16, 3
    %p272 = pnand %p270, %p271
    %p273 = pneg %p272
    // Predicated region
    $region9: #{gaussian_deformation_forward.1} parent=5 // pred_check
      _
    $region10: #{gaussian_deformation_forward.1} parent=5 // pred_check_branch
      %275 = sbr.rel (%p272) target = $region12
    $region11: #{gaussian_deformation_forward.1} parent=5 // pred_region
      %s276 = ssub.s32 %s16, 1
      // Predicated region
      $region13: #{gaussian_deformation_forward.1} parent=11 // pred_check
        %p277 = pneg %p89
      $region14: #{gaussian_deformation_forward.1} parent=11 // pred_check_branch
        %279 = sbr.rel (%p277) target = $region16
      $region15: #{gaussian_deformation_forward.1} parent=11 // pred_region
        _
      $region16: #{gaussian_deformation_forward.1} parent=11 // pred_fallthru
        _
      // Predicated region
      $region17: #{gaussian_deformation_forward.1} parent=11 // pred_check
        %p280 = pneg %p110
      $region18: #{gaussian_deformation_forward.1} parent=11 // pred_check_branch
        %282 = sbr.rel (%p280) target = $region20
      $region19: #{gaussian_deformation_forward.1} parent=11 // pred_region
        _
      $region20: #{gaussian_deformation_forward.1} parent=11 // pred_fallthru
        _
      // Predicated region
      $region21: #{gaussian_deformation_forward.1} parent=11 // pred_check
        %p283 = pneg %p131
      $region22: #{gaussian_deformation_forward.1} parent=11 // pred_check_branch
        %285 = sbr.rel (%p283) target = $region24
      $region23: #{gaussian_deformation_forward.1} parent=11 // pred_region
        _
      $region24: #{gaussian_deformation_forward.1} parent=11 // pred_fallthru
        _
      // Predicated region
      $region25: #{gaussian_deformation_forward.1} parent=11 // pred_check
        %p286 = pneg %p152
      $region26: #{gaussian_deformation_forward.1} parent=11 // pred_check_branch
        %288 = sbr.rel (%p286) target = $region28
      $region27: #{gaussian_deformation_forward.1} parent=11 // pred_region
        _
      $region28: #{gaussian_deformation_forward.1} parent=11 // pred_fallthru
        _
      // Predicated region
      $region29: #{gaussian_deformation_forward.1} parent=11 // pred_check
        %p289 = pneg %p173
      $region30: #{gaussian_deformation_forward.1} parent=11 // pred_check_branch
        %291 = sbr.rel (%p289) target = $region32
      $region31: #{gaussian_deformation_forward.1} parent=11 // pred_region
        _
      $region32: #{gaussian_deformation_forward.1} parent=11 // pred_fallthru
        _
      // Predicated region
      $region33: #{gaussian_deformation_forward.1} parent=11 // pred_check
        %p292 = pneg %p194
      $region34: #{gaussian_deformation_forward.1} parent=11 // pred_check_branch
        %294 = sbr.rel (%p292) target = $region36
      $region35: #{gaussian_deformation_forward.1} parent=11 // pred_region
        _
      $region36: #{gaussian_deformation_forward.1} parent=11 // pred_fallthru
        _
      // Predicated region
      $region37: #{gaussian_deformation_forward.1} parent=11 // pred_check
        %p295 = pneg %p215
      $region38: #{gaussian_deformation_forward.1} parent=11 // pred_check_branch
        %297 = sbr.rel (%p295) target = $region40
      $region39: #{gaussian_deformation_forward.1} parent=11 // pred_region
        _
      $region40: #{gaussian_deformation_forward.1} parent=11 // pred_fallthru
        _
      // Predicated region
      $region41: #{gaussian_deformation_forward.1} parent=11 // pred_check
        %p298 = pneg %p236
      $region42: #{gaussian_deformation_forward.1} parent=11 // pred_check_branch
        %300 = sbr.rel (%p298) target = $region44
      $region43: #{gaussian_deformation_forward.1} parent=11 // pred_region
        _
      $region44: #{gaussian_deformation_forward.1} parent=11 // pred_fallthru
        _
    $region12: #{gaussian_deformation_forward.1} parent=5 // pred_fallthru
      _
    %p301 = scmp.lt.s32.totalorder %s16, 2
    // Predicated region
    $region45: #{gaussian_deformation_forward.1} parent=5 // pred_check
      %p302 = pneg %p301
    $region46: #{gaussian_deformation_forward.1} parent=5 // pred_check_branch
      %304 = sbr.rel (%p302) target = $region48
    $region47: #{gaussian_deformation_forward.1} parent=5 // pred_region
      // Predicated region
      $region49: #{gaussian_deformation_forward.1} parent=47 // pred_check
        %p305 = pneg %p36
      $region50: #{gaussian_deformation_forward.1} parent=47 // pred_check_branch
        %307 = sbr.rel (%p305) target = $region52
      $region51: #{gaussian_deformation_forward.1} parent=47 // pred_region
        %s308 = smul.u32 64, %s16
        %p309 = scmp.lt.s32.totalorder %s308, 127
        %s310 = scalar_select %p309, %s308, 127
        %s311 = smul.addr %s310, 8
        %s312 = scalar_lea.vmem %s0, %s311
        %s313 = smul.u32 64, %s16
      $region52: #{gaussian_deformation_forward.1} parent=47 // pred_fallthru
        _
      // Predicated region
      $region53: #{gaussian_deformation_forward.1} parent=47 // pred_check
        %p314 = pneg %p62
      $region54: #{gaussian_deformation_forward.1} parent=47 // pred_check_branch
        %316 = sbr.rel (%p314) target = $region56
      $region55: #{gaussian_deformation_forward.1} parent=47 // pred_region
        %s317 = smul.u32 64, %s16
        %p318 = scmp.lt.s32.totalorder %s317, 127
        %s319 = scalar_select %p318, %s317, 127
        %s320 = smul.addr %s319, 8
        %s321 = scalar_lea.vmem %s1, %s320
        %s322 = smul.u32 64, %s16
      $region56: #{gaussian_deformation_forward.1} parent=47 // pred_fallthru
        _
    $region48: #{gaussian_deformation_forward.1} parent=5 // pred_fallthru
      _
    %p323 = scmp.le.s32.totalorder 1, %s16
    %p324 = scmp.lt.s32.totalorder %s16, 3
    %p325 = pnand %p323, %p324
    %p326 = pneg %p325
    // Predicated region
    $region57: #{gaussian_deformation_forward.1} parent=5 // pred_check
      _
    $region58: #{gaussian_deformation_forward.1} parent=5 // pred_check_branch
      %328 = sbr.rel (%p325) target = $region60
    $region59: #{gaussian_deformation_forward.1} parent=5 // pred_region
      %s329 = ssub.s32 %s16, 1
      %s330 = smul.u32 64, %s21
      %p331 = scmp.lt.s32.totalorder %s330, 127
      %s332 = scalar_select %p331, %s330, 127
      %s333 = smul.addr %s332, 8
      %s334 = scalar_lea.vmem %s0, %s333
      %p335 = pneg %p42
      %p336 = pneg %p39
      %s337 = smul.u32 64, %s21
      %p338 = scmp.lt.s32.totalorder %s337, 127
      %s339 = scalar_select %p338, %s337, 127
      %s340 = smul.addr %s339, 8
      %s341 = scalar_lea.vmem %s1, %s340
      %p342 = pneg %p68
      %p343 = pneg %p65
      %p344 = pneg %p89
      %p345 = pneg %p86
      %p346 = pneg %p110
      %p347 = pneg %p107
      %p348 = pneg %p131
      %p349 = pneg %p128
      %p350 = pneg %p152
      %p351 = pneg %p149
      %p352 = pneg %p173
      %p353 = pneg %p170
      %p354 = pneg %p194
      %p355 = pneg %p191
      %p356 = pneg %p215
      %p357 = pneg %p212
      %p358 = pneg %p236
      %p359 = pneg %p233
      %p360 = pneg %p262
      %p361 = pneg %p259
      %s362 = smul.u32 64, %s21
      %p363 = scmp.lt.s32.totalorder %s362, 127
      %s364 = scalar_select %p363, %s362, 127
      %s365 = smul.addr %s364, 8
      %s366 = scalar_lea.vmem %s10, %s365
      %s367 = smul.u32 64, %s21
      %p368 = scmp.lt.s32.totalorder %s367, 127
      %s369 = scalar_select %p368, %s367, 127
      %s370 = smul.addr %s369, 8
      %s371 = scalar_lea.vmem %s0, %s370
      %s372 = smul.u32 64, %s21
      %s373 = smul.u32 64, %s21
      %p374 = scmp.lt.s32.totalorder %s373, 127
      %s375 = scalar_select %p374, %s373, 127
      %s376 = smul.addr %s375, 8
      %s377 = scalar_lea.vmem %s1, %s376
      %s378 = smul.u32 64, %s21
      %s379 = smul.u32 64, %s21
      %p380 = scmp.lt.s32.totalorder %s379, 127
      %s381 = scalar_select %p380, %s379, 127
      %s382 = smul.addr %s381, 8
      %s383 = scalar_lea.vmem %s10, %s382
      %s384 = smul.u32 64, %s21
      %v386 = vld [vmem:[%s371] sm:$0xff]
      %v387 = vld [vmem:[%s371 + $0x8] sm:$0xff]
      %v388 = vld [vmem:[%s371 + $0x10] sm:$0xff]
      %v389 = vld [vmem:[%s371 + $0x18] sm:$0xff]
      %v390 = vld [vmem:[%s371 + $0x20] sm:$0xff]
      %v391 = vld [vmem:[%s371 + $0x28] sm:$0xff]
      %v392 = vld [vmem:[%s371 + $0x30] sm:$0xff]
      %v393 = vld [vmem:[%s371 + $0x38] sm:$0xff]
      %v394 = vld [vmem:[%s371 + $0x40] sm:$0xff]
      %v395 = vld [vmem:[%s371 + $0x48] sm:$0xff]
      %v396 = vld [vmem:[%s371 + $0x50] sm:$0xff]
      %v397 = vld [vmem:[%s371 + $0x58] sm:$0xff]
      %v398 = vld [vmem:[%s371 + $0x60] sm:$0xff]
      %v399 = vld [vmem:[%s371 + $0x68] sm:$0xff]
      %v400 = vld [vmem:[%s371 + $0x70] sm:$0xff]
      %v401 = vld [vmem:[%s371 + $0x78] sm:$0xff]
      %v402 = vld [vmem:[%s371 + $0x80] sm:$0xff]
      %v403 = vld [vmem:[%s371 + $0x88] sm:$0xff]
      %v404 = vld [vmem:[%s371 + $0x90] sm:$0xff]
      %v405 = vld [vmem:[%s371 + $0x98] sm:$0xff]
      %v406 = vld [vmem:[%s371 + $0xa0] sm:$0xff]
      %v407 = vld [vmem:[%s371 + $0xa8] sm:$0xff]
      %v408 = vld [vmem:[%s371 + $0xb0] sm:$0xff]
      %v409 = vld [vmem:[%s371 + $0xb8] sm:$0xff]
      %v410 = vld [vmem:[%s371 + $0xc0] sm:$0xff]
      %v411 = vld [vmem:[%s371 + $0xc8] sm:$0xff]
      %v412 = vld [vmem:[%s371 + $0xd0] sm:$0xff]
      %v413 = vld [vmem:[%s371 + $0xd8] sm:$0xff]
      %v414 = vld [vmem:[%s371 + $0xe0] sm:$0xff]
      %v415 = vld [vmem:[%s371 + $0xe8] sm:$0xff]
      %v416 = vld [vmem:[%s371 + $0xf0] sm:$0xff]
      %v417 = vld [vmem:[%s371 + $0xf8] sm:$0xff]
      %v418 = vld [vmem:[%s371 + $0x100] sm:$0xff]
      %v419 = vld [vmem:[%s371 + $0x108] sm:$0xff]
      %v420 = vld [vmem:[%s371 + $0x110] sm:$0xff]
      %v421 = vld [vmem:[%s371 + $0x118] sm:$0xff]
      %v422 = vld [vmem:[%s371 + $0x120] sm:$0xff]
      %v423 = vld [vmem:[%s371 + $0x128] sm:$0xff]
      %v424 = vld [vmem:[%s371 + $0x130] sm:$0xff]
      %v425 = vld [vmem:[%s371 + $0x138] sm:$0xff]
      %v426 = vld [vmem:[%s371 + $0x140] sm:$0xff]
      %v427 = vld [vmem:[%s371 + $0x148] sm:$0xff]
      %v428 = vld [vmem:[%s371 + $0x150] sm:$0xff]
      %v429 = vld [vmem:[%s371 + $0x158] sm:$0xff]
      %v430 = vld [vmem:[%s371 + $0x160] sm:$0xff]
      %v431 = vld [vmem:[%s371 + $0x168] sm:$0xff]
      %v432 = vld [vmem:[%s371 + $0x170] sm:$0xff]
      %v433 = vld [vmem:[%s371 + $0x178] sm:$0xff]
      %v434 = vld [vmem:[%s371 + $0x180] sm:$0xff]
      %v435 = vld [vmem:[%s371 + $0x188] sm:$0xff]
      %v436 = vld [vmem:[%s371 + $0x190] sm:$0xff]
      %v437 = vld [vmem:[%s371 + $0x198] sm:$0xff]
      %v438 = vld [vmem:[%s371 + $0x1a0] sm:$0xff]
      %v439 = vld [vmem:[%s371 + $0x1a8] sm:$0xff]
      %v440 = vld [vmem:[%s371 + $0x1b0] sm:$0xff]
      %v441 = vld [vmem:[%s371 + $0x1b8] sm:$0xff]
      %v442 = vld [vmem:[%s371 + $0x1c0] sm:$0xff]
      %v443 = vld [vmem:[%s371 + $0x1c8] sm:$0xff]
      %v444 = vld [vmem:[%s371 + $0x1d0] sm:$0xff]
      %v445 = vld [vmem:[%s371 + $0x1d8] sm:$0xff]
      %v446 = vld [vmem:[%s371 + $0x1e0] sm:$0xff]
      %v447 = vld [vmem:[%s371 + $0x1e8] sm:$0xff]
      %v448 = vld [vmem:[%s371 + $0x1f0] sm:$0xff]
      %v449 = vld [vmem:[%s371 + $0x1f8] sm:$0xff]
      %v450 = vpack.c.bf16 %v387, %v386
      %v451 = vpack.c.bf16 %v389, %v388
      %v452 = vpack.c.bf16 %v391, %v390
      %v453 = vpack.c.bf16 %v393, %v392
      %v454 = vpack.c.bf16 %v395, %v394
      %v455 = vpack.c.bf16 %v397, %v396
      %v456 = vpack.c.bf16 %v399, %v398
      %v457 = vpack.c.bf16 %v401, %v400
      %v458 = vpack.c.bf16 %v403, %v402
      %v459 = vpack.c.bf16 %v405, %v404
      %v460 = vpack.c.bf16 %v407, %v406
      %v461 = vpack.c.bf16 %v409, %v408
      %v462 = vpack.c.bf16 %v411, %v410
      %v463 = vpack.c.bf16 %v413, %v412
      %v464 = vpack.c.bf16 %v415, %v414
      %v465 = vpack.c.bf16 %v417, %v416
      %v466 = vpack.c.bf16 %v419, %v418
      %v467 = vpack.c.bf16 %v421, %v420
      %v468 = vpack.c.bf16 %v423, %v422
      %v469 = vpack.c.bf16 %v425, %v424
      %v470 = vpack.c.bf16 %v427, %v426
      %v471 = vpack.c.bf16 %v429, %v428
      %v472 = vpack.c.bf16 %v431, %v430
      %v473 = vpack.c.bf16 %v433, %v432
      %v474 = vpack.c.bf16 %v435, %v434
      %v475 = vpack.c.bf16 %v437, %v436
      %v476 = vpack.c.bf16 %v439, %v438
      %v477 = vpack.c.bf16 %v441, %v440
      %v478 = vpack.c.bf16 %v443, %v442
      %v479 = vpack.c.bf16 %v445, %v444
      %v480 = vpack.c.bf16 %v447, %v446
      %v481 = vpack.c.bf16 %v449, %v448
      %v482 = vld [vmem:[%s2] sm:$0xf]
      %v483 = vld [vmem:[%s3] sm:$0x3]
      %v485 = vlaneseq
      %v486 = vshrl.u32 %v485, 7
      %v487 = vsub.s32 0, %v486
      %v488 = vrot.slane %v483, %v487
      %v489 = vlaneseq
      %v490 = vshrl.u32 %v489, 7
      %v491 = vsub.s32 1, %v490
      %v492 = vrot.slane %v483, %v491
      %v497 = vunpack.c.l.s4 1983009808
      %v498 = vunpack.c.0.s8 %v497
      %v499 = vlaneseq
      %v500 = vshrl.u32 %v499, 7
      %v501 = vsub.s32 %v498, %v500
      %v502 = vrot.slane %v482, %v501
      %v503 = vcombine.high %v502, %v502
      %vm504 = vcmask 31744
      %v506 = vsel %vm504, %v450, 0
      %v509 = vsel %vm504, %v451, 0
      %v512 = vsel %vm504, %v452, 0
      %v515 = vsel %vm504, %v453, 0
      %v518 = vsel %vm504, %v454, 0
      %v521 = vsel %vm504, %v455, 0
      %v524 = vsel %vm504, %v456, 0
      %v527 = vsel %vm504, %v457, 0
      %v530 = vsel %vm504, %v458, 0
      %v533 = vsel %vm504, %v459, 0
      %v536 = vsel %vm504, %v460, 0
      %v539 = vsel %vm504, %v461, 0
      %v542 = vsel %vm504, %v462, 0
      %v545 = vsel %vm504, %v463, 0
      %v548 = vsel %vm504, %v464, 0
      %v551 = vsel %vm504, %v465, 0
      %v554 = vsel %vm504, %v466, 0
      %v557 = vsel %vm504, %v467, 0
      %v560 = vsel %vm504, %v468, 0
      %v563 = vsel %vm504, %v469, 0
      %v566 = vsel %vm504, %v470, 0
      %v569 = vsel %vm504, %v471, 0
      %v572 = vsel %vm504, %v472, 0
      %v575 = vsel %vm504, %v473, 0
      %v578 = vsel %vm504, %v474, 0
      %v581 = vsel %vm504, %v475, 0
      %v584 = vsel %vm504, %v476, 0
      %v587 = vsel %vm504, %v477, 0
      %v590 = vsel %vm504, %v478, 0
      %v593 = vsel %vm504, %v479, 0
      %v596 = vsel %vm504, %v480, 0
      %v599 = vsel %vm504, %v481, 0
      %vm601 = vcmask 1041408
      %v603 = vsel %vm601, %v502, 0
      %v606 = vsel %vm601, %v503, 0
      %608 = vmatprep.subr.bf16.mxu0 %v606
      %609 = vmatpush1.bf16.msra.mxu0 %v603
      %610 = vmatprep.subr.bf16.mxu0 0
      %611 = vmatpush1.bf16.msra.mxu0 0
      %612 = vmatprep.subr.bf16.mxu0 0
      %613 = vmatpush1.bf16.msra.mxu0 0
      %614 = vmatprep.subr.bf16.mxu0 0
      %615 = vmatpush1.bf16.msra.mxu0 0
      %616 = vmatprep.subr.bf16.mxu0 0
      %617 = vmatpush1.bf16.msra.mxu0 0
      %618 = vmatprep.subr.bf16.mxu0 0
      %619 = vmatpush1.bf16.msra.mxu0 0
      %620 = vmatprep.subr.bf16.mxu0 0
      %621 = vmatpush1.bf16.msra.mxu0 0
      %622 = vmatprep.subr.bf16.mxu0 0
      %623 = vmatpush1.bf16.msra.mxu0 0
      %624 = vmatprep.subr.bf16.mxu0 0
      %625 = vmatpush1.bf16.msra.mxu0 0
      %626 = vmatprep.subr.bf16.mxu0 0
      %627 = vmatpush1.bf16.msra.mxu0 0
      %628 = vmatprep.subr.bf16.mxu0 0
      %629 = vmatpush1.bf16.msra.mxu0 0
      %630 = vmatprep.subr.bf16.mxu0 0
      %631 = vmatpush1.bf16.msra.mxu0 0
      %632 = vmatprep.subr.bf16.mxu0 0
      %633 = vmatpush1.bf16.msra.mxu0 0
      %634 = vmatprep.subr.bf16.mxu0 0
      %635 = vmatpush1.bf16.msra.mxu0 0
      %636 = vmatprep.subr.bf16.mxu0 0
      %637 = vmatpush1.bf16.msra.mxu0 0
      %638 = vmatprep.subr.bf16.mxu0 0
      %639 = vmatpush1.bf16.msra.mxu0 0
      %640 = vmatprep.mubr.bf16.mxu0 0
      %641 = vmatmul.mubr.bf16.gmra.mrb[0].mxu0 %v506
      %v642 = vpop.f32.mrb[0].mxu0
      %v643 = vadd.f32 %v488, %v642
      %v644 = vpop.f32.mrb[0].mxu0
      %v645 = vadd.f32 %v492, %v644
      %v646 = vpop.f32.mrb[0].mxu0
      %v647 = vadd.f32 %v488, %v646
      %v648 = vpop.f32.mrb[0].mxu0
      %v649 = vadd.f32 %v492, %v648
      %650 = vmatprep.mubr.bf16.mxu0 0
      %651 = vmatmul.mubr.bf16.gmra.mrb[0].mxu0 %v509
      %v652 = vpop.f32.mrb[0].mxu0
      %v653 = vadd.f32 %v488, %v652
      %v654 = vpop.f32.mrb[0].mxu0
      %v655 = vadd.f32 %v492, %v654
      %v656 = vpop.f32.mrb[0].mxu0
      %v657 = vadd.f32 %v488, %v656
      %v658 = vpop.f32.mrb[0].mxu0
      %v659 = vadd.f32 %v492, %v658
      %660 = vmatprep.mubr.bf16.mxu0 0
      %661 = vmatmul.mubr.bf16.gmra.mrb[0].mxu0 %v512
      %v662 = vpop.f32.mrb[0].mxu0
      %v663 = vadd.f32 %v488, %v662
      %v664 = vpop.f32.mrb[0].mxu0
      %v665 = vadd.f32 %v492, %v664
      %v666 = vpop.f32.mrb[0].mxu0
      %v667 = vadd.f32 %v488, %v666
      %v668 = vpop.f32.mrb[0].mxu0
      %v669 = vadd.f32 %v492, %v668
      %670 = vmatprep.mubr.bf16.mxu0 0
      %671 = vmatmul.mubr.bf16.gmra.mrb[0].mxu0 %v515
      %v672 = vpop.f32.mrb[0].mxu0
      %v673 = vadd.f32 %v488, %v672
      %v674 = vpop.f32.mrb[0].mxu0
      %v675 = vadd.f32 %v492, %v674
      %v676 = vpop.f32.mrb[0].mxu0
      %v677 = vadd.f32 %v488, %v676
      %v678 = vpop.f32.mrb[0].mxu0
      %v679 = vadd.f32 %v492, %v678
      %680 = vmatprep.mubr.bf16.mxu0 0
      %681 = vmatmul.mubr.bf16.gmra.mrb[0].mxu0 %v518
      %v682 = vpop.f32.mrb[0].mxu0
      %v683 = vadd.f32 %v488, %v682
      %v684 = vpop.f32.mrb[0].mxu0
      %v685 = vadd.f32 %v492, %v684
      %v686 = vpop.f32.mrb[0].mxu0
      %v687 = vadd.f32 %v488, %v686
      %v688 = vpop.f32.mrb[0].mxu0
      %v689 = vadd.f32 %v492, %v688
      %690 = vmatprep.mubr.bf16.mxu0 0
      %691 = vmatmul.mubr.bf16.gmra.mrb[0].mxu0 %v521
      %v692 = vpop.f32.mrb[0].mxu0
      %v693 = vadd.f32 %v488, %v692
      %v694 = vpop.f32.mrb[0].mxu0
      %v695 = vadd.f32 %v492, %v694
      %v696 = vpop.f32.mrb[0].mxu0
      %v697 = vadd.f32 %v488, %v696
      %v698 = vpop.f32.mrb[0].mxu0
      %v699 = vadd.f32 %v492, %v698
      %700 = vmatprep.mubr.bf16.mxu0 0
      %701 = vmatmul.mubr.bf16.gmra.mrb[0].mxu0 %v524
      %v702 = vpop.f32.mrb[0].mxu0
      %v703 = vadd.f32 %v488, %v702
      %v704 = vpop.f32.mrb[0].mxu0
      %v705 = vadd.f32 %v492, %v704
      %v706 = vpop.f32.mrb[0].mxu0
      %v707 = vadd.f32 %v488, %v706
      %v708 = vpop.f32.mrb[0].mxu0
      %v709 = vadd.f32 %v492, %v708
      %710 = vmatprep.mubr.bf16.mxu0 0
      %711 = vmatmul.mubr.bf16.gmra.mrb[0].mxu0 %v527
      %v712 = vpop.f32.mrb[0].mxu0
      %v713 = vadd.f32 %v488, %v712
      %v714 = vpop.f32.mrb[0].mxu0
      %v715 = vadd.f32 %v492, %v714
      %v716 = vpop.f32.mrb[0].mxu0
      %v717 = vadd.f32 %v488, %v716
      %v718 = vpop.f32.mrb[0].mxu0
      %v719 = vadd.f32 %v492, %v718
      %720 = vmatprep.mubr.bf16.mxu0 0
      %721 = vmatmul.mubr.bf16.gmra.mrb[0].mxu0 %v530
      %v722 = vpop.f32.mrb[0].mxu0
      %v723 = vadd.f32 %v488, %v722
      %v724 = vpop.f32.mrb[0].mxu0
      %v725 = vadd.f32 %v492, %v724
      %v726 = vpop.f32.mrb[0].mxu0
      %v727 = vadd.f32 %v488, %v726
      %v728 = vpop.f32.mrb[0].mxu0
      %v729 = vadd.f32 %v492, %v728
      %730 = vmatprep.mubr.bf16.mxu0 0
      %731 = vmatmul.mubr.bf16.gmra.mrb[0].mxu0 %v533
      %v732 = vpop.f32.mrb[0].mxu0
      %v733 = vadd.f32 %v488, %v732
      %v734 = vpop.f32.mrb[0].mxu0
      %v735 = vadd.f32 %v492, %v734
      %v736 = vpop.f32.mrb[0].mxu0
      %v737 = vadd.f32 %v488, %v736
      %v738 = vpop.f32.mrb[0].mxu0
      %v739 = vadd.f32 %v492, %v738
      %740 = vmatprep.mubr.bf16.mxu0 0
      %741 = vmatmul.mubr.bf16.gmra.mrb[0].mxu0 %v536
      %v742 = vpop.f32.mrb[0].mxu0
      %v743 = vadd.f32 %v488, %v742
      %v744 = vpop.f32.mrb[0].mxu0
      %v745 = vadd.f32 %v492, %v744
      %v746 = vpop.f32.mrb[0].mxu0
      %v747 = vadd.f32 %v488, %v746
      %v748 = vpop.f32.mrb[0].mxu0
      %v749 = vadd.f32 %v492, %v748
      %750 = vmatprep.mubr.bf16.mxu0 0
      %751 = vmatmul.mubr.bf16.gmra.mrb[0].mxu0 %v539
      %v752 = vpop.f32.mrb[0].mxu0
      %v753 = vadd.f32 %v488, %v752
      %v754 = vpop.f32.mrb[0].mxu0
      %v755 = vadd.f32 %v492, %v754
      %v756 = vpop.f32.mrb[0].mxu0
      %v757 = vadd.f32 %v488, %v756
      %v758 = vpop.f32.mrb[0].mxu0
      %v759 = vadd.f32 %v492, %v758
      %760 = vmatprep.mubr.bf16.mxu0 0
      %761 = vmatmul.mubr.bf16.gmra.mrb[0].mxu0 %v542
      %v762 = vpop.f32.mrb[0].mxu0
      %v763 = vadd.f32 %v488, %v762
      %v764 = vpop.f32.mrb[0].mxu0
      %v765 = vadd.f32 %v492, %v764
      %v766 = vpop.f32.mrb[0].mxu0
      %v767 = vadd.f32 %v488, %v766
      %v768 = vpop.f32.mrb[0].mxu0
      %v769 = vadd.f32 %v492, %v768
      %770 = vmatprep.mubr.bf16.mxu0 0
      %771 = vmatmul.mubr.bf16.gmra.mrb[0].mxu0 %v545
      %v772 = vpop.f32.mrb[0].mxu0
      %v773 = vadd.f32 %v488, %v772
      %v774 = vpop.f32.mrb[0].mxu0
      %v775 = vadd.f32 %v492, %v774
      %v776 = vpop.f32.mrb[0].mxu0
      %v777 = vadd.f32 %v488, %v776
      %v778 = vpop.f32.mrb[0].mxu0
      %v779 = vadd.f32 %v492, %v778
      %780 = vmatprep.mubr.bf16.mxu0 0
      %781 = vmatmul.mubr.bf16.gmra.mrb[0].mxu0 %v548
      %v782 = vpop.f32.mrb[0].mxu0
      %v783 = vadd.f32 %v488, %v782
      %v784 = vpop.f32.mrb[0].mxu0
      %v785 = vadd.f32 %v492, %v784
      %v786 = vpop.f32.mrb[0].mxu0
      %v787 = vadd.f32 %v488, %v786
      %v788 = vpop.f32.mrb[0].mxu0
      %v789 = vadd.f32 %v492, %v788
      %790 = vmatprep.mubr.bf16.mxu0 0
      %791 = vmatmul.mubr.bf16.gmra.mrb[0].mxu0 %v551
      %v792 = vpop.f32.mrb[0].mxu0
      %v793 = vadd.f32 %v488, %v792
      %v794 = vpop.f32.mrb[0].mxu0
      %v795 = vadd.f32 %v492, %v794
      %v796 = vpop.f32.mrb[0].mxu0
      %v797 = vadd.f32 %v488, %v796
      %v798 = vpop.f32.mrb[0].mxu0
      %v799 = vadd.f32 %v492, %v798
      %800 = vmatprep.mubr.bf16.mxu0 0
      %801 = vmatmul.mubr.bf16.gmra.mrb[0].mxu0 %v554
      %v802 = vpop.f32.mrb[0].mxu0
      %v803 = vadd.f32 %v488, %v802
      %v804 = vpop.f32.mrb[0].mxu0
      %v805 = vadd.f32 %v492, %v804
      %v806 = vpop.f32.mrb[0].mxu0
      %v807 = vadd.f32 %v488, %v806
      %v808 = vpop.f32.mrb[0].mxu0
      %v809 = vadd.f32 %v492, %v808
      %810 = vmatprep.mubr.bf16.mxu0 0
      %811 = vmatmul.mubr.bf16.gmra.mrb[0].mxu0 %v557
      %v812 = vpop.f32.mrb[0].mxu0
      %v813 = vadd.f32 %v488, %v812
      %v814 = vpop.f32.mrb[0].mxu0
      %v815 = vadd.f32 %v492, %v814
      %v816 = vpop.f32.mrb[0].mxu0
      %v817 = vadd.f32 %v488, %v816
      %v818 = vpop.f32.mrb[0].mxu0
      %v819 = vadd.f32 %v492, %v818
      %820 = vmatprep.mubr.bf16.mxu0 0
      %821 = vmatmul.mubr.bf16.gmra.mrb[0].mxu0 %v560
      %v822 = vpop.f32.mrb[0].mxu0
      %v823 = vadd.f32 %v488, %v822
      %v824 = vpop.f32.mrb[0].mxu0
      %v825 = vadd.f32 %v492, %v824
      %v826 = vpop.f32.mrb[0].mxu0
      %v827 = vadd.f32 %v488, %v826
      %v828 = vpop.f32.mrb[0].mxu0
      %v829 = vadd.f32 %v492, %v828
      %830 = vmatprep.mubr.bf16.mxu0 0
      %831 = vmatmul.mubr.bf16.gmra.mrb[0].mxu0 %v563
      %v832 = vpop.f32.mrb[0].mxu0
      %v833 = vadd.f32 %v488, %v832
      %v834 = vpop.f32.mrb[0].mxu0
      %v835 = vadd.f32 %v492, %v834
      %v836 = vpop.f32.mrb[0].mxu0
      %v837 = vadd.f32 %v488, %v836
      %v838 = vpop.f32.mrb[0].mxu0
      %v839 = vadd.f32 %v492, %v838
      %840 = vmatprep.mubr.bf16.mxu0 0
      %841 = vmatmul.mubr.bf16.gmra.mrb[0].mxu0 %v566
      %v842 = vpop.f32.mrb[0].mxu0
      %v843 = vadd.f32 %v488, %v842
      %v844 = vpop.f32.mrb[0].mxu0
      %v845 = vadd.f32 %v492, %v844
      %v846 = vpop.f32.mrb[0].mxu0
      %v847 = vadd.f32 %v488, %v846
      %v848 = vpop.f32.mrb[0].mxu0
      %v849 = vadd.f32 %v492, %v848
      %850 = vmatprep.mubr.bf16.mxu0 0
      %851 = vmatmul.mubr.bf16.gmra.mrb[0].mxu0 %v569
      %v852 = vpop.f32.mrb[0].mxu0
      %v853 = vadd.f32 %v488, %v852
      %v854 = vpop.f32.mrb[0].mxu0
      %v855 = vadd.f32 %v492, %v854
      %v856 = vpop.f32.mrb[0].mxu0
      %v857 = vadd.f32 %v488, %v856
      %v858 = vpop.f32.mrb[0].mxu0
      %v859 = vadd.f32 %v492, %v858
      %860 = vmatprep.mubr.bf16.mxu0 0
      %861 = vmatmul.mubr.bf16.gmra.mrb[0].mxu0 %v572
      %v862 = vpop.f32.mrb[0].mxu0
      %v863 = vadd.f32 %v488, %v862
      %v864 = vpop.f32.mrb[0].mxu0
      %v865 = vadd.f32 %v492, %v864
      %v866 = vpop.f32.mrb[0].mxu0
      %v867 = vadd.f32 %v488, %v866
      %v868 = vpop.f32.mrb[0].mxu0
      %v869 = vadd.f32 %v492, %v868
      %870 = vmatprep.mubr.bf16.mxu0 0
      %871 = vmatmul.mubr.bf16.gmra.mrb[0].mxu0 %v575
      %v872 = vpop.f32.mrb[0].mxu0
      %v873 = vadd.f32 %v488, %v872
      %v874 = vpop.f32.mrb[0].mxu0
      %v875 = vadd.f32 %v492, %v874
      %v876 = vpop.f32.mrb[0].mxu0
      %v877 = vadd.f32 %v488, %v876
      %v878 = vpop.f32.mrb[0].mxu0
      %v879 = vadd.f32 %v492, %v878
      %880 = vmatprep.mubr.bf16.mxu0 0
      %881 = vmatmul.mubr.bf16.gmra.mrb[0].mxu0 %v578
      %v882 = vpop.f32.mrb[0].mxu0
      %v883 = vadd.f32 %v488, %v882
      %v884 = vpop.f32.mrb[0].mxu0
      %v885 = vadd.f32 %v492, %v884
      %v886 = vpop.f32.mrb[0].mxu0
      %v887 = vadd.f32 %v488, %v886
      %v888 = vpop.f32.mrb[0].mxu0
      %v889 = vadd.f32 %v492, %v888
      %890 = vmatprep.mubr.bf16.mxu0 0
      %891 = vmatmul.mubr.bf16.gmra.mrb[0].mxu0 %v581
      %v892 = vpop.f32.mrb[0].mxu0
      %v893 = vadd.f32 %v488, %v892
      %v894 = vpop.f32.mrb[0].mxu0
      %v895 = vadd.f32 %v492, %v894
      %v896 = vpop.f32.mrb[0].mxu0
      %v897 = vadd.f32 %v488, %v896
      %v898 = vpop.f32.mrb[0].mxu0
      %v899 = vadd.f32 %v492, %v898
      %900 = vmatprep.mubr.bf16.mxu0 0
      %901 = vmatmul.mubr.bf16.gmra.mrb[0].mxu0 %v584
      %v902 = vpop.f32.mrb[0].mxu0
      %v903 = vadd.f32 %v488, %v902
      %v904 = vpop.f32.mrb[0].mxu0
      %v905 = vadd.f32 %v492, %v904
      %v906 = vpop.f32.mrb[0].mxu0
      %v907 = vadd.f32 %v488, %v906
      %v908 = vpop.f32.mrb[0].mxu0
      %v909 = vadd.f32 %v492, %v908
      %910 = vmatprep.mubr.bf16.mxu0 0
      %911 = vmatmul.mubr.bf16.gmra.mrb[0].mxu0 %v587
      %v912 = vpop.f32.mrb[0].mxu0
      %v913 = vadd.f32 %v488, %v912
      %v914 = vpop.f32.mrb[0].mxu0
      %v915 = vadd.f32 %v492, %v914
      %v916 = vpop.f32.mrb[0].mxu0
      %v917 = vadd.f32 %v488, %v916
      %v918 = vpop.f32.mrb[0].mxu0
      %v919 = vadd.f32 %v492, %v918
      %920 = vmatprep.mubr.bf16.mxu0 0
      %921 = vmatmul.mubr.bf16.gmra.mrb[0].mxu0 %v590
      %v922 = vpop.f32.mrb[0].mxu0
      %v923 = vadd.f32 %v488, %v922
      %v924 = vpop.f32.mrb[0].mxu0
      %v925 = vadd.f32 %v492, %v924
      %v926 = vpop.f32.mrb[0].mxu0
      %v927 = vadd.f32 %v488, %v926
      %v928 = vpop.f32.mrb[0].mxu0
      %v929 = vadd.f32 %v492, %v928
      %930 = vmatprep.mubr.bf16.mxu0 0
      %931 = vmatmul.mubr.bf16.gmra.mrb[0].mxu0 %v593
      %v932 = vpop.f32.mrb[0].mxu0
      %v933 = vadd.f32 %v488, %v932
      %v934 = vpop.f32.mrb[0].mxu0
      %v935 = vadd.f32 %v492, %v934
      %v936 = vpop.f32.mrb[0].mxu0
      %v937 = vadd.f32 %v488, %v936
      %v938 = vpop.f32.mrb[0].mxu0
      %v939 = vadd.f32 %v492, %v938
      %940 = vmatprep.mubr.bf16.mxu0 0
      %941 = vmatmul.mubr.bf16.gmra.mrb[0].mxu0 %v596
      %v942 = vpop.f32.mrb[0].mxu0
      %v943 = vadd.f32 %v488, %v942
      %v944 = vpop.f32.mrb[0].mxu0
      %v945 = vadd.f32 %v492, %v944
      %v946 = vpop.f32.mrb[0].mxu0
      %v947 = vadd.f32 %v488, %v946
      %v948 = vpop.f32.mrb[0].mxu0
      %v949 = vadd.f32 %v492, %v948
      %950 = vmatprep.mubr.bf16.mxu0 0
      %951 = vmatmul.mubr.bf16.gmra.mrb[0].mxu0 %v599
      %v952 = vpop.f32.mrb[0].mxu0
      %v953 = vadd.f32 %v488, %v952
      %v954 = vpop.f32.mrb[0].mxu0
      %v955 = vadd.f32 %v492, %v954
      %v956 = vpop.f32.mrb[0].mxu0
      %v957 = vadd.f32 %v488, %v956
      %v958 = vpop.f32.mrb[0].mxu0
      %v959 = vadd.f32 %v492, %v958
      %960 = vdwg.mxu0
      %v961 = vmax.f32 %v643, 0.0
      %v962 = vmax.f32 %v645, 0.0
      %v963 = vmax.f32 %v647, 0.0
      %v964 = vmax.f32 %v649, 0.0
      %v965 = vmax.f32 %v653, 0.0
      %v966 = vmax.f32 %v655, 0.0
      %v967 = vmax.f32 %v657, 0.0
      %v968 = vmax.f32 %v659, 0.0
      %v969 = vmax.f32 %v663, 0.0
      %v970 = vmax.f32 %v665, 0.0
      %v971 = vmax.f32 %v667, 0.0
      %v972 = vmax.f32 %v669, 0.0
      %v973 = vmax.f32 %v673, 0.0
      %v974 = vmax.f32 %v675, 0.0
      %v975 = vmax.f32 %v677, 0.0
      %v976 = vmax.f32 %v679, 0.0
      %v977 = vmax.f32 %v683, 0.0
      %v978 = vmax.f32 %v685, 0.0
      %v979 = vmax.f32 %v687, 0.0
      %v980 = vmax.f32 %v689, 0.0
      %v981 = vmax.f32 %v693, 0.0
      %v982 = vmax.f32 %v695, 0.0
      %v983 = vmax.f32 %v697, 0.0
      %v984 = vmax.f32 %v699, 0.0
      %v985 = vmax.f32 %v703, 0.0
      %v986 = vmax.f32 %v705, 0.0
      %v987 = vmax.f32 %v707, 0.0
      %v988 = vmax.f32 %v709, 0.0
      %v989 = vmax.f32 %v713, 0.0
      %v990 = vmax.f32 %v715, 0.0
      %v991 = vmax.f32 %v717, 0.0
      %v992 = vmax.f32 %v719, 0.0
      %v993 = vmax.f32 %v723, 0.0
      %v994 = vmax.f32 %v725, 0.0
      %v995 = vmax.f32 %v727, 0.0
      %v996 = vmax.f32 %v729, 0.0
      %v997 = vmax.f32 %v733, 0.0
      %v998 = vmax.f32 %v735, 0.0
      %v999 = vmax.f32 %v737, 0.0
      %v1000 = vmax.f32 %v739, 0.0
      %v1001 = vmax.f32 %v743, 0.0
      %v1002 = vmax.f32 %v745, 0.0
      %v1003 = vmax.f32 %v747, 0.0
      %v1004 = vmax.f32 %v749, 0.0
      %v1005 = vmax.f32 %v753, 0.0
      %v1006 = vmax.f32 %v755, 0.0
      %v1007 = vmax.f32 %v757, 0.0
      %v1008 = vmax.f32 %v759, 0.0
      %v1009 = vmax.f32 %v763, 0.0
      %v1010 = vmax.f32 %v765, 0.0
      %v1011 = vmax.f32 %v767, 0.0
      %v1012 = vmax.f32 %v769, 0.0
      %v1013 = vmax.f32 %v773, 0.0
      %v1014 = vmax.f32 %v775, 0.0
      %v1015 = vmax.f32 %v777, 0.0
      %v1016 = vmax.f32 %v779, 0.0
      %v1017 = vmax.f32 %v783, 0.0
      %v1018 = vmax.f32 %v785, 0.0
      %v1019 = vmax.f32 %v787, 0.0
      %v1020 = vmax.f32 %v789, 0.0
      %v1021 = vmax.f32 %v793, 0.0
      %v1022 = vmax.f32 %v795, 0.0
      %v1023 = vmax.f32 %v797, 0.0
      %v1024 = vmax.f32 %v799, 0.0
      %v1025 = vmax.f32 %v803, 0.0
      %v1026 = vmax.f32 %v805, 0.0
      %v1027 = vmax.f32 %v807, 0.0
      %v1028 = vmax.f32 %v809, 0.0
      %v1029 = vmax.f32 %v813, 0.0
      %v1030 = vmax.f32 %v815, 0.0
      %v1031 = vmax.f32 %v817, 0.0
      %v1032 = vmax.f32 %v819, 0.0
      %v1033 = vmax.f32 %v823, 0.0
      %v1034 = vmax.f32 %v825, 0.0
      %v1035 = vmax.f32 %v827, 0.0
      %v1036 = vmax.f32 %v829, 0.0
      %v1037 = vmax.f32 %v833, 0.0
      %v1038 = vmax.f32 %v835, 0.0
      %v1039 = vmax.f32 %v837, 0.0
      %v1040 = vmax.f32 %v839, 0.0
      %v1041 = vmax.f32 %v843, 0.0
      %v1042 = vmax.f32 %v845, 0.0
      %v1043 = vmax.f32 %v847, 0.0
      %v1044 = vmax.f32 %v849, 0.0
      %v1045 = vmax.f32 %v853, 0.0
      %v1046 = vmax.f32 %v855, 0.0
      %v1047 = vmax.f32 %v857, 0.0
      %v1048 = vmax.f32 %v859, 0.0
      %v1049 = vmax.f32 %v863, 0.0
      %v1050 = vmax.f32 %v865, 0.0
      %v1051 = vmax.f32 %v867, 0.0
      %v1052 = vmax.f32 %v869, 0.0
      %v1053 = vmax.f32 %v873, 0.0
      %v1054 = vmax.f32 %v875, 0.0
      %v1055 = vmax.f32 %v877, 0.0
      %v1056 = vmax.f32 %v879, 0.0
      %v1057 = vmax.f32 %v883, 0.0
      %v1058 = vmax.f32 %v885, 0.0
      %v1059 = vmax.f32 %v887, 0.0
      %v1060 = vmax.f32 %v889, 0.0
      %v1061 = vmax.f32 %v893, 0.0
      %v1062 = vmax.f32 %v895, 0.0
      %v1063 = vmax.f32 %v897, 0.0
      %v1064 = vmax.f32 %v899, 0.0
      %v1065 = vmax.f32 %v903, 0.0
      %v1066 = vmax.f32 %v905, 0.0
      %v1067 = vmax.f32 %v907, 0.0
      %v1068 = vmax.f32 %v909, 0.0
      %v1069 = vmax.f32 %v913, 0.0
      %v1070 = vmax.f32 %v915, 0.0
      %v1071 = vmax.f32 %v917, 0.0
      %v1072 = vmax.f32 %v919, 0.0
      %v1073 = vmax.f32 %v923, 0.0
      %v1074 = vmax.f32 %v925, 0.0
      %v1075 = vmax.f32 %v927, 0.0
      %v1076 = vmax.f32 %v929, 0.0
      %v1077 = vmax.f32 %v933, 0.0
      %v1078 = vmax.f32 %v935, 0.0
      %v1079 = vmax.f32 %v937, 0.0
      %v1080 = vmax.f32 %v939, 0.0
      %v1081 = vmax.f32 %v943, 0.0
      %v1082 = vmax.f32 %v945, 0.0
      %v1083 = vmax.f32 %v947, 0.0
      %v1084 = vmax.f32 %v949, 0.0
      %v1085 = vmax.f32 %v953, 0.0
      %v1086 = vmax.f32 %v955, 0.0
      %v1087 = vmax.f32 %v957, 0.0
      %v1088 = vmax.f32 %v959, 0.0
      %v1089 = vpack.c.bf16 %v963, %v961
      %v1090 = vpack.c.bf16 %v964, %v962
      %v1091 = vpack.c.bf16 %v967, %v965
      %v1092 = vpack.c.bf16 %v968, %v966
      %v1093 = vpack.c.bf16 %v971, %v969
      %v1094 = vpack.c.bf16 %v972, %v970
      %v1095 = vpack.c.bf16 %v975, %v973
      %v1096 = vpack.c.bf16 %v976, %v974
      %v1097 = vpack.c.bf16 %v979, %v977
      %v1098 = vpack.c.bf16 %v980, %v978
      %v1099 = vpack.c.bf16 %v983, %v981
      %v1100 = vpack.c.bf16 %v984, %v982
      %v1101 = vpack.c.bf16 %v987, %v985
      %v1102 = vpack.c.bf16 %v988, %v986
      %v1103 = vpack.c.bf16 %v991, %v989
      %v1104 = vpack.c.bf16 %v992, %v990
      %v1105 = vpack.c.bf16 %v995, %v993
      %v1106 = vpack.c.bf16 %v996, %v994
      %v1107 = vpack.c.bf16 %v999, %v997
      %v1108 = vpack.c.bf16 %v1000, %v998
      %v1109 = vpack.c.bf16 %v1003, %v1001
      %v1110 = vpack.c.bf16 %v1004, %v1002
      %v1111 = vpack.c.bf16 %v1007, %v1005
      %v1112 = vpack.c.bf16 %v1008, %v1006
      %v1113 = vpack.c.bf16 %v1011, %v1009
      %v1114 = vpack.c.bf16 %v1012, %v1010
      %v1115 = vpack.c.bf16 %v1015, %v1013
      %v1116 = vpack.c.bf16 %v1016, %v1014
      %v1117 = vpack.c.bf16 %v1019, %v1017
      %v1118 = vpack.c.bf16 %v1020, %v1018
      %v1119 = vpack.c.bf16 %v1023, %v1021
      %v1120 = vpack.c.bf16 %v1024, %v1022
      %v1121 = vpack.c.bf16 %v1027, %v1025
      %v1122 = vpack.c.bf16 %v1028, %v1026
      %v1123 = vpack.c.bf16 %v1031, %v1029
      %v1124 = vpack.c.bf16 %v1032, %v1030
      %v1125 = vpack.c.bf16 %v1035, %v1033
      %v1126 = vpack.c.bf16 %v1036, %v1034
      %v1127 = vpack.c.bf16 %v1039, %v1037
      %v1128 = vpack.c.bf16 %v1040, %v1038
      %v1129 = vpack.c.bf16 %v1043, %v1041
      %v1130 = vpack.c.bf16 %v1044, %v1042
      %v1131 = vpack.c.bf16 %v1047, %v1045
      %v1132 = vpack.c.bf16 %v1048, %v1046
      %v1133 = vpack.c.bf16 %v1051, %v1049
      %v1134 = vpack.c.bf16 %v1052, %v1050
      %v1135 = vpack.c.bf16 %v1055, %v1053
      %v1136 = vpack.c.bf16 %v1056, %v1054
      %v1137 = vpack.c.bf16 %v1059, %v1057
      %v1138 = vpack.c.bf16 %v1060, %v1058
      %v1139 = vpack.c.bf16 %v1063, %v1061
      %v1140 = vpack.c.bf16 %v1064, %v1062
      %v1141 = vpack.c.bf16 %v1067, %v1065
      %v1142 = vpack.c.bf16 %v1068, %v1066
      %v1143 = vpack.c.bf16 %v1071, %v1069
      %v1144 = vpack.c.bf16 %v1072, %v1070
      %v1145 = vpack.c.bf16 %v1075, %v1073
      %v1146 = vpack.c.bf16 %v1076, %v1074
      %v1147 = vpack.c.bf16 %v1079, %v1077
      %v1148 = vpack.c.bf16 %v1080, %v1078
      %v1149 = vpack.c.bf16 %v1083, %v1081
      %v1150 = vpack.c.bf16 %v1084, %v1082
      %v1151 = vpack.c.bf16 %v1087, %v1085
      %v1152 = vpack.c.bf16 %v1088, %v1086
      %v1153 = vld [vmem:[%s4] sm:$0xff]
      %v1154 = vld [vmem:[%s4 + $0x8] sm:$0xff]
      %v1155 = vld [vmem:[%s4 + $0x10] sm:$0xff]
      %v1156 = vld [vmem:[%s4 + $0x18] sm:$0xff]
      %v1157 = vld [vmem:[%s4 + $0x20] sm:$0xff]
      %v1158 = vld [vmem:[%s4 + $0x28] sm:$0xff]
      %v1159 = vld [vmem:[%s4 + $0x30] sm:$0xff]
      %v1160 = vld [vmem:[%s4 + $0x38] sm:$0xff]
      %v1161 = vld [vmem:[%s4 + $0x40] sm:$0xff]
      %v1162 = vld [vmem:[%s4 + $0x48] sm:$0xff]
      %v1163 = vld [vmem:[%s4 + $0x50] sm:$0xff]
      %v1164 = vld [vmem:[%s4 + $0x58] sm:$0xff]
      %v1165 = vld [vmem:[%s4 + $0x60] sm:$0xff]
      %v1166 = vld [vmem:[%s4 + $0x68] sm:$0xff]
      %v1167 = vld [vmem:[%s4 + $0x70] sm:$0xff]
      %v1168 = vld [vmem:[%s4 + $0x78] sm:$0xff]
      %v1169 = vld [vmem:[%s4 + $0x80] sm:$0xff]
      %v1170 = vld [vmem:[%s4 + $0x88] sm:$0xff]
      %v1171 = vld [vmem:[%s4 + $0x90] sm:$0xff]
      %v1172 = vld [vmem:[%s4 + $0x98] sm:$0xff]
      %v1173 = vld [vmem:[%s4 + $0xa0] sm:$0xff]
      %v1174 = vld [vmem:[%s4 + $0xa8] sm:$0xff]
      %v1175 = vld [vmem:[%s4 + $0xb0] sm:$0xff]
      %v1176 = vld [vmem:[%s4 + $0xb8] sm:$0xff]
      %v1177 = vld [vmem:[%s4 + $0xc0] sm:$0xff]
      %v1178 = vld [vmem:[%s4 + $0xc8] sm:$0xff]
      %v1179 = vld [vmem:[%s4 + $0xd0] sm:$0xff]
      %v1180 = vld [vmem:[%s4 + $0xd8] sm:$0xff]
      %v1181 = vld [vmem:[%s4 + $0xe0] sm:$0xff]
      %v1182 = vld [vmem:[%s4 + $0xe8] sm:$0xff]
      %v1183 = vld [vmem:[%s4 + $0xf0] sm:$0xff]
      %v1184 = vld [vmem:[%s4 + $0xf8] sm:$0xff]
      %v1185 = vld [vmem:[%s5] sm:$0x3]
      %v1187 = vlaneseq
      %v1188 = vshrl.u32 %v1187, 7
      %v1189 = vsub.s32 0, %v1188
      %v1190 = vrot.slane %v1185, %v1189
      %v1191 = vlaneseq
      %v1192 = vshrl.u32 %v1191, 7
      %v1193 = vsub.s32 1, %v1192
      %v1194 = vrot.slane %v1185, %v1193
      %v1229 = vunpack.c.l.b16 %v1153
      %v1230 = vunpack.c.h.b16 %v1153
      %v1231 = vunpack.c.l.b16 %v1154
      %v1232 = vunpack.c.h.b16 %v1154
      %v1233 = vunpack.c.l.b16 %v1155
      %v1234 = vunpack.c.h.b16 %v1155
      %v1235 = vunpack.c.l.b16 %v1156
      %v1236 = vunpack.c.h.b16 %v1156
      %v1237 = vunpack.c.l.b16 %v1157
      %v1238 = vunpack.c.h.b16 %v1157
      %v1239 = vunpack.c.l.b16 %v1158
      %v1240 = vunpack.c.h.b16 %v1158
      %v1241 = vunpack.c.l.b16 %v1159
      %v1242 = vunpack.c.h.b16 %v1159
      %v1243 = vunpack.c.l.b16 %v1160
      %v1244 = vunpack.c.h.b16 %v1160
      %v1245 = vunpack.c.l.b16 %v1161
      %v1246 = vunpack.c.h.b16 %v1161
      %v1247 = vunpack.c.l.b16 %v1162
      %v1248 = vunpack.c.h.b16 %v1162
      %v1249 = vunpack.c.l.b16 %v1163
      %v1250 = vunpack.c.h.b16 %v1163
      %v1251 = vunpack.c.l.b16 %v1164
      %v1252 = vunpack.c.h.b16 %v1164
      %v1253 = vunpack.c.l.b16 %v1165
      %v1254 = vunpack.c.h.b16 %v1165
      %v1255 = vunpack.c.l.b16 %v1166
      %v1256 = vunpack.c.h.b16 %v1166
      %v1257 = vunpack.c.l.b16 %v1167
      %v1258 = vunpack.c.h.b16 %v1167
      %v1259 = vunpack.c.l.b16 %v1168
      %v1260 = vunpack.c.h.b16 %v1168
      %v1261 = vunpack.c.l.b16 %v1169
      %v1262 = vunpack.c.h.b16 %v1169
      %v1263 = vunpack.c.l.b16 %v1170
      %v1264 = vunpack.c.h.b16 %v1170
      %v1265 = vunpack.c.l.b16 %v1171
      %v1266 = vunpack.c.h.b16 %v1171
      %v1267 = vunpack.c.l.b16 %v1172
      %v1268 = vunpack.c.h.b16 %v1172
      %v1269 = vunpack.c.l.b16 %v1173
      %v1270 = vunpack.c.h.b16 %v1173
      %v1271 = vunpack.c.l.b16 %v1174
      %v1272 = vunpack.c.h.b16 %v1174
      %v1273 = vunpack.c.l.b16 %v1175
      %v1274 = vunpack.c.h.b16 %v1175
      %v1275 = vunpack.c.l.b16 %v1176
      %v1276 = vunpack.c.h.b16 %v1176
      %v1277 = vunpack.c.l.b16 %v1177
      %v1278 = vunpack.c.h.b16 %v1177
      %v1279 = vunpack.c.l.b16 %v1178
      %v1280 = vunpack.c.h.b16 %v1178
      %v1281 = vunpack.c.l.b16 %v1179
      %v1282 = vunpack.c.h.b16 %v1179
      %v1283 = vunpack.c.l.b16 %v1180
      %v1284 = vunpack.c.h.b16 %v1180
      %v1285 = vunpack.c.l.b16 %v1181
      %v1286 = vunpack.c.h.b16 %v1181
      %v1287 = vunpack.c.l.b16 %v1182
      %v1288 = vunpack.c.h.b16 %v1182
      %v1289 = vunpack.c.l.b16 %v1183
      %v1290 = vunpack.c.h.b16 %v1183
      %v1291 = vunpack.c.l.b16 %v1184
      %v1292 = vunpack.c.h.b16 %v1184
      %v1293 = vpack.c.b16 %v1231, %v1229
      %v1294 = vpack.c.b16 %v1232, %v1230
      %v1295 = vpack.c.b16 %v1235, %v1233
      %v1296 = vpack.c.b16 %v1236, %v1234
      %v1297 = vpack.c.b16 %v1239, %v1237
      %v1298 = vpack.c.b16 %v1240, %v1238
      %v1299 = vpack.c.b16 %v1243, %v1241
      %v1300 = vpack.c.b16 %v1244, %v1242
      %v1301 = vpack.c.b16 %v1247, %v1245
      %v1302 = vpack.c.b16 %v1248, %v1246
      %v1303 = vpack.c.b16 %v1251, %v1249
      %v1304 = vpack.c.b16 %v1252, %v1250
      %v1305 = vpack.c.b16 %v1255, %v1253
      %v1306 = vpack.c.b16 %v1256, %v1254
      %v1307 = vpack.c.b16 %v1259, %v1257
      %v1308 = vpack.c.b16 %v1260, %v1258
      %v1309 = vpack.c.b16 %v1263, %v1261
      %v1310 = vpack.c.b16 %v1264, %v1262
      %v1311 = vpack.c.b16 %v1267, %v1265
      %v1312 = vpack.c.b16 %v1268, %v1266
      %v1313 = vpack.c.b16 %v1271, %v1269
      %v1314 = vpack.c.b16 %v1272, %v1270
      %v1315 = vpack.c.b16 %v1275, %v1273
      %v1316 = vpack.c.b16 %v1276, %v1274
      %v1317 = vpack.c.b16 %v1279, %v1277
      %v1318 = vpack.c.b16 %v1280, %v1278
      %v1319 = vpack.c.b16 %v1283, %v1281
      %v1320 = vpack.c.b16 %v1284, %v1282
      %v1321 = vpack.c.b16 %v1287, %v1285
      %v1322 = vpack.c.b16 %v1288, %v1286
      %v1323 = vpack.c.b16 %v1291, %v1289
      %v1324 = vpack.c.b16 %v1292, %v1290
      %1357 = vmatprep.subr.bf16.mxu0 %v1294
      %1358 = vmatpush1.bf16.msra.mxu0 %v1293
      %1359 = vmatprep.subr.bf16.mxu0 %v1296
      %1360 = vmatpush1.bf16.msra.mxu0 %v1295
      %1361 = vmatprep.subr.bf16.mxu0 %v1298
      %1362 = vmatpush1.bf16.msra.mxu0 %v1297
      %1363 = vmatprep.subr.bf16.mxu0 %v1300
      %1364 = vmatpush1.bf16.msra.mxu0 %v1299
      %1365 = vmatprep.subr.bf16.mxu0 %v1302
      %1366 = vmatpush1.bf16.msra.mxu0 %v1301
      %1367 = vmatprep.subr.bf16.mxu0 %v1304
      %1368 = vmatpush1.bf16.msra.mxu0 %v1303
      %1369 = vmatprep.subr.bf16.mxu0 %v1306
      %1370 = vmatpush1.bf16.msra.mxu0 %v1305
      %1371 = vmatprep.subr.bf16.mxu0 %v1308
      %1372 = vmatpush1.bf16.msra.mxu0 %v1307
      %1373 = vmatprep.subr.bf16.mxu0 %v1310
      %1374 = vmatpush1.bf16.msra.mxu0 %v1309
      %1375 = vmatprep.subr.bf16.mxu0 %v1312
      %1376 = vmatpush1.bf16.msra.mxu0 %v1311
      %1377 = vmatprep.subr.bf16.mxu0 %v1314
      %1378 = vmatpush1.bf16.msra.mxu0 %v1313
      %1379 = vmatprep.subr.bf16.mxu0 %v1316
      %1380 = vmatpush1.bf16.msra.mxu0 %v1315
      %1381 = vmatprep.subr.bf16.mxu0 %v1318
      %1382 = vmatpush1.bf16.msra.mxu0 %v1317
      %1383 = vmatprep.subr.bf16.mxu0 %v1320
      %1384 = vmatpush1.bf16.msra.mxu0 %v1319
      %1385 = vmatprep.subr.bf16.mxu0 %v1322
      %1386 = vmatpush1.bf16.msra.mxu0 %v1321
      %1387 = vmatprep.subr.bf16.mxu0 %v1324
      %1388 = vmatpush1.bf16.msra.mxu0 %v1323
      %1389 = vmatprep.mubr.bf16.mxu0 %v1090
      %1390 = vmatmul.mubr.bf16.gmra.mrb[0].mxu0 %v1089
      %v1391 = vpop.f32.mrb[0].mxu0
      %v1392 = vadd.f32 %v1190, %v1391
      %v1393 = vpop.f32.mrb[0].mxu0
      %v1394 = vadd.f32 %v1194, %v1393
      %v1395 = vpop.f32.mrb[0].mxu0
      %v1396 = vadd.f32 %v1190, %v1395
      %v1397 = vpop.f32.mrb[0].mxu0
      %v1398 = vadd.f32 %v1194, %v1397
      %1399 = vmatprep.mubr.bf16.mxu0 %v1092
      %1400 = vmatmul.mubr.bf16.gmra.mrb[0].mxu0 %v1091
      %v1401 = vpop.f32.mrb[0].mxu0
      %v1402 = vadd.f32 %v1190, %v1401
      %v1403 = vpop.f32.mrb[0].mxu0
      %v1404 = vadd.f32 %v1194, %v1403
      %v1405 = vpop.f32.mrb[0].mxu0
      %v1406 = vadd.f32 %v1190, %v1405
      %v1407 = vpop.f32.mrb[0].mxu0
      %v1408 = vadd.f32 %v1194, %v1407
      %1409 = vmatprep.mubr.bf16.mxu0 %v1094
      %1410 = vmatmul.mubr.bf16.gmra.mrb[0].mxu0 %v1093
      %v1411 = vpop.f32.mrb[0].mxu0
      %v1412 = vadd.f32 %v1190, %v1411
      %v1413 = vpop.f32.mrb[0].mxu0
      %v1414 = vadd.f32 %v1194, %v1413
      %v1415 = vpop.f32.mrb[0].mxu0
      %v1416 = vadd.f32 %v1190, %v1415
      %v1417 = vpop.f32.mrb[0].mxu0
      %v1418 = vadd.f32 %v1194, %v1417
      %1419 = vmatprep.mubr.bf16.mxu0 %v1096
      %1420 = vmatmul.mubr.bf16.gmra.mrb[0].mxu0 %v1095
      %v1421 = vpop.f32.mrb[0].mxu0
      %v1422 = vadd.f32 %v1190, %v1421
      %v1423 = vpop.f32.mrb[0].mxu0
      %v1424 = vadd.f32 %v1194, %v1423
      %v1425 = vpop.f32.mrb[0].mxu0
      %v1426 = vadd.f32 %v1190, %v1425
      %v1427 = vpop.f32.mrb[0].mxu0
      %v1428 = vadd.f32 %v1194, %v1427
      %1429 = vmatprep.mubr.bf16.mxu0 %v1098
      %1430 = vmatmul.mubr.bf16.gmra.mrb[0].mxu0 %v1097
      %v1431 = vpop.f32.mrb[0].mxu0
      %v1432 = vadd.f32 %v1190, %v1431
      %v1433 = vpop.f32.mrb[0].mxu0
      %v1434 = vadd.f32 %v1194, %v1433
      %v1435 = vpop.f32.mrb[0].mxu0
      %v1436 = vadd.f32 %v1190, %v1435
      %v1437 = vpop.f32.mrb[0].mxu0
      %v1438 = vadd.f32 %v1194, %v1437
      %1439 = vmatprep.mubr.bf16.mxu0 %v1100
      %1440 = vmatmul.mubr.bf16.gmra.mrb[0].mxu0 %v1099
      %v1441 = vpop.f32.mrb[0].mxu0
      %v1442 = vadd.f32 %v1190, %v1441
      %v1443 = vpop.f32.mrb[0].mxu0
      %v1444 = vadd.f32 %v1194, %v1443
      %v1445 = vpop.f32.mrb[0].mxu0
      %v1446 = vadd.f32 %v1190, %v1445
      %v1447 = vpop.f32.mrb[0].mxu0
      %v1448 = vadd.f32 %v1194, %v1447
      %1449 = vmatprep.mubr.bf16.mxu0 %v1102
      %1450 = vmatmul.mubr.bf16.gmra.mrb[0].mxu0 %v1101
      %v1451 = vpop.f32.mrb[0].mxu0
      %v1452 = vadd.f32 %v1190, %v1451
      %v1453 = vpop.f32.mrb[0].mxu0
      %v1454 = vadd.f32 %v1194, %v1453
      %v1455 = vpop.f32.mrb[0].mxu0
      %v1456 = vadd.f32 %v1190, %v1455
      %v1457 = vpop.f32.mrb[0].mxu0
      %v1458 = vadd.f32 %v1194, %v1457
      %1459 = vmatprep.mubr.bf16.mxu0 %v1104
      %1460 = vmatmul.mubr.bf16.gmra.mrb[0].mxu0 %v1103
      %v1461 = vpop.f32.mrb[0].mxu0
      %v1462 = vadd.f32 %v1190, %v1461
      %v1463 = vpop.f32.mrb[0].mxu0
      %v1464 = vadd.f32 %v1194, %v1463
      %v1465 = vpop.f32.mrb[0].mxu0
      %v1466 = vadd.f32 %v1190, %v1465
      %v1467 = vpop.f32.mrb[0].mxu0
      %v1468 = vadd.f32 %v1194, %v1467
      %1469 = vmatprep.mubr.bf16.mxu0 %v1106
      %1470 = vmatmul.mubr.bf16.gmra.mrb[0].mxu0 %v1105
      %v1471 = vpop.f32.mrb[0].mxu0
      %v1472 = vadd.f32 %v1190, %v1471
      %v1473 = vpop.f32.mrb[0].mxu0
      %v1474 = vadd.f32 %v1194, %v1473
      %v1475 = vpop.f32.mrb[0].mxu0
      %v1476 = vadd.f32 %v1190, %v1475
      %v1477 = vpop.f32.mrb[0].mxu0
      %v1478 = vadd.f32 %v1194, %v1477
      %1479 = vmatprep.mubr.bf16.mxu0 %v1108
      %1480 = vmatmul.mubr.bf16.gmra.mrb[0].mxu0 %v1107
      %v1481 = vpop.f32.mrb[0].mxu0
      %v1482 = vadd.f32 %v1190, %v1481
      %v1483 = vpop.f32.mrb[0].mxu0
      %v1484 = vadd.f32 %v1194, %v1483
      %v1485 = vpop.f32.mrb[0].mxu0
      %v1486 = vadd.f32 %v1190, %v1485
      %v1487 = vpop.f32.mrb[0].mxu0
      %v1488 = vadd.f32 %v1194, %v1487
      %1489 = vmatprep.mubr.bf16.mxu0 %v1110
      %1490 = vmatmul.mubr.bf16.gmra.mrb[0].mxu0 %v1109
      %v1491 = vpop.f32.mrb[0].mxu0
      %v1492 = vadd.f32 %v1190, %v1491
      %v1493 = vpop.f32.mrb[0].mxu0
      %v1494 = vadd.f32 %v1194, %v1493
      %v1495 = vpop.f32.mrb[0].mxu0
      %v1496 = vadd.f32 %v1190, %v1495
      %v1497 = vpop.f32.mrb[0].mxu0
      %v1498 = vadd.f32 %v1194, %v1497
      %1499 = vmatprep.mubr.bf16.mxu0 %v1112
      %1500 = vmatmul.mubr.bf16.gmra.mrb[0].mxu0 %v1111
      %v1501 = vpop.f32.mrb[0].mxu0
      %v1502 = vadd.f32 %v1190, %v1501
      %v1503 = vpop.f32.mrb[0].mxu0
      %v1504 = vadd.f32 %v1194, %v1503
      %v1505 = vpop.f32.mrb[0].mxu0
      %v1506 = vadd.f32 %v1190, %v1505
      %v1507 = vpop.f32.mrb[0].mxu0
      %v1508 = vadd.f32 %v1194, %v1507
      %1509 = vmatprep.mubr.bf16.mxu0 %v1114
      %1510 = vmatmul.mubr.bf16.gmra.mrb[0].mxu0 %v1113
      %v1511 = vpop.f32.mrb[0].mxu0
      %v1512 = vadd.f32 %v1190, %v1511
      %v1513 = vpop.f32.mrb[0].mxu0
      %v1514 = vadd.f32 %v1194, %v1513
      %v1515 = vpop.f32.mrb[0].mxu0
      %v1516 = vadd.f32 %v1190, %v1515
      %v1517 = vpop.f32.mrb[0].mxu0
      %v1518 = vadd.f32 %v1194, %v1517
      %1519 = vmatprep.mubr.bf16.mxu0 %v1116
      %1520 = vmatmul.mubr.bf16.gmra.mrb[0].mxu0 %v1115
      %v1521 = vpop.f32.mrb[0].mxu0
      %v1522 = vadd.f32 %v1190, %v1521
      %v1523 = vpop.f32.mrb[0].mxu0
      %v1524 = vadd.f32 %v1194, %v1523
      %v1525 = vpop.f32.mrb[0].mxu0
      %v1526 = vadd.f32 %v1190, %v1525
      %v1527 = vpop.f32.mrb[0].mxu0
      %v1528 = vadd.f32 %v1194, %v1527
      %1529 = vmatprep.mubr.bf16.mxu0 %v1118
      %1530 = vmatmul.mubr.bf16.gmra.mrb[0].mxu0 %v1117
      %v1531 = vpop.f32.mrb[0].mxu0
      %v1532 = vadd.f32 %v1190, %v1531
      %v1533 = vpop.f32.mrb[0].mxu0
      %v1534 = vadd.f32 %v1194, %v1533
      %v1535 = vpop.f32.mrb[0].mxu0
      %v1536 = vadd.f32 %v1190, %v1535
      %v1537 = vpop.f32.mrb[0].mxu0
      %v1538 = vadd.f32 %v1194, %v1537
      %1539 = vmatprep.mubr.bf16.mxu0 %v1120
      %1540 = vmatmul.mubr.bf16.gmra.mrb[0].mxu0 %v1119
      %v1541 = vpop.f32.mrb[0].mxu0
      %v1542 = vadd.f32 %v1190, %v1541
      %v1543 = vpop.f32.mrb[0].mxu0
      %v1544 = vadd.f32 %v1194, %v1543
      %v1545 = vpop.f32.mrb[0].mxu0
      %v1546 = vadd.f32 %v1190, %v1545
      %v1547 = vpop.f32.mrb[0].mxu0
      %v1548 = vadd.f32 %v1194, %v1547
      %1549 = vmatprep.mubr.bf16.mxu0 %v1122
      %1550 = vmatmul.mubr.bf16.gmra.mrb[0].mxu0 %v1121
      %v1551 = vpop.f32.mrb[0].mxu0
      %v1552 = vadd.f32 %v1190, %v1551
      %v1553 = vpop.f32.mrb[0].mxu0
      %v1554 = vadd.f32 %v1194, %v1553
      %v1555 = vpop.f32.mrb[0].mxu0
      %v1556 = vadd.f32 %v1190, %v1555
      %v1557 = vpop.f32.mrb[0].mxu0
      %v1558 = vadd.f32 %v1194, %v1557
      %1559 = vmatprep.mubr.bf16.mxu0 %v1124
      %1560 = vmatmul.mubr.bf16.gmra.mrb[0].mxu0 %v1123
      %v1561 = vpop.f32.mrb[0].mxu0
      %v1562 = vadd.f32 %v1190, %v1561
      %v1563 = vpop.f32.mrb[0].mxu0
      %v1564 = vadd.f32 %v1194, %v1563
      %v1565 = vpop.f32.mrb[0].mxu0
      %v1566 = vadd.f32 %v1190, %v1565
      %v1567 = vpop.f32.mrb[0].mxu0
      %v1568 = vadd.f32 %v1194, %v1567
      %1569 = vmatprep.mubr.bf16.mxu0 %v1126
      %1570 = vmatmul.mubr.bf16.gmra.mrb[0].mxu0 %v1125
      %v1571 = vpop.f32.mrb[0].mxu0
      %v1572 = vadd.f32 %v1190, %v1571
      %v1573 = vpop.f32.mrb[0].mxu0
      %v1574 = vadd.f32 %v1194, %v1573
      %v1575 = vpop.f32.mrb[0].mxu0
      %v1576 = vadd.f32 %v1190, %v1575
      %v1577 = vpop.f32.mrb[0].mxu0
      %v1578 = vadd.f32 %v1194, %v1577
      %1579 = vmatprep.mubr.bf16.mxu0 %v1128
      %1580 = vmatmul.mubr.bf16.gmra.mrb[0].mxu0 %v1127
      %v1581 = vpop.f32.mrb[0].mxu0
      %v1582 = vadd.f32 %v1190, %v1581
      %v1583 = vpop.f32.mrb[0].mxu0
      %v1584 = vadd.f32 %v1194, %v1583
      %v1585 = vpop.f32.mrb[0].mxu0
      %v1586 = vadd.f32 %v1190, %v1585
      %v1587 = vpop.f32.mrb[0].mxu0
      %v1588 = vadd.f32 %v1194, %v1587
      %1589 = vmatprep.mubr.bf16.mxu0 %v1130
      %1590 = vmatmul.mubr.bf16.gmra.mrb[0].mxu0 %v1129
      %v1591 = vpop.f32.mrb[0].mxu0
      %v1592 = vadd.f32 %v1190, %v1591
      %v1593 = vpop.f32.mrb[0].mxu0
      %v1594 = vadd.f32 %v1194, %v1593
      %v1595 = vpop.f32.mrb[0].mxu0
      %v1596 = vadd.f32 %v1190, %v1595
      %v1597 = vpop.f32.mrb[0].mxu0
      %v1598 = vadd.f32 %v1194, %v1597
      %1599 = vmatprep.mubr.bf16.mxu0 %v1132
      %1600 = vmatmul.mubr.bf16.gmra.mrb[0].mxu0 %v1131
      %v1601 = vpop.f32.mrb[0].mxu0
      %v1602 = vadd.f32 %v1190, %v1601
      %v1603 = vpop.f32.mrb[0].mxu0
      %v1604 = vadd.f32 %v1194, %v1603
      %v1605 = vpop.f32.mrb[0].mxu0
      %v1606 = vadd.f32 %v1190, %v1605
      %v1607 = vpop.f32.mrb[0].mxu0
      %v1608 = vadd.f32 %v1194, %v1607
      %1609 = vmatprep.mubr.bf16.mxu0 %v1134
      %1610 = vmatmul.mubr.bf16.gmra.mrb[0].mxu0 %v1133
      %v1611 = vpop.f32.mrb[0].mxu0
      %v1612 = vadd.f32 %v1190, %v1611
      %v1613 = vpop.f32.mrb[0].mxu0
      %v1614 = vadd.f32 %v1194, %v1613
      %v1615 = vpop.f32.mrb[0].mxu0
      %v1616 = vadd.f32 %v1190, %v1615
      %v1617 = vpop.f32.mrb[0].mxu0
      %v1618 = vadd.f32 %v1194, %v1617
      %1619 = vmatprep.mubr.bf16.mxu0 %v1136
      %1620 = vmatmul.mubr.bf16.gmra.mrb[0].mxu0 %v1135
      %v1621 = vpop.f32.mrb[0].mxu0
      %v1622 = vadd.f32 %v1190, %v1621
      %v1623 = vpop.f32.mrb[0].mxu0
      %v1624 = vadd.f32 %v1194, %v1623
      %v1625 = vpop.f32.mrb[0].mxu0
      %v1626 = vadd.f32 %v1190, %v1625
      %v1627 = vpop.f32.mrb[0].mxu0
      %v1628 = vadd.f32 %v1194, %v1627
      %1629 = vmatprep.mubr.bf16.mxu0 %v1138
      %1630 = vmatmul.mubr.bf16.gmra.mrb[0].mxu0 %v1137
      %v1631 = vpop.f32.mrb[0].mxu0
      %v1632 = vadd.f32 %v1190, %v1631
      %v1633 = vpop.f32.mrb[0].mxu0
      %v1634 = vadd.f32 %v1194, %v1633
      %v1635 = vpop.f32.mrb[0].mxu0
      %v1636 = vadd.f32 %v1190, %v1635
      %v1637 = vpop.f32.mrb[0].mxu0
      %v1638 = vadd.f32 %v1194, %v1637
      %1639 = vmatprep.mubr.bf16.mxu0 %v1140
      %1640 = vmatmul.mubr.bf16.gmra.mrb[0].mxu0 %v1139
      %v1641 = vpop.f32.mrb[0].mxu0
      %v1642 = vadd.f32 %v1190, %v1641
      %v1643 = vpop.f32.mrb[0].mxu0
      %v1644 = vadd.f32 %v1194, %v1643
      %v1645 = vpop.f32.mrb[0].mxu0
      %v1646 = vadd.f32 %v1190, %v1645
      %v1647 = vpop.f32.mrb[0].mxu0
      %v1648 = vadd.f32 %v1194, %v1647
      %1649 = vmatprep.mubr.bf16.mxu0 %v1142
      %1650 = vmatmul.mubr.bf16.gmra.mrb[0].mxu0 %v1141
      %v1651 = vpop.f32.mrb[0].mxu0
      %v1652 = vadd.f32 %v1190, %v1651
      %v1653 = vpop.f32.mrb[0].mxu0
      %v1654 = vadd.f32 %v1194, %v1653
      %v1655 = vpop.f32.mrb[0].mxu0
      %v1656 = vadd.f32 %v1190, %v1655
      %v1657 = vpop.f32.mrb[0].mxu0
      %v1658 = vadd.f32 %v1194, %v1657
      %1659 = vmatprep.mubr.bf16.mxu0 %v1144
      %1660 = vmatmul.mubr.bf16.gmra.mrb[0].mxu0 %v1143
      %v1661 = vpop.f32.mrb[0].mxu0
      %v1662 = vadd.f32 %v1190, %v1661
      %v1663 = vpop.f32.mrb[0].mxu0
      %v1664 = vadd.f32 %v1194, %v1663
      %v1665 = vpop.f32.mrb[0].mxu0
      %v1666 = vadd.f32 %v1190, %v1665
      %v1667 = vpop.f32.mrb[0].mxu0
      %v1668 = vadd.f32 %v1194, %v1667
      %1669 = vmatprep.mubr.bf16.mxu0 %v1146
      %1670 = vmatmul.mubr.bf16.gmra.mrb[0].mxu0 %v1145
      %v1671 = vpop.f32.mrb[0].mxu0
      %v1672 = vadd.f32 %v1190, %v1671
      %v1673 = vpop.f32.mrb[0].mxu0
      %v1674 = vadd.f32 %v1194, %v1673
      %v1675 = vpop.f32.mrb[0].mxu0
      %v1676 = vadd.f32 %v1190, %v1675
      %v1677 = vpop.f32.mrb[0].mxu0
      %v1678 = vadd.f32 %v1194, %v1677
      %1679 = vmatprep.mubr.bf16.mxu0 %v1148
      %1680 = vmatmul.mubr.bf16.gmra.mrb[0].mxu0 %v1147
      %v1681 = vpop.f32.mrb[0].mxu0
      %v1682 = vadd.f32 %v1190, %v1681
      %v1683 = vpop.f32.mrb[0].mxu0
      %v1684 = vadd.f32 %v1194, %v1683
      %v1685 = vpop.f32.mrb[0].mxu0
      %v1686 = vadd.f32 %v1190, %v1685
      %v1687 = vpop.f32.mrb[0].mxu0
      %v1688 = vadd.f32 %v1194, %v1687
      %1689 = vmatprep.mubr.bf16.mxu0 %v1150
      %1690 = vmatmul.mubr.bf16.gmra.mrb[0].mxu0 %v1149
      %v1691 = vpop.f32.mrb[0].mxu0
      %v1692 = vadd.f32 %v1190, %v1691
      %v1693 = vpop.f32.mrb[0].mxu0
      %v1694 = vadd.f32 %v1194, %v1693
      %v1695 = vpop.f32.mrb[0].mxu0
      %v1696 = vadd.f32 %v1190, %v1695
      %v1697 = vpop.f32.mrb[0].mxu0
      %v1698 = vadd.f32 %v1194, %v1697
      %1699 = vmatprep.mubr.bf16.mxu0 %v1152
      %1700 = vmatmul.mubr.bf16.gmra.mrb[0].mxu0 %v1151
      %v1701 = vpop.f32.mrb[0].mxu0
      %v1702 = vadd.f32 %v1190, %v1701
      %v1703 = vpop.f32.mrb[0].mxu0
      %v1704 = vadd.f32 %v1194, %v1703
      %v1705 = vpop.f32.mrb[0].mxu0
      %v1706 = vadd.f32 %v1190, %v1705
      %v1707 = vpop.f32.mrb[0].mxu0
      %v1708 = vadd.f32 %v1194, %v1707
      %1709 = vdwg.mxu0
      %v1710 = vmax.f32 %v1392, 0.0
      %v1711 = vmax.f32 %v1394, 0.0
      %v1712 = vmax.f32 %v1396, 0.0
      %v1713 = vmax.f32 %v1398, 0.0
      %v1714 = vmax.f32 %v1402, 0.0
      %v1715 = vmax.f32 %v1404, 0.0
      %v1716 = vmax.f32 %v1406, 0.0
      %v1717 = vmax.f32 %v1408, 0.0
      %v1718 = vmax.f32 %v1412, 0.0
      %v1719 = vmax.f32 %v1414, 0.0
      %v1720 = vmax.f32 %v1416, 0.0
      %v1721 = vmax.f32 %v1418, 0.0
      %v1722 = vmax.f32 %v1422, 0.0
      %v1723 = vmax.f32 %v1424, 0.0
      %v1724 = vmax.f32 %v1426, 0.0
      %v1725 = vmax.f32 %v1428, 0.0
      %v1726 = vmax.f32 %v1432, 0.0
      %v1727 = vmax.f32 %v1434, 0.0
      %v1728 = vmax.f32 %v1436, 0.0
      %v1729 = vmax.f32 %v1438, 0.0
      %v1730 = vmax.f32 %v1442, 0.0
      %v1731 = vmax.f32 %v1444, 0.0
      %v1732 = vmax.f32 %v1446, 0.0
      %v1733 = vmax.f32 %v1448, 0.0
      %v1734 = vmax.f32 %v1452, 0.0
      %v1735 = vmax.f32 %v1454, 0.0
      %v1736 = vmax.f32 %v1456, 0.0
      %v1737 = vmax.f32 %v1458, 0.0
      %v1738 = vmax.f32 %v1462, 0.0
      %v1739 = vmax.f32 %v1464, 0.0
      %v1740 = vmax.f32 %v1466, 0.0
      %v1741 = vmax.f32 %v1468, 0.0
      %v1742 = vmax.f32 %v1472, 0.0
      %v1743 = vmax.f32 %v1474, 0.0
      %v1744 = vmax.f32 %v1476, 0.0
      %v1745 = vmax.f32 %v1478, 0.0
      %v1746 = vmax.f32 %v1482, 0.0
      %v1747 = vmax.f32 %v1484, 0.0
      %v1748 = vmax.f32 %v1486, 0.0
      %v1749 = vmax.f32 %v1488, 0.0
      %v1750 = vmax.f32 %v1492, 0.0
      %v1751 = vmax.f32 %v1494, 0.0
      %v1752 = vmax.f32 %v1496, 0.0
      %v1753 = vmax.f32 %v1498, 0.0
      %v1754 = vmax.f32 %v1502, 0.0
      %v1755 = vmax.f32 %v1504, 0.0
      %v1756 = vmax.f32 %v1506, 0.0
      %v1757 = vmax.f32 %v1508, 0.0
      %v1758 = vmax.f32 %v1512, 0.0
      %v1759 = vmax.f32 %v1514, 0.0
      %v1760 = vmax.f32 %v1516, 0.0
      %v1761 = vmax.f32 %v1518, 0.0
      %v1762 = vmax.f32 %v1522, 0.0
      %v1763 = vmax.f32 %v1524, 0.0
      %v1764 = vmax.f32 %v1526, 0.0
      %v1765 = vmax.f32 %v1528, 0.0
      %v1766 = vmax.f32 %v1532, 0.0
      %v1767 = vmax.f32 %v1534, 0.0
      %v1768 = vmax.f32 %v1536, 0.0
      %v1769 = vmax.f32 %v1538, 0.0
      %v1770 = vmax.f32 %v1542, 0.0
      %v1771 = vmax.f32 %v1544, 0.0
      %v1772 = vmax.f32 %v1546, 0.0
      %v1773 = vmax.f32 %v1548, 0.0
      %v1774 = vmax.f32 %v1552, 0.0
      %v1775 = vmax.f32 %v1554, 0.0
      %v1776 = vmax.f32 %v1556, 0.0
      %v1777 = vmax.f32 %v1558, 0.0
      %v1778 = vmax.f32 %v1562, 0.0
      %v1779 = vmax.f32 %v1564, 0.0
      %v1780 = vmax.f32 %v1566, 0.0
      %v1781 = vmax.f32 %v1568, 0.0
      %v1782 = vmax.f32 %v1572, 0.0
      %v1783 = vmax.f32 %v1574, 0.0
      %v1784 = vmax.f32 %v1576, 0.0
      %v1785 = vmax.f32 %v1578, 0.0
      %v1786 = vmax.f32 %v1582, 0.0
      %v1787 = vmax.f32 %v1584, 0.0
      %v1788 = vmax.f32 %v1586, 0.0
      %v1789 = vmax.f32 %v1588, 0.0
      %v1790 = vmax.f32 %v1592, 0.0
      %v1791 = vmax.f32 %v1594, 0.0
      %v1792 = vmax.f32 %v1596, 0.0
      %v1793 = vmax.f32 %v1598, 0.0
      %v1794 = vmax.f32 %v1602, 0.0
      %v1795 = vmax.f32 %v1604, 0.0
      %v1796 = vmax.f32 %v1606, 0.0
      %v1797 = vmax.f32 %v1608, 0.0
      %v1798 = vmax.f32 %v1612, 0.0
      %v1799 = vmax.f32 %v1614, 0.0
      %v1800 = vmax.f32 %v1616, 0.0
      %v1801 = vmax.f32 %v1618, 0.0
      %v1802 = vmax.f32 %v1622, 0.0
      %v1803 = vmax.f32 %v1624, 0.0
      %v1804 = vmax.f32 %v1626, 0.0
      %v1805 = vmax.f32 %v1628, 0.0
      %v1806 = vmax.f32 %v1632, 0.0
      %v1807 = vmax.f32 %v1634, 0.0
      %v1808 = vmax.f32 %v1636, 0.0
      %v1809 = vmax.f32 %v1638, 0.0
      %v1810 = vmax.f32 %v1642, 0.0
      %v1811 = vmax.f32 %v1644, 0.0
      %v1812 = vmax.f32 %v1646, 0.0
      %v1813 = vmax.f32 %v1648, 0.0
      %v1814 = vmax.f32 %v1652, 0.0
      %v1815 = vmax.f32 %v1654, 0.0
      %v1816 = vmax.f32 %v1656, 0.0
      %v1817 = vmax.f32 %v1658, 0.0
      %v1818 = vmax.f32 %v1662, 0.0
      %v1819 = vmax.f32 %v1664, 0.0
      %v1820 = vmax.f32 %v1666, 0.0
      %v1821 = vmax.f32 %v1668, 0.0
      %v1822 = vmax.f32 %v1672, 0.0
      %v1823 = vmax.f32 %v1674, 0.0
      %v1824 = vmax.f32 %v1676, 0.0
      %v1825 = vmax.f32 %v1678, 0.0
      %v1826 = vmax.f32 %v1682, 0.0
      %v1827 = vmax.f32 %v1684, 0.0
      %v1828 = vmax.f32 %v1686, 0.0
      %v1829 = vmax.f32 %v1688, 0.0
      %v1830 = vmax.f32 %v1692, 0.0
      %v1831 = vmax.f32 %v1694, 0.0
      %v1832 = vmax.f32 %v1696, 0.0
      %v1833 = vmax.f32 %v1698, 0.0
      %v1834 = vmax.f32 %v1702, 0.0
      %v1835 = vmax.f32 %v1704, 0.0
      %v1836 = vmax.f32 %v1706, 0.0
      %v1837 = vmax.f32 %v1708, 0.0
      %v1838 = vpack.c.bf16 %v1712, %v1710
      %v1839 = vpack.c.bf16 %v1713, %v1711
      %v1840 = vpack.c.bf16 %v1716, %v1714
      %v1841 = vpack.c.bf16 %v1717, %v1715
      %v1842 = vpack.c.bf16 %v1720, %v1718
      %v1843 = vpack.c.bf16 %v1721, %v1719
      %v1844 = vpack.c.bf16 %v1724, %v1722
      %v1845 = vpack.c.bf16 %v1725, %v1723
      %v1846 = vpack.c.bf16 %v1728, %v1726
      %v1847 = vpack.c.bf16 %v1729, %v1727
      %v1848 = vpack.c.bf16 %v1732, %v1730
      %v1849 = vpack.c.bf16 %v1733, %v1731
      %v1850 = vpack.c.bf16 %v1736, %v1734
      %v1851 = vpack.c.bf16 %v1737, %v1735
      %v1852 = vpack.c.bf16 %v1740, %v1738
      %v1853 = vpack.c.bf16 %v1741, %v1739
      %v1854 = vpack.c.bf16 %v1744, %v1742
      %v1855 = vpack.c.bf16 %v1745, %v1743
      %v1856 = vpack.c.bf16 %v1748, %v1746
      %v1857 = vpack.c.bf16 %v1749, %v1747
      %v1858 = vpack.c.bf16 %v1752, %v1750
      %v1859 = vpack.c.bf16 %v1753, %v1751
      %v1860 = vpack.c.bf16 %v1756, %v1754
      %v1861 = vpack.c.bf16 %v1757, %v1755
      %v1862 = vpack.c.bf16 %v1760, %v1758
      %v1863 = vpack.c.bf16 %v1761, %v1759
      %v1864 = vpack.c.bf16 %v1764, %v1762
      %v1865 = vpack.c.bf16 %v1765, %v1763
      %v1866 = vpack.c.bf16 %v1768, %v1766
      %v1867 = vpack.c.bf16 %v1769, %v1767
      %v1868 = vpack.c.bf16 %v1772, %v1770
      %v1869 = vpack.c.bf16 %v1773, %v1771
      %v1870 = vpack.c.bf16 %v1776, %v1774
      %v1871 = vpack.c.bf16 %v1777, %v1775
      %v1872 = vpack.c.bf16 %v1780, %v1778
      %v1873 = vpack.c.bf16 %v1781, %v1779
      %v1874 = vpack.c.bf16 %v1784, %v1782
      %v1875 = vpack.c.bf16 %v1785, %v1783
      %v1876 = vpack.c.bf16 %v1788, %v1786
      %v1877 = vpack.c.bf16 %v1789, %v1787
      %v1878 = vpack.c.bf16 %v1792, %v1790
      %v1879 = vpack.c.bf16 %v1793, %v1791
      %v1880 = vpack.c.bf16 %v1796, %v1794
      %v1881 = vpack.c.bf16 %v1797, %v1795
      %v1882 = vpack.c.bf16 %v1800, %v1798
      %v1883 = vpack.c.bf16 %v1801, %v1799
      %v1884 = vpack.c.bf16 %v1804, %v1802
      %v1885 = vpack.c.bf16 %v1805, %v1803
      %v1886 = vpack.c.bf16 %v1808, %v1806
      %v1887 = vpack.c.bf16 %v1809, %v1807
      %v1888 = vpack.c.bf16 %v1812, %v1810
      %v1889 = vpack.c.bf16 %v1813, %v1811
      %v1890 = vpack.c.bf16 %v1816, %v1814
      %v1891 = vpack.c.bf16 %v1817, %v1815
      %v1892 = vpack.c.bf16 %v1820, %v1818
      %v1893 = vpack.c.bf16 %v1821, %v1819
      %v1894 = vpack.c.bf16 %v1824, %v1822
      %v1895 = vpack.c.bf16 %v1825, %v1823
      %v1896 = vpack.c.bf16 %v1828, %v1826
      %v1897 = vpack.c.bf16 %v1829, %v1827
      %v1898 = vpack.c.bf16 %v1832, %v1830
      %v1899 = vpack.c.bf16 %v1833, %v1831
      %v1900 = vpack.c.bf16 %v1836, %v1834
      %v1901 = vpack.c.bf16 %v1837, %v1835
      %s1902 = scalar_lea.vmem %s4, 256
      %v1903 = vld [vmem:[%s1902] sm:$0xff]
      %v1904 = vld [vmem:[%s1902 + $0x8] sm:$0xff]
      %v1905 = vld [vmem:[%s1902 + $0x10] sm:$0xff]
      %v1906 = vld [vmem:[%s1902 + $0x18] sm:$0xff]
      %v1907 = vld [vmem:[%s1902 + $0x20] sm:$0xff]
      %v1908 = vld [vmem:[%s1902 + $0x28] sm:$0xff]
      %v1909 = vld [vmem:[%s1902 + $0x30] sm:$0xff]
      %v1910 = vld [vmem:[%s1902 + $0x38] sm:$0xff]
      %v1911 = vld [vmem:[%s1902 + $0x40] sm:$0xff]
      %v1912 = vld [vmem:[%s1902 + $0x48] sm:$0xff]
      %v1913 = vld [vmem:[%s1902 + $0x50] sm:$0xff]
      %v1914 = vld [vmem:[%s1902 + $0x58] sm:$0xff]
      %v1915 = vld [vmem:[%s1902 + $0x60] sm:$0xff]
      %v1916 = vld [vmem:[%s1902 + $0x68] sm:$0xff]
      %v1917 = vld [vmem:[%s1902 + $0x70] sm:$0xff]
      %v1918 = vld [vmem:[%s1902 + $0x78] sm:$0xff]
      %v1919 = vld [vmem:[%s1902 + $0x80] sm:$0xff]
      %v1920 = vld [vmem:[%s1902 + $0x88] sm:$0xff]
      %v1921 = vld [vmem:[%s1902 + $0x90] sm:$0xff]
      %v1922 = vld [vmem:[%s1902 + $0x98] sm:$0xff]
      %v1923 = vld [vmem:[%s1902 + $0xa0] sm:$0xff]
      %v1924 = vld [vmem:[%s1902 + $0xa8] sm:$0xff]
      %v1925 = vld [vmem:[%s1902 + $0xb0] sm:$0xff]
      %v1926 = vld [vmem:[%s1902 + $0xb8] sm:$0xff]
      %v1927 = vld [vmem:[%s1902 + $0xc0] sm:$0xff]
      %v1928 = vld [vmem:[%s1902 + $0xc8] sm:$0xff]
      %v1929 = vld [vmem:[%s1902 + $0xd0] sm:$0xff]
      %v1930 = vld [vmem:[%s1902 + $0xd8] sm:$0xff]
      %v1931 = vld [vmem:[%s1902 + $0xe0] sm:$0xff]
      %v1932 = vld [vmem:[%s1902 + $0xe8] sm:$0xff]
      %v1933 = vld [vmem:[%s1902 + $0xf0] sm:$0xff]
      %v1934 = vld [vmem:[%s1902 + $0xf8] sm:$0xff]
      %s1935 = scalar_lea.vmem %s5, 2
      %v1936 = vld [vmem:[%s1935] sm:$0x3]
      %v1938 = vlaneseq
      %v1939 = vshrl.u32 %v1938, 7
      %v1940 = vsub.s32 0, %v1939
      %v1941 = vrot.slane %v1936, %v1940
      %v1942 = vlaneseq
      %v1943 = vshrl.u32 %v1942, 7
      %v1944 = vsub.s32 1, %v1943
      %v1945 = vrot.slane %v1936, %v1944
      %v1980 = vunpack.c.l.b16 %v1903
      %v1981 = vunpack.c.h.b16 %v1903
      %v1982 = vunpack.c.l.b16 %v1904
      %v1983 = vunpack.c.h.b16 %v1904
      %v1984 = vunpack.c.l.b16 %v1905
      %v1985 = vunpack.c.h.b16 %v1905
      %v1986 = vunpack.c.l.b16 %v1906
      %v1987 = vunpack.c.h.b16 %v1906
      %v1988 = vunpack.c.l.b16 %v1907
      %v1989 = vunpack.c.h.b16 %v1907
      %v1990 = vunpack.c.l.b16 %v1908
      %v1991 = vunpack.c.h.b16 %v1908
      %v1992 = vunpack.c.l.b16 %v1909
      %v1993 = vunpack.c.h.b16 %v1909
      %v1994 = vunpack.c.l.b16 %v1910
      %v1995 = vunpack.c.h.b16 %v1910
      %v1996 = vunpack.c.l.b16 %v1911
      %v1997 = vunpack.c.h.b16 %v1911
      %v1998 = vunpack.c.l.b16 %v1912
      %v1999 = vunpack.c.h.b16 %v1912
      %v2000 = vunpack.c.l.b16 %v1913
      %v2001 = vunpack.c.h.b16 %v1913
      %v2002 = vunpack.c.l.b16 %v1914
      %v2003 = vunpack.c.h.b16 %v1914
      %v2004 = vunpack.c.l.b16 %v1915
      %v2005 = vunpack.c.h.b16 %v1915
      %v2006 = vunpack.c.l.b16 %v1916
      %v2007 = vunpack.c.h.b16 %v1916
      %v2008 = vunpack.c.l.b16 %v1917
      %v2009 = vunpack.c.h.b16 %v1917
      %v2010 = vunpack.c.l.b16 %v1918
      %v2011 = vunpack.c.h.b16 %v1918
      %v2012 = vunpack.c.l.b16 %v1919
      %v2013 = vunpack.c.h.b16 %v1919
      %v2014 = vunpack.c.l.b16 %v1920
      %v2015 = vunpack.c.h.b16 %v1920
      %v2016 = vunpack.c.l.b16 %v1921
      %v2017 = vunpack.c.h.b16 %v1921
      %v2018 = vunpack.c.l.b16 %v1922
      %v2019 = vunpack.c.h.b16 %v1922
      %v2020 = vunpack.c.l.b16 %v1923
      %v2021 = vunpack.c.h.b16 %v1923
      %v2022 = vunpack.c.l.b16 %v1924
      %v2023 = vunpack.c.h.b16 %v1924
      %v2024 = vunpack.c.l.b16 %v1925
      %v2025 = vunpack.c.h.b16 %v1925
      %v2026 = vunpack.c.l.b16 %v1926
      %v2027 = vunpack.c.h.b16 %v1926
      %v2028 = vunpack.c.l.b16 %v1927
      %v2029 = vunpack.c.h.b16 %v1927
      %v2030 = vunpack.c.l.b16 %v1928
      %v2031 = vunpack.c.h.b16 %v1928
      %v2032 = vunpack.c.l.b16 %v1929
      %v2033 = vunpack.c.h.b16 %v1929
      %v2034 = vunpack.c.l.b16 %v1930
      %v2035 = vunpack.c.h.b16 %v1930
      %v2036 = vunpack.c.l.b16 %v1931
      %v2037 = vunpack.c.h.b16 %v1931
      %v2038 = vunpack.c.l.b16 %v1932
      %v2039 = vunpack.c.h.b16 %v1932
      %v2040 = vunpack.c.l.b16 %v1933
      %v2041 = vunpack.c.h.b16 %v1933
      %v2042 = vunpack.c.l.b16 %v1934
      %v2043 = vunpack.c.h.b16 %v1934
      %v2044 = vpack.c.b16 %v1982, %v1980
      %v2045 = vpack.c.b16 %v1983, %v1981
      %v2046 = vpack.c.b16 %v1986, %v1984
      %v2047 = vpack.c.b16 %v1987, %v1985
      %v2048 = vpack.c.b16 %v1990, %v1988
      %v2049 = vpack.c.b16 %v1991, %v1989
      %v2050 = vpack.c.b16 %v1994, %v1992
      %v2051 = vpack.c.b16 %v1995, %v1993
      %v2052 = vpack.c.b16 %v1998, %v1996
      %v2053 = vpack.c.b16 %v1999, %v1997
      %v2054 = vpack.c.b16 %v2002, %v2000
      %v2055 = vpack.c.b16 %v2003, %v2001
      %v2056 = vpack.c.b16 %v2006, %v2004
      %v2057 = vpack.c.b16 %v2007, %v2005
      %v2058 = vpack.c.b16 %v2010, %v2008
      %v2059 = vpack.c.b16 %v2011, %v2009
      %v2060 = vpack.c.b16 %v2014, %v2012
      %v2061 = vpack.c.b16 %v2015, %v2013
      %v2062 = vpack.c.b16 %v2018, %v2016
      %v2063 = vpack.c.b16 %v2019, %v2017
      %v2064 = vpack.c.b16 %v2022, %v2020
      %v2065 = vpack.c.b16 %v2023, %v2021
      %v2066 = vpack.c.b16 %v2026, %v2024
      %v2067 = vpack.c.b16 %v2027, %v2025
      %v2068 = vpack.c.b16 %v2030, %v2028
      %v2069 = vpack.c.b16 %v2031, %v2029
      %v2070 = vpack.c.b16 %v2034, %v2032
      %v2071 = vpack.c.b16 %v2035, %v2033
      %v2072 = vpack.c.b16 %v2038, %v2036
      %v2073 = vpack.c.b16 %v2039, %v2037
      %v2074 = vpack.c.b16 %v2042, %v2040
      %v2075 = vpack.c.b16 %v2043, %v2041
      %2108 = vmatprep.subr.bf16.mxu0 %v2045
      %2109 = vmatpush1.bf16.msra.mxu0 %v2044
      %2110 = vmatprep.subr.bf16.mxu0 %v2047
      %2111 = vmatpush1.bf16.msra.mxu0 %v2046
      %2112 = vmatprep.subr.bf16.mxu0 %v2049
      %2113 = vmatpush1.bf16.msra.mxu0 %v2048
      %2114 = vmatprep.subr.bf16.mxu0 %v2051
      %2115 = vmatpush1.bf16.msra.mxu0 %v2050
      %2116 = vmatprep.subr.bf16.mxu0 %v2053
      %2117 = vmatpush1.bf16.msra.mxu0 %v2052
      %2118 = vmatprep.subr.bf16.mxu0 %v2055
      %2119 = vmatpush1.bf16.msra.mxu0 %v2054
      %2120 = vmatprep.subr.bf16.mxu0 %v2057
      %2121 = vmatpush1.bf16.msra.mxu0 %v2056
      %2122 = vmatprep.subr.bf16.mxu0 %v2059
      %2123 = vmatpush1.bf16.msra.mxu0 %v2058
      %2124 = vmatprep.subr.bf16.mxu0 %v2061
      %2125 = vmatpush1.bf16.msra.mxu0 %v2060
      %2126 = vmatprep.subr.bf16.mxu0 %v2063
      %2127 = vmatpush1.bf16.msra.mxu0 %v2062
      %2128 = vmatprep.subr.bf16.mxu0 %v2065
      %2129 = vmatpush1.bf16.msra.mxu0 %v2064
      %2130 = vmatprep.subr.bf16.mxu0 %v2067
      %2131 = vmatpush1.bf16.msra.mxu0 %v2066
      %2132 = vmatprep.subr.bf16.mxu0 %v2069
      %2133 = vmatpush1.bf16.msra.mxu0 %v2068
      %2134 = vmatprep.subr.bf16.mxu0 %v2071
      %2135 = vmatpush1.bf16.msra.mxu0 %v2070
      %2136 = vmatprep.subr.bf16.mxu0 %v2073
      %2137 = vmatpush1.bf16.msra.mxu0 %v2072
      %2138 = vmatprep.subr.bf16.mxu0 %v2075
      %2139 = vmatpush1.bf16.msra.mxu0 %v2074
      %2140 = vmatprep.mubr.bf16.mxu0 %v1839
      %2141 = vmatmul.mubr.bf16.gmra.mrb[0].mxu0 %v1838
      %v2142 = vpop.f32.mrb[0].mxu0
      %v2143 = vadd.f32 %v1941, %v2142
      %v2144 = vpop.f32.mrb[0].mxu0
      %v2145 = vadd.f32 %v1945, %v2144
      %v2146 = vpop.f32.mrb[0].mxu0
      %v2147 = vadd.f32 %v1941, %v2146
      %v2148 = vpop.f32.mrb[0].mxu0
      %v2149 = vadd.f32 %v1945, %v2148
      %2150 = vmatprep.mubr.bf16.mxu0 %v1841
      %2151 = vmatmul.mubr.bf16.gmra.mrb[0].mxu0 %v1840
      %v2152 = vpop.f32.mrb[0].mxu0
      %v2153 = vadd.f32 %v1941, %v2152
      %v2154 = vpop.f32.mrb[0].mxu0
      %v2155 = vadd.f32 %v1945, %v2154
      %v2156 = vpop.f32.mrb[0].mxu0
      %v2157 = vadd.f32 %v1941, %v2156
      %v2158 = vpop.f32.mrb[0].mxu0
      %v2159 = vadd.f32 %v1945, %v2158
      %2160 = vmatprep.mubr.bf16.mxu0 %v1843
      %2161 = vmatmul.mubr.bf16.gmra.mrb[0].mxu0 %v1842
      %v2162 = vpop.f32.mrb[0].mxu0
      %v2163 = vadd.f32 %v1941, %v2162
      %v2164 = vpop.f32.mrb[0].mxu0
      %v2165 = vadd.f32 %v1945, %v2164
      %v2166 = vpop.f32.mrb[0].mxu0
      %v2167 = vadd.f32 %v1941, %v2166
      %v2168 = vpop.f32.mrb[0].mxu0
      %v2169 = vadd.f32 %v1945, %v2168
      %2170 = vmatprep.mubr.bf16.mxu0 %v1845
      %2171 = vmatmul.mubr.bf16.gmra.mrb[0].mxu0 %v1844
      %v2172 = vpop.f32.mrb[0].mxu0
      %v2173 = vadd.f32 %v1941, %v2172
      %v2174 = vpop.f32.mrb[0].mxu0
      %v2175 = vadd.f32 %v1945, %v2174
      %v2176 = vpop.f32.mrb[0].mxu0
      %v2177 = vadd.f32 %v1941, %v2176
      %v2178 = vpop.f32.mrb[0].mxu0
      %v2179 = vadd.f32 %v1945, %v2178
      %2180 = vmatprep.mubr.bf16.mxu0 %v1847
      %2181 = vmatmul.mubr.bf16.gmra.mrb[0].mxu0 %v1846
      %v2182 = vpop.f32.mrb[0].mxu0
      %v2183 = vadd.f32 %v1941, %v2182
      %v2184 = vpop.f32.mrb[0].mxu0
      %v2185 = vadd.f32 %v1945, %v2184
      %v2186 = vpop.f32.mrb[0].mxu0
      %v2187 = vadd.f32 %v1941, %v2186
      %v2188 = vpop.f32.mrb[0].mxu0
      %v2189 = vadd.f32 %v1945, %v2188
      %2190 = vmatprep.mubr.bf16.mxu0 %v1849
      %2191 = vmatmul.mubr.bf16.gmra.mrb[0].mxu0 %v1848
      %v2192 = vpop.f32.mrb[0].mxu0
      %v2193 = vadd.f32 %v1941, %v2192
      %v2194 = vpop.f32.mrb[0].mxu0
      %v2195 = vadd.f32 %v1945, %v2194
      %v2196 = vpop.f32.mrb[0].mxu0
      %v2197 = vadd.f32 %v1941, %v2196
      %v2198 = vpop.f32.mrb[0].mxu0
      %v2199 = vadd.f32 %v1945, %v2198
      %2200 = vmatprep.mubr.bf16.mxu0 %v1851
      %2201 = vmatmul.mubr.bf16.gmra.mrb[0].mxu0 %v1850
      %v2202 = vpop.f32.mrb[0].mxu0
      %v2203 = vadd.f32 %v1941, %v2202
      %v2204 = vpop.f32.mrb[0].mxu0
      %v2205 = vadd.f32 %v1945, %v2204
      %v2206 = vpop.f32.mrb[0].mxu0
      %v2207 = vadd.f32 %v1941, %v2206
      %v2208 = vpop.f32.mrb[0].mxu0
      %v2209 = vadd.f32 %v1945, %v2208
      %2210 = vmatprep.mubr.bf16.mxu0 %v1853
      %2211 = vmatmul.mubr.bf16.gmra.mrb[0].mxu0 %v1852
      %v2212 = vpop.f32.mrb[0].mxu0
      %v2213 = vadd.f32 %v1941, %v2212
      %v2214 = vpop.f32.mrb[0].mxu0
      %v2215 = vadd.f32 %v1945, %v2214
      %v2216 = vpop.f32.mrb[0].mxu0
      %v2217 = vadd.f32 %v1941, %v2216
      %v2218 = vpop.f32.mrb[0].mxu0
      %v2219 = vadd.f32 %v1945, %v2218
      %2220 = vmatprep.mubr.bf16.mxu0 %v1855
      %2221 = vmatmul.mubr.bf16.gmra.mrb[0].mxu0 %v1854
      %v2222 = vpop.f32.mrb[0].mxu0
      %v2223 = vadd.f32 %v1941, %v2222
      %v2224 = vpop.f32.mrb[0].mxu0
      %v2225 = vadd.f32 %v1945, %v2224
      %v2226 = vpop.f32.mrb[0].mxu0
      %v2227 = vadd.f32 %v1941, %v2226
      %v2228 = vpop.f32.mrb[0].mxu0
      %v2229 = vadd.f32 %v1945, %v2228
      %2230 = vmatprep.mubr.bf16.mxu0 %v1857
      %2231 = vmatmul.mubr.bf16.gmra.mrb[0].mxu0 %v1856
      %v2232 = vpop.f32.mrb[0].mxu0
      %v2233 = vadd.f32 %v1941, %v2232
      %v2234 = vpop.f32.mrb[0].mxu0
      %v2235 = vadd.f32 %v1945, %v2234
      %v2236 = vpop.f32.mrb[0].mxu0
      %v2237 = vadd.f32 %v1941, %v2236
      %v2238 = vpop.f32.mrb[0].mxu0
      %v2239 = vadd.f32 %v1945, %v2238
      %2240 = vmatprep.mubr.bf16.mxu0 %v1859
      %2241 = vmatmul.mubr.bf16.gmra.mrb[0].mxu0 %v1858
      %v2242 = vpop.f32.mrb[0].mxu0
      %v2243 = vadd.f32 %v1941, %v2242
      %v2244 = vpop.f32.mrb[0].mxu0
      %v2245 = vadd.f32 %v1945, %v2244
      %v2246 = vpop.f32.mrb[0].mxu0
      %v2247 = vadd.f32 %v1941, %v2246
      %v2248 = vpop.f32.mrb[0].mxu0
      %v2249 = vadd.f32 %v1945, %v2248
      %2250 = vmatprep.mubr.bf16.mxu0 %v1861
      %2251 = vmatmul.mubr.bf16.gmra.mrb[0].mxu0 %v1860
      %v2252 = vpop.f32.mrb[0].mxu0
      %v2253 = vadd.f32 %v1941, %v2252
      %v2254 = vpop.f32.mrb[0].mxu0
      %v2255 = vadd.f32 %v1945, %v2254
      %v2256 = vpop.f32.mrb[0].mxu0
      %v2257 = vadd.f32 %v1941, %v2256
      %v2258 = vpop.f32.mrb[0].mxu0
      %v2259 = vadd.f32 %v1945, %v2258
      %2260 = vmatprep.mubr.bf16.mxu0 %v1863
      %2261 = vmatmul.mubr.bf16.gmra.mrb[0].mxu0 %v1862
      %v2262 = vpop.f32.mrb[0].mxu0
      %v2263 = vadd.f32 %v1941, %v2262
      %v2264 = vpop.f32.mrb[0].mxu0
      %v2265 = vadd.f32 %v1945, %v2264
      %v2266 = vpop.f32.mrb[0].mxu0
      %v2267 = vadd.f32 %v1941, %v2266
      %v2268 = vpop.f32.mrb[0].mxu0
      %v2269 = vadd.f32 %v1945, %v2268
      %2270 = vmatprep.mubr.bf16.mxu0 %v1865
      %2271 = vmatmul.mubr.bf16.gmra.mrb[0].mxu0 %v1864
      %v2272 = vpop.f32.mrb[0].mxu0
      %v2273 = vadd.f32 %v1941, %v2272
      %v2274 = vpop.f32.mrb[0].mxu0
      %v2275 = vadd.f32 %v1945, %v2274
      %v2276 = vpop.f32.mrb[0].mxu0
      %v2277 = vadd.f32 %v1941, %v2276
      %v2278 = vpop.f32.mrb[0].mxu0
      %v2279 = vadd.f32 %v1945, %v2278
      %2280 = vmatprep.mubr.bf16.mxu0 %v1867
      %2281 = vmatmul.mubr.bf16.gmra.mrb[0].mxu0 %v1866
      %v2282 = vpop.f32.mrb[0].mxu0
      %v2283 = vadd.f32 %v1941, %v2282
      %v2284 = vpop.f32.mrb[0].mxu0
      %v2285 = vadd.f32 %v1945, %v2284
      %v2286 = vpop.f32.mrb[0].mxu0
      %v2287 = vadd.f32 %v1941, %v2286
      %v2288 = vpop.f32.mrb[0].mxu0
      %v2289 = vadd.f32 %v1945, %v2288
      %2290 = vmatprep.mubr.bf16.mxu0 %v1869
      %2291 = vmatmul.mubr.bf16.gmra.mrb[0].mxu0 %v1868
      %v2292 = vpop.f32.mrb[0].mxu0
      %v2293 = vadd.f32 %v1941, %v2292
      %v2294 = vpop.f32.mrb[0].mxu0
      %v2295 = vadd.f32 %v1945, %v2294
      %v2296 = vpop.f32.mrb[0].mxu0
      %v2297 = vadd.f32 %v1941, %v2296
      %v2298 = vpop.f32.mrb[0].mxu0
      %v2299 = vadd.f32 %v1945, %v2298
      %2300 = vmatprep.mubr.bf16.mxu0 %v1871
      %2301 = vmatmul.mubr.bf16.gmra.mrb[0].mxu0 %v1870
      %v2302 = vpop.f32.mrb[0].mxu0
      %v2303 = vadd.f32 %v1941, %v2302
      %v2304 = vpop.f32.mrb[0].mxu0
      %v2305 = vadd.f32 %v1945, %v2304
      %v2306 = vpop.f32.mrb[0].mxu0
      %v2307 = vadd.f32 %v1941, %v2306
      %v2308 = vpop.f32.mrb[0].mxu0
      %v2309 = vadd.f32 %v1945, %v2308
      %2310 = vmatprep.mubr.bf16.mxu0 %v1873
      %2311 = vmatmul.mubr.bf16.gmra.mrb[0].mxu0 %v1872
      %v2312 = vpop.f32.mrb[0].mxu0
      %v2313 = vadd.f32 %v1941, %v2312
      %v2314 = vpop.f32.mrb[0].mxu0
      %v2315 = vadd.f32 %v1945, %v2314
      %v2316 = vpop.f32.mrb[0].mxu0
      %v2317 = vadd.f32 %v1941, %v2316
      %v2318 = vpop.f32.mrb[0].mxu0
      %v2319 = vadd.f32 %v1945, %v2318
      %2320 = vmatprep.mubr.bf16.mxu0 %v1875
      %2321 = vmatmul.mubr.bf16.gmra.mrb[0].mxu0 %v1874
      %v2322 = vpop.f32.mrb[0].mxu0
      %v2323 = vadd.f32 %v1941, %v2322
      %v2324 = vpop.f32.mrb[0].mxu0
      %v2325 = vadd.f32 %v1945, %v2324
      %v2326 = vpop.f32.mrb[0].mxu0
      %v2327 = vadd.f32 %v1941, %v2326
      %v2328 = vpop.f32.mrb[0].mxu0
      %v2329 = vadd.f32 %v1945, %v2328
      %2330 = vmatprep.mubr.bf16.mxu0 %v1877
      %2331 = vmatmul.mubr.bf16.gmra.mrb[0].mxu0 %v1876
      %v2332 = vpop.f32.mrb[0].mxu0
      %v2333 = vadd.f32 %v1941, %v2332
      %v2334 = vpop.f32.mrb[0].mxu0
      %v2335 = vadd.f32 %v1945, %v2334
      %v2336 = vpop.f32.mrb[0].mxu0
      %v2337 = vadd.f32 %v1941, %v2336
      %v2338 = vpop.f32.mrb[0].mxu0
      %v2339 = vadd.f32 %v1945, %v2338
      %2340 = vmatprep.mubr.bf16.mxu0 %v1879
      %2341 = vmatmul.mubr.bf16.gmra.mrb[0].mxu0 %v1878
      %v2342 = vpop.f32.mrb[0].mxu0
      %v2343 = vadd.f32 %v1941, %v2342
      %v2344 = vpop.f32.mrb[0].mxu0
      %v2345 = vadd.f32 %v1945, %v2344
      %v2346 = vpop.f32.mrb[0].mxu0
      %v2347 = vadd.f32 %v1941, %v2346
      %v2348 = vpop.f32.mrb[0].mxu0
      %v2349 = vadd.f32 %v1945, %v2348
      %2350 = vmatprep.mubr.bf16.mxu0 %v1881
      %2351 = vmatmul.mubr.bf16.gmra.mrb[0].mxu0 %v1880
      %v2352 = vpop.f32.mrb[0].mxu0
      %v2353 = vadd.f32 %v1941, %v2352
      %v2354 = vpop.f32.mrb[0].mxu0
      %v2355 = vadd.f32 %v1945, %v2354
      %v2356 = vpop.f32.mrb[0].mxu0
      %v2357 = vadd.f32 %v1941, %v2356
      %v2358 = vpop.f32.mrb[0].mxu0
      %v2359 = vadd.f32 %v1945, %v2358
      %2360 = vmatprep.mubr.bf16.mxu0 %v1883
      %2361 = vmatmul.mubr.bf16.gmra.mrb[0].mxu0 %v1882
      %v2362 = vpop.f32.mrb[0].mxu0
      %v2363 = vadd.f32 %v1941, %v2362
      %v2364 = vpop.f32.mrb[0].mxu0
      %v2365 = vadd.f32 %v1945, %v2364
      %v2366 = vpop.f32.mrb[0].mxu0
      %v2367 = vadd.f32 %v1941, %v2366
      %v2368 = vpop.f32.mrb[0].mxu0
      %v2369 = vadd.f32 %v1945, %v2368
      %2370 = vmatprep.mubr.bf16.mxu0 %v1885
      %2371 = vmatmul.mubr.bf16.gmra.mrb[0].mxu0 %v1884
      %v2372 = vpop.f32.mrb[0].mxu0
      %v2373 = vadd.f32 %v1941, %v2372
      %v2374 = vpop.f32.mrb[0].mxu0
      %v2375 = vadd.f32 %v1945, %v2374
      %v2376 = vpop.f32.mrb[0].mxu0
      %v2377 = vadd.f32 %v1941, %v2376
      %v2378 = vpop.f32.mrb[0].mxu0
      %v2379 = vadd.f32 %v1945, %v2378
      %2380 = vmatprep.mubr.bf16.mxu0 %v1887
      %2381 = vmatmul.mubr.bf16.gmra.mrb[0].mxu0 %v1886
      %v2382 = vpop.f32.mrb[0].mxu0
      %v2383 = vadd.f32 %v1941, %v2382
      %v2384 = vpop.f32.mrb[0].mxu0
      %v2385 = vadd.f32 %v1945, %v2384
      %v2386 = vpop.f32.mrb[0].mxu0
      %v2387 = vadd.f32 %v1941, %v2386
      %v2388 = vpop.f32.mrb[0].mxu0
      %v2389 = vadd.f32 %v1945, %v2388
      %2390 = vmatprep.mubr.bf16.mxu0 %v1889
      %2391 = vmatmul.mubr.bf16.gmra.mrb[0].mxu0 %v1888
      %v2392 = vpop.f32.mrb[0].mxu0
      %v2393 = vadd.f32 %v1941, %v2392
      %v2394 = vpop.f32.mrb[0].mxu0
      %v2395 = vadd.f32 %v1945, %v2394
      %v2396 = vpop.f32.mrb[0].mxu0
      %v2397 = vadd.f32 %v1941, %v2396
      %v2398 = vpop.f32.mrb[0].mxu0
      %v2399 = vadd.f32 %v1945, %v2398
      %2400 = vmatprep.mubr.bf16.mxu0 %v1891
      %2401 = vmatmul.mubr.bf16.gmra.mrb[0].mxu0 %v1890
      %v2402 = vpop.f32.mrb[0].mxu0
      %v2403 = vadd.f32 %v1941, %v2402
      %v2404 = vpop.f32.mrb[0].mxu0
      %v2405 = vadd.f32 %v1945, %v2404
      %v2406 = vpop.f32.mrb[0].mxu0
      %v2407 = vadd.f32 %v1941, %v2406
      %v2408 = vpop.f32.mrb[0].mxu0
      %v2409 = vadd.f32 %v1945, %v2408
      %2410 = vmatprep.mubr.bf16.mxu0 %v1893
      %2411 = vmatmul.mubr.bf16.gmra.mrb[0].mxu0 %v1892
      %v2412 = vpop.f32.mrb[0].mxu0
      %v2413 = vadd.f32 %v1941, %v2412
      %v2414 = vpop.f32.mrb[0].mxu0
      %v2415 = vadd.f32 %v1945, %v2414
      %v2416 = vpop.f32.mrb[0].mxu0
      %v2417 = vadd.f32 %v1941, %v2416
      %v2418 = vpop.f32.mrb[0].mxu0
      %v2419 = vadd.f32 %v1945, %v2418
      %2420 = vmatprep.mubr.bf16.mxu0 %v1895
      %2421 = vmatmul.mubr.bf16.gmra.mrb[0].mxu0 %v1894
      %v2422 = vpop.f32.mrb[0].mxu0
      %v2423 = vadd.f32 %v1941, %v2422
      %v2424 = vpop.f32.mrb[0].mxu0
      %v2425 = vadd.f32 %v1945, %v2424
      %v2426 = vpop.f32.mrb[0].mxu0
      %v2427 = vadd.f32 %v1941, %v2426
      %v2428 = vpop.f32.mrb[0].mxu0
      %v2429 = vadd.f32 %v1945, %v2428
      %2430 = vmatprep.mubr.bf16.mxu0 %v1897
      %2431 = vmatmul.mubr.bf16.gmra.mrb[0].mxu0 %v1896
      %v2432 = vpop.f32.mrb[0].mxu0
      %v2433 = vadd.f32 %v1941, %v2432
      %v2434 = vpop.f32.mrb[0].mxu0
      %v2435 = vadd.f32 %v1945, %v2434
      %v2436 = vpop.f32.mrb[0].mxu0
      %v2437 = vadd.f32 %v1941, %v2436
      %v2438 = vpop.f32.mrb[0].mxu0
      %v2439 = vadd.f32 %v1945, %v2438
      %2440 = vmatprep.mubr.bf16.mxu0 %v1899
      %2441 = vmatmul.mubr.bf16.gmra.mrb[0].mxu0 %v1898
      %v2442 = vpop.f32.mrb[0].mxu0
      %v2443 = vadd.f32 %v1941, %v2442
      %v2444 = vpop.f32.mrb[0].mxu0
      %v2445 = vadd.f32 %v1945, %v2444
      %v2446 = vpop.f32.mrb[0].mxu0
      %v2447 = vadd.f32 %v1941, %v2446
      %v2448 = vpop.f32.mrb[0].mxu0
      %v2449 = vadd.f32 %v1945, %v2448
      %2450 = vmatprep.mubr.bf16.mxu0 %v1901
      %2451 = vmatmul.mubr.bf16.gmra.mrb[0].mxu0 %v1900
      %v2452 = vpop.f32.mrb[0].mxu0
      %v2453 = vadd.f32 %v1941, %v2452
      %v2454 = vpop.f32.mrb[0].mxu0
      %v2455 = vadd.f32 %v1945, %v2454
      %v2456 = vpop.f32.mrb[0].mxu0
      %v2457 = vadd.f32 %v1941, %v2456
      %v2458 = vpop.f32.mrb[0].mxu0
      %v2459 = vadd.f32 %v1945, %v2458
      %2460 = vdwg.mxu0
      %v2461 = vmax.f32 %v2143, 0.0
      %v2462 = vmax.f32 %v2145, 0.0
      %v2463 = vmax.f32 %v2147, 0.0
      %v2464 = vmax.f32 %v2149, 0.0
      %v2465 = vmax.f32 %v2153, 0.0
      %v2466 = vmax.f32 %v2155, 0.0
      %v2467 = vmax.f32 %v2157, 0.0
      %v2468 = vmax.f32 %v2159, 0.0
      %v2469 = vmax.f32 %v2163, 0.0
      %v2470 = vmax.f32 %v2165, 0.0
      %v2471 = vmax.f32 %v2167, 0.0
      %v2472 = vmax.f32 %v2169, 0.0
      %v2473 = vmax.f32 %v2173, 0.0
      %v2474 = vmax.f32 %v2175, 0.0
      %v2475 = vmax.f32 %v2177, 0.0
      %v2476 = vmax.f32 %v2179, 0.0
      %v2477 = vmax.f32 %v2183, 0.0
      %v2478 = vmax.f32 %v2185, 0.0
      %v2479 = vmax.f32 %v2187, 0.0
      %v2480 = vmax.f32 %v2189, 0.0
      %v2481 = vmax.f32 %v2193, 0.0
      %v2482 = vmax.f32 %v2195, 0.0
      %v2483 = vmax.f32 %v2197, 0.0
      %v2484 = vmax.f32 %v2199, 0.0
      %v2485 = vmax.f32 %v2203, 0.0
      %v2486 = vmax.f32 %v2205, 0.0
      %v2487 = vmax.f32 %v2207, 0.0
      %v2488 = vmax.f32 %v2209, 0.0
      %v2489 = vmax.f32 %v2213, 0.0
      %v2490 = vmax.f32 %v2215, 0.0
      %v2491 = vmax.f32 %v2217, 0.0
      %v2492 = vmax.f32 %v2219, 0.0
      %v2493 = vmax.f32 %v2223, 0.0
      %v2494 = vmax.f32 %v2225, 0.0
      %v2495 = vmax.f32 %v2227, 0.0
      %v2496 = vmax.f32 %v2229, 0.0
      %v2497 = vmax.f32 %v2233, 0.0
      %v2498 = vmax.f32 %v2235, 0.0
      %v2499 = vmax.f32 %v2237, 0.0
      %v2500 = vmax.f32 %v2239, 0.0
      %v2501 = vmax.f32 %v2243, 0.0
      %v2502 = vmax.f32 %v2245, 0.0
      %v2503 = vmax.f32 %v2247, 0.0
      %v2504 = vmax.f32 %v2249, 0.0
      %v2505 = vmax.f32 %v2253, 0.0
      %v2506 = vmax.f32 %v2255, 0.0
      %v2507 = vmax.f32 %v2257, 0.0
      %v2508 = vmax.f32 %v2259, 0.0
      %v2509 = vmax.f32 %v2263, 0.0
      %v2510 = vmax.f32 %v2265, 0.0
      %v2511 = vmax.f32 %v2267, 0.0
      %v2512 = vmax.f32 %v2269, 0.0
      %v2513 = vmax.f32 %v2273, 0.0
      %v2514 = vmax.f32 %v2275, 0.0
      %v2515 = vmax.f32 %v2277, 0.0
      %v2516 = vmax.f32 %v2279, 0.0
      %v2517 = vmax.f32 %v2283, 0.0
      %v2518 = vmax.f32 %v2285, 0.0
      %v2519 = vmax.f32 %v2287, 0.0
      %v2520 = vmax.f32 %v2289, 0.0
      %v2521 = vmax.f32 %v2293, 0.0
      %v2522 = vmax.f32 %v2295, 0.0
      %v2523 = vmax.f32 %v2297, 0.0
      %v2524 = vmax.f32 %v2299, 0.0
      %v2525 = vmax.f32 %v2303, 0.0
      %v2526 = vmax.f32 %v2305, 0.0
      %v2527 = vmax.f32 %v2307, 0.0
      %v2528 = vmax.f32 %v2309, 0.0
      %v2529 = vmax.f32 %v2313, 0.0
      %v2530 = vmax.f32 %v2315, 0.0
      %v2531 = vmax.f32 %v2317, 0.0
      %v2532 = vmax.f32 %v2319, 0.0
      %v2533 = vmax.f32 %v2323, 0.0
      %v2534 = vmax.f32 %v2325, 0.0
      %v2535 = vmax.f32 %v2327, 0.0
      %v2536 = vmax.f32 %v2329, 0.0
      %v2537 = vmax.f32 %v2333, 0.0
      %v2538 = vmax.f32 %v2335, 0.0
      %v2539 = vmax.f32 %v2337, 0.0
      %v2540 = vmax.f32 %v2339, 0.0
      %v2541 = vmax.f32 %v2343, 0.0
      %v2542 = vmax.f32 %v2345, 0.0
      %v2543 = vmax.f32 %v2347, 0.0
      %v2544 = vmax.f32 %v2349, 0.0
      %v2545 = vmax.f32 %v2353, 0.0
      %v2546 = vmax.f32 %v2355, 0.0
      %v2547 = vmax.f32 %v2357, 0.0
      %v2548 = vmax.f32 %v2359, 0.0
      %v2549 = vmax.f32 %v2363, 0.0
      %v2550 = vmax.f32 %v2365, 0.0
      %v2551 = vmax.f32 %v2367, 0.0
      %v2552 = vmax.f32 %v2369, 0.0
      %v2553 = vmax.f32 %v2373, 0.0
      %v2554 = vmax.f32 %v2375, 0.0
      %v2555 = vmax.f32 %v2377, 0.0
      %v2556 = vmax.f32 %v2379, 0.0
      %v2557 = vmax.f32 %v2383, 0.0
      %v2558 = vmax.f32 %v2385, 0.0
      %v2559 = vmax.f32 %v2387, 0.0
      %v2560 = vmax.f32 %v2389, 0.0
      %v2561 = vmax.f32 %v2393, 0.0
      %v2562 = vmax.f32 %v2395, 0.0
      %v2563 = vmax.f32 %v2397, 0.0
      %v2564 = vmax.f32 %v2399, 0.0
      %v2565 = vmax.f32 %v2403, 0.0
      %v2566 = vmax.f32 %v2405, 0.0
      %v2567 = vmax.f32 %v2407, 0.0
      %v2568 = vmax.f32 %v2409, 0.0
      %v2569 = vmax.f32 %v2413, 0.0
      %v2570 = vmax.f32 %v2415, 0.0
      %v2571 = vmax.f32 %v2417, 0.0
      %v2572 = vmax.f32 %v2419, 0.0
      %v2573 = vmax.f32 %v2423, 0.0
      %v2574 = vmax.f32 %v2425, 0.0
      %v2575 = vmax.f32 %v2427, 0.0
      %v2576 = vmax.f32 %v2429, 0.0
      %v2577 = vmax.f32 %v2433, 0.0
      %v2578 = vmax.f32 %v2435, 0.0
      %v2579 = vmax.f32 %v2437, 0.0
      %v2580 = vmax.f32 %v2439, 0.0
      %v2581 = vmax.f32 %v2443, 0.0
      %v2582 = vmax.f32 %v2445, 0.0
      %v2583 = vmax.f32 %v2447, 0.0
      %v2584 = vmax.f32 %v2449, 0.0
      %v2585 = vmax.f32 %v2453, 0.0
      %v2586 = vmax.f32 %v2455, 0.0
      %v2587 = vmax.f32 %v2457, 0.0
      %v2588 = vmax.f32 %v2459, 0.0
      %v2589 = vpack.c.bf16 %v2463, %v2461
      %v2590 = vpack.c.bf16 %v2464, %v2462
      %v2591 = vpack.c.bf16 %v2467, %v2465
      %v2592 = vpack.c.bf16 %v2468, %v2466
      %v2593 = vpack.c.bf16 %v2471, %v2469
      %v2594 = vpack.c.bf16 %v2472, %v2470
      %v2595 = vpack.c.bf16 %v2475, %v2473
      %v2596 = vpack.c.bf16 %v2476, %v2474
      %v2597 = vpack.c.bf16 %v2479, %v2477
      %v2598 = vpack.c.bf16 %v2480, %v2478
      %v2599 = vpack.c.bf16 %v2483, %v2481
      %v2600 = vpack.c.bf16 %v2484, %v2482
      %v2601 = vpack.c.bf16 %v2487, %v2485
      %v2602 = vpack.c.bf16 %v2488, %v2486
      %v2603 = vpack.c.bf16 %v2491, %v2489
      %v2604 = vpack.c.bf16 %v2492, %v2490
      %v2605 = vpack.c.bf16 %v2495, %v2493
      %v2606 = vpack.c.bf16 %v2496, %v2494
      %v2607 = vpack.c.bf16 %v2499, %v2497
      %v2608 = vpack.c.bf16 %v2500, %v2498
      %v2609 = vpack.c.bf16 %v2503, %v2501
      %v2610 = vpack.c.bf16 %v2504, %v2502
      %v2611 = vpack.c.bf16 %v2507, %v2505
      %v2612 = vpack.c.bf16 %v2508, %v2506
      %v2613 = vpack.c.bf16 %v2511, %v2509
      %v2614 = vpack.c.bf16 %v2512, %v2510
      %v2615 = vpack.c.bf16 %v2515, %v2513
      %v2616 = vpack.c.bf16 %v2516, %v2514
      %v2617 = vpack.c.bf16 %v2519, %v2517
      %v2618 = vpack.c.bf16 %v2520, %v2518
      %v2619 = vpack.c.bf16 %v2523, %v2521
      %v2620 = vpack.c.bf16 %v2524, %v2522
      %v2621 = vpack.c.bf16 %v2527, %v2525
      %v2622 = vpack.c.bf16 %v2528, %v2526
      %v2623 = vpack.c.bf16 %v2531, %v2529
      %v2624 = vpack.c.bf16 %v2532, %v2530
      %v2625 = vpack.c.bf16 %v2535, %v2533
      %v2626 = vpack.c.bf16 %v2536, %v2534
      %v2627 = vpack.c.bf16 %v2539, %v2537
      %v2628 = vpack.c.bf16 %v2540, %v2538
      %v2629 = vpack.c.bf16 %v2543, %v2541
      %v2630 = vpack.c.bf16 %v2544, %v2542
      %v2631 = vpack.c.bf16 %v2547, %v2545
      %v2632 = vpack.c.bf16 %v2548, %v2546
      %v2633 = vpack.c.bf16 %v2551, %v2549
      %v2634 = vpack.c.bf16 %v2552, %v2550
      %v2635 = vpack.c.bf16 %v2555, %v2553
      %v2636 = vpack.c.bf16 %v2556, %v2554
      %v2637 = vpack.c.bf16 %v2559, %v2557
      %v2638 = vpack.c.bf16 %v2560, %v2558
      %v2639 = vpack.c.bf16 %v2563, %v2561
      %v2640 = vpack.c.bf16 %v2564, %v2562
      %v2641 = vpack.c.bf16 %v2567, %v2565
      %v2642 = vpack.c.bf16 %v2568, %v2566
      %v2643 = vpack.c.bf16 %v2571, %v2569
      %v2644 = vpack.c.bf16 %v2572, %v2570
      %v2645 = vpack.c.bf16 %v2575, %v2573
      %v2646 = vpack.c.bf16 %v2576, %v2574
      %v2647 = vpack.c.bf16 %v2579, %v2577
      %v2648 = vpack.c.bf16 %v2580, %v2578
      %v2649 = vpack.c.bf16 %v2583, %v2581
      %v2650 = vpack.c.bf16 %v2584, %v2582
      %v2651 = vpack.c.bf16 %v2587, %v2585
      %v2652 = vpack.c.bf16 %v2588, %v2586
      %s2653 = scalar_lea.vmem %s4, 512
      %v2654 = vld [vmem:[%s2653] sm:$0xff]
      %v2655 = vld [vmem:[%s2653 + $0x8] sm:$0xff]
      %v2656 = vld [vmem:[%s2653 + $0x10] sm:$0xff]
      %v2657 = vld [vmem:[%s2653 + $0x18] sm:$0xff]
      %v2658 = vld [vmem:[%s2653 + $0x20] sm:$0xff]
      %v2659 = vld [vmem:[%s2653 + $0x28] sm:$0xff]
      %v2660 = vld [vmem:[%s2653 + $0x30] sm:$0xff]
      %v2661 = vld [vmem:[%s2653 + $0x38] sm:$0xff]
      %v2662 = vld [vmem:[%s2653 + $0x40] sm:$0xff]
      %v2663 = vld [vmem:[%s2653 + $0x48] sm:$0xff]
      %v2664 = vld [vmem:[%s2653 + $0x50] sm:$0xff]
      %v2665 = vld [vmem:[%s2653 + $0x58] sm:$0xff]
      %v2666 = vld [vmem:[%s2653 + $0x60] sm:$0xff]
      %v2667 = vld [vmem:[%s2653 + $0x68] sm:$0xff]
      %v2668 = vld [vmem:[%s2653 + $0x70] sm:$0xff]
      %v2669 = vld [vmem:[%s2653 + $0x78] sm:$0xff]
      %v2670 = vld [vmem:[%s2653 + $0x80] sm:$0xff]
      %v2671 = vld [vmem:[%s2653 + $0x88] sm:$0xff]
      %v2672 = vld [vmem:[%s2653 + $0x90] sm:$0xff]
      %v2673 = vld [vmem:[%s2653 + $0x98] sm:$0xff]
      %v2674 = vld [vmem:[%s2653 + $0xa0] sm:$0xff]
      %v2675 = vld [vmem:[%s2653 + $0xa8] sm:$0xff]
      %v2676 = vld [vmem:[%s2653 + $0xb0] sm:$0xff]
      %v2677 = vld [vmem:[%s2653 + $0xb8] sm:$0xff]
      %v2678 = vld [vmem:[%s2653 + $0xc0] sm:$0xff]
      %v2679 = vld [vmem:[%s2653 + $0xc8] sm:$0xff]
      %v2680 = vld [vmem:[%s2653 + $0xd0] sm:$0xff]
      %v2681 = vld [vmem:[%s2653 + $0xd8] sm:$0xff]
      %v2682 = vld [vmem:[%s2653 + $0xe0] sm:$0xff]
      %v2683 = vld [vmem:[%s2653 + $0xe8] sm:$0xff]
      %v2684 = vld [vmem:[%s2653 + $0xf0] sm:$0xff]
      %v2685 = vld [vmem:[%s2653 + $0xf8] sm:$0xff]
      %s2686 = scalar_lea.vmem %s5, 4
      %v2687 = vld [vmem:[%s2686] sm:$0x3]
      %v2689 = vlaneseq
      %v2690 = vshrl.u32 %v2689, 7
      %v2691 = vsub.s32 0, %v2690
      %v2692 = vrot.slane %v2687, %v2691
      %v2693 = vlaneseq
      %v2694 = vshrl.u32 %v2693, 7
      %v2695 = vsub.s32 1, %v2694
      %v2696 = vrot.slane %v2687, %v2695
      %v2731 = vunpack.c.l.b16 %v2654
      %v2732 = vunpack.c.h.b16 %v2654
      %v2733 = vunpack.c.l.b16 %v2655
      %v2734 = vunpack.c.h.b16 %v2655
      %v2735 = vunpack.c.l.b16 %v2656
      %v2736 = vunpack.c.h.b16 %v2656
      %v2737 = vunpack.c.l.b16 %v2657
      %v2738 = vunpack.c.h.b16 %v2657
      %v2739 = vunpack.c.l.b16 %v2658
      %v2740 = vunpack.c.h.b16 %v2658
      %v2741 = vunpack.c.l.b16 %v2659
      %v2742 = vunpack.c.h.b16 %v2659
      %v2743 = vunpack.c.l.b16 %v2660
      %v2744 = vunpack.c.h.b16 %v2660
      %v2745 = vunpack.c.l.b16 %v2661
      %v2746 = vunpack.c.h.b16 %v2661
      %v2747 = vunpack.c.l.b16 %v2662
      %v2748 = vunpack.c.h.b16 %v2662
      %v2749 = vunpack.c.l.b16 %v2663
      %v2750 = vunpack.c.h.b16 %v2663
      %v2751 = vunpack.c.l.b16 %v2664
      %v2752 = vunpack.c.h.b16 %v2664
      %v2753 = vunpack.c.l.b16 %v2665
      %v2754 = vunpack.c.h.b16 %v2665
      %v2755 = vunpack.c.l.b16 %v2666
      %v2756 = vunpack.c.h.b16 %v2666
      %v2757 = vunpack.c.l.b16 %v2667
      %v2758 = vunpack.c.h.b16 %v2667
      %v2759 = vunpack.c.l.b16 %v2668
      %v2760 = vunpack.c.h.b16 %v2668
      %v2761 = vunpack.c.l.b16 %v2669
      %v2762 = vunpack.c.h.b16 %v2669
      %v2763 = vunpack.c.l.b16 %v2670
      %v2764 = vunpack.c.h.b16 %v2670
      %v2765 = vunpack.c.l.b16 %v2671
      %v2766 = vunpack.c.h.b16 %v2671
      %v2767 = vunpack.c.l.b16 %v2672
      %v2768 = vunpack.c.h.b16 %v2672
      %v2769 = vunpack.c.l.b16 %v2673
      %v2770 = vunpack.c.h.b16 %v2673
      %v2771 = vunpack.c.l.b16 %v2674
      %v2772 = vunpack.c.h.b16 %v2674
      %v2773 = vunpack.c.l.b16 %v2675
      %v2774 = vunpack.c.h.b16 %v2675
      %v2775 = vunpack.c.l.b16 %v2676
      %v2776 = vunpack.c.h.b16 %v2676
      %v2777 = vunpack.c.l.b16 %v2677
      %v2778 = vunpack.c.h.b16 %v2677
      %v2779 = vunpack.c.l.b16 %v2678
      %v2780 = vunpack.c.h.b16 %v2678
      %v2781 = vunpack.c.l.b16 %v2679
      %v2782 = vunpack.c.h.b16 %v2679
      %v2783 = vunpack.c.l.b16 %v2680
      %v2784 = vunpack.c.h.b16 %v2680
      %v2785 = vunpack.c.l.b16 %v2681
      %v2786 = vunpack.c.h.b16 %v2681
      %v2787 = vunpack.c.l.b16 %v2682
      %v2788 = vunpack.c.h.b16 %v2682
      %v2789 = vunpack.c.l.b16 %v2683
      %v2790 = vunpack.c.h.b16 %v2683
      %v2791 = vunpack.c.l.b16 %v2684
      %v2792 = vunpack.c.h.b16 %v2684
      %v2793 = vunpack.c.l.b16 %v2685
      %v2794 = vunpack.c.h.b16 %v2685
      %v2795 = vpack.c.b16 %v2733, %v2731
      %v2796 = vpack.c.b16 %v2734, %v2732
      %v2797 = vpack.c.b16 %v2737, %v2735
      %v2798 = vpack.c.b16 %v2738, %v2736
      %v2799 = vpack.c.b16 %v2741, %v2739
      %v2800 = vpack.c.b16 %v2742, %v2740
      %v2801 = vpack.c.b16 %v2745, %v2743
      %v2802 = vpack.c.b16 %v2746, %v2744
      %v2803 = vpack.c.b16 %v2749, %v2747
      %v2804 = vpack.c.b16 %v2750, %v2748
      %v2805 = vpack.c.b16 %v2753, %v2751
      %v2806 = vpack.c.b16 %v2754, %v2752
      %v2807 = vpack.c.b16 %v2757, %v2755
      %v2808 = vpack.c.b16 %v2758, %v2756
      %v2809 = vpack.c.b16 %v2761, %v2759
      %v2810 = vpack.c.b16 %v2762, %v2760
      %v2811 = vpack.c.b16 %v2765, %v2763
      %v2812 = vpack.c.b16 %v2766, %v2764
      %v2813 = vpack.c.b16 %v2769, %v2767
      %v2814 = vpack.c.b16 %v2770, %v2768
      %v2815 = vpack.c.b16 %v2773, %v2771
      %v2816 = vpack.c.b16 %v2774, %v2772
      %v2817 = vpack.c.b16 %v2777, %v2775
      %v2818 = vpack.c.b16 %v2778, %v2776
      %v2819 = vpack.c.b16 %v2781, %v2779
      %v2820 = vpack.c.b16 %v2782, %v2780
      %v2821 = vpack.c.b16 %v2785, %v2783
      %v2822 = vpack.c.b16 %v2786, %v2784
      %v2823 = vpack.c.b16 %v2789, %v2787
      %v2824 = vpack.c.b16 %v2790, %v2788
      %v2825 = vpack.c.b16 %v2793, %v2791
      %v2826 = vpack.c.b16 %v2794, %v2792
      %2859 = vmatprep.subr.bf16.mxu0 %v2796
      %2860 = vmatpush1.bf16.msra.mxu0 %v2795
      %2861 = vmatprep.subr.bf16.mxu0 %v2798
      %2862 = vmatpush1.bf16.msra.mxu0 %v2797
      %2863 = vmatprep.subr.bf16.mxu0 %v2800
      %2864 = vmatpush1.bf16.msra.mxu0 %v2799
      %2865 = vmatprep.subr.bf16.mxu0 %v2802
      %2866 = vmatpush1.bf16.msra.mxu0 %v2801
      %2867 = vmatprep.subr.bf16.mxu0 %v2804
      %2868 = vmatpush1.bf16.msra.mxu0 %v2803
      %2869 = vmatprep.subr.bf16.mxu0 %v2806
      %2870 = vmatpush1.bf16.msra.mxu0 %v2805
      %2871 = vmatprep.subr.bf16.mxu0 %v2808
      %2872 = vmatpush1.bf16.msra.mxu0 %v2807
      %2873 = vmatprep.subr.bf16.mxu0 %v2810
      %2874 = vmatpush1.bf16.msra.mxu0 %v2809
      %2875 = vmatprep.subr.bf16.mxu0 %v2812
      %2876 = vmatpush1.bf16.msra.mxu0 %v2811
      %2877 = vmatprep.subr.bf16.mxu0 %v2814
      %2878 = vmatpush1.bf16.msra.mxu0 %v2813
      %2879 = vmatprep.subr.bf16.mxu0 %v2816
      %2880 = vmatpush1.bf16.msra.mxu0 %v2815
      %2881 = vmatprep.subr.bf16.mxu0 %v2818
      %2882 = vmatpush1.bf16.msra.mxu0 %v2817
      %2883 = vmatprep.subr.bf16.mxu0 %v2820
      %2884 = vmatpush1.bf16.msra.mxu0 %v2819
      %2885 = vmatprep.subr.bf16.mxu0 %v2822
      %2886 = vmatpush1.bf16.msra.mxu0 %v2821
      %2887 = vmatprep.subr.bf16.mxu0 %v2824
      %2888 = vmatpush1.bf16.msra.mxu0 %v2823
      %2889 = vmatprep.subr.bf16.mxu0 %v2826
      %2890 = vmatpush1.bf16.msra.mxu0 %v2825
      %2891 = vmatprep.mubr.bf16.mxu0 %v2590
      %2892 = vmatmul.mubr.bf16.gmra.mrb[0].mxu0 %v2589
      %v2893 = vpop.f32.mrb[0].mxu0
      %v2894 = vadd.f32 %v2692, %v2893
      %v2895 = vpop.f32.mrb[0].mxu0
      %v2896 = vadd.f32 %v2696, %v2895
      %v2897 = vpop.f32.mrb[0].mxu0
      %v2898 = vadd.f32 %v2692, %v2897
      %v2899 = vpop.f32.mrb[0].mxu0
      %v2900 = vadd.f32 %v2696, %v2899
      %2901 = vmatprep.mubr.bf16.mxu0 %v2592
      %2902 = vmatmul.mubr.bf16.gmra.mrb[0].mxu0 %v2591
      %v2903 = vpop.f32.mrb[0].mxu0
      %v2904 = vadd.f32 %v2692, %v2903
      %v2905 = vpop.f32.mrb[0].mxu0
      %v2906 = vadd.f32 %v2696, %v2905
      %v2907 = vpop.f32.mrb[0].mxu0
      %v2908 = vadd.f32 %v2692, %v2907
      %v2909 = vpop.f32.mrb[0].mxu0
      %v2910 = vadd.f32 %v2696, %v2909
      %2911 = vmatprep.mubr.bf16.mxu0 %v2594
      %2912 = vmatmul.mubr.bf16.gmra.mrb[0].mxu0 %v2593
      %v2913 = vpop.f32.mrb[0].mxu0
      %v2914 = vadd.f32 %v2692, %v2913
      %v2915 = vpop.f32.mrb[0].mxu0
      %v2916 = vadd.f32 %v2696, %v2915
      %v2917 = vpop.f32.mrb[0].mxu0
      %v2918 = vadd.f32 %v2692, %v2917
      %v2919 = vpop.f32.mrb[0].mxu0
      %v2920 = vadd.f32 %v2696, %v2919
      %2921 = vmatprep.mubr.bf16.mxu0 %v2596
      %2922 = vmatmul.mubr.bf16.gmra.mrb[0].mxu0 %v2595
      %v2923 = vpop.f32.mrb[0].mxu0
      %v2924 = vadd.f32 %v2692, %v2923
      %v2925 = vpop.f32.mrb[0].mxu0
      %v2926 = vadd.f32 %v2696, %v2925
      %v2927 = vpop.f32.mrb[0].mxu0
      %v2928 = vadd.f32 %v2692, %v2927
      %v2929 = vpop.f32.mrb[0].mxu0
      %v2930 = vadd.f32 %v2696, %v2929
      %2931 = vmatprep.mubr.bf16.mxu0 %v2598
      %2932 = vmatmul.mubr.bf16.gmra.mrb[0].mxu0 %v2597
      %v2933 = vpop.f32.mrb[0].mxu0
      %v2934 = vadd.f32 %v2692, %v2933
      %v2935 = vpop.f32.mrb[0].mxu0
      %v2936 = vadd.f32 %v2696, %v2935
      %v2937 = vpop.f32.mrb[0].mxu0
      %v2938 = vadd.f32 %v2692, %v2937
      %v2939 = vpop.f32.mrb[0].mxu0
      %v2940 = vadd.f32 %v2696, %v2939
      %2941 = vmatprep.mubr.bf16.mxu0 %v2600
      %2942 = vmatmul.mubr.bf16.gmra.mrb[0].mxu0 %v2599
      %v2943 = vpop.f32.mrb[0].mxu0
      %v2944 = vadd.f32 %v2692, %v2943
      %v2945 = vpop.f32.mrb[0].mxu0
      %v2946 = vadd.f32 %v2696, %v2945
      %v2947 = vpop.f32.mrb[0].mxu0
      %v2948 = vadd.f32 %v2692, %v2947
      %v2949 = vpop.f32.mrb[0].mxu0
      %v2950 = vadd.f32 %v2696, %v2949
      %2951 = vmatprep.mubr.bf16.mxu0 %v2602
      %2952 = vmatmul.mubr.bf16.gmra.mrb[0].mxu0 %v2601
      %v2953 = vpop.f32.mrb[0].mxu0
      %v2954 = vadd.f32 %v2692, %v2953
      %v2955 = vpop.f32.mrb[0].mxu0
      %v2956 = vadd.f32 %v2696, %v2955
      %v2957 = vpop.f32.mrb[0].mxu0
      %v2958 = vadd.f32 %v2692, %v2957
      %v2959 = vpop.f32.mrb[0].mxu0
      %v2960 = vadd.f32 %v2696, %v2959
      %2961 = vmatprep.mubr.bf16.mxu0 %v2604
      %2962 = vmatmul.mubr.bf16.gmra.mrb[0].mxu0 %v2603
      %v2963 = vpop.f32.mrb[0].mxu0
      %v2964 = vadd.f32 %v2692, %v2963
      %v2965 = vpop.f32.mrb[0].mxu0
      %v2966 = vadd.f32 %v2696, %v2965
      %v2967 = vpop.f32.mrb[0].mxu0
      %v2968 = vadd.f32 %v2692, %v2967
      %v2969 = vpop.f32.mrb[0].mxu0
      %v2970 = vadd.f32 %v2696, %v2969
      %2971 = vmatprep.mubr.bf16.mxu0 %v2606
      %2972 = vmatmul.mubr.bf16.gmra.mrb[0].mxu0 %v2605
      %v2973 = vpop.f32.mrb[0].mxu0
      %v2974 = vadd.f32 %v2692, %v2973
      %v2975 = vpop.f32.mrb[0].mxu0
      %v2976 = vadd.f32 %v2696, %v2975
      %v2977 = vpop.f32.mrb[0].mxu0
      %v2978 = vadd.f32 %v2692, %v2977
      %v2979 = vpop.f32.mrb[0].mxu0
      %v2980 = vadd.f32 %v2696, %v2979
      %2981 = vmatprep.mubr.bf16.mxu0 %v2608
      %2982 = vmatmul.mubr.bf16.gmra.mrb[0].mxu0 %v2607
      %v2983 = vpop.f32.mrb[0].mxu0
      %v2984 = vadd.f32 %v2692, %v2983
      %v2985 = vpop.f32.mrb[0].mxu0
      %v2986 = vadd.f32 %v2696, %v2985
      %v2987 = vpop.f32.mrb[0].mxu0
      %v2988 = vadd.f32 %v2692, %v2987
      %v2989 = vpop.f32.mrb[0].mxu0
      %v2990 = vadd.f32 %v2696, %v2989
      %2991 = vmatprep.mubr.bf16.mxu0 %v2610
      %2992 = vmatmul.mubr.bf16.gmra.mrb[0].mxu0 %v2609
      %v2993 = vpop.f32.mrb[0].mxu0
      %v2994 = vadd.f32 %v2692, %v2993
      %v2995 = vpop.f32.mrb[0].mxu0
      %v2996 = vadd.f32 %v2696, %v2995
      %v2997 = vpop.f32.mrb[0].mxu0
      %v2998 = vadd.f32 %v2692, %v2997
      %v2999 = vpop.f32.mrb[0].mxu0
      %v3000 = vadd.f32 %v2696, %v2999
      %3001 = vmatprep.mubr.bf16.mxu0 %v2612
      %3002 = vmatmul.mubr.bf16.gmra.mrb[0].mxu0 %v2611
      %v3003 = vpop.f32.mrb[0].mxu0
      %v3004 = vadd.f32 %v2692, %v3003
      %v3005 = vpop.f32.mrb[0].mxu0
      %v3006 = vadd.f32 %v2696, %v3005
      %v3007 = vpop.f32.mrb[0].mxu0
      %v3008 = vadd.f32 %v2692, %v3007
      %v3009 = vpop.f32.mrb[0].mxu0
      %v3010 = vadd.f32 %v2696, %v3009
      %3011 = vmatprep.mubr.bf16.mxu0 %v2614
      %3012 = vmatmul.mubr.bf16.gmra.mrb[0].mxu0 %v2613
      %v3013 = vpop.f32.mrb[0].mxu0
      %v3014 = vadd.f32 %v2692, %v3013
      %v3015 = vpop.f32.mrb[0].mxu0
      %v3016 = vadd.f32 %v2696, %v3015
      %v3017 = vpop.f32.mrb[0].mxu0
      %v3018 = vadd.f32 %v2692, %v3017
      %v3019 = vpop.f32.mrb[0].mxu0
      %v3020 = vadd.f32 %v2696, %v3019
      %3021 = vmatprep.mubr.bf16.mxu0 %v2616
      %3022 = vmatmul.mubr.bf16.gmra.mrb[0].mxu0 %v2615
      %v3023 = vpop.f32.mrb[0].mxu0
      %v3024 = vadd.f32 %v2692, %v3023
      %v3025 = vpop.f32.mrb[0].mxu0
      %v3026 = vadd.f32 %v2696, %v3025
      %v3027 = vpop.f32.mrb[0].mxu0
      %v3028 = vadd.f32 %v2692, %v3027
      %v3029 = vpop.f32.mrb[0].mxu0
      %v3030 = vadd.f32 %v2696, %v3029
      %3031 = vmatprep.mubr.bf16.mxu0 %v2618
      %3032 = vmatmul.mubr.bf16.gmra.mrb[0].mxu0 %v2617
      %v3033 = vpop.f32.mrb[0].mxu0
      %v3034 = vadd.f32 %v2692, %v3033
      %v3035 = vpop.f32.mrb[0].mxu0
      %v3036 = vadd.f32 %v2696, %v3035
      %v3037 = vpop.f32.mrb[0].mxu0
      %v3038 = vadd.f32 %v2692, %v3037
      %v3039 = vpop.f32.mrb[0].mxu0
      %v3040 = vadd.f32 %v2696, %v3039
      %3041 = vmatprep.mubr.bf16.mxu0 %v2620
      %3042 = vmatmul.mubr.bf16.gmra.mrb[0].mxu0 %v2619
      %v3043 = vpop.f32.mrb[0].mxu0
      %v3044 = vadd.f32 %v2692, %v3043
      %v3045 = vpop.f32.mrb[0].mxu0
      %v3046 = vadd.f32 %v2696, %v3045
      %v3047 = vpop.f32.mrb[0].mxu0
      %v3048 = vadd.f32 %v2692, %v3047
      %v3049 = vpop.f32.mrb[0].mxu0
      %v3050 = vadd.f32 %v2696, %v3049
      %3051 = vmatprep.mubr.bf16.mxu0 %v2622
      %3052 = vmatmul.mubr.bf16.gmra.mrb[0].mxu0 %v2621
      %v3053 = vpop.f32.mrb[0].mxu0
      %v3054 = vadd.f32 %v2692, %v3053
      %v3055 = vpop.f32.mrb[0].mxu0
      %v3056 = vadd.f32 %v2696, %v3055
      %v3057 = vpop.f32.mrb[0].mxu0
      %v3058 = vadd.f32 %v2692, %v3057
      %v3059 = vpop.f32.mrb[0].mxu0
      %v3060 = vadd.f32 %v2696, %v3059
      %3061 = vmatprep.mubr.bf16.mxu0 %v2624
      %3062 = vmatmul.mubr.bf16.gmra.mrb[0].mxu0 %v2623
      %v3063 = vpop.f32.mrb[0].mxu0
      %v3064 = vadd.f32 %v2692, %v3063
      %v3065 = vpop.f32.mrb[0].mxu0
      %v3066 = vadd.f32 %v2696, %v3065
      %v3067 = vpop.f32.mrb[0].mxu0
      %v3068 = vadd.f32 %v2692, %v3067
      %v3069 = vpop.f32.mrb[0].mxu0
      %v3070 = vadd.f32 %v2696, %v3069
      %3071 = vmatprep.mubr.bf16.mxu0 %v2626
      %3072 = vmatmul.mubr.bf16.gmra.mrb[0].mxu0 %v2625
      %v3073 = vpop.f32.mrb[0].mxu0
      %v3074 = vadd.f32 %v2692, %v3073
      %v3075 = vpop.f32.mrb[0].mxu0
      %v3076 = vadd.f32 %v2696, %v3075
      %v3077 = vpop.f32.mrb[0].mxu0
      %v3078 = vadd.f32 %v2692, %v3077
      %v3079 = vpop.f32.mrb[0].mxu0
      %v3080 = vadd.f32 %v2696, %v3079
      %3081 = vmatprep.mubr.bf16.mxu0 %v2628
      %3082 = vmatmul.mubr.bf16.gmra.mrb[0].mxu0 %v2627
      %v3083 = vpop.f32.mrb[0].mxu0
      %v3084 = vadd.f32 %v2692, %v3083
      %v3085 = vpop.f32.mrb[0].mxu0
      %v3086 = vadd.f32 %v2696, %v3085
      %v3087 = vpop.f32.mrb[0].mxu0
      %v3088 = vadd.f32 %v2692, %v3087
      %v3089 = vpop.f32.mrb[0].mxu0
      %v3090 = vadd.f32 %v2696, %v3089
      %3091 = vmatprep.mubr.bf16.mxu0 %v2630
      %3092 = vmatmul.mubr.bf16.gmra.mrb[0].mxu0 %v2629
      %v3093 = vpop.f32.mrb[0].mxu0
      %v3094 = vadd.f32 %v2692, %v3093
      %v3095 = vpop.f32.mrb[0].mxu0
      %v3096 = vadd.f32 %v2696, %v3095
      %v3097 = vpop.f32.mrb[0].mxu0
      %v3098 = vadd.f32 %v2692, %v3097
      %v3099 = vpop.f32.mrb[0].mxu0
      %v3100 = vadd.f32 %v2696, %v3099
      %3101 = vmatprep.mubr.bf16.mxu0 %v2632
      %3102 = vmatmul.mubr.bf16.gmra.mrb[0].mxu0 %v2631
      %v3103 = vpop.f32.mrb[0].mxu0
      %v3104 = vadd.f32 %v2692, %v3103
      %v3105 = vpop.f32.mrb[0].mxu0
      %v3106 = vadd.f32 %v2696, %v3105
      %v3107 = vpop.f32.mrb[0].mxu0
      %v3108 = vadd.f32 %v2692, %v3107
      %v3109 = vpop.f32.mrb[0].mxu0
      %v3110 = vadd.f32 %v2696, %v3109
      %3111 = vmatprep.mubr.bf16.mxu0 %v2634
      %3112 = vmatmul.mubr.bf16.gmra.mrb[0].mxu0 %v2633
      %v3113 = vpop.f32.mrb[0].mxu0
      %v3114 = vadd.f32 %v2692, %v3113
      %v3115 = vpop.f32.mrb[0].mxu0
      %v3116 = vadd.f32 %v2696, %v3115
      %v3117 = vpop.f32.mrb[0].mxu0
      %v3118 = vadd.f32 %v2692, %v3117
      %v3119 = vpop.f32.mrb[0].mxu0
      %v3120 = vadd.f32 %v2696, %v3119
      %3121 = vmatprep.mubr.bf16.mxu0 %v2636
      %3122 = vmatmul.mubr.bf16.gmra.mrb[0].mxu0 %v2635
      %v3123 = vpop.f32.mrb[0].mxu0
      %v3124 = vadd.f32 %v2692, %v3123
      %v3125 = vpop.f32.mrb[0].mxu0
      %v3126 = vadd.f32 %v2696, %v3125
      %v3127 = vpop.f32.mrb[0].mxu0
      %v3128 = vadd.f32 %v2692, %v3127
      %v3129 = vpop.f32.mrb[0].mxu0
      %v3130 = vadd.f32 %v2696, %v3129
      %3131 = vmatprep.mubr.bf16.mxu0 %v2638
      %3132 = vmatmul.mubr.bf16.gmra.mrb[0].mxu0 %v2637
      %v3133 = vpop.f32.mrb[0].mxu0
      %v3134 = vadd.f32 %v2692, %v3133
      %v3135 = vpop.f32.mrb[0].mxu0
      %v3136 = vadd.f32 %v2696, %v3135
      %v3137 = vpop.f32.mrb[0].mxu0
      %v3138 = vadd.f32 %v2692, %v3137
      %v3139 = vpop.f32.mrb[0].mxu0
      %v3140 = vadd.f32 %v2696, %v3139
      %3141 = vmatprep.mubr.bf16.mxu0 %v2640
      %3142 = vmatmul.mubr.bf16.gmra.mrb[0].mxu0 %v2639
      %v3143 = vpop.f32.mrb[0].mxu0
      %v3144 = vadd.f32 %v2692, %v3143
      %v3145 = vpop.f32.mrb[0].mxu0
      %v3146 = vadd.f32 %v2696, %v3145
      %v3147 = vpop.f32.mrb[0].mxu0
      %v3148 = vadd.f32 %v2692, %v3147
      %v3149 = vpop.f32.mrb[0].mxu0
      %v3150 = vadd.f32 %v2696, %v3149
      %3151 = vmatprep.mubr.bf16.mxu0 %v2642
      %3152 = vmatmul.mubr.bf16.gmra.mrb[0].mxu0 %v2641
      %v3153 = vpop.f32.mrb[0].mxu0
      %v3154 = vadd.f32 %v2692, %v3153
      %v3155 = vpop.f32.mrb[0].mxu0
      %v3156 = vadd.f32 %v2696, %v3155
      %v3157 = vpop.f32.mrb[0].mxu0
      %v3158 = vadd.f32 %v2692, %v3157
      %v3159 = vpop.f32.mrb[0].mxu0
      %v3160 = vadd.f32 %v2696, %v3159
      %3161 = vmatprep.mubr.bf16.mxu0 %v2644
      %3162 = vmatmul.mubr.bf16.gmra.mrb[0].mxu0 %v2643
      %v3163 = vpop.f32.mrb[0].mxu0
      %v3164 = vadd.f32 %v2692, %v3163
      %v3165 = vpop.f32.mrb[0].mxu0
      %v3166 = vadd.f32 %v2696, %v3165
      %v3167 = vpop.f32.mrb[0].mxu0
      %v3168 = vadd.f32 %v2692, %v3167
      %v3169 = vpop.f32.mrb[0].mxu0
      %v3170 = vadd.f32 %v2696, %v3169
      %3171 = vmatprep.mubr.bf16.mxu0 %v2646
      %3172 = vmatmul.mubr.bf16.gmra.mrb[0].mxu0 %v2645
      %v3173 = vpop.f32.mrb[0].mxu0
      %v3174 = vadd.f32 %v2692, %v3173
      %v3175 = vpop.f32.mrb[0].mxu0
      %v3176 = vadd.f32 %v2696, %v3175
      %v3177 = vpop.f32.mrb[0].mxu0
      %v3178 = vadd.f32 %v2692, %v3177
      %v3179 = vpop.f32.mrb[0].mxu0
      %v3180 = vadd.f32 %v2696, %v3179
      %3181 = vmatprep.mubr.bf16.mxu0 %v2648
      %3182 = vmatmul.mubr.bf16.gmra.mrb[0].mxu0 %v2647
      %v3183 = vpop.f32.mrb[0].mxu0
      %v3184 = vadd.f32 %v2692, %v3183
      %v3185 = vpop.f32.mrb[0].mxu0
      %v3186 = vadd.f32 %v2696, %v3185
      %v3187 = vpop.f32.mrb[0].mxu0
      %v3188 = vadd.f32 %v2692, %v3187
      %v3189 = vpop.f32.mrb[0].mxu0
      %v3190 = vadd.f32 %v2696, %v3189
      %3191 = vmatprep.mubr.bf16.mxu0 %v2650
      %3192 = vmatmul.mubr.bf16.gmra.mrb[0].mxu0 %v2649
      %v3193 = vpop.f32.mrb[0].mxu0
      %v3194 = vadd.f32 %v2692, %v3193
      %v3195 = vpop.f32.mrb[0].mxu0
      %v3196 = vadd.f32 %v2696, %v3195
      %v3197 = vpop.f32.mrb[0].mxu0
      %v3198 = vadd.f32 %v2692, %v3197
      %v3199 = vpop.f32.mrb[0].mxu0
      %v3200 = vadd.f32 %v2696, %v3199
      %3201 = vmatprep.mubr.bf16.mxu0 %v2652
      %3202 = vmatmul.mubr.bf16.gmra.mrb[0].mxu0 %v2651
      %v3203 = vpop.f32.mrb[0].mxu0
      %v3204 = vadd.f32 %v2692, %v3203
      %v3205 = vpop.f32.mrb[0].mxu0
      %v3206 = vadd.f32 %v2696, %v3205
      %v3207 = vpop.f32.mrb[0].mxu0
      %v3208 = vadd.f32 %v2692, %v3207
      %v3209 = vpop.f32.mrb[0].mxu0
      %v3210 = vadd.f32 %v2696, %v3209
      %3211 = vdwg.mxu0
      %v3212 = vmax.f32 %v2894, 0.0
      %v3213 = vmax.f32 %v2896, 0.0
      %v3214 = vmax.f32 %v2898, 0.0
      %v3215 = vmax.f32 %v2900, 0.0
      %v3216 = vmax.f32 %v2904, 0.0
      %v3217 = vmax.f32 %v2906, 0.0
      %v3218 = vmax.f32 %v2908, 0.0
      %v3219 = vmax.f32 %v2910, 0.0
      %v3220 = vmax.f32 %v2914, 0.0
      %v3221 = vmax.f32 %v2916, 0.0
      %v3222 = vmax.f32 %v2918, 0.0
      %v3223 = vmax.f32 %v2920, 0.0
      %v3224 = vmax.f32 %v2924, 0.0
      %v3225 = vmax.f32 %v2926, 0.0
      %v3226 = vmax.f32 %v2928, 0.0
      %v3227 = vmax.f32 %v2930, 0.0
      %v3228 = vmax.f32 %v2934, 0.0
      %v3229 = vmax.f32 %v2936, 0.0
      %v3230 = vmax.f32 %v2938, 0.0
      %v3231 = vmax.f32 %v2940, 0.0
      %v3232 = vmax.f32 %v2944, 0.0
      %v3233 = vmax.f32 %v2946, 0.0
      %v3234 = vmax.f32 %v2948, 0.0
      %v3235 = vmax.f32 %v2950, 0.0
      %v3236 = vmax.f32 %v2954, 0.0
      %v3237 = vmax.f32 %v2956, 0.0
      %v3238 = vmax.f32 %v2958, 0.0
      %v3239 = vmax.f32 %v2960, 0.0
      %v3240 = vmax.f32 %v2964, 0.0
      %v3241 = vmax.f32 %v2966, 0.0
      %v3242 = vmax.f32 %v2968, 0.0
      %v3243 = vmax.f32 %v2970, 0.0
      %v3244 = vmax.f32 %v2974, 0.0
      %v3245 = vmax.f32 %v2976, 0.0
      %v3246 = vmax.f32 %v2978, 0.0
      %v3247 = vmax.f32 %v2980, 0.0
      %v3248 = vmax.f32 %v2984, 0.0
      %v3249 = vmax.f32 %v2986, 0.0
      %v3250 = vmax.f32 %v2988, 0.0
      %v3251 = vmax.f32 %v2990, 0.0
      %v3252 = vmax.f32 %v2994, 0.0
      %v3253 = vmax.f32 %v2996, 0.0
      %v3254 = vmax.f32 %v2998, 0.0
      %v3255 = vmax.f32 %v3000, 0.0
      %v3256 = vmax.f32 %v3004, 0.0
      %v3257 = vmax.f32 %v3006, 0.0
      %v3258 = vmax.f32 %v3008, 0.0
      %v3259 = vmax.f32 %v3010, 0.0
      %v3260 = vmax.f32 %v3014, 0.0
      %v3261 = vmax.f32 %v3016, 0.0
      %v3262 = vmax.f32 %v3018, 0.0
      %v3263 = vmax.f32 %v3020, 0.0
      %v3264 = vmax.f32 %v3024, 0.0
      %v3265 = vmax.f32 %v3026, 0.0
      %v3266 = vmax.f32 %v3028, 0.0
      %v3267 = vmax.f32 %v3030, 0.0
      %v3268 = vmax.f32 %v3034, 0.0
      %v3269 = vmax.f32 %v3036, 0.0
      %v3270 = vmax.f32 %v3038, 0.0
      %v3271 = vmax.f32 %v3040, 0.0
      %v3272 = vmax.f32 %v3044, 0.0
      %v3273 = vmax.f32 %v3046, 0.0
      %v3274 = vmax.f32 %v3048, 0.0
      %v3275 = vmax.f32 %v3050, 0.0
      %v3276 = vmax.f32 %v3054, 0.0
      %v3277 = vmax.f32 %v3056, 0.0
      %v3278 = vmax.f32 %v3058, 0.0
      %v3279 = vmax.f32 %v3060, 0.0
      %v3280 = vmax.f32 %v3064, 0.0
      %v3281 = vmax.f32 %v3066, 0.0
      %v3282 = vmax.f32 %v3068, 0.0
      %v3283 = vmax.f32 %v3070, 0.0
      %v3284 = vmax.f32 %v3074, 0.0
      %v3285 = vmax.f32 %v3076, 0.0
      %v3286 = vmax.f32 %v3078, 0.0
      %v3287 = vmax.f32 %v3080, 0.0
      %v3288 = vmax.f32 %v3084, 0.0
      %v3289 = vmax.f32 %v3086, 0.0
      %v3290 = vmax.f32 %v3088, 0.0
      %v3291 = vmax.f32 %v3090, 0.0
      %v3292 = vmax.f32 %v3094, 0.0
      %v3293 = vmax.f32 %v3096, 0.0
      %v3294 = vmax.f32 %v3098, 0.0
      %v3295 = vmax.f32 %v3100, 0.0
      %v3296 = vmax.f32 %v3104, 0.0
      %v3297 = vmax.f32 %v3106, 0.0
      %v3298 = vmax.f32 %v3108, 0.0
      %v3299 = vmax.f32 %v3110, 0.0
      %v3300 = vmax.f32 %v3114, 0.0
      %v3301 = vmax.f32 %v3116, 0.0
      %v3302 = vmax.f32 %v3118, 0.0
      %v3303 = vmax.f32 %v3120, 0.0
      %v3304 = vmax.f32 %v3124, 0.0
      %v3305 = vmax.f32 %v3126, 0.0
      %v3306 = vmax.f32 %v3128, 0.0
      %v3307 = vmax.f32 %v3130, 0.0
      %v3308 = vmax.f32 %v3134, 0.0
      %v3309 = vmax.f32 %v3136, 0.0
      %v3310 = vmax.f32 %v3138, 0.0
      %v3311 = vmax.f32 %v3140, 0.0
      %v3312 = vmax.f32 %v3144, 0.0
      %v3313 = vmax.f32 %v3146, 0.0
      %v3314 = vmax.f32 %v3148, 0.0
      %v3315 = vmax.f32 %v3150, 0.0
      %v3316 = vmax.f32 %v3154, 0.0
      %v3317 = vmax.f32 %v3156, 0.0
      %v3318 = vmax.f32 %v3158, 0.0
      %v3319 = vmax.f32 %v3160, 0.0
      %v3320 = vmax.f32 %v3164, 0.0
      %v3321 = vmax.f32 %v3166, 0.0
      %v3322 = vmax.f32 %v3168, 0.0
      %v3323 = vmax.f32 %v3170, 0.0
      %v3324 = vmax.f32 %v3174, 0.0
      %v3325 = vmax.f32 %v3176, 0.0
      %v3326 = vmax.f32 %v3178, 0.0
      %v3327 = vmax.f32 %v3180, 0.0
      %v3328 = vmax.f32 %v3184, 0.0
      %v3329 = vmax.f32 %v3186, 0.0
      %v3330 = vmax.f32 %v3188, 0.0
      %v3331 = vmax.f32 %v3190, 0.0
      %v3332 = vmax.f32 %v3194, 0.0
      %v3333 = vmax.f32 %v3196, 0.0
      %v3334 = vmax.f32 %v3198, 0.0
      %v3335 = vmax.f32 %v3200, 0.0
      %v3336 = vmax.f32 %v3204, 0.0
      %v3337 = vmax.f32 %v3206, 0.0
      %v3338 = vmax.f32 %v3208, 0.0
      %v3339 = vmax.f32 %v3210, 0.0
      %v3340 = vpack.c.bf16 %v3214, %v3212
      %v3341 = vpack.c.bf16 %v3215, %v3213
      %v3342 = vpack.c.bf16 %v3218, %v3216
      %v3343 = vpack.c.bf16 %v3219, %v3217
      %v3344 = vpack.c.bf16 %v3222, %v3220
      %v3345 = vpack.c.bf16 %v3223, %v3221
      %v3346 = vpack.c.bf16 %v3226, %v3224
      %v3347 = vpack.c.bf16 %v3227, %v3225
      %v3348 = vpack.c.bf16 %v3230, %v3228
      %v3349 = vpack.c.bf16 %v3231, %v3229
      %v3350 = vpack.c.bf16 %v3234, %v3232
      %v3351 = vpack.c.bf16 %v3235, %v3233
      %v3352 = vpack.c.bf16 %v3238, %v3236
      %v3353 = vpack.c.bf16 %v3239, %v3237
      %v3354 = vpack.c.bf16 %v3242, %v3240
      %v3355 = vpack.c.bf16 %v3243, %v3241
      %v3356 = vpack.c.bf16 %v3246, %v3244
      %v3357 = vpack.c.bf16 %v3247, %v3245
      %v3358 = vpack.c.bf16 %v3250, %v3248
      %v3359 = vpack.c.bf16 %v3251, %v3249
      %v3360 = vpack.c.bf16 %v3254, %v3252
      %v3361 = vpack.c.bf16 %v3255, %v3253
      %v3362 = vpack.c.bf16 %v3258, %v3256
      %v3363 = vpack.c.bf16 %v3259, %v3257
      %v3364 = vpack.c.bf16 %v3262, %v3260
      %v3365 = vpack.c.bf16 %v3263, %v3261
      %v3366 = vpack.c.bf16 %v3266, %v3264
      %v3367 = vpack.c.bf16 %v3267, %v3265
      %v3368 = vpack.c.bf16 %v3270, %v3268
      %v3369 = vpack.c.bf16 %v3271, %v3269
      %v3370 = vpack.c.bf16 %v3274, %v3272
      %v3371 = vpack.c.bf16 %v3275, %v3273
      %v3372 = vpack.c.bf16 %v3278, %v3276
      %v3373 = vpack.c.bf16 %v3279, %v3277
      %v3374 = vpack.c.bf16 %v3282, %v3280
      %v3375 = vpack.c.bf16 %v3283, %v3281
      %v3376 = vpack.c.bf16 %v3286, %v3284
      %v3377 = vpack.c.bf16 %v3287, %v3285
      %v3378 = vpack.c.bf16 %v3290, %v3288
      %v3379 = vpack.c.bf16 %v3291, %v3289
      %v3380 = vpack.c.bf16 %v3294, %v3292
      %v3381 = vpack.c.bf16 %v3295, %v3293
      %v3382 = vpack.c.bf16 %v3298, %v3296
      %v3383 = vpack.c.bf16 %v3299, %v3297
      %v3384 = vpack.c.bf16 %v3302, %v3300
      %v3385 = vpack.c.bf16 %v3303, %v3301
      %v3386 = vpack.c.bf16 %v3306, %v3304
      %v3387 = vpack.c.bf16 %v3307, %v3305
      %v3388 = vpack.c.bf16 %v3310, %v3308
      %v3389 = vpack.c.bf16 %v3311, %v3309
      %v3390 = vpack.c.bf16 %v3314, %v3312
      %v3391 = vpack.c.bf16 %v3315, %v3313
      %v3392 = vpack.c.bf16 %v3318, %v3316
      %v3393 = vpack.c.bf16 %v3319, %v3317
      %v3394 = vpack.c.bf16 %v3322, %v3320
      %v3395 = vpack.c.bf16 %v3323, %v3321
      %v3396 = vpack.c.bf16 %v3326, %v3324
      %v3397 = vpack.c.bf16 %v3327, %v3325
      %v3398 = vpack.c.bf16 %v3330, %v3328
      %v3399 = vpack.c.bf16 %v3331, %v3329
      %v3400 = vpack.c.bf16 %v3334, %v3332
      %v3401 = vpack.c.bf16 %v3335, %v3333
      %v3402 = vpack.c.bf16 %v3338, %v3336
      %v3403 = vpack.c.bf16 %v3339, %v3337
      %s3404 = scalar_lea.vmem %s4, 768
      %v3405 = vld [vmem:[%s3404] sm:$0xff]
      %v3406 = vld [vmem:[%s3404 + $0x8] sm:$0xff]
      %v3407 = vld [vmem:[%s3404 + $0x10] sm:$0xff]
      %v3408 = vld [vmem:[%s3404 + $0x18] sm:$0xff]
      %v3409 = vld [vmem:[%s3404 + $0x20] sm:$0xff]
      %v3410 = vld [vmem:[%s3404 + $0x28] sm:$0xff]
      %v3411 = vld [vmem:[%s3404 + $0x30] sm:$0xff]
      %v3412 = vld [vmem:[%s3404 + $0x38] sm:$0xff]
      %v3413 = vld [vmem:[%s3404 + $0x40] sm:$0xff]
      %v3414 = vld [vmem:[%s3404 + $0x48] sm:$0xff]
      %v3415 = vld [vmem:[%s3404 + $0x50] sm:$0xff]
      %v3416 = vld [vmem:[%s3404 + $0x58] sm:$0xff]
      %v3417 = vld [vmem:[%s3404 + $0x60] sm:$0xff]
      %v3418 = vld [vmem:[%s3404 + $0x68] sm:$0xff]
      %v3419 = vld [vmem:[%s3404 + $0x70] sm:$0xff]
      %v3420 = vld [vmem:[%s3404 + $0x78] sm:$0xff]
      %v3421 = vld [vmem:[%s3404 + $0x80] sm:$0xff]
      %v3422 = vld [vmem:[%s3404 + $0x88] sm:$0xff]
      %v3423 = vld [vmem:[%s3404 + $0x90] sm:$0xff]
      %v3424 = vld [vmem:[%s3404 + $0x98] sm:$0xff]
      %v3425 = vld [vmem:[%s3404 + $0xa0] sm:$0xff]
      %v3426 = vld [vmem:[%s3404 + $0xa8] sm:$0xff]
      %v3427 = vld [vmem:[%s3404 + $0xb0] sm:$0xff]
      %v3428 = vld [vmem:[%s3404 + $0xb8] sm:$0xff]
      %v3429 = vld [vmem:[%s3404 + $0xc0] sm:$0xff]
      %v3430 = vld [vmem:[%s3404 + $0xc8] sm:$0xff]
      %v3431 = vld [vmem:[%s3404 + $0xd0] sm:$0xff]
      %v3432 = vld [vmem:[%s3404 + $0xd8] sm:$0xff]
      %v3433 = vld [vmem:[%s3404 + $0xe0] sm:$0xff]
      %v3434 = vld [vmem:[%s3404 + $0xe8] sm:$0xff]
      %v3435 = vld [vmem:[%s3404 + $0xf0] sm:$0xff]
      %v3436 = vld [vmem:[%s3404 + $0xf8] sm:$0xff]
      %s3437 = scalar_lea.vmem %s5, 6
      %v3438 = vld [vmem:[%s3437] sm:$0x3]
      %v3440 = vlaneseq
      %v3441 = vshrl.u32 %v3440, 7
      %v3442 = vsub.s32 0, %v3441
      %v3443 = vrot.slane %v3438, %v3442
      %v3444 = vlaneseq
      %v3445 = vshrl.u32 %v3444, 7
      %v3446 = vsub.s32 1, %v3445
      %v3447 = vrot.slane %v3438, %v3446
      %v3482 = vunpack.c.l.b16 %v3405
      %v3483 = vunpack.c.h.b16 %v3405
      %v3484 = vunpack.c.l.b16 %v3406
      %v3485 = vunpack.c.h.b16 %v3406
      %v3486 = vunpack.c.l.b16 %v3407
      %v3487 = vunpack.c.h.b16 %v3407
      %v3488 = vunpack.c.l.b16 %v3408
      %v3489 = vunpack.c.h.b16 %v3408
      %v3490 = vunpack.c.l.b16 %v3409
      %v3491 = vunpack.c.h.b16 %v3409
      %v3492 = vunpack.c.l.b16 %v3410
      %v3493 = vunpack.c.h.b16 %v3410
      %v3494 = vunpack.c.l.b16 %v3411
      %v3495 = vunpack.c.h.b16 %v3411
      %v3496 = vunpack.c.l.b16 %v3412
      %v3497 = vunpack.c.h.b16 %v3412
      %v3498 = vunpack.c.l.b16 %v3413
      %v3499 = vunpack.c.h.b16 %v3413
      %v3500 = vunpack.c.l.b16 %v3414
      %v3501 = vunpack.c.h.b16 %v3414
      %v3502 = vunpack.c.l.b16 %v3415
      %v3503 = vunpack.c.h.b16 %v3415
      %v3504 = vunpack.c.l.b16 %v3416
      %v3505 = vunpack.c.h.b16 %v3416
      %v3506 = vunpack.c.l.b16 %v3417
      %v3507 = vunpack.c.h.b16 %v3417
      %v3508 = vunpack.c.l.b16 %v3418
      %v3509 = vunpack.c.h.b16 %v3418
      %v3510 = vunpack.c.l.b16 %v3419
      %v3511 = vunpack.c.h.b16 %v3419
      %v3512 = vunpack.c.l.b16 %v3420
      %v3513 = vunpack.c.h.b16 %v3420
      %v3514 = vunpack.c.l.b16 %v3421
      %v3515 = vunpack.c.h.b16 %v3421
      %v3516 = vunpack.c.l.b16 %v3422
      %v3517 = vunpack.c.h.b16 %v3422
      %v3518 = vunpack.c.l.b16 %v3423
      %v3519 = vunpack.c.h.b16 %v3423
      %v3520 = vunpack.c.l.b16 %v3424
      %v3521 = vunpack.c.h.b16 %v3424
      %v3522 = vunpack.c.l.b16 %v3425
      %v3523 = vunpack.c.h.b16 %v3425
      %v3524 = vunpack.c.l.b16 %v3426
      %v3525 = vunpack.c.h.b16 %v3426
      %v3526 = vunpack.c.l.b16 %v3427
      %v3527 = vunpack.c.h.b16 %v3427
      %v3528 = vunpack.c.l.b16 %v3428
      %v3529 = vunpack.c.h.b16 %v3428
      %v3530 = vunpack.c.l.b16 %v3429
      %v3531 = vunpack.c.h.b16 %v3429
      %v3532 = vunpack.c.l.b16 %v3430
      %v3533 = vunpack.c.h.b16 %v3430
      %v3534 = vunpack.c.l.b16 %v3431
      %v3535 = vunpack.c.h.b16 %v3431
      %v3536 = vunpack.c.l.b16 %v3432
      %v3537 = vunpack.c.h.b16 %v3432
      %v3538 = vunpack.c.l.b16 %v3433
      %v3539 = vunpack.c.h.b16 %v3433
      %v3540 = vunpack.c.l.b16 %v3434
      %v3541 = vunpack.c.h.b16 %v3434
      %v3542 = vunpack.c.l.b16 %v3435
      %v3543 = vunpack.c.h.b16 %v3435
      %v3544 = vunpack.c.l.b16 %v3436
      %v3545 = vunpack.c.h.b16 %v3436
      %v3546 = vpack.c.b16 %v3484, %v3482
      %v3547 = vpack.c.b16 %v3485, %v3483
      %v3548 = vpack.c.b16 %v3488, %v3486
      %v3549 = vpack.c.b16 %v3489, %v3487
      %v3550 = vpack.c.b16 %v3492, %v3490
      %v3551 = vpack.c.b16 %v3493, %v3491
      %v3552 = vpack.c.b16 %v3496, %v3494
      %v3553 = vpack.c.b16 %v3497, %v3495
      %v3554 = vpack.c.b16 %v3500, %v3498
      %v3555 = vpack.c.b16 %v3501, %v3499
      %v3556 = vpack.c.b16 %v3504, %v3502
      %v3557 = vpack.c.b16 %v3505, %v3503
      %v3558 = vpack.c.b16 %v3508, %v3506
      %v3559 = vpack.c.b16 %v3509, %v3507
      %v3560 = vpack.c.b16 %v3512, %v3510
      %v3561 = vpack.c.b16 %v3513, %v3511
      %v3562 = vpack.c.b16 %v3516, %v3514
      %v3563 = vpack.c.b16 %v3517, %v3515
      %v3564 = vpack.c.b16 %v3520, %v3518
      %v3565 = vpack.c.b16 %v3521, %v3519
      %v3566 = vpack.c.b16 %v3524, %v3522
      %v3567 = vpack.c.b16 %v3525, %v3523
      %v3568 = vpack.c.b16 %v3528, %v3526
      %v3569 = vpack.c.b16 %v3529, %v3527
      %v3570 = vpack.c.b16 %v3532, %v3530
      %v3571 = vpack.c.b16 %v3533, %v3531
      %v3572 = vpack.c.b16 %v3536, %v3534
      %v3573 = vpack.c.b16 %v3537, %v3535
      %v3574 = vpack.c.b16 %v3540, %v3538
      %v3575 = vpack.c.b16 %v3541, %v3539
      %v3576 = vpack.c.b16 %v3544, %v3542
      %v3577 = vpack.c.b16 %v3545, %v3543
      %3610 = vmatprep.subr.bf16.mxu0 %v3547
      %3611 = vmatpush1.bf16.msra.mxu0 %v3546
      %3612 = vmatprep.subr.bf16.mxu0 %v3549
      %3613 = vmatpush1.bf16.msra.mxu0 %v3548
      %3614 = vmatprep.subr.bf16.mxu0 %v3551
      %3615 = vmatpush1.bf16.msra.mxu0 %v3550
      %3616 = vmatprep.subr.bf16.mxu0 %v3553
      %3617 = vmatpush1.bf16.msra.mxu0 %v3552
      %3618 = vmatprep.subr.bf16.mxu0 %v3555
      %3619 = vmatpush1.bf16.msra.mxu0 %v3554
      %3620 = vmatprep.subr.bf16.mxu0 %v3557
      %3621 = vmatpush1.bf16.msra.mxu0 %v3556
      %3622 = vmatprep.subr.bf16.mxu0 %v3559
      %3623 = vmatpush1.bf16.msra.mxu0 %v3558
      %3624 = vmatprep.subr.bf16.mxu0 %v3561
      %3625 = vmatpush1.bf16.msra.mxu0 %v3560
      %3626 = vmatprep.subr.bf16.mxu0 %v3563
      %3627 = vmatpush1.bf16.msra.mxu0 %v3562
      %3628 = vmatprep.subr.bf16.mxu0 %v3565
      %3629 = vmatpush1.bf16.msra.mxu0 %v3564
      %3630 = vmatprep.subr.bf16.mxu0 %v3567
      %3631 = vmatpush1.bf16.msra.mxu0 %v3566
      %3632 = vmatprep.subr.bf16.mxu0 %v3569
      %3633 = vmatpush1.bf16.msra.mxu0 %v3568
      %3634 = vmatprep.subr.bf16.mxu0 %v3571
      %3635 = vmatpush1.bf16.msra.mxu0 %v3570
      %3636 = vmatprep.subr.bf16.mxu0 %v3573
      %3637 = vmatpush1.bf16.msra.mxu0 %v3572
      %3638 = vmatprep.subr.bf16.mxu0 %v3575
      %3639 = vmatpush1.bf16.msra.mxu0 %v3574
      %3640 = vmatprep.subr.bf16.mxu0 %v3577
      %3641 = vmatpush1.bf16.msra.mxu0 %v3576
      %3642 = vmatprep.mubr.bf16.mxu0 %v3341
      %3643 = vmatmul.mubr.bf16.gmra.mrb[0].mxu0 %v3340
      %v3644 = vpop.f32.mrb[0].mxu0
      %v3645 = vadd.f32 %v3443, %v3644
      %v3646 = vpop.f32.mrb[0].mxu0
      %v3647 = vadd.f32 %v3447, %v3646
      %v3648 = vpop.f32.mrb[0].mxu0
      %v3649 = vadd.f32 %v3443, %v3648
      %v3650 = vpop.f32.mrb[0].mxu0
      %v3651 = vadd.f32 %v3447, %v3650
      %3652 = vmatprep.mubr.bf16.mxu0 %v3343
      %3653 = vmatmul.mubr.bf16.gmra.mrb[0].mxu0 %v3342
      %v3654 = vpop.f32.mrb[0].mxu0
      %v3655 = vadd.f32 %v3443, %v3654
      %v3656 = vpop.f32.mrb[0].mxu0
      %v3657 = vadd.f32 %v3447, %v3656
      %v3658 = vpop.f32.mrb[0].mxu0
      %v3659 = vadd.f32 %v3443, %v3658
      %v3660 = vpop.f32.mrb[0].mxu0
      %v3661 = vadd.f32 %v3447, %v3660
      %3662 = vmatprep.mubr.bf16.mxu0 %v3345
      %3663 = vmatmul.mubr.bf16.gmra.mrb[0].mxu0 %v3344
      %v3664 = vpop.f32.mrb[0].mxu0
      %v3665 = vadd.f32 %v3443, %v3664
      %v3666 = vpop.f32.mrb[0].mxu0
      %v3667 = vadd.f32 %v3447, %v3666
      %v3668 = vpop.f32.mrb[0].mxu0
      %v3669 = vadd.f32 %v3443, %v3668
      %v3670 = vpop.f32.mrb[0].mxu0
      %v3671 = vadd.f32 %v3447, %v3670
      %3672 = vmatprep.mubr.bf16.mxu0 %v3347
      %3673 = vmatmul.mubr.bf16.gmra.mrb[0].mxu0 %v3346
      %v3674 = vpop.f32.mrb[0].mxu0
      %v3675 = vadd.f32 %v3443, %v3674
      %v3676 = vpop.f32.mrb[0].mxu0
      %v3677 = vadd.f32 %v3447, %v3676
      %v3678 = vpop.f32.mrb[0].mxu0
      %v3679 = vadd.f32 %v3443, %v3678
      %v3680 = vpop.f32.mrb[0].mxu0
      %v3681 = vadd.f32 %v3447, %v3680
      %3682 = vmatprep.mubr.bf16.mxu0 %v3349
      %3683 = vmatmul.mubr.bf16.gmra.mrb[0].mxu0 %v3348
      %v3684 = vpop.f32.mrb[0].mxu0
      %v3685 = vadd.f32 %v3443, %v3684
      %v3686 = vpop.f32.mrb[0].mxu0
      %v3687 = vadd.f32 %v3447, %v3686
      %v3688 = vpop.f32.mrb[0].mxu0
      %v3689 = vadd.f32 %v3443, %v3688
      %v3690 = vpop.f32.mrb[0].mxu0
      %v3691 = vadd.f32 %v3447, %v3690
      %3692 = vmatprep.mubr.bf16.mxu0 %v3351
      %3693 = vmatmul.mubr.bf16.gmra.mrb[0].mxu0 %v3350
      %v3694 = vpop.f32.mrb[0].mxu0
      %v3695 = vadd.f32 %v3443, %v3694
      %v3696 = vpop.f32.mrb[0].mxu0
      %v3697 = vadd.f32 %v3447, %v3696
      %v3698 = vpop.f32.mrb[0].mxu0
      %v3699 = vadd.f32 %v3443, %v3698
      %v3700 = vpop.f32.mrb[0].mxu0
      %v3701 = vadd.f32 %v3447, %v3700
      %3702 = vmatprep.mubr.bf16.mxu0 %v3353
      %3703 = vmatmul.mubr.bf16.gmra.mrb[0].mxu0 %v3352
      %v3704 = vpop.f32.mrb[0].mxu0
      %v3705 = vadd.f32 %v3443, %v3704
      %v3706 = vpop.f32.mrb[0].mxu0
      %v3707 = vadd.f32 %v3447, %v3706
      %v3708 = vpop.f32.mrb[0].mxu0
      %v3709 = vadd.f32 %v3443, %v3708
      %v3710 = vpop.f32.mrb[0].mxu0
      %v3711 = vadd.f32 %v3447, %v3710
      %3712 = vmatprep.mubr.bf16.mxu0 %v3355
      %3713 = vmatmul.mubr.bf16.gmra.mrb[0].mxu0 %v3354
      %v3714 = vpop.f32.mrb[0].mxu0
      %v3715 = vadd.f32 %v3443, %v3714
      %v3716 = vpop.f32.mrb[0].mxu0
      %v3717 = vadd.f32 %v3447, %v3716
      %v3718 = vpop.f32.mrb[0].mxu0
      %v3719 = vadd.f32 %v3443, %v3718
      %v3720 = vpop.f32.mrb[0].mxu0
      %v3721 = vadd.f32 %v3447, %v3720
      %3722 = vmatprep.mubr.bf16.mxu0 %v3357
      %3723 = vmatmul.mubr.bf16.gmra.mrb[0].mxu0 %v3356
      %v3724 = vpop.f32.mrb[0].mxu0
      %v3725 = vadd.f32 %v3443, %v3724
      %v3726 = vpop.f32.mrb[0].mxu0
      %v3727 = vadd.f32 %v3447, %v3726
      %v3728 = vpop.f32.mrb[0].mxu0
      %v3729 = vadd.f32 %v3443, %v3728
      %v3730 = vpop.f32.mrb[0].mxu0
      %v3731 = vadd.f32 %v3447, %v3730
      %3732 = vmatprep.mubr.bf16.mxu0 %v3359
      %3733 = vmatmul.mubr.bf16.gmra.mrb[0].mxu0 %v3358
      %v3734 = vpop.f32.mrb[0].mxu0
      %v3735 = vadd.f32 %v3443, %v3734
      %v3736 = vpop.f32.mrb[0].mxu0
      %v3737 = vadd.f32 %v3447, %v3736
      %v3738 = vpop.f32.mrb[0].mxu0
      %v3739 = vadd.f32 %v3443, %v3738
      %v3740 = vpop.f32.mrb[0].mxu0
      %v3741 = vadd.f32 %v3447, %v3740
      %3742 = vmatprep.mubr.bf16.mxu0 %v3361
      %3743 = vmatmul.mubr.bf16.gmra.mrb[0].mxu0 %v3360
      %v3744 = vpop.f32.mrb[0].mxu0
      %v3745 = vadd.f32 %v3443, %v3744
      %v3746 = vpop.f32.mrb[0].mxu0
      %v3747 = vadd.f32 %v3447, %v3746
      %v3748 = vpop.f32.mrb[0].mxu0
      %v3749 = vadd.f32 %v3443, %v3748
      %v3750 = vpop.f32.mrb[0].mxu0
      %v3751 = vadd.f32 %v3447, %v3750
      %3752 = vmatprep.mubr.bf16.mxu0 %v3363
      %3753 = vmatmul.mubr.bf16.gmra.mrb[0].mxu0 %v3362
      %v3754 = vpop.f32.mrb[0].mxu0
      %v3755 = vadd.f32 %v3443, %v3754
      %v3756 = vpop.f32.mrb[0].mxu0
      %v3757 = vadd.f32 %v3447, %v3756
      %v3758 = vpop.f32.mrb[0].mxu0
      %v3759 = vadd.f32 %v3443, %v3758
      %v3760 = vpop.f32.mrb[0].mxu0
      %v3761 = vadd.f32 %v3447, %v3760
      %3762 = vmatprep.mubr.bf16.mxu0 %v3365
      %3763 = vmatmul.mubr.bf16.gmra.mrb[0].mxu0 %v3364
      %v3764 = vpop.f32.mrb[0].mxu0
      %v3765 = vadd.f32 %v3443, %v3764
      %v3766 = vpop.f32.mrb[0].mxu0
      %v3767 = vadd.f32 %v3447, %v3766
      %v3768 = vpop.f32.mrb[0].mxu0
      %v3769 = vadd.f32 %v3443, %v3768
      %v3770 = vpop.f32.mrb[0].mxu0
      %v3771 = vadd.f32 %v3447, %v3770
      %3772 = vmatprep.mubr.bf16.mxu0 %v3367
      %3773 = vmatmul.mubr.bf16.gmra.mrb[0].mxu0 %v3366
      %v3774 = vpop.f32.mrb[0].mxu0
      %v3775 = vadd.f32 %v3443, %v3774
      %v3776 = vpop.f32.mrb[0].mxu0
      %v3777 = vadd.f32 %v3447, %v3776
      %v3778 = vpop.f32.mrb[0].mxu0
      %v3779 = vadd.f32 %v3443, %v3778
      %v3780 = vpop.f32.mrb[0].mxu0
      %v3781 = vadd.f32 %v3447, %v3780
      %3782 = vmatprep.mubr.bf16.mxu0 %v3369
      %3783 = vmatmul.mubr.bf16.gmra.mrb[0].mxu0 %v3368
      %v3784 = vpop.f32.mrb[0].mxu0
      %v3785 = vadd.f32 %v3443, %v3784
      %v3786 = vpop.f32.mrb[0].mxu0
      %v3787 = vadd.f32 %v3447, %v3786
      %v3788 = vpop.f32.mrb[0].mxu0
      %v3789 = vadd.f32 %v3443, %v3788
      %v3790 = vpop.f32.mrb[0].mxu0
      %v3791 = vadd.f32 %v3447, %v3790
      %3792 = vmatprep.mubr.bf16.mxu0 %v3371
      %3793 = vmatmul.mubr.bf16.gmra.mrb[0].mxu0 %v3370
      %v3794 = vpop.f32.mrb[0].mxu0
      %v3795 = vadd.f32 %v3443, %v3794
      %v3796 = vpop.f32.mrb[0].mxu0
      %v3797 = vadd.f32 %v3447, %v3796
      %v3798 = vpop.f32.mrb[0].mxu0
      %v3799 = vadd.f32 %v3443, %v3798
      %v3800 = vpop.f32.mrb[0].mxu0
      %v3801 = vadd.f32 %v3447, %v3800
      %3802 = vmatprep.mubr.bf16.mxu0 %v3373
      %3803 = vmatmul.mubr.bf16.gmra.mrb[0].mxu0 %v3372
      %v3804 = vpop.f32.mrb[0].mxu0
      %v3805 = vadd.f32 %v3443, %v3804
      %v3806 = vpop.f32.mrb[0].mxu0
      %v3807 = vadd.f32 %v3447, %v3806
      %v3808 = vpop.f32.mrb[0].mxu0
      %v3809 = vadd.f32 %v3443, %v3808
      %v3810 = vpop.f32.mrb[0].mxu0
      %v3811 = vadd.f32 %v3447, %v3810
      %3812 = vmatprep.mubr.bf16.mxu0 %v3375
      %3813 = vmatmul.mubr.bf16.gmra.mrb[0].mxu0 %v3374
      %v3814 = vpop.f32.mrb[0].mxu0
      %v3815 = vadd.f32 %v3443, %v3814
      %v3816 = vpop.f32.mrb[0].mxu0
      %v3817 = vadd.f32 %v3447, %v3816
      %v3818 = vpop.f32.mrb[0].mxu0
      %v3819 = vadd.f32 %v3443, %v3818
      %v3820 = vpop.f32.mrb[0].mxu0
      %v3821 = vadd.f32 %v3447, %v3820
      %3822 = vmatprep.mubr.bf16.mxu0 %v3377
      %3823 = vmatmul.mubr.bf16.gmra.mrb[0].mxu0 %v3376
      %v3824 = vpop.f32.mrb[0].mxu0
      %v3825 = vadd.f32 %v3443, %v3824
      %v3826 = vpop.f32.mrb[0].mxu0
      %v3827 = vadd.f32 %v3447, %v3826
      %v3828 = vpop.f32.mrb[0].mxu0
      %v3829 = vadd.f32 %v3443, %v3828
      %v3830 = vpop.f32.mrb[0].mxu0
      %v3831 = vadd.f32 %v3447, %v3830
      %3832 = vmatprep.mubr.bf16.mxu0 %v3379
      %3833 = vmatmul.mubr.bf16.gmra.mrb[0].mxu0 %v3378
      %v3834 = vpop.f32.mrb[0].mxu0
      %v3835 = vadd.f32 %v3443, %v3834
      %v3836 = vpop.f32.mrb[0].mxu0
      %v3837 = vadd.f32 %v3447, %v3836
      %v3838 = vpop.f32.mrb[0].mxu0
      %v3839 = vadd.f32 %v3443, %v3838
      %v3840 = vpop.f32.mrb[0].mxu0
      %v3841 = vadd.f32 %v3447, %v3840
      %3842 = vmatprep.mubr.bf16.mxu0 %v3381
      %3843 = vmatmul.mubr.bf16.gmra.mrb[0].mxu0 %v3380
      %v3844 = vpop.f32.mrb[0].mxu0
      %v3845 = vadd.f32 %v3443, %v3844
      %v3846 = vpop.f32.mrb[0].mxu0
      %v3847 = vadd.f32 %v3447, %v3846
      %v3848 = vpop.f32.mrb[0].mxu0
      %v3849 = vadd.f32 %v3443, %v3848
      %v3850 = vpop.f32.mrb[0].mxu0
      %v3851 = vadd.f32 %v3447, %v3850
      %3852 = vmatprep.mubr.bf16.mxu0 %v3383
      %3853 = vmatmul.mubr.bf16.gmra.mrb[0].mxu0 %v3382
      %v3854 = vpop.f32.mrb[0].mxu0
      %v3855 = vadd.f32 %v3443, %v3854
      %v3856 = vpop.f32.mrb[0].mxu0
      %v3857 = vadd.f32 %v3447, %v3856
      %v3858 = vpop.f32.mrb[0].mxu0
      %v3859 = vadd.f32 %v3443, %v3858
      %v3860 = vpop.f32.mrb[0].mxu0
      %v3861 = vadd.f32 %v3447, %v3860
      %3862 = vmatprep.mubr.bf16.mxu0 %v3385
      %3863 = vmatmul.mubr.bf16.gmra.mrb[0].mxu0 %v3384
      %v3864 = vpop.f32.mrb[0].mxu0
      %v3865 = vadd.f32 %v3443, %v3864
      %v3866 = vpop.f32.mrb[0].mxu0
      %v3867 = vadd.f32 %v3447, %v3866
      %v3868 = vpop.f32.mrb[0].mxu0
      %v3869 = vadd.f32 %v3443, %v3868
      %v3870 = vpop.f32.mrb[0].mxu0
      %v3871 = vadd.f32 %v3447, %v3870
      %3872 = vmatprep.mubr.bf16.mxu0 %v3387
      %3873 = vmatmul.mubr.bf16.gmra.mrb[0].mxu0 %v3386
      %v3874 = vpop.f32.mrb[0].mxu0
      %v3875 = vadd.f32 %v3443, %v3874
      %v3876 = vpop.f32.mrb[0].mxu0
      %v3877 = vadd.f32 %v3447, %v3876
      %v3878 = vpop.f32.mrb[0].mxu0
      %v3879 = vadd.f32 %v3443, %v3878
      %v3880 = vpop.f32.mrb[0].mxu0
      %v3881 = vadd.f32 %v3447, %v3880
      %3882 = vmatprep.mubr.bf16.mxu0 %v3389
      %3883 = vmatmul.mubr.bf16.gmra.mrb[0].mxu0 %v3388
      %v3884 = vpop.f32.mrb[0].mxu0
      %v3885 = vadd.f32 %v3443, %v3884
      %v3886 = vpop.f32.mrb[0].mxu0
      %v3887 = vadd.f32 %v3447, %v3886
      %v3888 = vpop.f32.mrb[0].mxu0
      %v3889 = vadd.f32 %v3443, %v3888
      %v3890 = vpop.f32.mrb[0].mxu0
      %v3891 = vadd.f32 %v3447, %v3890
      %3892 = vmatprep.mubr.bf16.mxu0 %v3391
      %3893 = vmatmul.mubr.bf16.gmra.mrb[0].mxu0 %v3390
      %v3894 = vpop.f32.mrb[0].mxu0
      %v3895 = vadd.f32 %v3443, %v3894
      %v3896 = vpop.f32.mrb[0].mxu0
      %v3897 = vadd.f32 %v3447, %v3896
      %v3898 = vpop.f32.mrb[0].mxu0
      %v3899 = vadd.f32 %v3443, %v3898
      %v3900 = vpop.f32.mrb[0].mxu0
      %v3901 = vadd.f32 %v3447, %v3900
      %3902 = vmatprep.mubr.bf16.mxu0 %v3393
      %3903 = vmatmul.mubr.bf16.gmra.mrb[0].mxu0 %v3392
      %v3904 = vpop.f32.mrb[0].mxu0
      %v3905 = vadd.f32 %v3443, %v3904
      %v3906 = vpop.f32.mrb[0].mxu0
      %v3907 = vadd.f32 %v3447, %v3906
      %v3908 = vpop.f32.mrb[0].mxu0
      %v3909 = vadd.f32 %v3443, %v3908
      %v3910 = vpop.f32.mrb[0].mxu0
      %v3911 = vadd.f32 %v3447, %v3910
      %3912 = vmatprep.mubr.bf16.mxu0 %v3395
      %3913 = vmatmul.mubr.bf16.gmra.mrb[0].mxu0 %v3394
      %v3914 = vpop.f32.mrb[0].mxu0
      %v3915 = vadd.f32 %v3443, %v3914
      %v3916 = vpop.f32.mrb[0].mxu0
      %v3917 = vadd.f32 %v3447, %v3916
      %v3918 = vpop.f32.mrb[0].mxu0
      %v3919 = vadd.f32 %v3443, %v3918
      %v3920 = vpop.f32.mrb[0].mxu0
      %v3921 = vadd.f32 %v3447, %v3920
      %3922 = vmatprep.mubr.bf16.mxu0 %v3397
      %3923 = vmatmul.mubr.bf16.gmra.mrb[0].mxu0 %v3396
      %v3924 = vpop.f32.mrb[0].mxu0
      %v3925 = vadd.f32 %v3443, %v3924
      %v3926 = vpop.f32.mrb[0].mxu0
      %v3927 = vadd.f32 %v3447, %v3926
      %v3928 = vpop.f32.mrb[0].mxu0
      %v3929 = vadd.f32 %v3443, %v3928
      %v3930 = vpop.f32.mrb[0].mxu0
      %v3931 = vadd.f32 %v3447, %v3930
      %3932 = vmatprep.mubr.bf16.mxu0 %v3399
      %3933 = vmatmul.mubr.bf16.gmra.mrb[0].mxu0 %v3398
      %v3934 = vpop.f32.mrb[0].mxu0
      %v3935 = vadd.f32 %v3443, %v3934
      %v3936 = vpop.f32.mrb[0].mxu0
      %v3937 = vadd.f32 %v3447, %v3936
      %v3938 = vpop.f32.mrb[0].mxu0
      %v3939 = vadd.f32 %v3443, %v3938
      %v3940 = vpop.f32.mrb[0].mxu0
      %v3941 = vadd.f32 %v3447, %v3940
      %3942 = vmatprep.mubr.bf16.mxu0 %v3401
      %3943 = vmatmul.mubr.bf16.gmra.mrb[0].mxu0 %v3400
      %v3944 = vpop.f32.mrb[0].mxu0
      %v3945 = vadd.f32 %v3443, %v3944
      %v3946 = vpop.f32.mrb[0].mxu0
      %v3947 = vadd.f32 %v3447, %v3946
      %v3948 = vpop.f32.mrb[0].mxu0
      %v3949 = vadd.f32 %v3443, %v3948
      %v3950 = vpop.f32.mrb[0].mxu0
      %v3951 = vadd.f32 %v3447, %v3950
      %3952 = vmatprep.mubr.bf16.mxu0 %v3403
      %3953 = vmatmul.mubr.bf16.gmra.mrb[0].mxu0 %v3402
      %v3954 = vpop.f32.mrb[0].mxu0
      %v3955 = vadd.f32 %v3443, %v3954
      %v3956 = vpop.f32.mrb[0].mxu0
      %v3957 = vadd.f32 %v3447, %v3956
      %v3958 = vpop.f32.mrb[0].mxu0
      %v3959 = vadd.f32 %v3443, %v3958
      %v3960 = vpop.f32.mrb[0].mxu0
      %v3961 = vadd.f32 %v3447, %v3960
      %3962 = vdwg.mxu0
      %v3963 = vmax.f32 %v3645, 0.0
      %v3964 = vmax.f32 %v3647, 0.0
      %v3965 = vmax.f32 %v3649, 0.0
      %v3966 = vmax.f32 %v3651, 0.0
      %v3967 = vmax.f32 %v3655, 0.0
      %v3968 = vmax.f32 %v3657, 0.0
      %v3969 = vmax.f32 %v3659, 0.0
      %v3970 = vmax.f32 %v3661, 0.0
      %v3971 = vmax.f32 %v3665, 0.0
      %v3972 = vmax.f32 %v3667, 0.0
      %v3973 = vmax.f32 %v3669, 0.0
      %v3974 = vmax.f32 %v3671, 0.0
      %v3975 = vmax.f32 %v3675, 0.0
      %v3976 = vmax.f32 %v3677, 0.0
      %v3977 = vmax.f32 %v3679, 0.0
      %v3978 = vmax.f32 %v3681, 0.0
      %v3979 = vmax.f32 %v3685, 0.0
      %v3980 = vmax.f32 %v3687, 0.0
      %v3981 = vmax.f32 %v3689, 0.0
      %v3982 = vmax.f32 %v3691, 0.0
      %v3983 = vmax.f32 %v3695, 0.0
      %v3984 = vmax.f32 %v3697, 0.0
      %v3985 = vmax.f32 %v3699, 0.0
      %v3986 = vmax.f32 %v3701, 0.0
      %v3987 = vmax.f32 %v3705, 0.0
      %v3988 = vmax.f32 %v3707, 0.0
      %v3989 = vmax.f32 %v3709, 0.0
      %v3990 = vmax.f32 %v3711, 0.0
      %v3991 = vmax.f32 %v3715, 0.0
      %v3992 = vmax.f32 %v3717, 0.0
      %v3993 = vmax.f32 %v3719, 0.0
      %v3994 = vmax.f32 %v3721, 0.0
      %v3995 = vmax.f32 %v3725, 0.0
      %v3996 = vmax.f32 %v3727, 0.0
      %v3997 = vmax.f32 %v3729, 0.0
      %v3998 = vmax.f32 %v3731, 0.0
      %v3999 = vmax.f32 %v3735, 0.0
      %v4000 = vmax.f32 %v3737, 0.0
      %v4001 = vmax.f32 %v3739, 0.0
      %v4002 = vmax.f32 %v3741, 0.0
      %v4003 = vmax.f32 %v3745, 0.0
      %v4004 = vmax.f32 %v3747, 0.0
      %v4005 = vmax.f32 %v3749, 0.0
      %v4006 = vmax.f32 %v3751, 0.0
      %v4007 = vmax.f32 %v3755, 0.0
      %v4008 = vmax.f32 %v3757, 0.0
      %v4009 = vmax.f32 %v3759, 0.0
      %v4010 = vmax.f32 %v3761, 0.0
      %v4011 = vmax.f32 %v3765, 0.0
      %v4012 = vmax.f32 %v3767, 0.0
      %v4013 = vmax.f32 %v3769, 0.0
      %v4014 = vmax.f32 %v3771, 0.0
      %v4015 = vmax.f32 %v3775, 0.0
      %v4016 = vmax.f32 %v3777, 0.0
      %v4017 = vmax.f32 %v3779, 0.0
      %v4018 = vmax.f32 %v3781, 0.0
      %v4019 = vmax.f32 %v3785, 0.0
      %v4020 = vmax.f32 %v3787, 0.0
      %v4021 = vmax.f32 %v3789, 0.0
      %v4022 = vmax.f32 %v3791, 0.0
      %v4023 = vmax.f32 %v3795, 0.0
      %v4024 = vmax.f32 %v3797, 0.0
      %v4025 = vmax.f32 %v3799, 0.0
      %v4026 = vmax.f32 %v3801, 0.0
      %v4027 = vmax.f32 %v3805, 0.0
      %v4028 = vmax.f32 %v3807, 0.0
      %v4029 = vmax.f32 %v3809, 0.0
      %v4030 = vmax.f32 %v3811, 0.0
      %v4031 = vmax.f32 %v3815, 0.0
      %v4032 = vmax.f32 %v3817, 0.0
      %v4033 = vmax.f32 %v3819, 0.0
      %v4034 = vmax.f32 %v3821, 0.0
      %v4035 = vmax.f32 %v3825, 0.0
      %v4036 = vmax.f32 %v3827, 0.0
      %v4037 = vmax.f32 %v3829, 0.0
      %v4038 = vmax.f32 %v3831, 0.0
      %v4039 = vmax.f32 %v3835, 0.0
      %v4040 = vmax.f32 %v3837, 0.0
      %v4041 = vmax.f32 %v3839, 0.0
      %v4042 = vmax.f32 %v3841, 0.0
      %v4043 = vmax.f32 %v3845, 0.0
      %v4044 = vmax.f32 %v3847, 0.0
      %v4045 = vmax.f32 %v3849, 0.0
      %v4046 = vmax.f32 %v3851, 0.0
      %v4047 = vmax.f32 %v3855, 0.0
      %v4048 = vmax.f32 %v3857, 0.0
      %v4049 = vmax.f32 %v3859, 0.0
      %v4050 = vmax.f32 %v3861, 0.0
      %v4051 = vmax.f32 %v3865, 0.0
      %v4052 = vmax.f32 %v3867, 0.0
      %v4053 = vmax.f32 %v3869, 0.0
      %v4054 = vmax.f32 %v3871, 0.0
      %v4055 = vmax.f32 %v3875, 0.0
      %v4056 = vmax.f32 %v3877, 0.0
      %v4057 = vmax.f32 %v3879, 0.0
      %v4058 = vmax.f32 %v3881, 0.0
      %v4059 = vmax.f32 %v3885, 0.0
      %v4060 = vmax.f32 %v3887, 0.0
      %v4061 = vmax.f32 %v3889, 0.0
      %v4062 = vmax.f32 %v3891, 0.0
      %v4063 = vmax.f32 %v3895, 0.0
      %v4064 = vmax.f32 %v3897, 0.0
      %v4065 = vmax.f32 %v3899, 0.0
      %v4066 = vmax.f32 %v3901, 0.0
      %v4067 = vmax.f32 %v3905, 0.0
      %v4068 = vmax.f32 %v3907, 0.0
      %v4069 = vmax.f32 %v3909, 0.0
      %v4070 = vmax.f32 %v3911, 0.0
      %v4071 = vmax.f32 %v3915, 0.0
      %v4072 = vmax.f32 %v3917, 0.0
      %v4073 = vmax.f32 %v3919, 0.0
      %v4074 = vmax.f32 %v3921, 0.0
      %v4075 = vmax.f32 %v3925, 0.0
      %v4076 = vmax.f32 %v3927, 0.0
      %v4077 = vmax.f32 %v3929, 0.0
      %v4078 = vmax.f32 %v3931, 0.0
      %v4079 = vmax.f32 %v3935, 0.0
      %v4080 = vmax.f32 %v3937, 0.0
      %v4081 = vmax.f32 %v3939, 0.0
      %v4082 = vmax.f32 %v3941, 0.0
      %v4083 = vmax.f32 %v3945, 0.0
      %v4084 = vmax.f32 %v3947, 0.0
      %v4085 = vmax.f32 %v3949, 0.0
      %v4086 = vmax.f32 %v3951, 0.0
      %v4087 = vmax.f32 %v3955, 0.0
      %v4088 = vmax.f32 %v3957, 0.0
      %v4089 = vmax.f32 %v3959, 0.0
      %v4090 = vmax.f32 %v3961, 0.0
      %v4091 = vpack.c.bf16 %v3965, %v3963
      %v4092 = vpack.c.bf16 %v3966, %v3964
      %v4093 = vpack.c.bf16 %v3969, %v3967
      %v4094 = vpack.c.bf16 %v3970, %v3968
      %v4095 = vpack.c.bf16 %v3973, %v3971
      %v4096 = vpack.c.bf16 %v3974, %v3972
      %v4097 = vpack.c.bf16 %v3977, %v3975
      %v4098 = vpack.c.bf16 %v3978, %v3976
      %v4099 = vpack.c.bf16 %v3981, %v3979
      %v4100 = vpack.c.bf16 %v3982, %v3980
      %v4101 = vpack.c.bf16 %v3985, %v3983
      %v4102 = vpack.c.bf16 %v3986, %v3984
      %v4103 = vpack.c.bf16 %v3989, %v3987
      %v4104 = vpack.c.bf16 %v3990, %v3988
      %v4105 = vpack.c.bf16 %v3993, %v3991
      %v4106 = vpack.c.bf16 %v3994, %v3992
      %v4107 = vpack.c.bf16 %v3997, %v3995
      %v4108 = vpack.c.bf16 %v3998, %v3996
      %v4109 = vpack.c.bf16 %v4001, %v3999
      %v4110 = vpack.c.bf16 %v4002, %v4000
      %v4111 = vpack.c.bf16 %v4005, %v4003
      %v4112 = vpack.c.bf16 %v4006, %v4004
      %v4113 = vpack.c.bf16 %v4009, %v4007
      %v4114 = vpack.c.bf16 %v4010, %v4008
      %v4115 = vpack.c.bf16 %v4013, %v4011
      %v4116 = vpack.c.bf16 %v4014, %v4012
      %v4117 = vpack.c.bf16 %v4017, %v4015
      %v4118 = vpack.c.bf16 %v4018, %v4016
      %v4119 = vpack.c.bf16 %v4021, %v4019
      %v4120 = vpack.c.bf16 %v4022, %v4020
      %v4121 = vpack.c.bf16 %v4025, %v4023
      %v4122 = vpack.c.bf16 %v4026, %v4024
      %v4123 = vpack.c.bf16 %v4029, %v4027
      %v4124 = vpack.c.bf16 %v4030, %v4028
      %v4125 = vpack.c.bf16 %v4033, %v4031
      %v4126 = vpack.c.bf16 %v4034, %v4032
      %v4127 = vpack.c.bf16 %v4037, %v4035
      %v4128 = vpack.c.bf16 %v4038, %v4036
      %v4129 = vpack.c.bf16 %v4041, %v4039
      %v4130 = vpack.c.bf16 %v4042, %v4040
      %v4131 = vpack.c.bf16 %v4045, %v4043
      %v4132 = vpack.c.bf16 %v4046, %v4044
      %v4133 = vpack.c.bf16 %v4049, %v4047
      %v4134 = vpack.c.bf16 %v4050, %v4048
      %v4135 = vpack.c.bf16 %v4053, %v4051
      %v4136 = vpack.c.bf16 %v4054, %v4052
      %v4137 = vpack.c.bf16 %v4057, %v4055
      %v4138 = vpack.c.bf16 %v4058, %v4056
      %v4139 = vpack.c.bf16 %v4061, %v4059
      %v4140 = vpack.c.bf16 %v4062, %v4060
      %v4141 = vpack.c.bf16 %v4065, %v4063
      %v4142 = vpack.c.bf16 %v4066, %v4064
      %v4143 = vpack.c.bf16 %v4069, %v4067
      %v4144 = vpack.c.bf16 %v4070, %v4068
      %v4145 = vpack.c.bf16 %v4073, %v4071
      %v4146 = vpack.c.bf16 %v4074, %v4072
      %v4147 = vpack.c.bf16 %v4077, %v4075
      %v4148 = vpack.c.bf16 %v4078, %v4076
      %v4149 = vpack.c.bf16 %v4081, %v4079
      %v4150 = vpack.c.bf16 %v4082, %v4080
      %v4151 = vpack.c.bf16 %v4085, %v4083
      %v4152 = vpack.c.bf16 %v4086, %v4084
      %v4153 = vpack.c.bf16 %v4089, %v4087
      %v4154 = vpack.c.bf16 %v4090, %v4088
      %s4155 = scalar_lea.vmem %s4, 1024
      %v4156 = vld [vmem:[%s4155] sm:$0xff]
      %v4157 = vld [vmem:[%s4155 + $0x8] sm:$0xff]
      %v4158 = vld [vmem:[%s4155 + $0x10] sm:$0xff]
      %v4159 = vld [vmem:[%s4155 + $0x18] sm:$0xff]
      %v4160 = vld [vmem:[%s4155 + $0x20] sm:$0xff]
      %v4161 = vld [vmem:[%s4155 + $0x28] sm:$0xff]
      %v4162 = vld [vmem:[%s4155 + $0x30] sm:$0xff]
      %v4163 = vld [vmem:[%s4155 + $0x38] sm:$0xff]
      %v4164 = vld [vmem:[%s4155 + $0x40] sm:$0xff]
      %v4165 = vld [vmem:[%s4155 + $0x48] sm:$0xff]
      %v4166 = vld [vmem:[%s4155 + $0x50] sm:$0xff]
      %v4167 = vld [vmem:[%s4155 + $0x58] sm:$0xff]
      %v4168 = vld [vmem:[%s4155 + $0x60] sm:$0xff]
      %v4169 = vld [vmem:[%s4155 + $0x68] sm:$0xff]
      %v4170 = vld [vmem:[%s4155 + $0x70] sm:$0xff]
      %v4171 = vld [vmem:[%s4155 + $0x78] sm:$0xff]
      %v4172 = vld [vmem:[%s4155 + $0x80] sm:$0xff]
      %v4173 = vld [vmem:[%s4155 + $0x88] sm:$0xff]
      %v4174 = vld [vmem:[%s4155 + $0x90] sm:$0xff]
      %v4175 = vld [vmem:[%s4155 + $0x98] sm:$0xff]
      %v4176 = vld [vmem:[%s4155 + $0xa0] sm:$0xff]
      %v4177 = vld [vmem:[%s4155 + $0xa8] sm:$0xff]
      %v4178 = vld [vmem:[%s4155 + $0xb0] sm:$0xff]
      %v4179 = vld [vmem:[%s4155 + $0xb8] sm:$0xff]
      %v4180 = vld [vmem:[%s4155 + $0xc0] sm:$0xff]
      %v4181 = vld [vmem:[%s4155 + $0xc8] sm:$0xff]
      %v4182 = vld [vmem:[%s4155 + $0xd0] sm:$0xff]
      %v4183 = vld [vmem:[%s4155 + $0xd8] sm:$0xff]
      %v4184 = vld [vmem:[%s4155 + $0xe0] sm:$0xff]
      %v4185 = vld [vmem:[%s4155 + $0xe8] sm:$0xff]
      %v4186 = vld [vmem:[%s4155 + $0xf0] sm:$0xff]
      %v4187 = vld [vmem:[%s4155 + $0xf8] sm:$0xff]
      %s4188 = scalar_lea.vmem %s5, 8
      %v4189 = vld [vmem:[%s4188] sm:$0x3]
      %v4191 = vlaneseq
      %v4192 = vshrl.u32 %v4191, 7
      %v4193 = vsub.s32 0, %v4192
      %v4194 = vrot.slane %v4189, %v4193
      %v4195 = vlaneseq
      %v4196 = vshrl.u32 %v4195, 7
      %v4197 = vsub.s32 1, %v4196
      %v4198 = vrot.slane %v4189, %v4197
      %v4233 = vunpack.c.l.b16 %v4156
      %v4234 = vunpack.c.h.b16 %v4156
      %v4235 = vunpack.c.l.b16 %v4157
      %v4236 = vunpack.c.h.b16 %v4157
      %v4237 = vunpack.c.l.b16 %v4158
      %v4238 = vunpack.c.h.b16 %v4158
      %v4239 = vunpack.c.l.b16 %v4159
      %v4240 = vunpack.c.h.b16 %v4159
      %v4241 = vunpack.c.l.b16 %v4160
      %v4242 = vunpack.c.h.b16 %v4160
      %v4243 = vunpack.c.l.b16 %v4161
      %v4244 = vunpack.c.h.b16 %v4161
      %v4245 = vunpack.c.l.b16 %v4162
      %v4246 = vunpack.c.h.b16 %v4162
      %v4247 = vunpack.c.l.b16 %v4163
      %v4248 = vunpack.c.h.b16 %v4163
      %v4249 = vunpack.c.l.b16 %v4164
      %v4250 = vunpack.c.h.b16 %v4164
      %v4251 = vunpack.c.l.b16 %v4165
      %v4252 = vunpack.c.h.b16 %v4165
      %v4253 = vunpack.c.l.b16 %v4166
      %v4254 = vunpack.c.h.b16 %v4166
      %v4255 = vunpack.c.l.b16 %v4167
      %v4256 = vunpack.c.h.b16 %v4167
      %v4257 = vunpack.c.l.b16 %v4168
      %v4258 = vunpack.c.h.b16 %v4168
      %v4259 = vunpack.c.l.b16 %v4169
      %v4260 = vunpack.c.h.b16 %v4169
      %v4261 = vunpack.c.l.b16 %v4170
      %v4262 = vunpack.c.h.b16 %v4170
      %v4263 = vunpack.c.l.b16 %v4171
      %v4264 = vunpack.c.h.b16 %v4171
      %v4265 = vunpack.c.l.b16 %v4172
      %v4266 = vunpack.c.h.b16 %v4172
      %v4267 = vunpack.c.l.b16 %v4173
      %v4268 = vunpack.c.h.b16 %v4173
      %v4269 = vunpack.c.l.b16 %v4174
      %v4270 = vunpack.c.h.b16 %v4174
      %v4271 = vunpack.c.l.b16 %v4175
      %v4272 = vunpack.c.h.b16 %v4175
      %v4273 = vunpack.c.l.b16 %v4176
      %v4274 = vunpack.c.h.b16 %v4176
      %v4275 = vunpack.c.l.b16 %v4177
      %v4276 = vunpack.c.h.b16 %v4177
      %v4277 = vunpack.c.l.b16 %v4178
      %v4278 = vunpack.c.h.b16 %v4178
      %v4279 = vunpack.c.l.b16 %v4179
      %v4280 = vunpack.c.h.b16 %v4179
      %v4281 = vunpack.c.l.b16 %v4180
      %v4282 = vunpack.c.h.b16 %v4180
      %v4283 = vunpack.c.l.b16 %v4181
      %v4284 = vunpack.c.h.b16 %v4181
      %v4285 = vunpack.c.l.b16 %v4182
      %v4286 = vunpack.c.h.b16 %v4182
      %v4287 = vunpack.c.l.b16 %v4183
      %v4288 = vunpack.c.h.b16 %v4183
      %v4289 = vunpack.c.l.b16 %v4184
      %v4290 = vunpack.c.h.b16 %v4184
      %v4291 = vunpack.c.l.b16 %v4185
      %v4292 = vunpack.c.h.b16 %v4185
      %v4293 = vunpack.c.l.b16 %v4186
      %v4294 = vunpack.c.h.b16 %v4186
      %v4295 = vunpack.c.l.b16 %v4187
      %v4296 = vunpack.c.h.b16 %v4187
      %v4297 = vpack.c.b16 %v4235, %v4233
      %v4298 = vpack.c.b16 %v4236, %v4234
      %v4299 = vpack.c.b16 %v4239, %v4237
      %v4300 = vpack.c.b16 %v4240, %v4238
      %v4301 = vpack.c.b16 %v4243, %v4241
      %v4302 = vpack.c.b16 %v4244, %v4242
      %v4303 = vpack.c.b16 %v4247, %v4245
      %v4304 = vpack.c.b16 %v4248, %v4246
      %v4305 = vpack.c.b16 %v4251, %v4249
      %v4306 = vpack.c.b16 %v4252, %v4250
      %v4307 = vpack.c.b16 %v4255, %v4253
      %v4308 = vpack.c.b16 %v4256, %v4254
      %v4309 = vpack.c.b16 %v4259, %v4257
      %v4310 = vpack.c.b16 %v4260, %v4258
      %v4311 = vpack.c.b16 %v4263, %v4261
      %v4312 = vpack.c.b16 %v4264, %v4262
      %v4313 = vpack.c.b16 %v4267, %v4265
      %v4314 = vpack.c.b16 %v4268, %v4266
      %v4315 = vpack.c.b16 %v4271, %v4269
      %v4316 = vpack.c.b16 %v4272, %v4270
      %v4317 = vpack.c.b16 %v4275, %v4273
      %v4318 = vpack.c.b16 %v4276, %v4274
      %v4319 = vpack.c.b16 %v4279, %v4277
      %v4320 = vpack.c.b16 %v4280, %v4278
      %v4321 = vpack.c.b16 %v4283, %v4281
      %v4322 = vpack.c.b16 %v4284, %v4282
      %v4323 = vpack.c.b16 %v4287, %v4285
      %v4324 = vpack.c.b16 %v4288, %v4286
      %v4325 = vpack.c.b16 %v4291, %v4289
      %v4326 = vpack.c.b16 %v4292, %v4290
      %v4327 = vpack.c.b16 %v4295, %v4293
      %v4328 = vpack.c.b16 %v4296, %v4294
      %4361 = vmatprep.subr.bf16.mxu0 %v4298
      %4362 = vmatpush1.bf16.msra.mxu0 %v4297
      %4363 = vmatprep.subr.bf16.mxu0 %v4300
      %4364 = vmatpush1.bf16.msra.mxu0 %v4299
      %4365 = vmatprep.subr.bf16.mxu0 %v4302
      %4366 = vmatpush1.bf16.msra.mxu0 %v4301
      %4367 = vmatprep.subr.bf16.mxu0 %v4304
      %4368 = vmatpush1.bf16.msra.mxu0 %v4303
      %4369 = vmatprep.subr.bf16.mxu0 %v4306
      %4370 = vmatpush1.bf16.msra.mxu0 %v4305
      %4371 = vmatprep.subr.bf16.mxu0 %v4308
      %4372 = vmatpush1.bf16.msra.mxu0 %v4307
      %4373 = vmatprep.subr.bf16.mxu0 %v4310
      %4374 = vmatpush1.bf16.msra.mxu0 %v4309
      %4375 = vmatprep.subr.bf16.mxu0 %v4312
      %4376 = vmatpush1.bf16.msra.mxu0 %v4311
      %4377 = vmatprep.subr.bf16.mxu0 %v4314
      %4378 = vmatpush1.bf16.msra.mxu0 %v4313
      %4379 = vmatprep.subr.bf16.mxu0 %v4316
      %4380 = vmatpush1.bf16.msra.mxu0 %v4315
      %4381 = vmatprep.subr.bf16.mxu0 %v4318
      %4382 = vmatpush1.bf16.msra.mxu0 %v4317
      %4383 = vmatprep.subr.bf16.mxu0 %v4320
      %4384 = vmatpush1.bf16.msra.mxu0 %v4319
      %4385 = vmatprep.subr.bf16.mxu0 %v4322
      %4386 = vmatpush1.bf16.msra.mxu0 %v4321
      %4387 = vmatprep.subr.bf16.mxu0 %v4324
      %4388 = vmatpush1.bf16.msra.mxu0 %v4323
      %4389 = vmatprep.subr.bf16.mxu0 %v4326
      %4390 = vmatpush1.bf16.msra.mxu0 %v4325
      %4391 = vmatprep.subr.bf16.mxu0 %v4328
      %4392 = vmatpush1.bf16.msra.mxu0 %v4327
      %4393 = vmatprep.mubr.bf16.mxu0 %v4092
      %4394 = vmatmul.mubr.bf16.gmra.mrb[0].mxu0 %v4091
      %v4395 = vpop.f32.mrb[0].mxu0
      %v4396 = vadd.f32 %v4194, %v4395
      %v4397 = vpop.f32.mrb[0].mxu0
      %v4398 = vadd.f32 %v4198, %v4397
      %v4399 = vpop.f32.mrb[0].mxu0
      %v4400 = vadd.f32 %v4194, %v4399
      %v4401 = vpop.f32.mrb[0].mxu0
      %v4402 = vadd.f32 %v4198, %v4401
      %4403 = vmatprep.mubr.bf16.mxu0 %v4094
      %4404 = vmatmul.mubr.bf16.gmra.mrb[0].mxu0 %v4093
      %v4405 = vpop.f32.mrb[0].mxu0
      %v4406 = vadd.f32 %v4194, %v4405
      %v4407 = vpop.f32.mrb[0].mxu0
      %v4408 = vadd.f32 %v4198, %v4407
      %v4409 = vpop.f32.mrb[0].mxu0
      %v4410 = vadd.f32 %v4194, %v4409
      %v4411 = vpop.f32.mrb[0].mxu0
      %v4412 = vadd.f32 %v4198, %v4411
      %4413 = vmatprep.mubr.bf16.mxu0 %v4096
      %4414 = vmatmul.mubr.bf16.gmra.mrb[0].mxu0 %v4095
      %v4415 = vpop.f32.mrb[0].mxu0
      %v4416 = vadd.f32 %v4194, %v4415
      %v4417 = vpop.f32.mrb[0].mxu0
      %v4418 = vadd.f32 %v4198, %v4417
      %v4419 = vpop.f32.mrb[0].mxu0
      %v4420 = vadd.f32 %v4194, %v4419
      %v4421 = vpop.f32.mrb[0].mxu0
      %v4422 = vadd.f32 %v4198, %v4421
      %4423 = vmatprep.mubr.bf16.mxu0 %v4098
      %4424 = vmatmul.mubr.bf16.gmra.mrb[0].mxu0 %v4097
      %v4425 = vpop.f32.mrb[0].mxu0
      %v4426 = vadd.f32 %v4194, %v4425
      %v4427 = vpop.f32.mrb[0].mxu0
      %v4428 = vadd.f32 %v4198, %v4427
      %v4429 = vpop.f32.mrb[0].mxu0
      %v4430 = vadd.f32 %v4194, %v4429
      %v4431 = vpop.f32.mrb[0].mxu0
      %v4432 = vadd.f32 %v4198, %v4431
      %4433 = vmatprep.mubr.bf16.mxu0 %v4100
      %4434 = vmatmul.mubr.bf16.gmra.mrb[0].mxu0 %v4099
      %v4435 = vpop.f32.mrb[0].mxu0
      %v4436 = vadd.f32 %v4194, %v4435
      %v4437 = vpop.f32.mrb[0].mxu0
      %v4438 = vadd.f32 %v4198, %v4437
      %v4439 = vpop.f32.mrb[0].mxu0
      %v4440 = vadd.f32 %v4194, %v4439
      %v4441 = vpop.f32.mrb[0].mxu0
      %v4442 = vadd.f32 %v4198, %v4441
      %4443 = vmatprep.mubr.bf16.mxu0 %v4102
      %4444 = vmatmul.mubr.bf16.gmra.mrb[0].mxu0 %v4101
      %v4445 = vpop.f32.mrb[0].mxu0
      %v4446 = vadd.f32 %v4194, %v4445
      %v4447 = vpop.f32.mrb[0].mxu0
      %v4448 = vadd.f32 %v4198, %v4447
      %v4449 = vpop.f32.mrb[0].mxu0
      %v4450 = vadd.f32 %v4194, %v4449
      %v4451 = vpop.f32.mrb[0].mxu0
      %v4452 = vadd.f32 %v4198, %v4451
      %4453 = vmatprep.mubr.bf16.mxu0 %v4104
      %4454 = vmatmul.mubr.bf16.gmra.mrb[0].mxu0 %v4103
      %v4455 = vpop.f32.mrb[0].mxu0
      %v4456 = vadd.f32 %v4194, %v4455
      %v4457 = vpop.f32.mrb[0].mxu0
      %v4458 = vadd.f32 %v4198, %v4457
      %v4459 = vpop.f32.mrb[0].mxu0
      %v4460 = vadd.f32 %v4194, %v4459
      %v4461 = vpop.f32.mrb[0].mxu0
      %v4462 = vadd.f32 %v4198, %v4461
      %4463 = vmatprep.mubr.bf16.mxu0 %v4106
      %4464 = vmatmul.mubr.bf16.gmra.mrb[0].mxu0 %v4105
      %v4465 = vpop.f32.mrb[0].mxu0
      %v4466 = vadd.f32 %v4194, %v4465
      %v4467 = vpop.f32.mrb[0].mxu0
      %v4468 = vadd.f32 %v4198, %v4467
      %v4469 = vpop.f32.mrb[0].mxu0
      %v4470 = vadd.f32 %v4194, %v4469
      %v4471 = vpop.f32.mrb[0].mxu0
      %v4472 = vadd.f32 %v4198, %v4471
      %4473 = vmatprep.mubr.bf16.mxu0 %v4108
      %4474 = vmatmul.mubr.bf16.gmra.mrb[0].mxu0 %v4107
      %v4475 = vpop.f32.mrb[0].mxu0
      %v4476 = vadd.f32 %v4194, %v4475
      %v4477 = vpop.f32.mrb[0].mxu0
      %v4478 = vadd.f32 %v4198, %v4477
      %v4479 = vpop.f32.mrb[0].mxu0
      %v4480 = vadd.f32 %v4194, %v4479
      %v4481 = vpop.f32.mrb[0].mxu0
      %v4482 = vadd.f32 %v4198, %v4481
      %4483 = vmatprep.mubr.bf16.mxu0 %v4110
      %4484 = vmatmul.mubr.bf16.gmra.mrb[0].mxu0 %v4109
      %v4485 = vpop.f32.mrb[0].mxu0
      %v4486 = vadd.f32 %v4194, %v4485
      %v4487 = vpop.f32.mrb[0].mxu0
      %v4488 = vadd.f32 %v4198, %v4487
      %v4489 = vpop.f32.mrb[0].mxu0
      %v4490 = vadd.f32 %v4194, %v4489
      %v4491 = vpop.f32.mrb[0].mxu0
      %v4492 = vadd.f32 %v4198, %v4491
      %4493 = vmatprep.mubr.bf16.mxu0 %v4112
      %4494 = vmatmul.mubr.bf16.gmra.mrb[0].mxu0 %v4111
      %v4495 = vpop.f32.mrb[0].mxu0
      %v4496 = vadd.f32 %v4194, %v4495
      %v4497 = vpop.f32.mrb[0].mxu0
      %v4498 = vadd.f32 %v4198, %v4497
      %v4499 = vpop.f32.mrb[0].mxu0
      %v4500 = vadd.f32 %v4194, %v4499
      %v4501 = vpop.f32.mrb[0].mxu0
      %v4502 = vadd.f32 %v4198, %v4501
      %4503 = vmatprep.mubr.bf16.mxu0 %v4114
      %4504 = vmatmul.mubr.bf16.gmra.mrb[0].mxu0 %v4113
      %v4505 = vpop.f32.mrb[0].mxu0
      %v4506 = vadd.f32 %v4194, %v4505
      %v4507 = vpop.f32.mrb[0].mxu0
      %v4508 = vadd.f32 %v4198, %v4507
      %v4509 = vpop.f32.mrb[0].mxu0
      %v4510 = vadd.f32 %v4194, %v4509
      %v4511 = vpop.f32.mrb[0].mxu0
      %v4512 = vadd.f32 %v4198, %v4511
      %4513 = vmatprep.mubr.bf16.mxu0 %v4116
      %4514 = vmatmul.mubr.bf16.gmra.mrb[0].mxu0 %v4115
      %v4515 = vpop.f32.mrb[0].mxu0
      %v4516 = vadd.f32 %v4194, %v4515
      %v4517 = vpop.f32.mrb[0].mxu0
      %v4518 = vadd.f32 %v4198, %v4517
      %v4519 = vpop.f32.mrb[0].mxu0
      %v4520 = vadd.f32 %v4194, %v4519
      %v4521 = vpop.f32.mrb[0].mxu0
      %v4522 = vadd.f32 %v4198, %v4521
      %4523 = vmatprep.mubr.bf16.mxu0 %v4118
      %4524 = vmatmul.mubr.bf16.gmra.mrb[0].mxu0 %v4117
      %v4525 = vpop.f32.mrb[0].mxu0
      %v4526 = vadd.f32 %v4194, %v4525
      %v4527 = vpop.f32.mrb[0].mxu0
      %v4528 = vadd.f32 %v4198, %v4527
      %v4529 = vpop.f32.mrb[0].mxu0
      %v4530 = vadd.f32 %v4194, %v4529
      %v4531 = vpop.f32.mrb[0].mxu0
      %v4532 = vadd.f32 %v4198, %v4531
      %4533 = vmatprep.mubr.bf16.mxu0 %v4120
      %4534 = vmatmul.mubr.bf16.gmra.mrb[0].mxu0 %v4119
      %v4535 = vpop.f32.mrb[0].mxu0
      %v4536 = vadd.f32 %v4194, %v4535
      %v4537 = vpop.f32.mrb[0].mxu0
      %v4538 = vadd.f32 %v4198, %v4537
      %v4539 = vpop.f32.mrb[0].mxu0
      %v4540 = vadd.f32 %v4194, %v4539
      %v4541 = vpop.f32.mrb[0].mxu0
      %v4542 = vadd.f32 %v4198, %v4541
      %4543 = vmatprep.mubr.bf16.mxu0 %v4122
      %4544 = vmatmul.mubr.bf16.gmra.mrb[0].mxu0 %v4121
      %v4545 = vpop.f32.mrb[0].mxu0
      %v4546 = vadd.f32 %v4194, %v4545
      %v4547 = vpop.f32.mrb[0].mxu0
      %v4548 = vadd.f32 %v4198, %v4547
      %v4549 = vpop.f32.mrb[0].mxu0
      %v4550 = vadd.f32 %v4194, %v4549
      %v4551 = vpop.f32.mrb[0].mxu0
      %v4552 = vadd.f32 %v4198, %v4551
      %4553 = vmatprep.mubr.bf16.mxu0 %v4124
      %4554 = vmatmul.mubr.bf16.gmra.mrb[0].mxu0 %v4123
      %v4555 = vpop.f32.mrb[0].mxu0
      %v4556 = vadd.f32 %v4194, %v4555
      %v4557 = vpop.f32.mrb[0].mxu0
      %v4558 = vadd.f32 %v4198, %v4557
      %v4559 = vpop.f32.mrb[0].mxu0
      %v4560 = vadd.f32 %v4194, %v4559
      %v4561 = vpop.f32.mrb[0].mxu0
      %v4562 = vadd.f32 %v4198, %v4561
      %4563 = vmatprep.mubr.bf16.mxu0 %v4126
      %4564 = vmatmul.mubr.bf16.gmra.mrb[0].mxu0 %v4125
      %v4565 = vpop.f32.mrb[0].mxu0
      %v4566 = vadd.f32 %v4194, %v4565
      %v4567 = vpop.f32.mrb[0].mxu0
      %v4568 = vadd.f32 %v4198, %v4567
      %v4569 = vpop.f32.mrb[0].mxu0
      %v4570 = vadd.f32 %v4194, %v4569
      %v4571 = vpop.f32.mrb[0].mxu0
      %v4572 = vadd.f32 %v4198, %v4571
      %4573 = vmatprep.mubr.bf16.mxu0 %v4128
      %4574 = vmatmul.mubr.bf16.gmra.mrb[0].mxu0 %v4127
      %v4575 = vpop.f32.mrb[0].mxu0
      %v4576 = vadd.f32 %v4194, %v4575
      %v4577 = vpop.f32.mrb[0].mxu0
      %v4578 = vadd.f32 %v4198, %v4577
      %v4579 = vpop.f32.mrb[0].mxu0
      %v4580 = vadd.f32 %v4194, %v4579
      %v4581 = vpop.f32.mrb[0].mxu0
      %v4582 = vadd.f32 %v4198, %v4581
      %4583 = vmatprep.mubr.bf16.mxu0 %v4130
      %4584 = vmatmul.mubr.bf16.gmra.mrb[0].mxu0 %v4129
      %v4585 = vpop.f32.mrb[0].mxu0
      %v4586 = vadd.f32 %v4194, %v4585
      %v4587 = vpop.f32.mrb[0].mxu0
      %v4588 = vadd.f32 %v4198, %v4587
      %v4589 = vpop.f32.mrb[0].mxu0
      %v4590 = vadd.f32 %v4194, %v4589
      %v4591 = vpop.f32.mrb[0].mxu0
      %v4592 = vadd.f32 %v4198, %v4591
      %4593 = vmatprep.mubr.bf16.mxu0 %v4132
      %4594 = vmatmul.mubr.bf16.gmra.mrb[0].mxu0 %v4131
      %v4595 = vpop.f32.mrb[0].mxu0
      %v4596 = vadd.f32 %v4194, %v4595
      %v4597 = vpop.f32.mrb[0].mxu0
      %v4598 = vadd.f32 %v4198, %v4597
      %v4599 = vpop.f32.mrb[0].mxu0
      %v4600 = vadd.f32 %v4194, %v4599
      %v4601 = vpop.f32.mrb[0].mxu0
      %v4602 = vadd.f32 %v4198, %v4601
      %4603 = vmatprep.mubr.bf16.mxu0 %v4134
      %4604 = vmatmul.mubr.bf16.gmra.mrb[0].mxu0 %v4133
      %v4605 = vpop.f32.mrb[0].mxu0
      %v4606 = vadd.f32 %v4194, %v4605
      %v4607 = vpop.f32.mrb[0].mxu0
      %v4608 = vadd.f32 %v4198, %v4607
      %v4609 = vpop.f32.mrb[0].mxu0
      %v4610 = vadd.f32 %v4194, %v4609
      %v4611 = vpop.f32.mrb[0].mxu0
      %v4612 = vadd.f32 %v4198, %v4611
      %4613 = vmatprep.mubr.bf16.mxu0 %v4136
      %4614 = vmatmul.mubr.bf16.gmra.mrb[0].mxu0 %v4135
      %v4615 = vpop.f32.mrb[0].mxu0
      %v4616 = vadd.f32 %v4194, %v4615
      %v4617 = vpop.f32.mrb[0].mxu0
      %v4618 = vadd.f32 %v4198, %v4617
      %v4619 = vpop.f32.mrb[0].mxu0
      %v4620 = vadd.f32 %v4194, %v4619
      %v4621 = vpop.f32.mrb[0].mxu0
      %v4622 = vadd.f32 %v4198, %v4621
      %4623 = vmatprep.mubr.bf16.mxu0 %v4138
      %4624 = vmatmul.mubr.bf16.gmra.mrb[0].mxu0 %v4137
      %v4625 = vpop.f32.mrb[0].mxu0
      %v4626 = vadd.f32 %v4194, %v4625
      %v4627 = vpop.f32.mrb[0].mxu0
      %v4628 = vadd.f32 %v4198, %v4627
      %v4629 = vpop.f32.mrb[0].mxu0
      %v4630 = vadd.f32 %v4194, %v4629
      %v4631 = vpop.f32.mrb[0].mxu0
      %v4632 = vadd.f32 %v4198, %v4631
      %4633 = vmatprep.mubr.bf16.mxu0 %v4140
      %4634 = vmatmul.mubr.bf16.gmra.mrb[0].mxu0 %v4139
      %v4635 = vpop.f32.mrb[0].mxu0
      %v4636 = vadd.f32 %v4194, %v4635
      %v4637 = vpop.f32.mrb[0].mxu0
      %v4638 = vadd.f32 %v4198, %v4637
      %v4639 = vpop.f32.mrb[0].mxu0
      %v4640 = vadd.f32 %v4194, %v4639
      %v4641 = vpop.f32.mrb[0].mxu0
      %v4642 = vadd.f32 %v4198, %v4641
      %4643 = vmatprep.mubr.bf16.mxu0 %v4142
      %4644 = vmatmul.mubr.bf16.gmra.mrb[0].mxu0 %v4141
      %v4645 = vpop.f32.mrb[0].mxu0
      %v4646 = vadd.f32 %v4194, %v4645
      %v4647 = vpop.f32.mrb[0].mxu0
      %v4648 = vadd.f32 %v4198, %v4647
      %v4649 = vpop.f32.mrb[0].mxu0
      %v4650 = vadd.f32 %v4194, %v4649
      %v4651 = vpop.f32.mrb[0].mxu0
      %v4652 = vadd.f32 %v4198, %v4651
      %4653 = vmatprep.mubr.bf16.mxu0 %v4144
      %4654 = vmatmul.mubr.bf16.gmra.mrb[0].mxu0 %v4143
      %v4655 = vpop.f32.mrb[0].mxu0
      %v4656 = vadd.f32 %v4194, %v4655
      %v4657 = vpop.f32.mrb[0].mxu0
      %v4658 = vadd.f32 %v4198, %v4657
      %v4659 = vpop.f32.mrb[0].mxu0
      %v4660 = vadd.f32 %v4194, %v4659
      %v4661 = vpop.f32.mrb[0].mxu0
      %v4662 = vadd.f32 %v4198, %v4661
      %4663 = vmatprep.mubr.bf16.mxu0 %v4146
      %4664 = vmatmul.mubr.bf16.gmra.mrb[0].mxu0 %v4145
      %v4665 = vpop.f32.mrb[0].mxu0
      %v4666 = vadd.f32 %v4194, %v4665
      %v4667 = vpop.f32.mrb[0].mxu0
      %v4668 = vadd.f32 %v4198, %v4667
      %v4669 = vpop.f32.mrb[0].mxu0
      %v4670 = vadd.f32 %v4194, %v4669
      %v4671 = vpop.f32.mrb[0].mxu0
      %v4672 = vadd.f32 %v4198, %v4671
      %4673 = vmatprep.mubr.bf16.mxu0 %v4148
      %4674 = vmatmul.mubr.bf16.gmra.mrb[0].mxu0 %v4147
      %v4675 = vpop.f32.mrb[0].mxu0
      %v4676 = vadd.f32 %v4194, %v4675
      %v4677 = vpop.f32.mrb[0].mxu0
      %v4678 = vadd.f32 %v4198, %v4677
      %v4679 = vpop.f32.mrb[0].mxu0
      %v4680 = vadd.f32 %v4194, %v4679
      %v4681 = vpop.f32.mrb[0].mxu0
      %v4682 = vadd.f32 %v4198, %v4681
      %4683 = vmatprep.mubr.bf16.mxu0 %v4150
      %4684 = vmatmul.mubr.bf16.gmra.mrb[0].mxu0 %v4149
      %v4685 = vpop.f32.mrb[0].mxu0
      %v4686 = vadd.f32 %v4194, %v4685
      %v4687 = vpop.f32.mrb[0].mxu0
      %v4688 = vadd.f32 %v4198, %v4687
      %v4689 = vpop.f32.mrb[0].mxu0
      %v4690 = vadd.f32 %v4194, %v4689
      %v4691 = vpop.f32.mrb[0].mxu0
      %v4692 = vadd.f32 %v4198, %v4691
      %4693 = vmatprep.mubr.bf16.mxu0 %v4152
      %4694 = vmatmul.mubr.bf16.gmra.mrb[0].mxu0 %v4151
      %v4695 = vpop.f32.mrb[0].mxu0
      %v4696 = vadd.f32 %v4194, %v4695
      %v4697 = vpop.f32.mrb[0].mxu0
      %v4698 = vadd.f32 %v4198, %v4697
      %v4699 = vpop.f32.mrb[0].mxu0
      %v4700 = vadd.f32 %v4194, %v4699
      %v4701 = vpop.f32.mrb[0].mxu0
      %v4702 = vadd.f32 %v4198, %v4701
      %4703 = vmatprep.mubr.bf16.mxu0 %v4154
      %4704 = vmatmul.mubr.bf16.gmra.mrb[0].mxu0 %v4153
      %v4705 = vpop.f32.mrb[0].mxu0
      %v4706 = vadd.f32 %v4194, %v4705
      %v4707 = vpop.f32.mrb[0].mxu0
      %v4708 = vadd.f32 %v4198, %v4707
      %v4709 = vpop.f32.mrb[0].mxu0
      %v4710 = vadd.f32 %v4194, %v4709
      %v4711 = vpop.f32.mrb[0].mxu0
      %v4712 = vadd.f32 %v4198, %v4711
      %4713 = vdwg.mxu0
      %v4714 = vmax.f32 %v4396, 0.0
      %v4715 = vmax.f32 %v4398, 0.0
      %v4716 = vmax.f32 %v4400, 0.0
      %v4717 = vmax.f32 %v4402, 0.0
      %v4718 = vmax.f32 %v4406, 0.0
      %v4719 = vmax.f32 %v4408, 0.0
      %v4720 = vmax.f32 %v4410, 0.0
      %v4721 = vmax.f32 %v4412, 0.0
      %v4722 = vmax.f32 %v4416, 0.0
      %v4723 = vmax.f32 %v4418, 0.0
      %v4724 = vmax.f32 %v4420, 0.0
      %v4725 = vmax.f32 %v4422, 0.0
      %v4726 = vmax.f32 %v4426, 0.0
      %v4727 = vmax.f32 %v4428, 0.0
      %v4728 = vmax.f32 %v4430, 0.0
      %v4729 = vmax.f32 %v4432, 0.0
      %v4730 = vmax.f32 %v4436, 0.0
      %v4731 = vmax.f32 %v4438, 0.0
      %v4732 = vmax.f32 %v4440, 0.0
      %v4733 = vmax.f32 %v4442, 0.0
      %v4734 = vmax.f32 %v4446, 0.0
      %v4735 = vmax.f32 %v4448, 0.0
      %v4736 = vmax.f32 %v4450, 0.0
      %v4737 = vmax.f32 %v4452, 0.0
      %v4738 = vmax.f32 %v4456, 0.0
      %v4739 = vmax.f32 %v4458, 0.0
      %v4740 = vmax.f32 %v4460, 0.0
      %v4741 = vmax.f32 %v4462, 0.0
      %v4742 = vmax.f32 %v4466, 0.0
      %v4743 = vmax.f32 %v4468, 0.0
      %v4744 = vmax.f32 %v4470, 0.0
      %v4745 = vmax.f32 %v4472, 0.0
      %v4746 = vmax.f32 %v4476, 0.0
      %v4747 = vmax.f32 %v4478, 0.0
      %v4748 = vmax.f32 %v4480, 0.0
      %v4749 = vmax.f32 %v4482, 0.0
      %v4750 = vmax.f32 %v4486, 0.0
      %v4751 = vmax.f32 %v4488, 0.0
      %v4752 = vmax.f32 %v4490, 0.0
      %v4753 = vmax.f32 %v4492, 0.0
      %v4754 = vmax.f32 %v4496, 0.0
      %v4755 = vmax.f32 %v4498, 0.0
      %v4756 = vmax.f32 %v4500, 0.0
      %v4757 = vmax.f32 %v4502, 0.0
      %v4758 = vmax.f32 %v4506, 0.0
      %v4759 = vmax.f32 %v4508, 0.0
      %v4760 = vmax.f32 %v4510, 0.0
      %v4761 = vmax.f32 %v4512, 0.0
      %v4762 = vmax.f32 %v4516, 0.0
      %v4763 = vmax.f32 %v4518, 0.0
      %v4764 = vmax.f32 %v4520, 0.0
      %v4765 = vmax.f32 %v4522, 0.0
      %v4766 = vmax.f32 %v4526, 0.0
      %v4767 = vmax.f32 %v4528, 0.0
      %v4768 = vmax.f32 %v4530, 0.0
      %v4769 = vmax.f32 %v4532, 0.0
      %v4770 = vmax.f32 %v4536, 0.0
      %v4771 = vmax.f32 %v4538, 0.0
      %v4772 = vmax.f32 %v4540, 0.0
      %v4773 = vmax.f32 %v4542, 0.0
      %v4774 = vmax.f32 %v4546, 0.0
      %v4775 = vmax.f32 %v4548, 0.0
      %v4776 = vmax.f32 %v4550, 0.0
      %v4777 = vmax.f32 %v4552, 0.0
      %v4778 = vmax.f32 %v4556, 0.0
      %v4779 = vmax.f32 %v4558, 0.0
      %v4780 = vmax.f32 %v4560, 0.0
      %v4781 = vmax.f32 %v4562, 0.0
      %v4782 = vmax.f32 %v4566, 0.0
      %v4783 = vmax.f32 %v4568, 0.0
      %v4784 = vmax.f32 %v4570, 0.0
      %v4785 = vmax.f32 %v4572, 0.0
      %v4786 = vmax.f32 %v4576, 0.0
      %v4787 = vmax.f32 %v4578, 0.0
      %v4788 = vmax.f32 %v4580, 0.0
      %v4789 = vmax.f32 %v4582, 0.0
      %v4790 = vmax.f32 %v4586, 0.0
      %v4791 = vmax.f32 %v4588, 0.0
      %v4792 = vmax.f32 %v4590, 0.0
      %v4793 = vmax.f32 %v4592, 0.0
      %v4794 = vmax.f32 %v4596, 0.0
      %v4795 = vmax.f32 %v4598, 0.0
      %v4796 = vmax.f32 %v4600, 0.0
      %v4797 = vmax.f32 %v4602, 0.0
      %v4798 = vmax.f32 %v4606, 0.0
      %v4799 = vmax.f32 %v4608, 0.0
      %v4800 = vmax.f32 %v4610, 0.0
      %v4801 = vmax.f32 %v4612, 0.0
      %v4802 = vmax.f32 %v4616, 0.0
      %v4803 = vmax.f32 %v4618, 0.0
      %v4804 = vmax.f32 %v4620, 0.0
      %v4805 = vmax.f32 %v4622, 0.0
      %v4806 = vmax.f32 %v4626, 0.0
      %v4807 = vmax.f32 %v4628, 0.0
      %v4808 = vmax.f32 %v4630, 0.0
      %v4809 = vmax.f32 %v4632, 0.0
      %v4810 = vmax.f32 %v4636, 0.0
      %v4811 = vmax.f32 %v4638, 0.0
      %v4812 = vmax.f32 %v4640, 0.0
      %v4813 = vmax.f32 %v4642, 0.0
      %v4814 = vmax.f32 %v4646, 0.0
      %v4815 = vmax.f32 %v4648, 0.0
      %v4816 = vmax.f32 %v4650, 0.0
      %v4817 = vmax.f32 %v4652, 0.0
      %v4818 = vmax.f32 %v4656, 0.0
      %v4819 = vmax.f32 %v4658, 0.0
      %v4820 = vmax.f32 %v4660, 0.0
      %v4821 = vmax.f32 %v4662, 0.0
      %v4822 = vmax.f32 %v4666, 0.0
      %v4823 = vmax.f32 %v4668, 0.0
      %v4824 = vmax.f32 %v4670, 0.0
      %v4825 = vmax.f32 %v4672, 0.0
      %v4826 = vmax.f32 %v4676, 0.0
      %v4827 = vmax.f32 %v4678, 0.0
      %v4828 = vmax.f32 %v4680, 0.0
      %v4829 = vmax.f32 %v4682, 0.0
      %v4830 = vmax.f32 %v4686, 0.0
      %v4831 = vmax.f32 %v4688, 0.0
      %v4832 = vmax.f32 %v4690, 0.0
      %v4833 = vmax.f32 %v4692, 0.0
      %v4834 = vmax.f32 %v4696, 0.0
      %v4835 = vmax.f32 %v4698, 0.0
      %v4836 = vmax.f32 %v4700, 0.0
      %v4837 = vmax.f32 %v4702, 0.0
      %v4838 = vmax.f32 %v4706, 0.0
      %v4839 = vmax.f32 %v4708, 0.0
      %v4840 = vmax.f32 %v4710, 0.0
      %v4841 = vmax.f32 %v4712, 0.0
      %v4842 = vpack.c.bf16 %v4716, %v4714
      %v4843 = vpack.c.bf16 %v4717, %v4715
      %v4844 = vpack.c.bf16 %v4720, %v4718
      %v4845 = vpack.c.bf16 %v4721, %v4719
      %v4846 = vpack.c.bf16 %v4724, %v4722
      %v4847 = vpack.c.bf16 %v4725, %v4723
      %v4848 = vpack.c.bf16 %v4728, %v4726
      %v4849 = vpack.c.bf16 %v4729, %v4727
      %v4850 = vpack.c.bf16 %v4732, %v4730
      %v4851 = vpack.c.bf16 %v4733, %v4731
      %v4852 = vpack.c.bf16 %v4736, %v4734
      %v4853 = vpack.c.bf16 %v4737, %v4735
      %v4854 = vpack.c.bf16 %v4740, %v4738
      %v4855 = vpack.c.bf16 %v4741, %v4739
      %v4856 = vpack.c.bf16 %v4744, %v4742
      %v4857 = vpack.c.bf16 %v4745, %v4743
      %v4858 = vpack.c.bf16 %v4748, %v4746
      %v4859 = vpack.c.bf16 %v4749, %v4747
      %v4860 = vpack.c.bf16 %v4752, %v4750
      %v4861 = vpack.c.bf16 %v4753, %v4751
      %v4862 = vpack.c.bf16 %v4756, %v4754
      %v4863 = vpack.c.bf16 %v4757, %v4755
      %v4864 = vpack.c.bf16 %v4760, %v4758
      %v4865 = vpack.c.bf16 %v4761, %v4759
      %v4866 = vpack.c.bf16 %v4764, %v4762
      %v4867 = vpack.c.bf16 %v4765, %v4763
      %v4868 = vpack.c.bf16 %v4768, %v4766
      %v4869 = vpack.c.bf16 %v4769, %v4767
      %v4870 = vpack.c.bf16 %v4772, %v4770
      %v4871 = vpack.c.bf16 %v4773, %v4771
      %v4872 = vpack.c.bf16 %v4776, %v4774
      %v4873 = vpack.c.bf16 %v4777, %v4775
      %v4874 = vpack.c.bf16 %v4780, %v4778
      %v4875 = vpack.c.bf16 %v4781, %v4779
      %v4876 = vpack.c.bf16 %v4784, %v4782
      %v4877 = vpack.c.bf16 %v4785, %v4783
      %v4878 = vpack.c.bf16 %v4788, %v4786
      %v4879 = vpack.c.bf16 %v4789, %v4787
      %v4880 = vpack.c.bf16 %v4792, %v4790
      %v4881 = vpack.c.bf16 %v4793, %v4791
      %v4882 = vpack.c.bf16 %v4796, %v4794
      %v4883 = vpack.c.bf16 %v4797, %v4795
      %v4884 = vpack.c.bf16 %v4800, %v4798
      %v4885 = vpack.c.bf16 %v4801, %v4799
      %v4886 = vpack.c.bf16 %v4804, %v4802
      %v4887 = vpack.c.bf16 %v4805, %v4803
      %v4888 = vpack.c.bf16 %v4808, %v4806
      %v4889 = vpack.c.bf16 %v4809, %v4807
      %v4890 = vpack.c.bf16 %v4812, %v4810
      %v4891 = vpack.c.bf16 %v4813, %v4811
      %v4892 = vpack.c.bf16 %v4816, %v4814
      %v4893 = vpack.c.bf16 %v4817, %v4815
      %v4894 = vpack.c.bf16 %v4820, %v4818
      %v4895 = vpack.c.bf16 %v4821, %v4819
      %v4896 = vpack.c.bf16 %v4824, %v4822
      %v4897 = vpack.c.bf16 %v4825, %v4823
      %v4898 = vpack.c.bf16 %v4828, %v4826
      %v4899 = vpack.c.bf16 %v4829, %v4827
      %v4900 = vpack.c.bf16 %v4832, %v4830
      %v4901 = vpack.c.bf16 %v4833, %v4831
      %v4902 = vpack.c.bf16 %v4836, %v4834
      %v4903 = vpack.c.bf16 %v4837, %v4835
      %v4904 = vpack.c.bf16 %v4840, %v4838
      %v4905 = vpack.c.bf16 %v4841, %v4839
      %s4906 = scalar_lea.vmem %s4, 1280
      %v4907 = vld [vmem:[%s4906] sm:$0xff]
      %v4908 = vld [vmem:[%s4906 + $0x8] sm:$0xff]
      %v4909 = vld [vmem:[%s4906 + $0x10] sm:$0xff]
      %v4910 = vld [vmem:[%s4906 + $0x18] sm:$0xff]
      %v4911 = vld [vmem:[%s4906 + $0x20] sm:$0xff]
      %v4912 = vld [vmem:[%s4906 + $0x28] sm:$0xff]
      %v4913 = vld [vmem:[%s4906 + $0x30] sm:$0xff]
      %v4914 = vld [vmem:[%s4906 + $0x38] sm:$0xff]
      %v4915 = vld [vmem:[%s4906 + $0x40] sm:$0xff]
      %v4916 = vld [vmem:[%s4906 + $0x48] sm:$0xff]
      %v4917 = vld [vmem:[%s4906 + $0x50] sm:$0xff]
      %v4918 = vld [vmem:[%s4906 + $0x58] sm:$0xff]
      %v4919 = vld [vmem:[%s4906 + $0x60] sm:$0xff]
      %v4920 = vld [vmem:[%s4906 + $0x68] sm:$0xff]
      %v4921 = vld [vmem:[%s4906 + $0x70] sm:$0xff]
      %v4922 = vld [vmem:[%s4906 + $0x78] sm:$0xff]
      %v4923 = vld [vmem:[%s4906 + $0x80] sm:$0xff]
      %v4924 = vld [vmem:[%s4906 + $0x88] sm:$0xff]
      %v4925 = vld [vmem:[%s4906 + $0x90] sm:$0xff]
      %v4926 = vld [vmem:[%s4906 + $0x98] sm:$0xff]
      %v4927 = vld [vmem:[%s4906 + $0xa0] sm:$0xff]
      %v4928 = vld [vmem:[%s4906 + $0xa8] sm:$0xff]
      %v4929 = vld [vmem:[%s4906 + $0xb0] sm:$0xff]
      %v4930 = vld [vmem:[%s4906 + $0xb8] sm:$0xff]
      %v4931 = vld [vmem:[%s4906 + $0xc0] sm:$0xff]
      %v4932 = vld [vmem:[%s4906 + $0xc8] sm:$0xff]
      %v4933 = vld [vmem:[%s4906 + $0xd0] sm:$0xff]
      %v4934 = vld [vmem:[%s4906 + $0xd8] sm:$0xff]
      %v4935 = vld [vmem:[%s4906 + $0xe0] sm:$0xff]
      %v4936 = vld [vmem:[%s4906 + $0xe8] sm:$0xff]
      %v4937 = vld [vmem:[%s4906 + $0xf0] sm:$0xff]
      %v4938 = vld [vmem:[%s4906 + $0xf8] sm:$0xff]
      %s4939 = scalar_lea.vmem %s5, 10
      %v4940 = vld [vmem:[%s4939] sm:$0x3]
      %v4942 = vlaneseq
      %v4943 = vshrl.u32 %v4942, 7
      %v4944 = vsub.s32 0, %v4943
      %v4945 = vrot.slane %v4940, %v4944
      %v4946 = vlaneseq
      %v4947 = vshrl.u32 %v4946, 7
      %v4948 = vsub.s32 1, %v4947
      %v4949 = vrot.slane %v4940, %v4948
      %v4984 = vunpack.c.l.b16 %v4907
      %v4985 = vunpack.c.h.b16 %v4907
      %v4986 = vunpack.c.l.b16 %v4908
      %v4987 = vunpack.c.h.b16 %v4908
      %v4988 = vunpack.c.l.b16 %v4909
      %v4989 = vunpack.c.h.b16 %v4909
      %v4990 = vunpack.c.l.b16 %v4910
      %v4991 = vunpack.c.h.b16 %v4910
      %v4992 = vunpack.c.l.b16 %v4911
      %v4993 = vunpack.c.h.b16 %v4911
      %v4994 = vunpack.c.l.b16 %v4912
      %v4995 = vunpack.c.h.b16 %v4912
      %v4996 = vunpack.c.l.b16 %v4913
      %v4997 = vunpack.c.h.b16 %v4913
      %v4998 = vunpack.c.l.b16 %v4914
      %v4999 = vunpack.c.h.b16 %v4914
      %v5000 = vunpack.c.l.b16 %v4915
      %v5001 = vunpack.c.h.b16 %v4915
      %v5002 = vunpack.c.l.b16 %v4916
      %v5003 = vunpack.c.h.b16 %v4916
      %v5004 = vunpack.c.l.b16 %v4917
      %v5005 = vunpack.c.h.b16 %v4917
      %v5006 = vunpack.c.l.b16 %v4918
      %v5007 = vunpack.c.h.b16 %v4918
      %v5008 = vunpack.c.l.b16 %v4919
      %v5009 = vunpack.c.h.b16 %v4919
      %v5010 = vunpack.c.l.b16 %v4920
      %v5011 = vunpack.c.h.b16 %v4920
      %v5012 = vunpack.c.l.b16 %v4921
      %v5013 = vunpack.c.h.b16 %v4921
      %v5014 = vunpack.c.l.b16 %v4922
      %v5015 = vunpack.c.h.b16 %v4922
      %v5016 = vunpack.c.l.b16 %v4923
      %v5017 = vunpack.c.h.b16 %v4923
      %v5018 = vunpack.c.l.b16 %v4924
      %v5019 = vunpack.c.h.b16 %v4924
      %v5020 = vunpack.c.l.b16 %v4925
      %v5021 = vunpack.c.h.b16 %v4925
      %v5022 = vunpack.c.l.b16 %v4926
      %v5023 = vunpack.c.h.b16 %v4926
      %v5024 = vunpack.c.l.b16 %v4927
      %v5025 = vunpack.c.h.b16 %v4927
      %v5026 = vunpack.c.l.b16 %v4928
      %v5027 = vunpack.c.h.b16 %v4928
      %v5028 = vunpack.c.l.b16 %v4929
      %v5029 = vunpack.c.h.b16 %v4929
      %v5030 = vunpack.c.l.b16 %v4930
      %v5031 = vunpack.c.h.b16 %v4930
      %v5032 = vunpack.c.l.b16 %v4931
      %v5033 = vunpack.c.h.b16 %v4931
      %v5034 = vunpack.c.l.b16 %v4932
      %v5035 = vunpack.c.h.b16 %v4932
      %v5036 = vunpack.c.l.b16 %v4933
      %v5037 = vunpack.c.h.b16 %v4933
      %v5038 = vunpack.c.l.b16 %v4934
      %v5039 = vunpack.c.h.b16 %v4934
      %v5040 = vunpack.c.l.b16 %v4935
      %v5041 = vunpack.c.h.b16 %v4935
      %v5042 = vunpack.c.l.b16 %v4936
      %v5043 = vunpack.c.h.b16 %v4936
      %v5044 = vunpack.c.l.b16 %v4937
      %v5045 = vunpack.c.h.b16 %v4937
      %v5046 = vunpack.c.l.b16 %v4938
      %v5047 = vunpack.c.h.b16 %v4938
      %v5048 = vpack.c.b16 %v4986, %v4984
      %v5049 = vpack.c.b16 %v4987, %v4985
      %v5050 = vpack.c.b16 %v4990, %v4988
      %v5051 = vpack.c.b16 %v4991, %v4989
      %v5052 = vpack.c.b16 %v4994, %v4992
      %v5053 = vpack.c.b16 %v4995, %v4993
      %v5054 = vpack.c.b16 %v4998, %v4996
      %v5055 = vpack.c.b16 %v4999, %v4997
      %v5056 = vpack.c.b16 %v5002, %v5000
      %v5057 = vpack.c.b16 %v5003, %v5001
      %v5058 = vpack.c.b16 %v5006, %v5004
      %v5059 = vpack.c.b16 %v5007, %v5005
      %v5060 = vpack.c.b16 %v5010, %v5008
      %v5061 = vpack.c.b16 %v5011, %v5009
      %v5062 = vpack.c.b16 %v5014, %v5012
      %v5063 = vpack.c.b16 %v5015, %v5013
      %v5064 = vpack.c.b16 %v5018, %v5016
      %v5065 = vpack.c.b16 %v5019, %v5017
      %v5066 = vpack.c.b16 %v5022, %v5020
      %v5067 = vpack.c.b16 %v5023, %v5021
      %v5068 = vpack.c.b16 %v5026, %v5024
      %v5069 = vpack.c.b16 %v5027, %v5025
      %v5070 = vpack.c.b16 %v5030, %v5028
      %v5071 = vpack.c.b16 %v5031, %v5029
      %v5072 = vpack.c.b16 %v5034, %v5032
      %v5073 = vpack.c.b16 %v5035, %v5033
      %v5074 = vpack.c.b16 %v5038, %v5036
      %v5075 = vpack.c.b16 %v5039, %v5037
      %v5076 = vpack.c.b16 %v5042, %v5040
      %v5077 = vpack.c.b16 %v5043, %v5041
      %v5078 = vpack.c.b16 %v5046, %v5044
      %v5079 = vpack.c.b16 %v5047, %v5045
      %5112 = vmatprep.subr.bf16.mxu0 %v5049
      %5113 = vmatpush1.bf16.msra.mxu0 %v5048
      %5114 = vmatprep.subr.bf16.mxu0 %v5051
      %5115 = vmatpush1.bf16.msra.mxu0 %v5050
      %5116 = vmatprep.subr.bf16.mxu0 %v5053
      %5117 = vmatpush1.bf16.msra.mxu0 %v5052
      %5118 = vmatprep.subr.bf16.mxu0 %v5055
      %5119 = vmatpush1.bf16.msra.mxu0 %v5054
      %5120 = vmatprep.subr.bf16.mxu0 %v5057
      %5121 = vmatpush1.bf16.msra.mxu0 %v5056
      %5122 = vmatprep.subr.bf16.mxu0 %v5059
      %5123 = vmatpush1.bf16.msra.mxu0 %v5058
      %5124 = vmatprep.subr.bf16.mxu0 %v5061
      %5125 = vmatpush1.bf16.msra.mxu0 %v5060
      %5126 = vmatprep.subr.bf16.mxu0 %v5063
      %5127 = vmatpush1.bf16.msra.mxu0 %v5062
      %5128 = vmatprep.subr.bf16.mxu0 %v5065
      %5129 = vmatpush1.bf16.msra.mxu0 %v5064
      %5130 = vmatprep.subr.bf16.mxu0 %v5067
      %5131 = vmatpush1.bf16.msra.mxu0 %v5066
      %5132 = vmatprep.subr.bf16.mxu0 %v5069
      %5133 = vmatpush1.bf16.msra.mxu0 %v5068
      %5134 = vmatprep.subr.bf16.mxu0 %v5071
      %5135 = vmatpush1.bf16.msra.mxu0 %v5070
      %5136 = vmatprep.subr.bf16.mxu0 %v5073
      %5137 = vmatpush1.bf16.msra.mxu0 %v5072
      %5138 = vmatprep.subr.bf16.mxu0 %v5075
      %5139 = vmatpush1.bf16.msra.mxu0 %v5074
      %5140 = vmatprep.subr.bf16.mxu0 %v5077
      %5141 = vmatpush1.bf16.msra.mxu0 %v5076
      %5142 = vmatprep.subr.bf16.mxu0 %v5079
      %5143 = vmatpush1.bf16.msra.mxu0 %v5078
      %5144 = vmatprep.mubr.bf16.mxu0 %v4843
      %5145 = vmatmul.mubr.bf16.gmra.mrb[0].mxu0 %v4842
      %v5146 = vpop.f32.mrb[0].mxu0
      %v5147 = vadd.f32 %v4945, %v5146
      %v5148 = vpop.f32.mrb[0].mxu0
      %v5149 = vadd.f32 %v4949, %v5148
      %v5150 = vpop.f32.mrb[0].mxu0
      %v5151 = vadd.f32 %v4945, %v5150
      %v5152 = vpop.f32.mrb[0].mxu0
      %v5153 = vadd.f32 %v4949, %v5152
      %5154 = vmatprep.mubr.bf16.mxu0 %v4845
      %5155 = vmatmul.mubr.bf16.gmra.mrb[0].mxu0 %v4844
      %v5156 = vpop.f32.mrb[0].mxu0
      %v5157 = vadd.f32 %v4945, %v5156
      %v5158 = vpop.f32.mrb[0].mxu0
      %v5159 = vadd.f32 %v4949, %v5158
      %v5160 = vpop.f32.mrb[0].mxu0
      %v5161 = vadd.f32 %v4945, %v5160
      %v5162 = vpop.f32.mrb[0].mxu0
      %v5163 = vadd.f32 %v4949, %v5162
      %5164 = vmatprep.mubr.bf16.mxu0 %v4847
      %5165 = vmatmul.mubr.bf16.gmra.mrb[0].mxu0 %v4846
      %v5166 = vpop.f32.mrb[0].mxu0
      %v5167 = vadd.f32 %v4945, %v5166
      %v5168 = vpop.f32.mrb[0].mxu0
      %v5169 = vadd.f32 %v4949, %v5168
      %v5170 = vpop.f32.mrb[0].mxu0
      %v5171 = vadd.f32 %v4945, %v5170
      %v5172 = vpop.f32.mrb[0].mxu0
      %v5173 = vadd.f32 %v4949, %v5172
      %5174 = vmatprep.mubr.bf16.mxu0 %v4849
      %5175 = vmatmul.mubr.bf16.gmra.mrb[0].mxu0 %v4848
      %v5176 = vpop.f32.mrb[0].mxu0
      %v5177 = vadd.f32 %v4945, %v5176
      %v5178 = vpop.f32.mrb[0].mxu0
      %v5179 = vadd.f32 %v4949, %v5178
      %v5180 = vpop.f32.mrb[0].mxu0
      %v5181 = vadd.f32 %v4945, %v5180
      %v5182 = vpop.f32.mrb[0].mxu0
      %v5183 = vadd.f32 %v4949, %v5182
      %5184 = vmatprep.mubr.bf16.mxu0 %v4851
      %5185 = vmatmul.mubr.bf16.gmra.mrb[0].mxu0 %v4850
      %v5186 = vpop.f32.mrb[0].mxu0
      %v5187 = vadd.f32 %v4945, %v5186
      %v5188 = vpop.f32.mrb[0].mxu0
      %v5189 = vadd.f32 %v4949, %v5188
      %v5190 = vpop.f32.mrb[0].mxu0
      %v5191 = vadd.f32 %v4945, %v5190
      %v5192 = vpop.f32.mrb[0].mxu0
      %v5193 = vadd.f32 %v4949, %v5192
      %5194 = vmatprep.mubr.bf16.mxu0 %v4853
      %5195 = vmatmul.mubr.bf16.gmra.mrb[0].mxu0 %v4852
      %v5196 = vpop.f32.mrb[0].mxu0
      %v5197 = vadd.f32 %v4945, %v5196
      %v5198 = vpop.f32.mrb[0].mxu0
      %v5199 = vadd.f32 %v4949, %v5198
      %v5200 = vpop.f32.mrb[0].mxu0
      %v5201 = vadd.f32 %v4945, %v5200
      %v5202 = vpop.f32.mrb[0].mxu0
      %v5203 = vadd.f32 %v4949, %v5202
      %5204 = vmatprep.mubr.bf16.mxu0 %v4855
      %5205 = vmatmul.mubr.bf16.gmra.mrb[0].mxu0 %v4854
      %v5206 = vpop.f32.mrb[0].mxu0
      %v5207 = vadd.f32 %v4945, %v5206
      %v5208 = vpop.f32.mrb[0].mxu0
      %v5209 = vadd.f32 %v4949, %v5208
      %v5210 = vpop.f32.mrb[0].mxu0
      %v5211 = vadd.f32 %v4945, %v5210
      %v5212 = vpop.f32.mrb[0].mxu0
      %v5213 = vadd.f32 %v4949, %v5212
      %5214 = vmatprep.mubr.bf16.mxu0 %v4857
      %5215 = vmatmul.mubr.bf16.gmra.mrb[0].mxu0 %v4856
      %v5216 = vpop.f32.mrb[0].mxu0
      %v5217 = vadd.f32 %v4945, %v5216
      %v5218 = vpop.f32.mrb[0].mxu0
      %v5219 = vadd.f32 %v4949, %v5218
      %v5220 = vpop.f32.mrb[0].mxu0
      %v5221 = vadd.f32 %v4945, %v5220
      %v5222 = vpop.f32.mrb[0].mxu0
      %v5223 = vadd.f32 %v4949, %v5222
      %5224 = vmatprep.mubr.bf16.mxu0 %v4859
      %5225 = vmatmul.mubr.bf16.gmra.mrb[0].mxu0 %v4858
      %v5226 = vpop.f32.mrb[0].mxu0
      %v5227 = vadd.f32 %v4945, %v5226
      %v5228 = vpop.f32.mrb[0].mxu0
      %v5229 = vadd.f32 %v4949, %v5228
      %v5230 = vpop.f32.mrb[0].mxu0
      %v5231 = vadd.f32 %v4945, %v5230
      %v5232 = vpop.f32.mrb[0].mxu0
      %v5233 = vadd.f32 %v4949, %v5232
      %5234 = vmatprep.mubr.bf16.mxu0 %v4861
      %5235 = vmatmul.mubr.bf16.gmra.mrb[0].mxu0 %v4860
      %v5236 = vpop.f32.mrb[0].mxu0
      %v5237 = vadd.f32 %v4945, %v5236
      %v5238 = vpop.f32.mrb[0].mxu0
      %v5239 = vadd.f32 %v4949, %v5238
      %v5240 = vpop.f32.mrb[0].mxu0
      %v5241 = vadd.f32 %v4945, %v5240
      %v5242 = vpop.f32.mrb[0].mxu0
      %v5243 = vadd.f32 %v4949, %v5242
      %5244 = vmatprep.mubr.bf16.mxu0 %v4863
      %5245 = vmatmul.mubr.bf16.gmra.mrb[0].mxu0 %v4862
      %v5246 = vpop.f32.mrb[0].mxu0
      %v5247 = vadd.f32 %v4945, %v5246
      %v5248 = vpop.f32.mrb[0].mxu0
      %v5249 = vadd.f32 %v4949, %v5248
      %v5250 = vpop.f32.mrb[0].mxu0
      %v5251 = vadd.f32 %v4945, %v5250
      %v5252 = vpop.f32.mrb[0].mxu0
      %v5253 = vadd.f32 %v4949, %v5252
      %5254 = vmatprep.mubr.bf16.mxu0 %v4865
      %5255 = vmatmul.mubr.bf16.gmra.mrb[0].mxu0 %v4864
      %v5256 = vpop.f32.mrb[0].mxu0
      %v5257 = vadd.f32 %v4945, %v5256
      %v5258 = vpop.f32.mrb[0].mxu0
      %v5259 = vadd.f32 %v4949, %v5258
      %v5260 = vpop.f32.mrb[0].mxu0
      %v5261 = vadd.f32 %v4945, %v5260
      %v5262 = vpop.f32.mrb[0].mxu0
      %v5263 = vadd.f32 %v4949, %v5262
      %5264 = vmatprep.mubr.bf16.mxu0 %v4867
      %5265 = vmatmul.mubr.bf16.gmra.mrb[0].mxu0 %v4866
      %v5266 = vpop.f32.mrb[0].mxu0
      %v5267 = vadd.f32 %v4945, %v5266
      %v5268 = vpop.f32.mrb[0].mxu0
      %v5269 = vadd.f32 %v4949, %v5268
      %v5270 = vpop.f32.mrb[0].mxu0
      %v5271 = vadd.f32 %v4945, %v5270
      %v5272 = vpop.f32.mrb[0].mxu0
      %v5273 = vadd.f32 %v4949, %v5272
      %5274 = vmatprep.mubr.bf16.mxu0 %v4869
      %5275 = vmatmul.mubr.bf16.gmra.mrb[0].mxu0 %v4868
      %v5276 = vpop.f32.mrb[0].mxu0
      %v5277 = vadd.f32 %v4945, %v5276
      %v5278 = vpop.f32.mrb[0].mxu0
      %v5279 = vadd.f32 %v4949, %v5278
      %v5280 = vpop.f32.mrb[0].mxu0
      %v5281 = vadd.f32 %v4945, %v5280
      %v5282 = vpop.f32.mrb[0].mxu0
      %v5283 = vadd.f32 %v4949, %v5282
      %5284 = vmatprep.mubr.bf16.mxu0 %v4871
      %5285 = vmatmul.mubr.bf16.gmra.mrb[0].mxu0 %v4870
      %v5286 = vpop.f32.mrb[0].mxu0
      %v5287 = vadd.f32 %v4945, %v5286
      %v5288 = vpop.f32.mrb[0].mxu0
      %v5289 = vadd.f32 %v4949, %v5288
      %v5290 = vpop.f32.mrb[0].mxu0
      %v5291 = vadd.f32 %v4945, %v5290
      %v5292 = vpop.f32.mrb[0].mxu0
      %v5293 = vadd.f32 %v4949, %v5292
      %5294 = vmatprep.mubr.bf16.mxu0 %v4873
      %5295 = vmatmul.mubr.bf16.gmra.mrb[0].mxu0 %v4872
      %v5296 = vpop.f32.mrb[0].mxu0
      %v5297 = vadd.f32 %v4945, %v5296
      %v5298 = vpop.f32.mrb[0].mxu0
      %v5299 = vadd.f32 %v4949, %v5298
      %v5300 = vpop.f32.mrb[0].mxu0
      %v5301 = vadd.f32 %v4945, %v5300
      %v5302 = vpop.f32.mrb[0].mxu0
      %v5303 = vadd.f32 %v4949, %v5302
      %5304 = vmatprep.mubr.bf16.mxu0 %v4875
      %5305 = vmatmul.mubr.bf16.gmra.mrb[0].mxu0 %v4874
      %v5306 = vpop.f32.mrb[0].mxu0
      %v5307 = vadd.f32 %v4945, %v5306
      %v5308 = vpop.f32.mrb[0].mxu0
      %v5309 = vadd.f32 %v4949, %v5308
      %v5310 = vpop.f32.mrb[0].mxu0
      %v5311 = vadd.f32 %v4945, %v5310
      %v5312 = vpop.f32.mrb[0].mxu0
      %v5313 = vadd.f32 %v4949, %v5312
      %5314 = vmatprep.mubr.bf16.mxu0 %v4877
      %5315 = vmatmul.mubr.bf16.gmra.mrb[0].mxu0 %v4876
      %v5316 = vpop.f32.mrb[0].mxu0
      %v5317 = vadd.f32 %v4945, %v5316
      %v5318 = vpop.f32.mrb[0].mxu0
      %v5319 = vadd.f32 %v4949, %v5318
      %v5320 = vpop.f32.mrb[0].mxu0
      %v5321 = vadd.f32 %v4945, %v5320
      %v5322 = vpop.f32.mrb[0].mxu0
      %v5323 = vadd.f32 %v4949, %v5322
      %5324 = vmatprep.mubr.bf16.mxu0 %v4879
      %5325 = vmatmul.mubr.bf16.gmra.mrb[0].mxu0 %v4878
      %v5326 = vpop.f32.mrb[0].mxu0
      %v5327 = vadd.f32 %v4945, %v5326
      %v5328 = vpop.f32.mrb[0].mxu0
      %v5329 = vadd.f32 %v4949, %v5328
      %v5330 = vpop.f32.mrb[0].mxu0
      %v5331 = vadd.f32 %v4945, %v5330
      %v5332 = vpop.f32.mrb[0].mxu0
      %v5333 = vadd.f32 %v4949, %v5332
      %5334 = vmatprep.mubr.bf16.mxu0 %v4881
      %5335 = vmatmul.mubr.bf16.gmra.mrb[0].mxu0 %v4880
      %v5336 = vpop.f32.mrb[0].mxu0
      %v5337 = vadd.f32 %v4945, %v5336
      %v5338 = vpop.f32.mrb[0].mxu0
      %v5339 = vadd.f32 %v4949, %v5338
      %v5340 = vpop.f32.mrb[0].mxu0
      %v5341 = vadd.f32 %v4945, %v5340
      %v5342 = vpop.f32.mrb[0].mxu0
      %v5343 = vadd.f32 %v4949, %v5342
      %5344 = vmatprep.mubr.bf16.mxu0 %v4883
      %5345 = vmatmul.mubr.bf16.gmra.mrb[0].mxu0 %v4882
      %v5346 = vpop.f32.mrb[0].mxu0
      %v5347 = vadd.f32 %v4945, %v5346
      %v5348 = vpop.f32.mrb[0].mxu0
      %v5349 = vadd.f32 %v4949, %v5348
      %v5350 = vpop.f32.mrb[0].mxu0
      %v5351 = vadd.f32 %v4945, %v5350
      %v5352 = vpop.f32.mrb[0].mxu0
      %v5353 = vadd.f32 %v4949, %v5352
      %5354 = vmatprep.mubr.bf16.mxu0 %v4885
      %5355 = vmatmul.mubr.bf16.gmra.mrb[0].mxu0 %v4884
      %v5356 = vpop.f32.mrb[0].mxu0
      %v5357 = vadd.f32 %v4945, %v5356
      %v5358 = vpop.f32.mrb[0].mxu0
      %v5359 = vadd.f32 %v4949, %v5358
      %v5360 = vpop.f32.mrb[0].mxu0
      %v5361 = vadd.f32 %v4945, %v5360
      %v5362 = vpop.f32.mrb[0].mxu0
      %v5363 = vadd.f32 %v4949, %v5362
      %5364 = vmatprep.mubr.bf16.mxu0 %v4887
      %5365 = vmatmul.mubr.bf16.gmra.mrb[0].mxu0 %v4886
      %v5366 = vpop.f32.mrb[0].mxu0
      %v5367 = vadd.f32 %v4945, %v5366
      %v5368 = vpop.f32.mrb[0].mxu0
      %v5369 = vadd.f32 %v4949, %v5368
      %v5370 = vpop.f32.mrb[0].mxu0
      %v5371 = vadd.f32 %v4945, %v5370
      %v5372 = vpop.f32.mrb[0].mxu0
      %v5373 = vadd.f32 %v4949, %v5372
      %5374 = vmatprep.mubr.bf16.mxu0 %v4889
      %5375 = vmatmul.mubr.bf16.gmra.mrb[0].mxu0 %v4888
      %v5376 = vpop.f32.mrb[0].mxu0
      %v5377 = vadd.f32 %v4945, %v5376
      %v5378 = vpop.f32.mrb[0].mxu0
      %v5379 = vadd.f32 %v4949, %v5378
      %v5380 = vpop.f32.mrb[0].mxu0
      %v5381 = vadd.f32 %v4945, %v5380
      %v5382 = vpop.f32.mrb[0].mxu0
      %v5383 = vadd.f32 %v4949, %v5382
      %5384 = vmatprep.mubr.bf16.mxu0 %v4891
      %5385 = vmatmul.mubr.bf16.gmra.mrb[0].mxu0 %v4890
      %v5386 = vpop.f32.mrb[0].mxu0
      %v5387 = vadd.f32 %v4945, %v5386
      %v5388 = vpop.f32.mrb[0].mxu0
      %v5389 = vadd.f32 %v4949, %v5388
      %v5390 = vpop.f32.mrb[0].mxu0
      %v5391 = vadd.f32 %v4945, %v5390
      %v5392 = vpop.f32.mrb[0].mxu0
      %v5393 = vadd.f32 %v4949, %v5392
      %5394 = vmatprep.mubr.bf16.mxu0 %v4893
      %5395 = vmatmul.mubr.bf16.gmra.mrb[0].mxu0 %v4892
      %v5396 = vpop.f32.mrb[0].mxu0
      %v5397 = vadd.f32 %v4945, %v5396
      %v5398 = vpop.f32.mrb[0].mxu0
      %v5399 = vadd.f32 %v4949, %v5398
      %v5400 = vpop.f32.mrb[0].mxu0
      %v5401 = vadd.f32 %v4945, %v5400
      %v5402 = vpop.f32.mrb[0].mxu0
      %v5403 = vadd.f32 %v4949, %v5402
      %5404 = vmatprep.mubr.bf16.mxu0 %v4895
      %5405 = vmatmul.mubr.bf16.gmra.mrb[0].mxu0 %v4894
      %v5406 = vpop.f32.mrb[0].mxu0
      %v5407 = vadd.f32 %v4945, %v5406
      %v5408 = vpop.f32.mrb[0].mxu0
      %v5409 = vadd.f32 %v4949, %v5408
      %v5410 = vpop.f32.mrb[0].mxu0
      %v5411 = vadd.f32 %v4945, %v5410
      %v5412 = vpop.f32.mrb[0].mxu0
      %v5413 = vadd.f32 %v4949, %v5412
      %5414 = vmatprep.mubr.bf16.mxu0 %v4897
      %5415 = vmatmul.mubr.bf16.gmra.mrb[0].mxu0 %v4896
      %v5416 = vpop.f32.mrb[0].mxu0
      %v5417 = vadd.f32 %v4945, %v5416
      %v5418 = vpop.f32.mrb[0].mxu0
      %v5419 = vadd.f32 %v4949, %v5418
      %v5420 = vpop.f32.mrb[0].mxu0
      %v5421 = vadd.f32 %v4945, %v5420
      %v5422 = vpop.f32.mrb[0].mxu0
      %v5423 = vadd.f32 %v4949, %v5422
      %5424 = vmatprep.mubr.bf16.mxu0 %v4899
      %5425 = vmatmul.mubr.bf16.gmra.mrb[0].mxu0 %v4898
      %v5426 = vpop.f32.mrb[0].mxu0
      %v5427 = vadd.f32 %v4945, %v5426
      %v5428 = vpop.f32.mrb[0].mxu0
      %v5429 = vadd.f32 %v4949, %v5428
      %v5430 = vpop.f32.mrb[0].mxu0
      %v5431 = vadd.f32 %v4945, %v5430
      %v5432 = vpop.f32.mrb[0].mxu0
      %v5433 = vadd.f32 %v4949, %v5432
      %5434 = vmatprep.mubr.bf16.mxu0 %v4901
      %5435 = vmatmul.mubr.bf16.gmra.mrb[0].mxu0 %v4900
      %v5436 = vpop.f32.mrb[0].mxu0
      %v5437 = vadd.f32 %v4945, %v5436
      %v5438 = vpop.f32.mrb[0].mxu0
      %v5439 = vadd.f32 %v4949, %v5438
      %v5440 = vpop.f32.mrb[0].mxu0
      %v5441 = vadd.f32 %v4945, %v5440
      %v5442 = vpop.f32.mrb[0].mxu0
      %v5443 = vadd.f32 %v4949, %v5442
      %5444 = vmatprep.mubr.bf16.mxu0 %v4903
      %5445 = vmatmul.mubr.bf16.gmra.mrb[0].mxu0 %v4902
      %v5446 = vpop.f32.mrb[0].mxu0
      %v5447 = vadd.f32 %v4945, %v5446
      %v5448 = vpop.f32.mrb[0].mxu0
      %v5449 = vadd.f32 %v4949, %v5448
      %v5450 = vpop.f32.mrb[0].mxu0
      %v5451 = vadd.f32 %v4945, %v5450
      %v5452 = vpop.f32.mrb[0].mxu0
      %v5453 = vadd.f32 %v4949, %v5452
      %5454 = vmatprep.mubr.bf16.mxu0 %v4905
      %5455 = vmatmul.mubr.bf16.gmra.mrb[0].mxu0 %v4904
      %v5456 = vpop.f32.mrb[0].mxu0
      %v5457 = vadd.f32 %v4945, %v5456
      %v5458 = vpop.f32.mrb[0].mxu0
      %v5459 = vadd.f32 %v4949, %v5458
      %v5460 = vpop.f32.mrb[0].mxu0
      %v5461 = vadd.f32 %v4945, %v5460
      %v5462 = vpop.f32.mrb[0].mxu0
      %v5463 = vadd.f32 %v4949, %v5462
      %5464 = vdwg.mxu0
      %v5465 = vmax.f32 %v5147, 0.0
      %v5466 = vmax.f32 %v5149, 0.0
      %v5467 = vmax.f32 %v5151, 0.0
      %v5468 = vmax.f32 %v5153, 0.0
      %v5469 = vmax.f32 %v5157, 0.0
      %v5470 = vmax.f32 %v5159, 0.0
      %v5471 = vmax.f32 %v5161, 0.0
      %v5472 = vmax.f32 %v5163, 0.0
      %v5473 = vmax.f32 %v5167, 0.0
      %v5474 = vmax.f32 %v5169, 0.0
      %v5475 = vmax.f32 %v5171, 0.0
      %v5476 = vmax.f32 %v5173, 0.0
      %v5477 = vmax.f32 %v5177, 0.0
      %v5478 = vmax.f32 %v5179, 0.0
      %v5479 = vmax.f32 %v5181, 0.0
      %v5480 = vmax.f32 %v5183, 0.0
      %v5481 = vmax.f32 %v5187, 0.0
      %v5482 = vmax.f32 %v5189, 0.0
      %v5483 = vmax.f32 %v5191, 0.0
      %v5484 = vmax.f32 %v5193, 0.0
      %v5485 = vmax.f32 %v5197, 0.0
      %v5486 = vmax.f32 %v5199, 0.0
      %v5487 = vmax.f32 %v5201, 0.0
      %v5488 = vmax.f32 %v5203, 0.0
      %v5489 = vmax.f32 %v5207, 0.0
      %v5490 = vmax.f32 %v5209, 0.0
      %v5491 = vmax.f32 %v5211, 0.0
      %v5492 = vmax.f32 %v5213, 0.0
      %v5493 = vmax.f32 %v5217, 0.0
      %v5494 = vmax.f32 %v5219, 0.0
      %v5495 = vmax.f32 %v5221, 0.0
      %v5496 = vmax.f32 %v5223, 0.0
      %v5497 = vmax.f32 %v5227, 0.0
      %v5498 = vmax.f32 %v5229, 0.0
      %v5499 = vmax.f32 %v5231, 0.0
      %v5500 = vmax.f32 %v5233, 0.0
      %v5501 = vmax.f32 %v5237, 0.0
      %v5502 = vmax.f32 %v5239, 0.0
      %v5503 = vmax.f32 %v5241, 0.0
      %v5504 = vmax.f32 %v5243, 0.0
      %v5505 = vmax.f32 %v5247, 0.0
      %v5506 = vmax.f32 %v5249, 0.0
      %v5507 = vmax.f32 %v5251, 0.0
      %v5508 = vmax.f32 %v5253, 0.0
      %v5509 = vmax.f32 %v5257, 0.0
      %v5510 = vmax.f32 %v5259, 0.0
      %v5511 = vmax.f32 %v5261, 0.0
      %v5512 = vmax.f32 %v5263, 0.0
      %v5513 = vmax.f32 %v5267, 0.0
      %v5514 = vmax.f32 %v5269, 0.0
      %v5515 = vmax.f32 %v5271, 0.0
      %v5516 = vmax.f32 %v5273, 0.0
      %v5517 = vmax.f32 %v5277, 0.0
      %v5518 = vmax.f32 %v5279, 0.0
      %v5519 = vmax.f32 %v5281, 0.0
      %v5520 = vmax.f32 %v5283, 0.0
      %v5521 = vmax.f32 %v5287, 0.0
      %v5522 = vmax.f32 %v5289, 0.0
      %v5523 = vmax.f32 %v5291, 0.0
      %v5524 = vmax.f32 %v5293, 0.0
      %v5525 = vmax.f32 %v5297, 0.0
      %v5526 = vmax.f32 %v5299, 0.0
      %v5527 = vmax.f32 %v5301, 0.0
      %v5528 = vmax.f32 %v5303, 0.0
      %v5529 = vmax.f32 %v5307, 0.0
      %v5530 = vmax.f32 %v5309, 0.0
      %v5531 = vmax.f32 %v5311, 0.0
      %v5532 = vmax.f32 %v5313, 0.0
      %v5533 = vmax.f32 %v5317, 0.0
      %v5534 = vmax.f32 %v5319, 0.0
      %v5535 = vmax.f32 %v5321, 0.0
      %v5536 = vmax.f32 %v5323, 0.0
      %v5537 = vmax.f32 %v5327, 0.0
      %v5538 = vmax.f32 %v5329, 0.0
      %v5539 = vmax.f32 %v5331, 0.0
      %v5540 = vmax.f32 %v5333, 0.0
      %v5541 = vmax.f32 %v5337, 0.0
      %v5542 = vmax.f32 %v5339, 0.0
      %v5543 = vmax.f32 %v5341, 0.0
      %v5544 = vmax.f32 %v5343, 0.0
      %v5545 = vmax.f32 %v5347, 0.0
      %v5546 = vmax.f32 %v5349, 0.0
      %v5547 = vmax.f32 %v5351, 0.0
      %v5548 = vmax.f32 %v5353, 0.0
      %v5549 = vmax.f32 %v5357, 0.0
      %v5550 = vmax.f32 %v5359, 0.0
      %v5551 = vmax.f32 %v5361, 0.0
      %v5552 = vmax.f32 %v5363, 0.0
      %v5553 = vmax.f32 %v5367, 0.0
      %v5554 = vmax.f32 %v5369, 0.0
      %v5555 = vmax.f32 %v5371, 0.0
      %v5556 = vmax.f32 %v5373, 0.0
      %v5557 = vmax.f32 %v5377, 0.0
      %v5558 = vmax.f32 %v5379, 0.0
      %v5559 = vmax.f32 %v5381, 0.0
      %v5560 = vmax.f32 %v5383, 0.0
      %v5561 = vmax.f32 %v5387, 0.0
      %v5562 = vmax.f32 %v5389, 0.0
      %v5563 = vmax.f32 %v5391, 0.0
      %v5564 = vmax.f32 %v5393, 0.0
      %v5565 = vmax.f32 %v5397, 0.0
      %v5566 = vmax.f32 %v5399, 0.0
      %v5567 = vmax.f32 %v5401, 0.0
      %v5568 = vmax.f32 %v5403, 0.0
      %v5569 = vmax.f32 %v5407, 0.0
      %v5570 = vmax.f32 %v5409, 0.0
      %v5571 = vmax.f32 %v5411, 0.0
      %v5572 = vmax.f32 %v5413, 0.0
      %v5573 = vmax.f32 %v5417, 0.0
      %v5574 = vmax.f32 %v5419, 0.0
      %v5575 = vmax.f32 %v5421, 0.0
      %v5576 = vmax.f32 %v5423, 0.0
      %v5577 = vmax.f32 %v5427, 0.0
      %v5578 = vmax.f32 %v5429, 0.0
      %v5579 = vmax.f32 %v5431, 0.0
      %v5580 = vmax.f32 %v5433, 0.0
      %v5581 = vmax.f32 %v5437, 0.0
      %v5582 = vmax.f32 %v5439, 0.0
      %v5583 = vmax.f32 %v5441, 0.0
      %v5584 = vmax.f32 %v5443, 0.0
      %v5585 = vmax.f32 %v5447, 0.0
      %v5586 = vmax.f32 %v5449, 0.0
      %v5587 = vmax.f32 %v5451, 0.0
      %v5588 = vmax.f32 %v5453, 0.0
      %v5589 = vmax.f32 %v5457, 0.0
      %v5590 = vmax.f32 %v5459, 0.0
      %v5591 = vmax.f32 %v5461, 0.0
      %v5592 = vmax.f32 %v5463, 0.0
      %v5593 = vpack.c.bf16 %v5467, %v5465
      %v5594 = vpack.c.bf16 %v5468, %v5466
      %v5595 = vpack.c.bf16 %v5471, %v5469
      %v5596 = vpack.c.bf16 %v5472, %v5470
      %v5597 = vpack.c.bf16 %v5475, %v5473
      %v5598 = vpack.c.bf16 %v5476, %v5474
      %v5599 = vpack.c.bf16 %v5479, %v5477
      %v5600 = vpack.c.bf16 %v5480, %v5478
      %v5601 = vpack.c.bf16 %v5483, %v5481
      %v5602 = vpack.c.bf16 %v5484, %v5482
      %v5603 = vpack.c.bf16 %v5487, %v5485
      %v5604 = vpack.c.bf16 %v5488, %v5486
      %v5605 = vpack.c.bf16 %v5491, %v5489
      %v5606 = vpack.c.bf16 %v5492, %v5490
      %v5607 = vpack.c.bf16 %v5495, %v5493
      %v5608 = vpack.c.bf16 %v5496, %v5494
      %v5609 = vpack.c.bf16 %v5499, %v5497
      %v5610 = vpack.c.bf16 %v5500, %v5498
      %v5611 = vpack.c.bf16 %v5503, %v5501
      %v5612 = vpack.c.bf16 %v5504, %v5502
      %v5613 = vpack.c.bf16 %v5507, %v5505
      %v5614 = vpack.c.bf16 %v5508, %v5506
      %v5615 = vpack.c.bf16 %v5511, %v5509
      %v5616 = vpack.c.bf16 %v5512, %v5510
      %v5617 = vpack.c.bf16 %v5515, %v5513
      %v5618 = vpack.c.bf16 %v5516, %v5514
      %v5619 = vpack.c.bf16 %v5519, %v5517
      %v5620 = vpack.c.bf16 %v5520, %v5518
      %v5621 = vpack.c.bf16 %v5523, %v5521
      %v5622 = vpack.c.bf16 %v5524, %v5522
      %v5623 = vpack.c.bf16 %v5527, %v5525
      %v5624 = vpack.c.bf16 %v5528, %v5526
      %v5625 = vpack.c.bf16 %v5531, %v5529
      %v5626 = vpack.c.bf16 %v5532, %v5530
      %v5627 = vpack.c.bf16 %v5535, %v5533
      %v5628 = vpack.c.bf16 %v5536, %v5534
      %v5629 = vpack.c.bf16 %v5539, %v5537
      %v5630 = vpack.c.bf16 %v5540, %v5538
      %v5631 = vpack.c.bf16 %v5543, %v5541
      %v5632 = vpack.c.bf16 %v5544, %v5542
      %v5633 = vpack.c.bf16 %v5547, %v5545
      %v5634 = vpack.c.bf16 %v5548, %v5546
      %v5635 = vpack.c.bf16 %v5551, %v5549
      %v5636 = vpack.c.bf16 %v5552, %v5550
      %v5637 = vpack.c.bf16 %v5555, %v5553
      %v5638 = vpack.c.bf16 %v5556, %v5554
      %v5639 = vpack.c.bf16 %v5559, %v5557
      %v5640 = vpack.c.bf16 %v5560, %v5558
      %v5641 = vpack.c.bf16 %v5563, %v5561
      %v5642 = vpack.c.bf16 %v5564, %v5562
      %v5643 = vpack.c.bf16 %v5567, %v5565
      %v5644 = vpack.c.bf16 %v5568, %v5566
      %v5645 = vpack.c.bf16 %v5571, %v5569
      %v5646 = vpack.c.bf16 %v5572, %v5570
      %v5647 = vpack.c.bf16 %v5575, %v5573
      %v5648 = vpack.c.bf16 %v5576, %v5574
      %v5649 = vpack.c.bf16 %v5579, %v5577
      %v5650 = vpack.c.bf16 %v5580, %v5578
      %v5651 = vpack.c.bf16 %v5583, %v5581
      %v5652 = vpack.c.bf16 %v5584, %v5582
      %v5653 = vpack.c.bf16 %v5587, %v5585
      %v5654 = vpack.c.bf16 %v5588, %v5586
      %v5655 = vpack.c.bf16 %v5591, %v5589
      %v5656 = vpack.c.bf16 %v5592, %v5590
      %s5657 = scalar_lea.vmem %s4, 1536
      %v5658 = vld [vmem:[%s5657] sm:$0xff]
      %v5659 = vld [vmem:[%s5657 + $0x8] sm:$0xff]
      %v5660 = vld [vmem:[%s5657 + $0x10] sm:$0xff]
      %v5661 = vld [vmem:[%s5657 + $0x18] sm:$0xff]
      %v5662 = vld [vmem:[%s5657 + $0x20] sm:$0xff]
      %v5663 = vld [vmem:[%s5657 + $0x28] sm:$0xff]
      %v5664 = vld [vmem:[%s5657 + $0x30] sm:$0xff]
      %v5665 = vld [vmem:[%s5657 + $0x38] sm:$0xff]
      %v5666 = vld [vmem:[%s5657 + $0x40] sm:$0xff]
      %v5667 = vld [vmem:[%s5657 + $0x48] sm:$0xff]
      %v5668 = vld [vmem:[%s5657 + $0x50] sm:$0xff]
      %v5669 = vld [vmem:[%s5657 + $0x58] sm:$0xff]
      %v5670 = vld [vmem:[%s5657 + $0x60] sm:$0xff]
      %v5671 = vld [vmem:[%s5657 + $0x68] sm:$0xff]
      %v5672 = vld [vmem:[%s5657 + $0x70] sm:$0xff]
      %v5673 = vld [vmem:[%s5657 + $0x78] sm:$0xff]
      %v5674 = vld [vmem:[%s5657 + $0x80] sm:$0xff]
      %v5675 = vld [vmem:[%s5657 + $0x88] sm:$0xff]
      %v5676 = vld [vmem:[%s5657 + $0x90] sm:$0xff]
      %v5677 = vld [vmem:[%s5657 + $0x98] sm:$0xff]
      %v5678 = vld [vmem:[%s5657 + $0xa0] sm:$0xff]
      %v5679 = vld [vmem:[%s5657 + $0xa8] sm:$0xff]
      %v5680 = vld [vmem:[%s5657 + $0xb0] sm:$0xff]
      %v5681 = vld [vmem:[%s5657 + $0xb8] sm:$0xff]
      %v5682 = vld [vmem:[%s5657 + $0xc0] sm:$0xff]
      %v5683 = vld [vmem:[%s5657 + $0xc8] sm:$0xff]
      %v5684 = vld [vmem:[%s5657 + $0xd0] sm:$0xff]
      %v5685 = vld [vmem:[%s5657 + $0xd8] sm:$0xff]
      %v5686 = vld [vmem:[%s5657 + $0xe0] sm:$0xff]
      %v5687 = vld [vmem:[%s5657 + $0xe8] sm:$0xff]
      %v5688 = vld [vmem:[%s5657 + $0xf0] sm:$0xff]
      %v5689 = vld [vmem:[%s5657 + $0xf8] sm:$0xff]
      %s5690 = scalar_lea.vmem %s5, 12
      %v5691 = vld [vmem:[%s5690] sm:$0x3]
      %v5693 = vlaneseq
      %v5694 = vshrl.u32 %v5693, 7
      %v5695 = vsub.s32 0, %v5694
      %v5696 = vrot.slane %v5691, %v5695
      %v5697 = vlaneseq
      %v5698 = vshrl.u32 %v5697, 7
      %v5699 = vsub.s32 1, %v5698
      %v5700 = vrot.slane %v5691, %v5699
      %v5735 = vunpack.c.l.b16 %v5658
      %v5736 = vunpack.c.h.b16 %v5658
      %v5737 = vunpack.c.l.b16 %v5659
      %v5738 = vunpack.c.h.b16 %v5659
      %v5739 = vunpack.c.l.b16 %v5660
      %v5740 = vunpack.c.h.b16 %v5660
      %v5741 = vunpack.c.l.b16 %v5661
      %v5742 = vunpack.c.h.b16 %v5661
      %v5743 = vunpack.c.l.b16 %v5662
      %v5744 = vunpack.c.h.b16 %v5662
      %v5745 = vunpack.c.l.b16 %v5663
      %v5746 = vunpack.c.h.b16 %v5663
      %v5747 = vunpack.c.l.b16 %v5664
      %v5748 = vunpack.c.h.b16 %v5664
      %v5749 = vunpack.c.l.b16 %v5665
      %v5750 = vunpack.c.h.b16 %v5665
      %v5751 = vunpack.c.l.b16 %v5666
      %v5752 = vunpack.c.h.b16 %v5666
      %v5753 = vunpack.c.l.b16 %v5667
      %v5754 = vunpack.c.h.b16 %v5667
      %v5755 = vunpack.c.l.b16 %v5668
      %v5756 = vunpack.c.h.b16 %v5668
      %v5757 = vunpack.c.l.b16 %v5669
      %v5758 = vunpack.c.h.b16 %v5669
      %v5759 = vunpack.c.l.b16 %v5670
      %v5760 = vunpack.c.h.b16 %v5670
      %v5761 = vunpack.c.l.b16 %v5671
      %v5762 = vunpack.c.h.b16 %v5671
      %v5763 = vunpack.c.l.b16 %v5672
      %v5764 = vunpack.c.h.b16 %v5672
      %v5765 = vunpack.c.l.b16 %v5673
      %v5766 = vunpack.c.h.b16 %v5673
      %v5767 = vunpack.c.l.b16 %v5674
      %v5768 = vunpack.c.h.b16 %v5674
      %v5769 = vunpack.c.l.b16 %v5675
      %v5770 = vunpack.c.h.b16 %v5675
      %v5771 = vunpack.c.l.b16 %v5676
      %v5772 = vunpack.c.h.b16 %v5676
      %v5773 = vunpack.c.l.b16 %v5677
      %v5774 = vunpack.c.h.b16 %v5677
      %v5775 = vunpack.c.l.b16 %v5678
      %v5776 = vunpack.c.h.b16 %v5678
      %v5777 = vunpack.c.l.b16 %v5679
      %v5778 = vunpack.c.h.b16 %v5679
      %v5779 = vunpack.c.l.b16 %v5680
      %v5780 = vunpack.c.h.b16 %v5680
      %v5781 = vunpack.c.l.b16 %v5681
      %v5782 = vunpack.c.h.b16 %v5681
      %v5783 = vunpack.c.l.b16 %v5682
      %v5784 = vunpack.c.h.b16 %v5682
      %v5785 = vunpack.c.l.b16 %v5683
      %v5786 = vunpack.c.h.b16 %v5683
      %v5787 = vunpack.c.l.b16 %v5684
      %v5788 = vunpack.c.h.b16 %v5684
      %v5789 = vunpack.c.l.b16 %v5685
      %v5790 = vunpack.c.h.b16 %v5685
      %v5791 = vunpack.c.l.b16 %v5686
      %v5792 = vunpack.c.h.b16 %v5686
      %v5793 = vunpack.c.l.b16 %v5687
      %v5794 = vunpack.c.h.b16 %v5687
      %v5795 = vunpack.c.l.b16 %v5688
      %v5796 = vunpack.c.h.b16 %v5688
      %v5797 = vunpack.c.l.b16 %v5689
      %v5798 = vunpack.c.h.b16 %v5689
      %v5799 = vpack.c.b16 %v5737, %v5735
      %v5800 = vpack.c.b16 %v5738, %v5736
      %v5801 = vpack.c.b16 %v5741, %v5739
      %v5802 = vpack.c.b16 %v5742, %v5740
      %v5803 = vpack.c.b16 %v5745, %v5743
      %v5804 = vpack.c.b16 %v5746, %v5744
      %v5805 = vpack.c.b16 %v5749, %v5747
      %v5806 = vpack.c.b16 %v5750, %v5748
      %v5807 = vpack.c.b16 %v5753, %v5751
      %v5808 = vpack.c.b16 %v5754, %v5752
      %v5809 = vpack.c.b16 %v5757, %v5755
      %v5810 = vpack.c.b16 %v5758, %v5756
      %v5811 = vpack.c.b16 %v5761, %v5759
      %v5812 = vpack.c.b16 %v5762, %v5760
      %v5813 = vpack.c.b16 %v5765, %v5763
      %v5814 = vpack.c.b16 %v5766, %v5764
      %v5815 = vpack.c.b16 %v5769, %v5767
      %v5816 = vpack.c.b16 %v5770, %v5768
      %v5817 = vpack.c.b16 %v5773, %v5771
      %v5818 = vpack.c.b16 %v5774, %v5772
      %v5819 = vpack.c.b16 %v5777, %v5775
      %v5820 = vpack.c.b16 %v5778, %v5776
      %v5821 = vpack.c.b16 %v5781, %v5779
      %v5822 = vpack.c.b16 %v5782, %v5780
      %v5823 = vpack.c.b16 %v5785, %v5783
      %v5824 = vpack.c.b16 %v5786, %v5784
      %v5825 = vpack.c.b16 %v5789, %v5787
      %v5826 = vpack.c.b16 %v5790, %v5788
      %v5827 = vpack.c.b16 %v5793, %v5791
      %v5828 = vpack.c.b16 %v5794, %v5792
      %v5829 = vpack.c.b16 %v5797, %v5795
      %v5830 = vpack.c.b16 %v5798, %v5796
      %5863 = vmatprep.subr.bf16.mxu0 %v5800
      %5864 = vmatpush1.bf16.msra.mxu0 %v5799
      %5865 = vmatprep.subr.bf16.mxu0 %v5802
      %5866 = vmatpush1.bf16.msra.mxu0 %v5801
      %5867 = vmatprep.subr.bf16.mxu0 %v5804
      %5868 = vmatpush1.bf16.msra.mxu0 %v5803
      %5869 = vmatprep.subr.bf16.mxu0 %v5806
      %5870 = vmatpush1.bf16.msra.mxu0 %v5805
      %5871 = vmatprep.subr.bf16.mxu0 %v5808
      %5872 = vmatpush1.bf16.msra.mxu0 %v5807
      %5873 = vmatprep.subr.bf16.mxu0 %v5810
      %5874 = vmatpush1.bf16.msra.mxu0 %v5809
      %5875 = vmatprep.subr.bf16.mxu0 %v5812
      %5876 = vmatpush1.bf16.msra.mxu0 %v5811
      %5877 = vmatprep.subr.bf16.mxu0 %v5814
      %5878 = vmatpush1.bf16.msra.mxu0 %v5813
      %5879 = vmatprep.subr.bf16.mxu0 %v5816
      %5880 = vmatpush1.bf16.msra.mxu0 %v5815
      %5881 = vmatprep.subr.bf16.mxu0 %v5818
      %5882 = vmatpush1.bf16.msra.mxu0 %v5817
      %5883 = vmatprep.subr.bf16.mxu0 %v5820
      %5884 = vmatpush1.bf16.msra.mxu0 %v5819
      %5885 = vmatprep.subr.bf16.mxu0 %v5822
      %5886 = vmatpush1.bf16.msra.mxu0 %v5821
      %5887 = vmatprep.subr.bf16.mxu0 %v5824
      %5888 = vmatpush1.bf16.msra.mxu0 %v5823
      %5889 = vmatprep.subr.bf16.mxu0 %v5826
      %5890 = vmatpush1.bf16.msra.mxu0 %v5825
      %5891 = vmatprep.subr.bf16.mxu0 %v5828
      %5892 = vmatpush1.bf16.msra.mxu0 %v5827
      %5893 = vmatprep.subr.bf16.mxu0 %v5830
      %5894 = vmatpush1.bf16.msra.mxu0 %v5829
      %5895 = vmatprep.mubr.bf16.mxu0 %v5594
      %5896 = vmatmul.mubr.bf16.gmra.mrb[0].mxu0 %v5593
      %v5897 = vpop.f32.mrb[0].mxu0
      %v5898 = vadd.f32 %v5696, %v5897
      %v5899 = vpop.f32.mrb[0].mxu0
      %v5900 = vadd.f32 %v5700, %v5899
      %v5901 = vpop.f32.mrb[0].mxu0
      %v5902 = vadd.f32 %v5696, %v5901
      %v5903 = vpop.f32.mrb[0].mxu0
      %v5904 = vadd.f32 %v5700, %v5903
      %5905 = vmatprep.mubr.bf16.mxu0 %v5596
      %5906 = vmatmul.mubr.bf16.gmra.mrb[0].mxu0 %v5595
      %v5907 = vpop.f32.mrb[0].mxu0
      %v5908 = vadd.f32 %v5696, %v5907
      %v5909 = vpop.f32.mrb[0].mxu0
      %v5910 = vadd.f32 %v5700, %v5909
      %v5911 = vpop.f32.mrb[0].mxu0
      %v5912 = vadd.f32 %v5696, %v5911
      %v5913 = vpop.f32.mrb[0].mxu0
      %v5914 = vadd.f32 %v5700, %v5913
      %5915 = vmatprep.mubr.bf16.mxu0 %v5598
      %5916 = vmatmul.mubr.bf16.gmra.mrb[0].mxu0 %v5597
      %v5917 = vpop.f32.mrb[0].mxu0
      %v5918 = vadd.f32 %v5696, %v5917
      %v5919 = vpop.f32.mrb[0].mxu0
      %v5920 = vadd.f32 %v5700, %v5919
      %v5921 = vpop.f32.mrb[0].mxu0
      %v5922 = vadd.f32 %v5696, %v5921
      %v5923 = vpop.f32.mrb[0].mxu0
      %v5924 = vadd.f32 %v5700, %v5923
      %5925 = vmatprep.mubr.bf16.mxu0 %v5600
      %5926 = vmatmul.mubr.bf16.gmra.mrb[0].mxu0 %v5599
      %v5927 = vpop.f32.mrb[0].mxu0
      %v5928 = vadd.f32 %v5696, %v5927
      %v5929 = vpop.f32.mrb[0].mxu0
      %v5930 = vadd.f32 %v5700, %v5929
      %v5931 = vpop.f32.mrb[0].mxu0
      %v5932 = vadd.f32 %v5696, %v5931
      %v5933 = vpop.f32.mrb[0].mxu0
      %v5934 = vadd.f32 %v5700, %v5933
      %5935 = vmatprep.mubr.bf16.mxu0 %v5602
      %5936 = vmatmul.mubr.bf16.gmra.mrb[0].mxu0 %v5601
      %v5937 = vpop.f32.mrb[0].mxu0
      %v5938 = vadd.f32 %v5696, %v5937
      %v5939 = vpop.f32.mrb[0].mxu0
      %v5940 = vadd.f32 %v5700, %v5939
      %v5941 = vpop.f32.mrb[0].mxu0
      %v5942 = vadd.f32 %v5696, %v5941
      %v5943 = vpop.f32.mrb[0].mxu0
      %v5944 = vadd.f32 %v5700, %v5943
      %5945 = vmatprep.mubr.bf16.mxu0 %v5604
      %5946 = vmatmul.mubr.bf16.gmra.mrb[0].mxu0 %v5603
      %v5947 = vpop.f32.mrb[0].mxu0
      %v5948 = vadd.f32 %v5696, %v5947
      %v5949 = vpop.f32.mrb[0].mxu0
      %v5950 = vadd.f32 %v5700, %v5949
      %v5951 = vpop.f32.mrb[0].mxu0
      %v5952 = vadd.f32 %v5696, %v5951
      %v5953 = vpop.f32.mrb[0].mxu0
      %v5954 = vadd.f32 %v5700, %v5953
      %5955 = vmatprep.mubr.bf16.mxu0 %v5606
      %5956 = vmatmul.mubr.bf16.gmra.mrb[0].mxu0 %v5605
      %v5957 = vpop.f32.mrb[0].mxu0
      %v5958 = vadd.f32 %v5696, %v5957
      %v5959 = vpop.f32.mrb[0].mxu0
      %v5960 = vadd.f32 %v5700, %v5959
      %v5961 = vpop.f32.mrb[0].mxu0
      %v5962 = vadd.f32 %v5696, %v5961
      %v5963 = vpop.f32.mrb[0].mxu0
      %v5964 = vadd.f32 %v5700, %v5963
      %5965 = vmatprep.mubr.bf16.mxu0 %v5608
      %5966 = vmatmul.mubr.bf16.gmra.mrb[0].mxu0 %v5607
      %v5967 = vpop.f32.mrb[0].mxu0
      %v5968 = vadd.f32 %v5696, %v5967
      %v5969 = vpop.f32.mrb[0].mxu0
      %v5970 = vadd.f32 %v5700, %v5969
      %v5971 = vpop.f32.mrb[0].mxu0
      %v5972 = vadd.f32 %v5696, %v5971
      %v5973 = vpop.f32.mrb[0].mxu0
      %v5974 = vadd.f32 %v5700, %v5973
      %5975 = vmatprep.mubr.bf16.mxu0 %v5610
      %5976 = vmatmul.mubr.bf16.gmra.mrb[0].mxu0 %v5609
      %v5977 = vpop.f32.mrb[0].mxu0
      %v5978 = vadd.f32 %v5696, %v5977
      %v5979 = vpop.f32.mrb[0].mxu0
      %v5980 = vadd.f32 %v5700, %v5979
      %v5981 = vpop.f32.mrb[0].mxu0
      %v5982 = vadd.f32 %v5696, %v5981
      %v5983 = vpop.f32.mrb[0].mxu0
      %v5984 = vadd.f32 %v5700, %v5983
      %5985 = vmatprep.mubr.bf16.mxu0 %v5612
      %5986 = vmatmul.mubr.bf16.gmra.mrb[0].mxu0 %v5611
      %v5987 = vpop.f32.mrb[0].mxu0
      %v5988 = vadd.f32 %v5696, %v5987
      %v5989 = vpop.f32.mrb[0].mxu0
      %v5990 = vadd.f32 %v5700, %v5989
      %v5991 = vpop.f32.mrb[0].mxu0
      %v5992 = vadd.f32 %v5696, %v5991
      %v5993 = vpop.f32.mrb[0].mxu0
      %v5994 = vadd.f32 %v5700, %v5993
      %5995 = vmatprep.mubr.bf16.mxu0 %v5614
      %5996 = vmatmul.mubr.bf16.gmra.mrb[0].mxu0 %v5613
      %v5997 = vpop.f32.mrb[0].mxu0
      %v5998 = vadd.f32 %v5696, %v5997
      %v5999 = vpop.f32.mrb[0].mxu0
      %v6000 = vadd.f32 %v5700, %v5999
      %v6001 = vpop.f32.mrb[0].mxu0
      %v6002 = vadd.f32 %v5696, %v6001
      %v6003 = vpop.f32.mrb[0].mxu0
      %v6004 = vadd.f32 %v5700, %v6003
      %6005 = vmatprep.mubr.bf16.mxu0 %v5616
      %6006 = vmatmul.mubr.bf16.gmra.mrb[0].mxu0 %v5615
      %v6007 = vpop.f32.mrb[0].mxu0
      %v6008 = vadd.f32 %v5696, %v6007
      %v6009 = vpop.f32.mrb[0].mxu0
      %v6010 = vadd.f32 %v5700, %v6009
      %v6011 = vpop.f32.mrb[0].mxu0
      %v6012 = vadd.f32 %v5696, %v6011
      %v6013 = vpop.f32.mrb[0].mxu0
      %v6014 = vadd.f32 %v5700, %v6013
      %6015 = vmatprep.mubr.bf16.mxu0 %v5618
      %6016 = vmatmul.mubr.bf16.gmra.mrb[0].mxu0 %v5617
      %v6017 = vpop.f32.mrb[0].mxu0
      %v6018 = vadd.f32 %v5696, %v6017
      %v6019 = vpop.f32.mrb[0].mxu0
      %v6020 = vadd.f32 %v5700, %v6019
      %v6021 = vpop.f32.mrb[0].mxu0
      %v6022 = vadd.f32 %v5696, %v6021
      %v6023 = vpop.f32.mrb[0].mxu0
      %v6024 = vadd.f32 %v5700, %v6023
      %6025 = vmatprep.mubr.bf16.mxu0 %v5620
      %6026 = vmatmul.mubr.bf16.gmra.mrb[0].mxu0 %v5619
      %v6027 = vpop.f32.mrb[0].mxu0
      %v6028 = vadd.f32 %v5696, %v6027
      %v6029 = vpop.f32.mrb[0].mxu0
      %v6030 = vadd.f32 %v5700, %v6029
      %v6031 = vpop.f32.mrb[0].mxu0
      %v6032 = vadd.f32 %v5696, %v6031
      %v6033 = vpop.f32.mrb[0].mxu0
      %v6034 = vadd.f32 %v5700, %v6033
      %6035 = vmatprep.mubr.bf16.mxu0 %v5622
      %6036 = vmatmul.mubr.bf16.gmra.mrb[0].mxu0 %v5621
      %v6037 = vpop.f32.mrb[0].mxu0
      %v6038 = vadd.f32 %v5696, %v6037
      %v6039 = vpop.f32.mrb[0].mxu0
      %v6040 = vadd.f32 %v5700, %v6039
      %v6041 = vpop.f32.mrb[0].mxu0
      %v6042 = vadd.f32 %v5696, %v6041
      %v6043 = vpop.f32.mrb[0].mxu0
      %v6044 = vadd.f32 %v5700, %v6043
      %6045 = vmatprep.mubr.bf16.mxu0 %v5624
      %6046 = vmatmul.mubr.bf16.gmra.mrb[0].mxu0 %v5623
      %v6047 = vpop.f32.mrb[0].mxu0
      %v6048 = vadd.f32 %v5696, %v6047
      %v6049 = vpop.f32.mrb[0].mxu0
      %v6050 = vadd.f32 %v5700, %v6049
      %v6051 = vpop.f32.mrb[0].mxu0
      %v6052 = vadd.f32 %v5696, %v6051
      %v6053 = vpop.f32.mrb[0].mxu0
      %v6054 = vadd.f32 %v5700, %v6053
      %6055 = vmatprep.mubr.bf16.mxu0 %v5626
      %6056 = vmatmul.mubr.bf16.gmra.mrb[0].mxu0 %v5625
      %v6057 = vpop.f32.mrb[0].mxu0
      %v6058 = vadd.f32 %v5696, %v6057
      %v6059 = vpop.f32.mrb[0].mxu0
      %v6060 = vadd.f32 %v5700, %v6059
      %v6061 = vpop.f32.mrb[0].mxu0
      %v6062 = vadd.f32 %v5696, %v6061
      %v6063 = vpop.f32.mrb[0].mxu0
      %v6064 = vadd.f32 %v5700, %v6063
      %6065 = vmatprep.mubr.bf16.mxu0 %v5628
      %6066 = vmatmul.mubr.bf16.gmra.mrb[0].mxu0 %v5627
      %v6067 = vpop.f32.mrb[0].mxu0
      %v6068 = vadd.f32 %v5696, %v6067
      %v6069 = vpop.f32.mrb[0].mxu0
      %v6070 = vadd.f32 %v5700, %v6069
      %v6071 = vpop.f32.mrb[0].mxu0
      %v6072 = vadd.f32 %v5696, %v6071
      %v6073 = vpop.f32.mrb[0].mxu0
      %v6074 = vadd.f32 %v5700, %v6073
      %6075 = vmatprep.mubr.bf16.mxu0 %v5630
      %6076 = vmatmul.mubr.bf16.gmra.mrb[0].mxu0 %v5629
      %v6077 = vpop.f32.mrb[0].mxu0
      %v6078 = vadd.f32 %v5696, %v6077
      %v6079 = vpop.f32.mrb[0].mxu0
      %v6080 = vadd.f32 %v5700, %v6079
      %v6081 = vpop.f32.mrb[0].mxu0
      %v6082 = vadd.f32 %v5696, %v6081
      %v6083 = vpop.f32.mrb[0].mxu0
      %v6084 = vadd.f32 %v5700, %v6083
      %6085 = vmatprep.mubr.bf16.mxu0 %v5632
      %6086 = vmatmul.mubr.bf16.gmra.mrb[0].mxu0 %v5631
      %v6087 = vpop.f32.mrb[0].mxu0
      %v6088 = vadd.f32 %v5696, %v6087
      %v6089 = vpop.f32.mrb[0].mxu0
      %v6090 = vadd.f32 %v5700, %v6089
      %v6091 = vpop.f32.mrb[0].mxu0
      %v6092 = vadd.f32 %v5696, %v6091
      %v6093 = vpop.f32.mrb[0].mxu0
      %v6094 = vadd.f32 %v5700, %v6093
      %6095 = vmatprep.mubr.bf16.mxu0 %v5634
      %6096 = vmatmul.mubr.bf16.gmra.mrb[0].mxu0 %v5633
      %v6097 = vpop.f32.mrb[0].mxu0
      %v6098 = vadd.f32 %v5696, %v6097
      %v6099 = vpop.f32.mrb[0].mxu0
      %v6100 = vadd.f32 %v5700, %v6099
      %v6101 = vpop.f32.mrb[0].mxu0
      %v6102 = vadd.f32 %v5696, %v6101
      %v6103 = vpop.f32.mrb[0].mxu0
      %v6104 = vadd.f32 %v5700, %v6103
      %6105 = vmatprep.mubr.bf16.mxu0 %v5636
      %6106 = vmatmul.mubr.bf16.gmra.mrb[0].mxu0 %v5635
      %v6107 = vpop.f32.mrb[0].mxu0
      %v6108 = vadd.f32 %v5696, %v6107
      %v6109 = vpop.f32.mrb[0].mxu0
      %v6110 = vadd.f32 %v5700, %v6109
      %v6111 = vpop.f32.mrb[0].mxu0
      %v6112 = vadd.f32 %v5696, %v6111
      %v6113 = vpop.f32.mrb[0].mxu0
      %v6114 = vadd.f32 %v5700, %v6113
      %6115 = vmatprep.mubr.bf16.mxu0 %v5638
      %6116 = vmatmul.mubr.bf16.gmra.mrb[0].mxu0 %v5637
      %v6117 = vpop.f32.mrb[0].mxu0
      %v6118 = vadd.f32 %v5696, %v6117
      %v6119 = vpop.f32.mrb[0].mxu0
      %v6120 = vadd.f32 %v5700, %v6119
      %v6121 = vpop.f32.mrb[0].mxu0
      %v6122 = vadd.f32 %v5696, %v6121
      %v6123 = vpop.f32.mrb[0].mxu0
      %v6124 = vadd.f32 %v5700, %v6123
      %6125 = vmatprep.mubr.bf16.mxu0 %v5640
      %6126 = vmatmul.mubr.bf16.gmra.mrb[0].mxu0 %v5639
      %v6127 = vpop.f32.mrb[0].mxu0
      %v6128 = vadd.f32 %v5696, %v6127
      %v6129 = vpop.f32.mrb[0].mxu0
      %v6130 = vadd.f32 %v5700, %v6129
      %v6131 = vpop.f32.mrb[0].mxu0
      %v6132 = vadd.f32 %v5696, %v6131
      %v6133 = vpop.f32.mrb[0].mxu0
      %v6134 = vadd.f32 %v5700, %v6133
      %6135 = vmatprep.mubr.bf16.mxu0 %v5642
      %6136 = vmatmul.mubr.bf16.gmra.mrb[0].mxu0 %v5641
      %v6137 = vpop.f32.mrb[0].mxu0
      %v6138 = vadd.f32 %v5696, %v6137
      %v6139 = vpop.f32.mrb[0].mxu0
      %v6140 = vadd.f32 %v5700, %v6139
      %v6141 = vpop.f32.mrb[0].mxu0
      %v6142 = vadd.f32 %v5696, %v6141
      %v6143 = vpop.f32.mrb[0].mxu0
      %v6144 = vadd.f32 %v5700, %v6143
      %6145 = vmatprep.mubr.bf16.mxu0 %v5644
      %6146 = vmatmul.mubr.bf16.gmra.mrb[0].mxu0 %v5643
      %v6147 = vpop.f32.mrb[0].mxu0
      %v6148 = vadd.f32 %v5696, %v6147
      %v6149 = vpop.f32.mrb[0].mxu0
      %v6150 = vadd.f32 %v5700, %v6149
      %v6151 = vpop.f32.mrb[0].mxu0
      %v6152 = vadd.f32 %v5696, %v6151
      %v6153 = vpop.f32.mrb[0].mxu0
      %v6154 = vadd.f32 %v5700, %v6153
      %6155 = vmatprep.mubr.bf16.mxu0 %v5646
      %6156 = vmatmul.mubr.bf16.gmra.mrb[0].mxu0 %v5645
      %v6157 = vpop.f32.mrb[0].mxu0
      %v6158 = vadd.f32 %v5696, %v6157
      %v6159 = vpop.f32.mrb[0].mxu0
      %v6160 = vadd.f32 %v5700, %v6159
      %v6161 = vpop.f32.mrb[0].mxu0
      %v6162 = vadd.f32 %v5696, %v6161
      %v6163 = vpop.f32.mrb[0].mxu0
      %v6164 = vadd.f32 %v5700, %v6163
      %6165 = vmatprep.mubr.bf16.mxu0 %v5648
      %6166 = vmatmul.mubr.bf16.gmra.mrb[0].mxu0 %v5647
      %v6167 = vpop.f32.mrb[0].mxu0
      %v6168 = vadd.f32 %v5696, %v6167
      %v6169 = vpop.f32.mrb[0].mxu0
      %v6170 = vadd.f32 %v5700, %v6169
      %v6171 = vpop.f32.mrb[0].mxu0
      %v6172 = vadd.f32 %v5696, %v6171
      %v6173 = vpop.f32.mrb[0].mxu0
      %v6174 = vadd.f32 %v5700, %v6173
      %6175 = vmatprep.mubr.bf16.mxu0 %v5650
      %6176 = vmatmul.mubr.bf16.gmra.mrb[0].mxu0 %v5649
      %v6177 = vpop.f32.mrb[0].mxu0
      %v6178 = vadd.f32 %v5696, %v6177
      %v6179 = vpop.f32.mrb[0].mxu0
      %v6180 = vadd.f32 %v5700, %v6179
      %v6181 = vpop.f32.mrb[0].mxu0
      %v6182 = vadd.f32 %v5696, %v6181
      %v6183 = vpop.f32.mrb[0].mxu0
      %v6184 = vadd.f32 %v5700, %v6183
      %6185 = vmatprep.mubr.bf16.mxu0 %v5652
      %6186 = vmatmul.mubr.bf16.gmra.mrb[0].mxu0 %v5651
      %v6187 = vpop.f32.mrb[0].mxu0
      %v6188 = vadd.f32 %v5696, %v6187
      %v6189 = vpop.f32.mrb[0].mxu0
      %v6190 = vadd.f32 %v5700, %v6189
      %v6191 = vpop.f32.mrb[0].mxu0
      %v6192 = vadd.f32 %v5696, %v6191
      %v6193 = vpop.f32.mrb[0].mxu0
      %v6194 = vadd.f32 %v5700, %v6193
      %6195 = vmatprep.mubr.bf16.mxu0 %v5654
      %6196 = vmatmul.mubr.bf16.gmra.mrb[0].mxu0 %v5653
      %v6197 = vpop.f32.mrb[0].mxu0
      %v6198 = vadd.f32 %v5696, %v6197
      %v6199 = vpop.f32.mrb[0].mxu0
      %v6200 = vadd.f32 %v5700, %v6199
      %v6201 = vpop.f32.mrb[0].mxu0
      %v6202 = vadd.f32 %v5696, %v6201
      %v6203 = vpop.f32.mrb[0].mxu0
      %v6204 = vadd.f32 %v5700, %v6203
      %6205 = vmatprep.mubr.bf16.mxu0 %v5656
      %6206 = vmatmul.mubr.bf16.gmra.mrb[0].mxu0 %v5655
      %v6207 = vpop.f32.mrb[0].mxu0
      %v6208 = vadd.f32 %v5696, %v6207
      %v6209 = vpop.f32.mrb[0].mxu0
      %v6210 = vadd.f32 %v5700, %v6209
      %v6211 = vpop.f32.mrb[0].mxu0
      %v6212 = vadd.f32 %v5696, %v6211
      %v6213 = vpop.f32.mrb[0].mxu0
      %v6214 = vadd.f32 %v5700, %v6213
      %6215 = vdwg.mxu0
      %v6216 = vmax.f32 %v5898, 0.0
      %v6217 = vmax.f32 %v5900, 0.0
      %v6218 = vmax.f32 %v5902, 0.0
      %v6219 = vmax.f32 %v5904, 0.0
      %v6220 = vmax.f32 %v5908, 0.0
      %v6221 = vmax.f32 %v5910, 0.0
      %v6222 = vmax.f32 %v5912, 0.0
      %v6223 = vmax.f32 %v5914, 0.0
      %v6224 = vmax.f32 %v5918, 0.0
      %v6225 = vmax.f32 %v5920, 0.0
      %v6226 = vmax.f32 %v5922, 0.0
      %v6227 = vmax.f32 %v5924, 0.0
      %v6228 = vmax.f32 %v5928, 0.0
      %v6229 = vmax.f32 %v5930, 0.0
      %v6230 = vmax.f32 %v5932, 0.0
      %v6231 = vmax.f32 %v5934, 0.0
      %v6232 = vmax.f32 %v5938, 0.0
      %v6233 = vmax.f32 %v5940, 0.0
      %v6234 = vmax.f32 %v5942, 0.0
      %v6235 = vmax.f32 %v5944, 0.0
      %v6236 = vmax.f32 %v5948, 0.0
      %v6237 = vmax.f32 %v5950, 0.0
      %v6238 = vmax.f32 %v5952, 0.0
      %v6239 = vmax.f32 %v5954, 0.0
      %v6240 = vmax.f32 %v5958, 0.0
      %v6241 = vmax.f32 %v5960, 0.0
      %v6242 = vmax.f32 %v5962, 0.0
      %v6243 = vmax.f32 %v5964, 0.0
      %v6244 = vmax.f32 %v5968, 0.0
      %v6245 = vmax.f32 %v5970, 0.0
      %v6246 = vmax.f32 %v5972, 0.0
      %v6247 = vmax.f32 %v5974, 0.0
      %v6248 = vmax.f32 %v5978, 0.0
      %v6249 = vmax.f32 %v5980, 0.0
      %v6250 = vmax.f32 %v5982, 0.0
      %v6251 = vmax.f32 %v5984, 0.0
      %v6252 = vmax.f32 %v5988, 0.0
      %v6253 = vmax.f32 %v5990, 0.0
      %v6254 = vmax.f32 %v5992, 0.0
      %v6255 = vmax.f32 %v5994, 0.0
      %v6256 = vmax.f32 %v5998, 0.0
      %v6257 = vmax.f32 %v6000, 0.0
      %v6258 = vmax.f32 %v6002, 0.0
      %v6259 = vmax.f32 %v6004, 0.0
      %v6260 = vmax.f32 %v6008, 0.0
      %v6261 = vmax.f32 %v6010, 0.0
      %v6262 = vmax.f32 %v6012, 0.0
      %v6263 = vmax.f32 %v6014, 0.0
      %v6264 = vmax.f32 %v6018, 0.0
      %v6265 = vmax.f32 %v6020, 0.0
      %v6266 = vmax.f32 %v6022, 0.0
      %v6267 = vmax.f32 %v6024, 0.0
      %v6268 = vmax.f32 %v6028, 0.0
      %v6269 = vmax.f32 %v6030, 0.0
      %v6270 = vmax.f32 %v6032, 0.0
      %v6271 = vmax.f32 %v6034, 0.0
      %v6272 = vmax.f32 %v6038, 0.0
      %v6273 = vmax.f32 %v6040, 0.0
      %v6274 = vmax.f32 %v6042, 0.0
      %v6275 = vmax.f32 %v6044, 0.0
      %v6276 = vmax.f32 %v6048, 0.0
      %v6277 = vmax.f32 %v6050, 0.0
      %v6278 = vmax.f32 %v6052, 0.0
      %v6279 = vmax.f32 %v6054, 0.0
      %v6280 = vmax.f32 %v6058, 0.0
      %v6281 = vmax.f32 %v6060, 0.0
      %v6282 = vmax.f32 %v6062, 0.0
      %v6283 = vmax.f32 %v6064, 0.0
      %v6284 = vmax.f32 %v6068, 0.0
      %v6285 = vmax.f32 %v6070, 0.0
      %v6286 = vmax.f32 %v6072, 0.0
      %v6287 = vmax.f32 %v6074, 0.0
      %v6288 = vmax.f32 %v6078, 0.0
      %v6289 = vmax.f32 %v6080, 0.0
      %v6290 = vmax.f32 %v6082, 0.0
      %v6291 = vmax.f32 %v6084, 0.0
      %v6292 = vmax.f32 %v6088, 0.0
      %v6293 = vmax.f32 %v6090, 0.0
      %v6294 = vmax.f32 %v6092, 0.0
      %v6295 = vmax.f32 %v6094, 0.0
      %v6296 = vmax.f32 %v6098, 0.0
      %v6297 = vmax.f32 %v6100, 0.0
      %v6298 = vmax.f32 %v6102, 0.0
      %v6299 = vmax.f32 %v6104, 0.0
      %v6300 = vmax.f32 %v6108, 0.0
      %v6301 = vmax.f32 %v6110, 0.0
      %v6302 = vmax.f32 %v6112, 0.0
      %v6303 = vmax.f32 %v6114, 0.0
      %v6304 = vmax.f32 %v6118, 0.0
      %v6305 = vmax.f32 %v6120, 0.0
      %v6306 = vmax.f32 %v6122, 0.0
      %v6307 = vmax.f32 %v6124, 0.0
      %v6308 = vmax.f32 %v6128, 0.0
      %v6309 = vmax.f32 %v6130, 0.0
      %v6310 = vmax.f32 %v6132, 0.0
      %v6311 = vmax.f32 %v6134, 0.0
      %v6312 = vmax.f32 %v6138, 0.0
      %v6313 = vmax.f32 %v6140, 0.0
      %v6314 = vmax.f32 %v6142, 0.0
      %v6315 = vmax.f32 %v6144, 0.0
      %v6316 = vmax.f32 %v6148, 0.0
      %v6317 = vmax.f32 %v6150, 0.0
      %v6318 = vmax.f32 %v6152, 0.0
      %v6319 = vmax.f32 %v6154, 0.0
      %v6320 = vmax.f32 %v6158, 0.0
      %v6321 = vmax.f32 %v6160, 0.0
      %v6322 = vmax.f32 %v6162, 0.0
      %v6323 = vmax.f32 %v6164, 0.0
      %v6324 = vmax.f32 %v6168, 0.0
      %v6325 = vmax.f32 %v6170, 0.0
      %v6326 = vmax.f32 %v6172, 0.0
      %v6327 = vmax.f32 %v6174, 0.0
      %v6328 = vmax.f32 %v6178, 0.0
      %v6329 = vmax.f32 %v6180, 0.0
      %v6330 = vmax.f32 %v6182, 0.0
      %v6331 = vmax.f32 %v6184, 0.0
      %v6332 = vmax.f32 %v6188, 0.0
      %v6333 = vmax.f32 %v6190, 0.0
      %v6334 = vmax.f32 %v6192, 0.0
      %v6335 = vmax.f32 %v6194, 0.0
      %v6336 = vmax.f32 %v6198, 0.0
      %v6337 = vmax.f32 %v6200, 0.0
      %v6338 = vmax.f32 %v6202, 0.0
      %v6339 = vmax.f32 %v6204, 0.0
      %v6340 = vmax.f32 %v6208, 0.0
      %v6341 = vmax.f32 %v6210, 0.0
      %v6342 = vmax.f32 %v6212, 0.0
      %v6343 = vmax.f32 %v6214, 0.0
      %v6344 = vpack.c.bf16 %v6218, %v6216
      %v6345 = vpack.c.bf16 %v6219, %v6217
      %v6346 = vpack.c.bf16 %v6222, %v6220
      %v6347 = vpack.c.bf16 %v6223, %v6221
      %v6348 = vpack.c.bf16 %v6226, %v6224
      %v6349 = vpack.c.bf16 %v6227, %v6225
      %v6350 = vpack.c.bf16 %v6230, %v6228
      %v6351 = vpack.c.bf16 %v6231, %v6229
      %v6352 = vpack.c.bf16 %v6234, %v6232
      %v6353 = vpack.c.bf16 %v6235, %v6233
      %v6354 = vpack.c.bf16 %v6238, %v6236
      %v6355 = vpack.c.bf16 %v6239, %v6237
      %v6356 = vpack.c.bf16 %v6242, %v6240
      %v6357 = vpack.c.bf16 %v6243, %v6241
      %v6358 = vpack.c.bf16 %v6246, %v6244
      %v6359 = vpack.c.bf16 %v6247, %v6245
      %v6360 = vpack.c.bf16 %v6250, %v6248
      %v6361 = vpack.c.bf16 %v6251, %v6249
      %v6362 = vpack.c.bf16 %v6254, %v6252
      %v6363 = vpack.c.bf16 %v6255, %v6253
      %v6364 = vpack.c.bf16 %v6258, %v6256
      %v6365 = vpack.c.bf16 %v6259, %v6257
      %v6366 = vpack.c.bf16 %v6262, %v6260
      %v6367 = vpack.c.bf16 %v6263, %v6261
      %v6368 = vpack.c.bf16 %v6266, %v6264
      %v6369 = vpack.c.bf16 %v6267, %v6265
      %v6370 = vpack.c.bf16 %v6270, %v6268
      %v6371 = vpack.c.bf16 %v6271, %v6269
      %v6372 = vpack.c.bf16 %v6274, %v6272
      %v6373 = vpack.c.bf16 %v6275, %v6273
      %v6374 = vpack.c.bf16 %v6278, %v6276
      %v6375 = vpack.c.bf16 %v6279, %v6277
      %v6376 = vpack.c.bf16 %v6282, %v6280
      %v6377 = vpack.c.bf16 %v6283, %v6281
      %v6378 = vpack.c.bf16 %v6286, %v6284
      %v6379 = vpack.c.bf16 %v6287, %v6285
      %v6380 = vpack.c.bf16 %v6290, %v6288
      %v6381 = vpack.c.bf16 %v6291, %v6289
      %v6382 = vpack.c.bf16 %v6294, %v6292
      %v6383 = vpack.c.bf16 %v6295, %v6293
      %v6384 = vpack.c.bf16 %v6298, %v6296
      %v6385 = vpack.c.bf16 %v6299, %v6297
      %v6386 = vpack.c.bf16 %v6302, %v6300
      %v6387 = vpack.c.bf16 %v6303, %v6301
      %v6388 = vpack.c.bf16 %v6306, %v6304
      %v6389 = vpack.c.bf16 %v6307, %v6305
      %v6390 = vpack.c.bf16 %v6310, %v6308
      %v6391 = vpack.c.bf16 %v6311, %v6309
      %v6392 = vpack.c.bf16 %v6314, %v6312
      %v6393 = vpack.c.bf16 %v6315, %v6313
      %v6394 = vpack.c.bf16 %v6318, %v6316
      %v6395 = vpack.c.bf16 %v6319, %v6317
      %v6396 = vpack.c.bf16 %v6322, %v6320
      %v6397 = vpack.c.bf16 %v6323, %v6321
      %v6398 = vpack.c.bf16 %v6326, %v6324
      %v6399 = vpack.c.bf16 %v6327, %v6325
      %v6400 = vpack.c.bf16 %v6330, %v6328
      %v6401 = vpack.c.bf16 %v6331, %v6329
      %v6402 = vpack.c.bf16 %v6334, %v6332
      %v6403 = vpack.c.bf16 %v6335, %v6333
      %v6404 = vpack.c.bf16 %v6338, %v6336
      %v6405 = vpack.c.bf16 %v6339, %v6337
      %v6406 = vpack.c.bf16 %v6342, %v6340
      %v6407 = vpack.c.bf16 %v6343, %v6341
      %v6408 = vld [vmem:[%s6] sm:$0xff]
      %v6409 = vld [vmem:[%s6 + $0x8] sm:$0xff]
      %v6410 = vld [vmem:[%s6 + $0x10] sm:$0xff]
      %v6411 = vld [vmem:[%s6 + $0x18] sm:$0xff]
      %v6412 = vld [vmem:[%s6 + $0x20] sm:$0xff]
      %v6413 = vld [vmem:[%s6 + $0x28] sm:$0xff]
      %v6414 = vld [vmem:[%s6 + $0x30] sm:$0xff]
      %v6415 = vld [vmem:[%s6 + $0x38] sm:$0xff]
      %v6416 = vld [vmem:[%s6 + $0x40] sm:$0xff]
      %v6417 = vld [vmem:[%s6 + $0x48] sm:$0xff]
      %v6418 = vld [vmem:[%s6 + $0x50] sm:$0xff]
      %v6419 = vld [vmem:[%s6 + $0x58] sm:$0xff]
      %v6420 = vld [vmem:[%s6 + $0x60] sm:$0xff]
      %v6421 = vld [vmem:[%s6 + $0x68] sm:$0xff]
      %v6422 = vld [vmem:[%s6 + $0x70] sm:$0xff]
      %v6423 = vld [vmem:[%s6 + $0x78] sm:$0xff]
      %v6424 = vld [vmem:[%s6 + $0x80] sm:$0xff]
      %v6425 = vld [vmem:[%s6 + $0x88] sm:$0xff]
      %v6426 = vld [vmem:[%s6 + $0x90] sm:$0xff]
      %v6427 = vld [vmem:[%s6 + $0x98] sm:$0xff]
      %v6428 = vld [vmem:[%s6 + $0xa0] sm:$0xff]
      %v6429 = vld [vmem:[%s6 + $0xa8] sm:$0xff]
      %v6430 = vld [vmem:[%s6 + $0xb0] sm:$0xff]
      %v6431 = vld [vmem:[%s6 + $0xb8] sm:$0xff]
      %v6432 = vld [vmem:[%s6 + $0xc0] sm:$0xff]
      %v6433 = vld [vmem:[%s6 + $0xc8] sm:$0xff]
      %v6434 = vld [vmem:[%s6 + $0xd0] sm:$0xff]
      %v6435 = vld [vmem:[%s6 + $0xd8] sm:$0xff]
      %v6436 = vld [vmem:[%s6 + $0xe0] sm:$0xff]
      %v6437 = vld [vmem:[%s6 + $0xe8] sm:$0xff]
      %v6438 = vld [vmem:[%s6 + $0xf0] sm:$0xff]
      %v6439 = vld [vmem:[%s6 + $0xf8] sm:$0xff]
      %v6440 = vld [vmem:[%s6 + $0x100] sm:$0xff]
      %v6441 = vld [vmem:[%s6 + $0x108] sm:$0xff]
      %v6442 = vld [vmem:[%s6 + $0x110] sm:$0xff]
      %v6443 = vld [vmem:[%s6 + $0x118] sm:$0xff]
      %v6444 = vld [vmem:[%s6 + $0x120] sm:$0xff]
      %v6445 = vld [vmem:[%s6 + $0x128] sm:$0xff]
      %v6446 = vld [vmem:[%s6 + $0x130] sm:$0xff]
      %v6447 = vld [vmem:[%s6 + $0x138] sm:$0xff]
      %v6448 = vld [vmem:[%s6 + $0x140] sm:$0xff]
      %v6449 = vld [vmem:[%s6 + $0x148] sm:$0xff]
      %v6450 = vld [vmem:[%s6 + $0x150] sm:$0xff]
      %v6451 = vld [vmem:[%s6 + $0x158] sm:$0xff]
      %v6452 = vld [vmem:[%s6 + $0x160] sm:$0xff]
      %v6453 = vld [vmem:[%s6 + $0x168] sm:$0xff]
      %v6454 = vld [vmem:[%s6 + $0x170] sm:$0xff]
      %v6455 = vld [vmem:[%s6 + $0x178] sm:$0xff]
      %v6456 = vld [vmem:[%s6 + $0x180] sm:$0xff]
      %v6457 = vld [vmem:[%s6 + $0x188] sm:$0xff]
      %v6458 = vld [vmem:[%s6 + $0x190] sm:$0xff]
      %v6459 = vld [vmem:[%s6 + $0x198] sm:$0xff]
      %v6460 = vld [vmem:[%s6 + $0x1a0] sm:$0xff]
      %v6461 = vld [vmem:[%s6 + $0x1a8] sm:$0xff]
      %v6462 = vld [vmem:[%s6 + $0x1b0] sm:$0xff]
      %v6463 = vld [vmem:[%s6 + $0x1b8] sm:$0xff]
      %v6464 = vld [vmem:[%s6 + $0x1c0] sm:$0xff]
      %v6465 = vld [vmem:[%s6 + $0x1c8] sm:$0xff]
      %v6466 = vld [vmem:[%s6 + $0x1d0] sm:$0xff]
      %v6467 = vld [vmem:[%s6 + $0x1d8] sm:$0xff]
      %v6468 = vld [vmem:[%s6 + $0x1e0] sm:$0xff]
      %v6469 = vld [vmem:[%s6 + $0x1e8] sm:$0xff]
      %v6470 = vld [vmem:[%s6 + $0x1f0] sm:$0xff]
      %v6471 = vld [vmem:[%s6 + $0x1f8] sm:$0xff]
      %v6472 = vld [vmem:[%s6 + $0x200] sm:$0xff]
      %v6473 = vld [vmem:[%s6 + $0x208] sm:$0xff]
      %v6474 = vld [vmem:[%s6 + $0x210] sm:$0xff]
      %v6475 = vld [vmem:[%s6 + $0x218] sm:$0xff]
      %v6476 = vld [vmem:[%s6 + $0x220] sm:$0xff]
      %v6477 = vld [vmem:[%s6 + $0x228] sm:$0xff]
      %v6478 = vld [vmem:[%s6 + $0x230] sm:$0xff]
      %v6479 = vld [vmem:[%s6 + $0x238] sm:$0xff]
      %v6480 = vld [vmem:[%s6 + $0x240] sm:$0xff]
      %v6481 = vld [vmem:[%s6 + $0x248] sm:$0xff]
      %v6482 = vld [vmem:[%s6 + $0x250] sm:$0xff]
      %v6483 = vld [vmem:[%s6 + $0x258] sm:$0xff]
      %v6484 = vld [vmem:[%s6 + $0x260] sm:$0xff]
      %v6485 = vld [vmem:[%s6 + $0x268] sm:$0xff]
      %v6486 = vld [vmem:[%s6 + $0x270] sm:$0xff]
      %v6487 = vld [vmem:[%s6 + $0x278] sm:$0xff]
      %v6488 = vld [vmem:[%s6 + $0x280] sm:$0xff]
      %v6489 = vld [vmem:[%s6 + $0x288] sm:$0xff]
      %v6490 = vld [vmem:[%s6 + $0x290] sm:$0xff]
      %v6491 = vld [vmem:[%s6 + $0x298] sm:$0xff]
      %v6492 = vld [vmem:[%s6 + $0x2a0] sm:$0xff]
      %v6493 = vld [vmem:[%s6 + $0x2a8] sm:$0xff]
      %v6494 = vld [vmem:[%s6 + $0x2b0] sm:$0xff]
      %v6495 = vld [vmem:[%s6 + $0x2b8] sm:$0xff]
      %v6496 = vld [vmem:[%s6 + $0x2c0] sm:$0xff]
      %v6497 = vld [vmem:[%s6 + $0x2c8] sm:$0xff]
      %v6498 = vld [vmem:[%s6 + $0x2d0] sm:$0xff]
      %v6499 = vld [vmem:[%s6 + $0x2d8] sm:$0xff]
      %v6500 = vld [vmem:[%s6 + $0x2e0] sm:$0xff]
      %v6501 = vld [vmem:[%s6 + $0x2e8] sm:$0xff]
      %v6502 = vld [vmem:[%s6 + $0x2f0] sm:$0xff]
      %v6503 = vld [vmem:[%s6 + $0x2f8] sm:$0xff]
      %v6504 = vld [vmem:[%s6 + $0x300] sm:$0xff]
      %v6505 = vld [vmem:[%s6 + $0x308] sm:$0xff]
      %v6506 = vld [vmem:[%s6 + $0x310] sm:$0xff]
      %v6507 = vld [vmem:[%s6 + $0x318] sm:$0xff]
      %v6508 = vld [vmem:[%s6 + $0x320] sm:$0xff]
      %v6509 = vld [vmem:[%s6 + $0x328] sm:$0xff]
      %v6510 = vld [vmem:[%s6 + $0x330] sm:$0xff]
      %v6511 = vld [vmem:[%s6 + $0x338] sm:$0xff]
      %v6512 = vld [vmem:[%s6 + $0x340] sm:$0xff]
      %v6513 = vld [vmem:[%s6 + $0x348] sm:$0xff]
      %v6514 = vld [vmem:[%s6 + $0x350] sm:$0xff]
      %v6515 = vld [vmem:[%s6 + $0x358] sm:$0xff]
      %v6516 = vld [vmem:[%s6 + $0x360] sm:$0xff]
      %v6517 = vld [vmem:[%s6 + $0x368] sm:$0xff]
      %v6518 = vld [vmem:[%s6 + $0x370] sm:$0xff]
      %v6519 = vld [vmem:[%s6 + $0x378] sm:$0xff]
      %v6520 = vld [vmem:[%s6 + $0x380] sm:$0xff]
      %v6521 = vld [vmem:[%s6 + $0x388] sm:$0xff]
      %v6522 = vld [vmem:[%s6 + $0x390] sm:$0xff]
      %v6523 = vld [vmem:[%s6 + $0x398] sm:$0xff]
      %v6524 = vld [vmem:[%s6 + $0x3a0] sm:$0xff]
      %v6525 = vld [vmem:[%s6 + $0x3a8] sm:$0xff]
      %v6526 = vld [vmem:[%s6 + $0x3b0] sm:$0xff]
      %v6527 = vld [vmem:[%s6 + $0x3b8] sm:$0xff]
      %v6528 = vld [vmem:[%s6 + $0x3c0] sm:$0xff]
      %v6529 = vld [vmem:[%s6 + $0x3c8] sm:$0xff]
      %v6530 = vld [vmem:[%s6 + $0x3d0] sm:$0xff]
      %v6531 = vld [vmem:[%s6 + $0x3d8] sm:$0xff]
      %v6532 = vld [vmem:[%s6 + $0x3e0] sm:$0xff]
      %v6533 = vld [vmem:[%s6 + $0x3e8] sm:$0xff]
      %v6534 = vld [vmem:[%s6 + $0x3f0] sm:$0xff]
      %v6535 = vld [vmem:[%s6 + $0x3f8] sm:$0xff]
      %v6536 = vld [vmem:[%s7] sm:$0xff]
      %v6538 = vlaneseq
      %v6539 = vshrl.u32 %v6538, 7
      %v6540 = vsub.s32 0, %v6539
      %v6541 = vrot.slane %v6536, %v6540
      %v6542 = vlaneseq
      %v6543 = vshrl.u32 %v6542, 7
      %v6544 = vsub.s32 1, %v6543
      %v6545 = vrot.slane %v6536, %v6544
      %v6546 = vlaneseq
      %v6547 = vshrl.u32 %v6546, 7
      %v6548 = vsub.s32 2, %v6547
      %v6549 = vrot.slane %v6536, %v6548
      %v6550 = vlaneseq
      %v6551 = vshrl.u32 %v6550, 7
      %v6552 = vsub.s32 3, %v6551
      %v6553 = vrot.slane %v6536, %v6552
      %v6554 = vlaneseq
      %v6555 = vshrl.u32 %v6554, 7
      %v6556 = vsub.s32 4, %v6555
      %v6557 = vrot.slane %v6536, %v6556
      %v6558 = vlaneseq
      %v6559 = vshrl.u32 %v6558, 7
      %v6560 = vsub.s32 5, %v6559
      %v6561 = vrot.slane %v6536, %v6560
      %v6562 = vlaneseq
      %v6563 = vshrl.u32 %v6562, 7
      %v6564 = vsub.s32 6, %v6563
      %v6565 = vrot.slane %v6536, %v6564
      %v6566 = vlaneseq
      %v6567 = vshrl.u32 %v6566, 7
      %v6568 = vsub.s32 7, %v6567
      %v6569 = vrot.slane %v6536, %v6568
      %v6706 = vunpack.c.l.b16 %v6408
      %v6707 = vunpack.c.h.b16 %v6408
      %v6708 = vunpack.c.l.b16 %v6409
      %v6709 = vunpack.c.h.b16 %v6409
      %v6710 = vunpack.c.l.b16 %v6410
      %v6711 = vunpack.c.h.b16 %v6410
      %v6712 = vunpack.c.l.b16 %v6411
      %v6713 = vunpack.c.h.b16 %v6411
      %v6714 = vunpack.c.l.b16 %v6412
      %v6715 = vunpack.c.h.b16 %v6412
      %v6716 = vunpack.c.l.b16 %v6413
      %v6717 = vunpack.c.h.b16 %v6413
      %v6718 = vunpack.c.l.b16 %v6414
      %v6719 = vunpack.c.h.b16 %v6414
      %v6720 = vunpack.c.l.b16 %v6415
      %v6721 = vunpack.c.h.b16 %v6415
      %v6722 = vunpack.c.l.b16 %v6416
      %v6723 = vunpack.c.h.b16 %v6416
      %v6724 = vunpack.c.l.b16 %v6417
      %v6725 = vunpack.c.h.b16 %v6417
      %v6726 = vunpack.c.l.b16 %v6418
      %v6727 = vunpack.c.h.b16 %v6418
      %v6728 = vunpack.c.l.b16 %v6419
      %v6729 = vunpack.c.h.b16 %v6419
      %v6730 = vunpack.c.l.b16 %v6420
      %v6731 = vunpack.c.h.b16 %v6420
      %v6732 = vunpack.c.l.b16 %v6421
      %v6733 = vunpack.c.h.b16 %v6421
      %v6734 = vunpack.c.l.b16 %v6422
      %v6735 = vunpack.c.h.b16 %v6422
      %v6736 = vunpack.c.l.b16 %v6423
      %v6737 = vunpack.c.h.b16 %v6423
      %v6738 = vunpack.c.l.b16 %v6424
      %v6739 = vunpack.c.h.b16 %v6424
      %v6740 = vunpack.c.l.b16 %v6425
      %v6741 = vunpack.c.h.b16 %v6425
      %v6742 = vunpack.c.l.b16 %v6426
      %v6743 = vunpack.c.h.b16 %v6426
      %v6744 = vunpack.c.l.b16 %v6427
      %v6745 = vunpack.c.h.b16 %v6427
      %v6746 = vunpack.c.l.b16 %v6428
      %v6747 = vunpack.c.h.b16 %v6428
      %v6748 = vunpack.c.l.b16 %v6429
      %v6749 = vunpack.c.h.b16 %v6429
      %v6750 = vunpack.c.l.b16 %v6430
      %v6751 = vunpack.c.h.b16 %v6430
      %v6752 = vunpack.c.l.b16 %v6431
      %v6753 = vunpack.c.h.b16 %v6431
      %v6754 = vunpack.c.l.b16 %v6432
      %v6755 = vunpack.c.h.b16 %v6432
      %v6756 = vunpack.c.l.b16 %v6433
      %v6757 = vunpack.c.h.b16 %v6433
      %v6758 = vunpack.c.l.b16 %v6434
      %v6759 = vunpack.c.h.b16 %v6434
      %v6760 = vunpack.c.l.b16 %v6435
      %v6761 = vunpack.c.h.b16 %v6435
      %v6762 = vunpack.c.l.b16 %v6436
      %v6763 = vunpack.c.h.b16 %v6436
      %v6764 = vunpack.c.l.b16 %v6437
      %v6765 = vunpack.c.h.b16 %v6437
      %v6766 = vunpack.c.l.b16 %v6438
      %v6767 = vunpack.c.h.b16 %v6438
      %v6768 = vunpack.c.l.b16 %v6439
      %v6769 = vunpack.c.h.b16 %v6439
      %v6770 = vunpack.c.l.b16 %v6440
      %v6771 = vunpack.c.h.b16 %v6440
      %v6772 = vunpack.c.l.b16 %v6441
      %v6773 = vunpack.c.h.b16 %v6441
      %v6774 = vunpack.c.l.b16 %v6442
      %v6775 = vunpack.c.h.b16 %v6442
      %v6776 = vunpack.c.l.b16 %v6443
      %v6777 = vunpack.c.h.b16 %v6443
      %v6778 = vunpack.c.l.b16 %v6444
      %v6779 = vunpack.c.h.b16 %v6444
      %v6780 = vunpack.c.l.b16 %v6445
      %v6781 = vunpack.c.h.b16 %v6445
      %v6782 = vunpack.c.l.b16 %v6446
      %v6783 = vunpack.c.h.b16 %v6446
      %v6784 = vunpack.c.l.b16 %v6447
      %v6785 = vunpack.c.h.b16 %v6447
      %v6786 = vunpack.c.l.b16 %v6448
      %v6787 = vunpack.c.h.b16 %v6448
      %v6788 = vunpack.c.l.b16 %v6449
      %v6789 = vunpack.c.h.b16 %v6449
      %v6790 = vunpack.c.l.b16 %v6450
      %v6791 = vunpack.c.h.b16 %v6450
      %v6792 = vunpack.c.l.b16 %v6451
      %v6793 = vunpack.c.h.b16 %v6451
      %v6794 = vunpack.c.l.b16 %v6452
      %v6795 = vunpack.c.h.b16 %v6452
      %v6796 = vunpack.c.l.b16 %v6453
      %v6797 = vunpack.c.h.b16 %v6453
      %v6798 = vunpack.c.l.b16 %v6454
      %v6799 = vunpack.c.h.b16 %v6454
      %v6800 = vunpack.c.l.b16 %v6455
      %v6801 = vunpack.c.h.b16 %v6455
      %v6802 = vunpack.c.l.b16 %v6456
      %v6803 = vunpack.c.h.b16 %v6456
      %v6804 = vunpack.c.l.b16 %v6457
      %v6805 = vunpack.c.h.b16 %v6457
      %v6806 = vunpack.c.l.b16 %v6458
      %v6807 = vunpack.c.h.b16 %v6458
      %v6808 = vunpack.c.l.b16 %v6459
      %v6809 = vunpack.c.h.b16 %v6459
      %v6810 = vunpack.c.l.b16 %v6460
      %v6811 = vunpack.c.h.b16 %v6460
      %v6812 = vunpack.c.l.b16 %v6461
      %v6813 = vunpack.c.h.b16 %v6461
      %v6814 = vunpack.c.l.b16 %v6462
      %v6815 = vunpack.c.h.b16 %v6462
      %v6816 = vunpack.c.l.b16 %v6463
      %v6817 = vunpack.c.h.b16 %v6463
      %v6818 = vunpack.c.l.b16 %v6464
      %v6819 = vunpack.c.h.b16 %v6464
      %v6820 = vunpack.c.l.b16 %v6465
      %v6821 = vunpack.c.h.b16 %v6465
      %v6822 = vunpack.c.l.b16 %v6466
      %v6823 = vunpack.c.h.b16 %v6466
      %v6824 = vunpack.c.l.b16 %v6467
      %v6825 = vunpack.c.h.b16 %v6467
      %v6826 = vunpack.c.l.b16 %v6468
      %v6827 = vunpack.c.h.b16 %v6468
      %v6828 = vunpack.c.l.b16 %v6469
      %v6829 = vunpack.c.h.b16 %v6469
      %v6830 = vunpack.c.l.b16 %v6470
      %v6831 = vunpack.c.h.b16 %v6470
      %v6832 = vunpack.c.l.b16 %v6471
      %v6833 = vunpack.c.h.b16 %v6471
      %v6834 = vunpack.c.l.b16 %v6472
      %v6835 = vunpack.c.h.b16 %v6472
      %v6836 = vunpack.c.l.b16 %v6473
      %v6837 = vunpack.c.h.b16 %v6473
      %v6838 = vunpack.c.l.b16 %v6474
      %v6839 = vunpack.c.h.b16 %v6474
      %v6840 = vunpack.c.l.b16 %v6475
      %v6841 = vunpack.c.h.b16 %v6475
      %v6842 = vunpack.c.l.b16 %v6476
      %v6843 = vunpack.c.h.b16 %v6476
      %v6844 = vunpack.c.l.b16 %v6477
      %v6845 = vunpack.c.h.b16 %v6477
      %v6846 = vunpack.c.l.b16 %v6478
      %v6847 = vunpack.c.h.b16 %v6478
      %v6848 = vunpack.c.l.b16 %v6479
      %v6849 = vunpack.c.h.b16 %v6479
      %v6850 = vunpack.c.l.b16 %v6480
      %v6851 = vunpack.c.h.b16 %v6480
      %v6852 = vunpack.c.l.b16 %v6481
      %v6853 = vunpack.c.h.b16 %v6481
      %v6854 = vunpack.c.l.b16 %v6482
      %v6855 = vunpack.c.h.b16 %v6482
      %v6856 = vunpack.c.l.b16 %v6483
      %v6857 = vunpack.c.h.b16 %v6483
      %v6858 = vunpack.c.l.b16 %v6484
      %v6859 = vunpack.c.h.b16 %v6484
      %v6860 = vunpack.c.l.b16 %v6485
      %v6861 = vunpack.c.h.b16 %v6485
      %v6862 = vunpack.c.l.b16 %v6486
      %v6863 = vunpack.c.h.b16 %v6486
      %v6864 = vunpack.c.l.b16 %v6487
      %v6865 = vunpack.c.h.b16 %v6487
      %v6866 = vunpack.c.l.b16 %v6488
      %v6867 = vunpack.c.h.b16 %v6488
      %v6868 = vunpack.c.l.b16 %v6489
      %v6869 = vunpack.c.h.b16 %v6489
      %v6870 = vunpack.c.l.b16 %v6490
      %v6871 = vunpack.c.h.b16 %v6490
      %v6872 = vunpack.c.l.b16 %v6491
      %v6873 = vunpack.c.h.b16 %v6491
      %v6874 = vunpack.c.l.b16 %v6492
      %v6875 = vunpack.c.h.b16 %v6492
      %v6876 = vunpack.c.l.b16 %v6493
      %v6877 = vunpack.c.h.b16 %v6493
      %v6878 = vunpack.c.l.b16 %v6494
      %v6879 = vunpack.c.h.b16 %v6494
      %v6880 = vunpack.c.l.b16 %v6495
      %v6881 = vunpack.c.h.b16 %v6495
      %v6882 = vunpack.c.l.b16 %v6496
      %v6883 = vunpack.c.h.b16 %v6496
      %v6884 = vunpack.c.l.b16 %v6497
      %v6885 = vunpack.c.h.b16 %v6497
      %v6886 = vunpack.c.l.b16 %v6498
      %v6887 = vunpack.c.h.b16 %v6498
      %v6888 = vunpack.c.l.b16 %v6499
      %v6889 = vunpack.c.h.b16 %v6499
      %v6890 = vunpack.c.l.b16 %v6500
      %v6891 = vunpack.c.h.b16 %v6500
      %v6892 = vunpack.c.l.b16 %v6501
      %v6893 = vunpack.c.h.b16 %v6501
      %v6894 = vunpack.c.l.b16 %v6502
      %v6895 = vunpack.c.h.b16 %v6502
      %v6896 = vunpack.c.l.b16 %v6503
      %v6897 = vunpack.c.h.b16 %v6503
      %v6898 = vunpack.c.l.b16 %v6504
      %v6899 = vunpack.c.h.b16 %v6504
      %v6900 = vunpack.c.l.b16 %v6505
      %v6901 = vunpack.c.h.b16 %v6505
      %v6902 = vunpack.c.l.b16 %v6506
      %v6903 = vunpack.c.h.b16 %v6506
      %v6904 = vunpack.c.l.b16 %v6507
      %v6905 = vunpack.c.h.b16 %v6507
      %v6906 = vunpack.c.l.b16 %v6508
      %v6907 = vunpack.c.h.b16 %v6508
      %v6908 = vunpack.c.l.b16 %v6509
      %v6909 = vunpack.c.h.b16 %v6509
      %v6910 = vunpack.c.l.b16 %v6510
      %v6911 = vunpack.c.h.b16 %v6510
      %v6912 = vunpack.c.l.b16 %v6511
      %v6913 = vunpack.c.h.b16 %v6511
      %v6914 = vunpack.c.l.b16 %v6512
      %v6915 = vunpack.c.h.b16 %v6512
      %v6916 = vunpack.c.l.b16 %v6513
      %v6917 = vunpack.c.h.b16 %v6513
      %v6918 = vunpack.c.l.b16 %v6514
      %v6919 = vunpack.c.h.b16 %v6514
      %v6920 = vunpack.c.l.b16 %v6515
      %v6921 = vunpack.c.h.b16 %v6515
      %v6922 = vunpack.c.l.b16 %v6516
      %v6923 = vunpack.c.h.b16 %v6516
      %v6924 = vunpack.c.l.b16 %v6517
      %v6925 = vunpack.c.h.b16 %v6517
      %v6926 = vunpack.c.l.b16 %v6518
      %v6927 = vunpack.c.h.b16 %v6518
      %v6928 = vunpack.c.l.b16 %v6519
      %v6929 = vunpack.c.h.b16 %v6519
      %v6930 = vunpack.c.l.b16 %v6520
      %v6931 = vunpack.c.h.b16 %v6520
      %v6932 = vunpack.c.l.b16 %v6521
      %v6933 = vunpack.c.h.b16 %v6521
      %v6934 = vunpack.c.l.b16 %v6522
      %v6935 = vunpack.c.h.b16 %v6522
      %v6936 = vunpack.c.l.b16 %v6523
      %v6937 = vunpack.c.h.b16 %v6523
      %v6938 = vunpack.c.l.b16 %v6524
      %v6939 = vunpack.c.h.b16 %v6524
      %v6940 = vunpack.c.l.b16 %v6525
      %v6941 = vunpack.c.h.b16 %v6525
      %v6942 = vunpack.c.l.b16 %v6526
      %v6943 = vunpack.c.h.b16 %v6526
      %v6944 = vunpack.c.l.b16 %v6527
      %v6945 = vunpack.c.h.b16 %v6527
      %v6946 = vunpack.c.l.b16 %v6528
      %v6947 = vunpack.c.h.b16 %v6528
      %v6948 = vunpack.c.l.b16 %v6529
      %v6949 = vunpack.c.h.b16 %v6529
      %v6950 = vunpack.c.l.b16 %v6530
      %v6951 = vunpack.c.h.b16 %v6530
      %v6952 = vunpack.c.l.b16 %v6531
      %v6953 = vunpack.c.h.b16 %v6531
      %v6954 = vunpack.c.l.b16 %v6532
      %v6955 = vunpack.c.h.b16 %v6532
      %v6956 = vunpack.c.l.b16 %v6533
      %v6957 = vunpack.c.h.b16 %v6533
      %v6958 = vunpack.c.l.b16 %v6534
      %v6959 = vunpack.c.h.b16 %v6534
      %v6960 = vunpack.c.l.b16 %v6535
      %v6961 = vunpack.c.h.b16 %v6535
      %v6962 = vpack.c.b16 %v6714, %v6706
      %v6963 = vpack.c.b16 %v6715, %v6707
      %v6964 = vpack.c.b16 %v6716, %v6708
      %v6965 = vpack.c.b16 %v6717, %v6709
      %v6966 = vpack.c.b16 %v6718, %v6710
      %v6967 = vpack.c.b16 %v6719, %v6711
      %v6968 = vpack.c.b16 %v6720, %v6712
      %v6969 = vpack.c.b16 %v6721, %v6713
      %v6970 = vpack.c.b16 %v6730, %v6722
      %v6971 = vpack.c.b16 %v6731, %v6723
      %v6972 = vpack.c.b16 %v6732, %v6724
      %v6973 = vpack.c.b16 %v6733, %v6725
      %v6974 = vpack.c.b16 %v6734, %v6726
      %v6975 = vpack.c.b16 %v6735, %v6727
      %v6976 = vpack.c.b16 %v6736, %v6728
      %v6977 = vpack.c.b16 %v6737, %v6729
      %v6978 = vpack.c.b16 %v6746, %v6738
      %v6979 = vpack.c.b16 %v6747, %v6739
      %v6980 = vpack.c.b16 %v6748, %v6740
      %v6981 = vpack.c.b16 %v6749, %v6741
      %v6982 = vpack.c.b16 %v6750, %v6742
      %v6983 = vpack.c.b16 %v6751, %v6743
      %v6984 = vpack.c.b16 %v6752, %v6744
      %v6985 = vpack.c.b16 %v6753, %v6745
      %v6986 = vpack.c.b16 %v6762, %v6754
      %v6987 = vpack.c.b16 %v6763, %v6755
      %v6988 = vpack.c.b16 %v6764, %v6756
      %v6989 = vpack.c.b16 %v6765, %v6757
      %v6990 = vpack.c.b16 %v6766, %v6758
      %v6991 = vpack.c.b16 %v6767, %v6759
      %v6992 = vpack.c.b16 %v6768, %v6760
      %v6993 = vpack.c.b16 %v6769, %v6761
      %v6994 = vpack.c.b16 %v6778, %v6770
      %v6995 = vpack.c.b16 %v6779, %v6771
      %v6996 = vpack.c.b16 %v6780, %v6772
      %v6997 = vpack.c.b16 %v6781, %v6773
      %v6998 = vpack.c.b16 %v6782, %v6774
      %v6999 = vpack.c.b16 %v6783, %v6775
      %v7000 = vpack.c.b16 %v6784, %v6776
      %v7001 = vpack.c.b16 %v6785, %v6777
      %v7002 = vpack.c.b16 %v6794, %v6786
      %v7003 = vpack.c.b16 %v6795, %v6787
      %v7004 = vpack.c.b16 %v6796, %v6788
      %v7005 = vpack.c.b16 %v6797, %v6789
      %v7006 = vpack.c.b16 %v6798, %v6790
      %v7007 = vpack.c.b16 %v6799, %v6791
      %v7008 = vpack.c.b16 %v6800, %v6792
      %v7009 = vpack.c.b16 %v6801, %v6793
      %v7010 = vpack.c.b16 %v6810, %v6802
      %v7011 = vpack.c.b16 %v6811, %v6803
      %v7012 = vpack.c.b16 %v6812, %v6804
      %v7013 = vpack.c.b16 %v6813, %v6805
      %v7014 = vpack.c.b16 %v6814, %v6806
      %v7015 = vpack.c.b16 %v6815, %v6807
      %v7016 = vpack.c.b16 %v6816, %v6808
      %v7017 = vpack.c.b16 %v6817, %v6809
      %v7018 = vpack.c.b16 %v6826, %v6818
      %v7019 = vpack.c.b16 %v6827, %v6819
      %v7020 = vpack.c.b16 %v6828, %v6820
      %v7021 = vpack.c.b16 %v6829, %v6821
      %v7022 = vpack.c.b16 %v6830, %v6822
      %v7023 = vpack.c.b16 %v6831, %v6823
      %v7024 = vpack.c.b16 %v6832, %v6824
      %v7025 = vpack.c.b16 %v6833, %v6825
      %v7026 = vpack.c.b16 %v6842, %v6834
      %v7027 = vpack.c.b16 %v6843, %v6835
      %v7028 = vpack.c.b16 %v6844, %v6836
      %v7029 = vpack.c.b16 %v6845, %v6837
      %v7030 = vpack.c.b16 %v6846, %v6838
      %v7031 = vpack.c.b16 %v6847, %v6839
      %v7032 = vpack.c.b16 %v6848, %v6840
      %v7033 = vpack.c.b16 %v6849, %v6841
      %v7034 = vpack.c.b16 %v6858, %v6850
      %v7035 = vpack.c.b16 %v6859, %v6851
      %v7036 = vpack.c.b16 %v6860, %v6852
      %v7037 = vpack.c.b16 %v6861, %v6853
      %v7038 = vpack.c.b16 %v6862, %v6854
      %v7039 = vpack.c.b16 %v6863, %v6855
      %v7040 = vpack.c.b16 %v6864, %v6856
      %v7041 = vpack.c.b16 %v6865, %v6857
      %v7042 = vpack.c.b16 %v6874, %v6866
      %v7043 = vpack.c.b16 %v6875, %v6867
      %v7044 = vpack.c.b16 %v6876, %v6868
      %v7045 = vpack.c.b16 %v6877, %v6869
      %v7046 = vpack.c.b16 %v6878, %v6870
      %v7047 = vpack.c.b16 %v6879, %v6871
      %v7048 = vpack.c.b16 %v6880, %v6872
      %v7049 = vpack.c.b16 %v6881, %v6873
      %v7050 = vpack.c.b16 %v6890, %v6882
      %v7051 = vpack.c.b16 %v6891, %v6883
      %v7052 = vpack.c.b16 %v6892, %v6884
      %v7053 = vpack.c.b16 %v6893, %v6885
      %v7054 = vpack.c.b16 %v6894, %v6886
      %v7055 = vpack.c.b16 %v6895, %v6887
      %v7056 = vpack.c.b16 %v6896, %v6888
      %v7057 = vpack.c.b16 %v6897, %v6889
      %v7058 = vpack.c.b16 %v6906, %v6898
      %v7059 = vpack.c.b16 %v6907, %v6899
      %v7060 = vpack.c.b16 %v6908, %v6900
      %v7061 = vpack.c.b16 %v6909, %v6901
      %v7062 = vpack.c.b16 %v6910, %v6902
      %v7063 = vpack.c.b16 %v6911, %v6903
      %v7064 = vpack.c.b16 %v6912, %v6904
      %v7065 = vpack.c.b16 %v6913, %v6905
      %v7066 = vpack.c.b16 %v6922, %v6914
      %v7067 = vpack.c.b16 %v6923, %v6915
      %v7068 = vpack.c.b16 %v6924, %v6916
      %v7069 = vpack.c.b16 %v6925, %v6917
      %v7070 = vpack.c.b16 %v6926, %v6918
      %v7071 = vpack.c.b16 %v6927, %v6919
      %v7072 = vpack.c.b16 %v6928, %v6920
      %v7073 = vpack.c.b16 %v6929, %v6921
      %v7074 = vpack.c.b16 %v6938, %v6930
      %v7075 = vpack.c.b16 %v6939, %v6931
      %v7076 = vpack.c.b16 %v6940, %v6932
      %v7077 = vpack.c.b16 %v6941, %v6933
      %v7078 = vpack.c.b16 %v6942, %v6934
      %v7079 = vpack.c.b16 %v6943, %v6935
      %v7080 = vpack.c.b16 %v6944, %v6936
      %v7081 = vpack.c.b16 %v6945, %v6937
      %v7082 = vpack.c.b16 %v6954, %v6946
      %v7083 = vpack.c.b16 %v6955, %v6947
      %v7084 = vpack.c.b16 %v6956, %v6948
      %v7085 = vpack.c.b16 %v6957, %v6949
      %v7086 = vpack.c.b16 %v6958, %v6950
      %v7087 = vpack.c.b16 %v6959, %v6951
      %v7088 = vpack.c.b16 %v6960, %v6952
      %v7089 = vpack.c.b16 %v6961, %v6953
      %7218 = vmatprep.subr.bf16.mxu0 %v6963
      %7219 = vmatpush1.bf16.msra.mxu0 %v6962
      %7220 = vmatprep.subr.bf16.mxu0 %v6971
      %7221 = vmatpush1.bf16.msra.mxu0 %v6970
      %7222 = vmatprep.subr.bf16.mxu0 %v6979
      %7223 = vmatpush1.bf16.msra.mxu0 %v6978
      %7224 = vmatprep.subr.bf16.mxu0 %v6987
      %7225 = vmatpush1.bf16.msra.mxu0 %v6986
      %7226 = vmatprep.subr.bf16.mxu0 %v6995
      %7227 = vmatpush1.bf16.msra.mxu0 %v6994
      %7228 = vmatprep.subr.bf16.mxu0 %v7003
      %7229 = vmatpush1.bf16.msra.mxu0 %v7002
      %7230 = vmatprep.subr.bf16.mxu0 %v7011
      %7231 = vmatpush1.bf16.msra.mxu0 %v7010
      %7232 = vmatprep.subr.bf16.mxu0 %v7019
      %7233 = vmatpush1.bf16.msra.mxu0 %v7018
      %7234 = vmatprep.subr.bf16.mxu0 %v7027
      %7235 = vmatpush1.bf16.msra.mxu0 %v7026
      %7236 = vmatprep.subr.bf16.mxu0 %v7035
      %7237 = vmatpush1.bf16.msra.mxu0 %v7034
      %7238 = vmatprep.subr.bf16.mxu0 %v7043
      %7239 = vmatpush1.bf16.msra.mxu0 %v7042
      %7240 = vmatprep.subr.bf16.mxu0 %v7051
      %7241 = vmatpush1.bf16.msra.mxu0 %v7050
      %7242 = vmatprep.subr.bf16.mxu0 %v7059
      %7243 = vmatpush1.bf16.msra.mxu0 %v7058
      %7244 = vmatprep.subr.bf16.mxu0 %v7067
      %7245 = vmatpush1.bf16.msra.mxu0 %v7066
      %7246 = vmatprep.subr.bf16.mxu0 %v7075
      %7247 = vmatpush1.bf16.msra.mxu0 %v7074
      %7248 = vmatprep.subr.bf16.mxu0 %v7083
      %7249 = vmatpush1.bf16.msra.mxu0 %v7082
      %7250 = vmatprep.mubr.bf16.mxu0 %v6345
      %7251 = vmatmul.mubr.bf16.gmra.mrb[0].mxu0 %v6344
      %v7252 = vpop.f32.mrb[0].mxu0
      %v7253 = vadd.f32 %v6541, %v7252
      %v7254 = vpop.f32.mrb[0].mxu0
      %v7255 = vadd.f32 %v6545, %v7254
      %v7256 = vpop.f32.mrb[0].mxu0
      %v7257 = vadd.f32 %v6541, %v7256
      %v7258 = vpop.f32.mrb[0].mxu0
      %v7259 = vadd.f32 %v6545, %v7258
      %7260 = vmatprep.mubr.bf16.mxu0 %v6347
      %7261 = vmatmul.mubr.bf16.gmra.mrb[0].mxu0 %v6346
      %v7262 = vpop.f32.mrb[0].mxu0
      %v7263 = vadd.f32 %v6541, %v7262
      %v7264 = vpop.f32.mrb[0].mxu0
      %v7265 = vadd.f32 %v6545, %v7264
      %v7266 = vpop.f32.mrb[0].mxu0
      %v7267 = vadd.f32 %v6541, %v7266
      %v7268 = vpop.f32.mrb[0].mxu0
      %v7269 = vadd.f32 %v6545, %v7268
      %7270 = vmatprep.mubr.bf16.mxu0 %v6349
      %7271 = vmatmul.mubr.bf16.gmra.mrb[0].mxu0 %v6348
      %v7272 = vpop.f32.mrb[0].mxu0
      %v7273 = vadd.f32 %v6541, %v7272
      %v7274 = vpop.f32.mrb[0].mxu0
      %v7275 = vadd.f32 %v6545, %v7274
      %v7276 = vpop.f32.mrb[0].mxu0
      %v7277 = vadd.f32 %v6541, %v7276
      %v7278 = vpop.f32.mrb[0].mxu0
      %v7279 = vadd.f32 %v6545, %v7278
      %7280 = vmatprep.mubr.bf16.mxu0 %v6351
      %7281 = vmatmul.mubr.bf16.gmra.mrb[0].mxu0 %v6350
      %v7282 = vpop.f32.mrb[0].mxu0
      %v7283 = vadd.f32 %v6541, %v7282
      %v7284 = vpop.f32.mrb[0].mxu0
      %v7285 = vadd.f32 %v6545, %v7284
      %v7286 = vpop.f32.mrb[0].mxu0
      %v7287 = vadd.f32 %v6541, %v7286
      %v7288 = vpop.f32.mrb[0].mxu0
      %v7289 = vadd.f32 %v6545, %v7288
      %7290 = vmatprep.mubr.bf16.mxu0 %v6353
      %7291 = vmatmul.mubr.bf16.gmra.mrb[0].mxu0 %v6352
      %v7292 = vpop.f32.mrb[0].mxu0
      %v7293 = vadd.f32 %v6541, %v7292
      %v7294 = vpop.f32.mrb[0].mxu0
      %v7295 = vadd.f32 %v6545, %v7294
      %v7296 = vpop.f32.mrb[0].mxu0
      %v7297 = vadd.f32 %v6541, %v7296
      %v7298 = vpop.f32.mrb[0].mxu0
      %v7299 = vadd.f32 %v6545, %v7298
      %7300 = vmatprep.mubr.bf16.mxu0 %v6355
      %7301 = vmatmul.mubr.bf16.gmra.mrb[0].mxu0 %v6354
      %v7302 = vpop.f32.mrb[0].mxu0
      %v7303 = vadd.f32 %v6541, %v7302
      %v7304 = vpop.f32.mrb[0].mxu0
      %v7305 = vadd.f32 %v6545, %v7304
      %v7306 = vpop.f32.mrb[0].mxu0
      %v7307 = vadd.f32 %v6541, %v7306
      %v7308 = vpop.f32.mrb[0].mxu0
      %v7309 = vadd.f32 %v6545, %v7308
      %7310 = vmatprep.mubr.bf16.mxu0 %v6357
      %7311 = vmatmul.mubr.bf16.gmra.mrb[0].mxu0 %v6356
      %v7312 = vpop.f32.mrb[0].mxu0
      %v7313 = vadd.f32 %v6541, %v7312
      %v7314 = vpop.f32.mrb[0].mxu0
      %v7315 = vadd.f32 %v6545, %v7314
      %v7316 = vpop.f32.mrb[0].mxu0
      %v7317 = vadd.f32 %v6541, %v7316
      %v7318 = vpop.f32.mrb[0].mxu0
      %v7319 = vadd.f32 %v6545, %v7318
      %7320 = vmatprep.mubr.bf16.mxu0 %v6359
      %7321 = vmatmul.mubr.bf16.gmra.mrb[0].mxu0 %v6358
      %v7322 = vpop.f32.mrb[0].mxu0
      %v7323 = vadd.f32 %v6541, %v7322
      %v7324 = vpop.f32.mrb[0].mxu0
      %v7325 = vadd.f32 %v6545, %v7324
      %v7326 = vpop.f32.mrb[0].mxu0
      %v7327 = vadd.f32 %v6541, %v7326
      %v7328 = vpop.f32.mrb[0].mxu0
      %v7329 = vadd.f32 %v6545, %v7328
      %7330 = vmatprep.mubr.bf16.mxu0 %v6361
      %7331 = vmatmul.mubr.bf16.gmra.mrb[0].mxu0 %v6360
      %v7332 = vpop.f32.mrb[0].mxu0
      %v7333 = vadd.f32 %v6541, %v7332
      %v7334 = vpop.f32.mrb[0].mxu0
      %v7335 = vadd.f32 %v6545, %v7334
      %v7336 = vpop.f32.mrb[0].mxu0
      %v7337 = vadd.f32 %v6541, %v7336
      %v7338 = vpop.f32.mrb[0].mxu0
      %v7339 = vadd.f32 %v6545, %v7338
      %7340 = vmatprep.mubr.bf16.mxu0 %v6363
      %7341 = vmatmul.mubr.bf16.gmra.mrb[0].mxu0 %v6362
      %v7342 = vpop.f32.mrb[0].mxu0
      %v7343 = vadd.f32 %v6541, %v7342
      %v7344 = vpop.f32.mrb[0].mxu0
      %v7345 = vadd.f32 %v6545, %v7344
      %v7346 = vpop.f32.mrb[0].mxu0
      %v7347 = vadd.f32 %v6541, %v7346
      %v7348 = vpop.f32.mrb[0].mxu0
      %v7349 = vadd.f32 %v6545, %v7348
      %7350 = vmatprep.mubr.bf16.mxu0 %v6365
      %7351 = vmatmul.mubr.bf16.gmra.mrb[0].mxu0 %v6364
      %v7352 = vpop.f32.mrb[0].mxu0
      %v7353 = vadd.f32 %v6541, %v7352
      %v7354 = vpop.f32.mrb[0].mxu0
      %v7355 = vadd.f32 %v6545, %v7354
      %v7356 = vpop.f32.mrb[0].mxu0
      %v7357 = vadd.f32 %v6541, %v7356
      %v7358 = vpop.f32.mrb[0].mxu0
      %v7359 = vadd.f32 %v6545, %v7358
      %7360 = vmatprep.mubr.bf16.mxu0 %v6367
      %7361 = vmatmul.mubr.bf16.gmra.mrb[0].mxu0 %v6366
      %v7362 = vpop.f32.mrb[0].mxu0
      %v7363 = vadd.f32 %v6541, %v7362
      %v7364 = vpop.f32.mrb[0].mxu0
      %v7365 = vadd.f32 %v6545, %v7364
      %v7366 = vpop.f32.mrb[0].mxu0
      %v7367 = vadd.f32 %v6541, %v7366
      %v7368 = vpop.f32.mrb[0].mxu0
      %v7369 = vadd.f32 %v6545, %v7368
      %7370 = vmatprep.mubr.bf16.mxu0 %v6369
      %7371 = vmatmul.mubr.bf16.gmra.mrb[0].mxu0 %v6368
      %v7372 = vpop.f32.mrb[0].mxu0
      %v7373 = vadd.f32 %v6541, %v7372
      %v7374 = vpop.f32.mrb[0].mxu0
      %v7375 = vadd.f32 %v6545, %v7374
      %v7376 = vpop.f32.mrb[0].mxu0
      %v7377 = vadd.f32 %v6541, %v7376
      %v7378 = vpop.f32.mrb[0].mxu0
      %v7379 = vadd.f32 %v6545, %v7378
      %7380 = vmatprep.mubr.bf16.mxu0 %v6371
      %7381 = vmatmul.mubr.bf16.gmra.mrb[0].mxu0 %v6370
      %v7382 = vpop.f32.mrb[0].mxu0
      %v7383 = vadd.f32 %v6541, %v7382
      %v7384 = vpop.f32.mrb[0].mxu0
      %v7385 = vadd.f32 %v6545, %v7384
      %v7386 = vpop.f32.mrb[0].mxu0
      %v7387 = vadd.f32 %v6541, %v7386
      %v7388 = vpop.f32.mrb[0].mxu0
      %v7389 = vadd.f32 %v6545, %v7388
      %7390 = vmatprep.mubr.bf16.mxu0 %v6373
      %7391 = vmatmul.mubr.bf16.gmra.mrb[0].mxu0 %v6372
      %v7392 = vpop.f32.mrb[0].mxu0
      %v7393 = vadd.f32 %v6541, %v7392
      %v7394 = vpop.f32.mrb[0].mxu0
      %v7395 = vadd.f32 %v6545, %v7394
      %v7396 = vpop.f32.mrb[0].mxu0
      %v7397 = vadd.f32 %v6541, %v7396
      %v7398 = vpop.f32.mrb[0].mxu0
      %v7399 = vadd.f32 %v6545, %v7398
      %7400 = vmatprep.mubr.bf16.mxu0 %v6375
      %7401 = vmatmul.mubr.bf16.gmra.mrb[0].mxu0 %v6374
      %v7402 = vpop.f32.mrb[0].mxu0
      %v7403 = vadd.f32 %v6541, %v7402
      %v7404 = vpop.f32.mrb[0].mxu0
      %v7405 = vadd.f32 %v6545, %v7404
      %v7406 = vpop.f32.mrb[0].mxu0
      %v7407 = vadd.f32 %v6541, %v7406
      %v7408 = vpop.f32.mrb[0].mxu0
      %v7409 = vadd.f32 %v6545, %v7408
      %7410 = vmatprep.mubr.bf16.mxu0 %v6377
      %7411 = vmatmul.mubr.bf16.gmra.mrb[0].mxu0 %v6376
      %v7412 = vpop.f32.mrb[0].mxu0
      %v7413 = vadd.f32 %v6541, %v7412
      %v7414 = vpop.f32.mrb[0].mxu0
      %v7415 = vadd.f32 %v6545, %v7414
      %v7416 = vpop.f32.mrb[0].mxu0
      %v7417 = vadd.f32 %v6541, %v7416
      %v7418 = vpop.f32.mrb[0].mxu0
      %v7419 = vadd.f32 %v6545, %v7418
      %7420 = vmatprep.mubr.bf16.mxu0 %v6379
      %7421 = vmatmul.mubr.bf16.gmra.mrb[0].mxu0 %v6378
      %v7422 = vpop.f32.mrb[0].mxu0
      %v7423 = vadd.f32 %v6541, %v7422
      %v7424 = vpop.f32.mrb[0].mxu0
      %v7425 = vadd.f32 %v6545, %v7424
      %v7426 = vpop.f32.mrb[0].mxu0
      %v7427 = vadd.f32 %v6541, %v7426
      %v7428 = vpop.f32.mrb[0].mxu0
      %v7429 = vadd.f32 %v6545, %v7428
      %7430 = vmatprep.mubr.bf16.mxu0 %v6381
      %7431 = vmatmul.mubr.bf16.gmra.mrb[0].mxu0 %v6380
      %v7432 = vpop.f32.mrb[0].mxu0
      %v7433 = vadd.f32 %v6541, %v7432
      %v7434 = vpop.f32.mrb[0].mxu0
      %v7435 = vadd.f32 %v6545, %v7434
      %v7436 = vpop.f32.mrb[0].mxu0
      %v7437 = vadd.f32 %v6541, %v7436
      %v7438 = vpop.f32.mrb[0].mxu0
      %v7439 = vadd.f32 %v6545, %v7438
      %7440 = vmatprep.mubr.bf16.mxu0 %v6383
      %7441 = vmatmul.mubr.bf16.gmra.mrb[0].mxu0 %v6382
      %v7442 = vpop.f32.mrb[0].mxu0
      %v7443 = vadd.f32 %v6541, %v7442
      %v7444 = vpop.f32.mrb[0].mxu0
      %v7445 = vadd.f32 %v6545, %v7444
      %v7446 = vpop.f32.mrb[0].mxu0
      %v7447 = vadd.f32 %v6541, %v7446
      %v7448 = vpop.f32.mrb[0].mxu0
      %v7449 = vadd.f32 %v6545, %v7448
      %7450 = vmatprep.mubr.bf16.mxu0 %v6385
      %7451 = vmatmul.mubr.bf16.gmra.mrb[0].mxu0 %v6384
      %v7452 = vpop.f32.mrb[0].mxu0
      %v7453 = vadd.f32 %v6541, %v7452
      %v7454 = vpop.f32.mrb[0].mxu0
      %v7455 = vadd.f32 %v6545, %v7454
      %v7456 = vpop.f32.mrb[0].mxu0
      %v7457 = vadd.f32 %v6541, %v7456
      %v7458 = vpop.f32.mrb[0].mxu0
      %v7459 = vadd.f32 %v6545, %v7458
      %7460 = vmatprep.mubr.bf16.mxu0 %v6387
      %7461 = vmatmul.mubr.bf16.gmra.mrb[0].mxu0 %v6386
      %v7462 = vpop.f32.mrb[0].mxu0
      %v7463 = vadd.f32 %v6541, %v7462
      %v7464 = vpop.f32.mrb[0].mxu0
      %v7465 = vadd.f32 %v6545, %v7464
      %v7466 = vpop.f32.mrb[0].mxu0
      %v7467 = vadd.f32 %v6541, %v7466
      %v7468 = vpop.f32.mrb[0].mxu0
      %v7469 = vadd.f32 %v6545, %v7468
      %7470 = vmatprep.mubr.bf16.mxu0 %v6389
      %7471 = vmatmul.mubr.bf16.gmra.mrb[0].mxu0 %v6388
      %v7472 = vpop.f32.mrb[0].mxu0
      %v7473 = vadd.f32 %v6541, %v7472
      %v7474 = vpop.f32.mrb[0].mxu0
      %v7475 = vadd.f32 %v6545, %v7474
      %v7476 = vpop.f32.mrb[0].mxu0
      %v7477 = vadd.f32 %v6541, %v7476
      %v7478 = vpop.f32.mrb[0].mxu0
      %v7479 = vadd.f32 %v6545, %v7478
      %7480 = vmatprep.mubr.bf16.mxu0 %v6391
      %7481 = vmatmul.mubr.bf16.gmra.mrb[0].mxu0 %v6390
      %v7482 = vpop.f32.mrb[0].mxu0
      %v7483 = vadd.f32 %v6541, %v7482
      %v7484 = vpop.f32.mrb[0].mxu0
      %v7485 = vadd.f32 %v6545, %v7484
      %v7486 = vpop.f32.mrb[0].mxu0
      %v7487 = vadd.f32 %v6541, %v7486
      %v7488 = vpop.f32.mrb[0].mxu0
      %v7489 = vadd.f32 %v6545, %v7488
      %7490 = vmatprep.mubr.bf16.mxu0 %v6393
      %7491 = vmatmul.mubr.bf16.gmra.mrb[0].mxu0 %v6392
      %v7492 = vpop.f32.mrb[0].mxu0
      %v7493 = vadd.f32 %v6541, %v7492
      %v7494 = vpop.f32.mrb[0].mxu0
      %v7495 = vadd.f32 %v6545, %v7494
      %v7496 = vpop.f32.mrb[0].mxu0
      %v7497 = vadd.f32 %v6541, %v7496
      %v7498 = vpop.f32.mrb[0].mxu0
      %v7499 = vadd.f32 %v6545, %v7498
      %7500 = vmatprep.mubr.bf16.mxu0 %v6395
      %7501 = vmatmul.mubr.bf16.gmra.mrb[0].mxu0 %v6394
      %v7502 = vpop.f32.mrb[0].mxu0
      %v7503 = vadd.f32 %v6541, %v7502
      %v7504 = vpop.f32.mrb[0].mxu0
      %v7505 = vadd.f32 %v6545, %v7504
      %v7506 = vpop.f32.mrb[0].mxu0
      %v7507 = vadd.f32 %v6541, %v7506
      %v7508 = vpop.f32.mrb[0].mxu0
      %v7509 = vadd.f32 %v6545, %v7508
      %7510 = vmatprep.mubr.bf16.mxu0 %v6397
      %7511 = vmatmul.mubr.bf16.gmra.mrb[0].mxu0 %v6396
      %v7512 = vpop.f32.mrb[0].mxu0
      %v7513 = vadd.f32 %v6541, %v7512
      %v7514 = vpop.f32.mrb[0].mxu0
      %v7515 = vadd.f32 %v6545, %v7514
      %v7516 = vpop.f32.mrb[0].mxu0
      %v7517 = vadd.f32 %v6541, %v7516
      %v7518 = vpop.f32.mrb[0].mxu0
      %v7519 = vadd.f32 %v6545, %v7518
      %7520 = vmatprep.mubr.bf16.mxu0 %v6399
      %7521 = vmatmul.mubr.bf16.gmra.mrb[0].mxu0 %v6398
      %v7522 = vpop.f32.mrb[0].mxu0
      %v7523 = vadd.f32 %v6541, %v7522
      %v7524 = vpop.f32.mrb[0].mxu0
      %v7525 = vadd.f32 %v6545, %v7524
      %v7526 = vpop.f32.mrb[0].mxu0
      %v7527 = vadd.f32 %v6541, %v7526
      %v7528 = vpop.f32.mrb[0].mxu0
      %v7529 = vadd.f32 %v6545, %v7528
      %7530 = vmatprep.mubr.bf16.mxu0 %v6401
      %7531 = vmatmul.mubr.bf16.gmra.mrb[0].mxu0 %v6400
      %v7532 = vpop.f32.mrb[0].mxu0
      %v7533 = vadd.f32 %v6541, %v7532
      %v7534 = vpop.f32.mrb[0].mxu0
      %v7535 = vadd.f32 %v6545, %v7534
      %v7536 = vpop.f32.mrb[0].mxu0
      %v7537 = vadd.f32 %v6541, %v7536
      %v7538 = vpop.f32.mrb[0].mxu0
      %v7539 = vadd.f32 %v6545, %v7538
      %7540 = vmatprep.mubr.bf16.mxu0 %v6403
      %7541 = vmatmul.mubr.bf16.gmra.mrb[0].mxu0 %v6402
      %v7542 = vpop.f32.mrb[0].mxu0
      %v7543 = vadd.f32 %v6541, %v7542
      %v7544 = vpop.f32.mrb[0].mxu0
      %v7545 = vadd.f32 %v6545, %v7544
      %v7546 = vpop.f32.mrb[0].mxu0
      %v7547 = vadd.f32 %v6541, %v7546
      %v7548 = vpop.f32.mrb[0].mxu0
      %v7549 = vadd.f32 %v6545, %v7548
      %7550 = vmatprep.mubr.bf16.mxu0 %v6405
      %7551 = vmatmul.mubr.bf16.gmra.mrb[0].mxu0 %v6404
      %v7552 = vpop.f32.mrb[0].mxu0
      %v7553 = vadd.f32 %v6541, %v7552
      %v7554 = vpop.f32.mrb[0].mxu0
      %v7555 = vadd.f32 %v6545, %v7554
      %v7556 = vpop.f32.mrb[0].mxu0
      %v7557 = vadd.f32 %v6541, %v7556
      %v7558 = vpop.f32.mrb[0].mxu0
      %v7559 = vadd.f32 %v6545, %v7558
      %7560 = vmatprep.mubr.bf16.mxu0 %v6407
      %7561 = vmatmul.mubr.bf16.gmra.mrb[0].mxu0 %v6406
      %v7562 = vpop.f32.mrb[0].mxu0
      %v7563 = vadd.f32 %v6541, %v7562
      %v7564 = vpop.f32.mrb[0].mxu0
      %v7565 = vadd.f32 %v6545, %v7564
      %v7566 = vpop.f32.mrb[0].mxu0
      %v7567 = vadd.f32 %v6541, %v7566
      %v7568 = vpop.f32.mrb[0].mxu0
      %v7569 = vadd.f32 %v6545, %v7568
      %7570 = vdwg.mxu0
      %7571 = vmatprep.subr.bf16.mxu0 %v6965
      %7572 = vmatpush1.bf16.msra.mxu0 %v6964
      %7573 = vmatprep.subr.bf16.mxu0 %v6973
      %7574 = vmatpush1.bf16.msra.mxu0 %v6972
      %7575 = vmatprep.subr.bf16.mxu0 %v6981
      %7576 = vmatpush1.bf16.msra.mxu0 %v6980
      %7577 = vmatprep.subr.bf16.mxu0 %v6989
      %7578 = vmatpush1.bf16.msra.mxu0 %v6988
      %7579 = vmatprep.subr.bf16.mxu0 %v6997
      %7580 = vmatpush1.bf16.msra.mxu0 %v6996
      %7581 = vmatprep.subr.bf16.mxu0 %v7005
      %7582 = vmatpush1.bf16.msra.mxu0 %v7004
      %7583 = vmatprep.subr.bf16.mxu0 %v7013
      %7584 = vmatpush1.bf16.msra.mxu0 %v7012
      %7585 = vmatprep.subr.bf16.mxu0 %v7021
      %7586 = vmatpush1.bf16.msra.mxu0 %v7020
      %7587 = vmatprep.subr.bf16.mxu0 %v7029
      %7588 = vmatpush1.bf16.msra.mxu0 %v7028
      %7589 = vmatprep.subr.bf16.mxu0 %v7037
      %7590 = vmatpush1.bf16.msra.mxu0 %v7036
      %7591 = vmatprep.subr.bf16.mxu0 %v7045
      %7592 = vmatpush1.bf16.msra.mxu0 %v7044
      %7593 = vmatprep.subr.bf16.mxu0 %v7053
      %7594 = vmatpush1.bf16.msra.mxu0 %v7052
      %7595 = vmatprep.subr.bf16.mxu0 %v7061
      %7596 = vmatpush1.bf16.msra.mxu0 %v7060
      %7597 = vmatprep.subr.bf16.mxu0 %v7069
      %7598 = vmatpush1.bf16.msra.mxu0 %v7068
      %7599 = vmatprep.subr.bf16.mxu0 %v7077
      %7600 = vmatpush1.bf16.msra.mxu0 %v7076
      %7601 = vmatprep.subr.bf16.mxu0 %v7085
      %7602 = vmatpush1.bf16.msra.mxu0 %v7084
      %7603 = vmatprep.mubr.bf16.mxu0 %v6345
      %7604 = vmatmul.mubr.bf16.gmra.mrb[0].mxu0 %v6344
      %v7605 = vpop.f32.mrb[0].mxu0
      %v7606 = vadd.f32 %v6549, %v7605
      %v7607 = vpop.f32.mrb[0].mxu0
      %v7608 = vadd.f32 %v6553, %v7607
      %v7609 = vpop.f32.mrb[0].mxu0
      %v7610 = vadd.f32 %v6549, %v7609
      %v7611 = vpop.f32.mrb[0].mxu0
      %v7612 = vadd.f32 %v6553, %v7611
      %7613 = vmatprep.mubr.bf16.mxu0 %v6347
      %7614 = vmatmul.mubr.bf16.gmra.mrb[0].mxu0 %v6346
      %v7615 = vpop.f32.mrb[0].mxu0
      %v7616 = vadd.f32 %v6549, %v7615
      %v7617 = vpop.f32.mrb[0].mxu0
      %v7618 = vadd.f32 %v6553, %v7617
      %v7619 = vpop.f32.mrb[0].mxu0
      %v7620 = vadd.f32 %v6549, %v7619
      %v7621 = vpop.f32.mrb[0].mxu0
      %v7622 = vadd.f32 %v6553, %v7621
      %7623 = vmatprep.mubr.bf16.mxu0 %v6349
      %7624 = vmatmul.mubr.bf16.gmra.mrb[0].mxu0 %v6348
      %v7625 = vpop.f32.mrb[0].mxu0
      %v7626 = vadd.f32 %v6549, %v7625
      %v7627 = vpop.f32.mrb[0].mxu0
      %v7628 = vadd.f32 %v6553, %v7627
      %v7629 = vpop.f32.mrb[0].mxu0
      %v7630 = vadd.f32 %v6549, %v7629
      %v7631 = vpop.f32.mrb[0].mxu0
      %v7632 = vadd.f32 %v6553, %v7631
      %7633 = vmatprep.mubr.bf16.mxu0 %v6351
      %7634 = vmatmul.mubr.bf16.gmra.mrb[0].mxu0 %v6350
      %v7635 = vpop.f32.mrb[0].mxu0
      %v7636 = vadd.f32 %v6549, %v7635
      %v7637 = vpop.f32.mrb[0].mxu0
      %v7638 = vadd.f32 %v6553, %v7637
      %v7639 = vpop.f32.mrb[0].mxu0
      %v7640 = vadd.f32 %v6549, %v7639
      %v7641 = vpop.f32.mrb[0].mxu0
      %v7642 = vadd.f32 %v6553, %v7641
      %7643 = vmatprep.mubr.bf16.mxu0 %v6353
      %7644 = vmatmul.mubr.bf16.gmra.mrb[0].mxu0 %v6352
      %v7645 = vpop.f32.mrb[0].mxu0
      %v7646 = vadd.f32 %v6549, %v7645
      %v7647 = vpop.f32.mrb[0].mxu0
      %v7648 = vadd.f32 %v6553, %v7647
      %v7649 = vpop.f32.mrb[0].mxu0
      %v7650 = vadd.f32 %v6549, %v7649
      %v7651 = vpop.f32.mrb[0].mxu0
      %v7652 = vadd.f32 %v6553, %v7651
      %7653 = vmatprep.mubr.bf16.mxu0 %v6355
      %7654 = vmatmul.mubr.bf16.gmra.mrb[0].mxu0 %v6354
      %v7655 = vpop.f32.mrb[0].mxu0
      %v7656 = vadd.f32 %v6549, %v7655
      %v7657 = vpop.f32.mrb[0].mxu0
      %v7658 = vadd.f32 %v6553, %v7657
      %v7659 = vpop.f32.mrb[0].mxu0
      %v7660 = vadd.f32 %v6549, %v7659
      %v7661 = vpop.f32.mrb[0].mxu0
      %v7662 = vadd.f32 %v6553, %v7661
      %7663 = vmatprep.mubr.bf16.mxu0 %v6357
      %7664 = vmatmul.mubr.bf16.gmra.mrb[0].mxu0 %v6356
      %v7665 = vpop.f32.mrb[0].mxu0
      %v7666 = vadd.f32 %v6549, %v7665
      %v7667 = vpop.f32.mrb[0].mxu0
      %v7668 = vadd.f32 %v6553, %v7667
      %v7669 = vpop.f32.mrb[0].mxu0
      %v7670 = vadd.f32 %v6549, %v7669
      %v7671 = vpop.f32.mrb[0].mxu0
      %v7672 = vadd.f32 %v6553, %v7671
      %7673 = vmatprep.mubr.bf16.mxu0 %v6359
      %7674 = vmatmul.mubr.bf16.gmra.mrb[0].mxu0 %v6358
      %v7675 = vpop.f32.mrb[0].mxu0
      %v7676 = vadd.f32 %v6549, %v7675
      %v7677 = vpop.f32.mrb[0].mxu0
      %v7678 = vadd.f32 %v6553, %v7677
      %v7679 = vpop.f32.mrb[0].mxu0
      %v7680 = vadd.f32 %v6549, %v7679
      %v7681 = vpop.f32.mrb[0].mxu0
      %v7682 = vadd.f32 %v6553, %v7681
      %7683 = vmatprep.mubr.bf16.mxu0 %v6361
      %7684 = vmatmul.mubr.bf16.gmra.mrb[0].mxu0 %v6360
      %v7685 = vpop.f32.mrb[0].mxu0
      %v7686 = vadd.f32 %v6549, %v7685
      %v7687 = vpop.f32.mrb[0].mxu0
      %v7688 = vadd.f32 %v6553, %v7687
      %v7689 = vpop.f32.mrb[0].mxu0
      %v7690 = vadd.f32 %v6549, %v7689
      %v7691 = vpop.f32.mrb[0].mxu0
      %v7692 = vadd.f32 %v6553, %v7691
      %7693 = vmatprep.mubr.bf16.mxu0 %v6363
      %7694 = vmatmul.mubr.bf16.gmra.mrb[0].mxu0 %v6362
      %v7695 = vpop.f32.mrb[0].mxu0
      %v7696 = vadd.f32 %v6549, %v7695
      %v7697 = vpop.f32.mrb[0].mxu0
      %v7698 = vadd.f32 %v6553, %v7697
      %v7699 = vpop.f32.mrb[0].mxu0
      %v7700 = vadd.f32 %v6549, %v7699
      %v7701 = vpop.f32.mrb[0].mxu0
      %v7702 = vadd.f32 %v6553, %v7701
      %7703 = vmatprep.mubr.bf16.mxu0 %v6365
      %7704 = vmatmul.mubr.bf16.gmra.mrb[0].mxu0 %v6364
      %v7705 = vpop.f32.mrb[0].mxu0
      %v7706 = vadd.f32 %v6549, %v7705
      %v7707 = vpop.f32.mrb[0].mxu0
      %v7708 = vadd.f32 %v6553, %v7707
      %v7709 = vpop.f32.mrb[0].mxu0
      %v7710 = vadd.f32 %v6549, %v7709
      %v7711 = vpop.f32.mrb[0].mxu0
      %v7712 = vadd.f32 %v6553, %v7711
      %7713 = vmatprep.mubr.bf16.mxu0 %v6367
      %7714 = vmatmul.mubr.bf16.gmra.mrb[0].mxu0 %v6366
      %v7715 = vpop.f32.mrb[0].mxu0
      %v7716 = vadd.f32 %v6549, %v7715
      %v7717 = vpop.f32.mrb[0].mxu0
      %v7718 = vadd.f32 %v6553, %v7717
      %v7719 = vpop.f32.mrb[0].mxu0
      %v7720 = vadd.f32 %v6549, %v7719
      %v7721 = vpop.f32.mrb[0].mxu0
      %v7722 = vadd.f32 %v6553, %v7721
      %7723 = vmatprep.mubr.bf16.mxu0 %v6369
      %7724 = vmatmul.mubr.bf16.gmra.mrb[0].mxu0 %v6368
      %v7725 = vpop.f32.mrb[0].mxu0
      %v7726 = vadd.f32 %v6549, %v7725
      %v7727 = vpop.f32.mrb[0].mxu0
      %v7728 = vadd.f32 %v6553, %v7727
      %v7729 = vpop.f32.mrb[0].mxu0
      %v7730 = vadd.f32 %v6549, %v7729
      %v7731 = vpop.f32.mrb[0].mxu0
      %v7732 = vadd.f32 %v6553, %v7731
      %7733 = vmatprep.mubr.bf16.mxu0 %v6371
      %7734 = vmatmul.mubr.bf16.gmra.mrb[0].mxu0 %v6370
      %v7735 = vpop.f32.mrb[0].mxu0
      %v7736 = vadd.f32 %v6549, %v7735
      %v7737 = vpop.f32.mrb[0].mxu0
      %v7738 = vadd.f32 %v6553, %v7737
      %v7739 = vpop.f32.mrb[0].mxu0
      %v7740 = vadd.f32 %v6549, %v7739
      %v7741 = vpop.f32.mrb[0].mxu0
      %v7742 = vadd.f32 %v6553, %v7741
      %7743 = vmatprep.mubr.bf16.mxu0 %v6373
      %7744 = vmatmul.mubr.bf16.gmra.mrb[0].mxu0 %v6372
      %v7745 = vpop.f32.mrb[0].mxu0
      %v7746 = vadd.f32 %v6549, %v7745
      %v7747 = vpop.f32.mrb[0].mxu0
      %v7748 = vadd.f32 %v6553, %v7747
      %v7749 = vpop.f32.mrb[0].mxu0
      %v7750 = vadd.f32 %v6549, %v7749
      %v7751 = vpop.f32.mrb[0].mxu0
      %v7752 = vadd.f32 %v6553, %v7751
      %7753 = vmatprep.mubr.bf16.mxu0 %v6375
      %7754 = vmatmul.mubr.bf16.gmra.mrb[0].mxu0 %v6374
      %v7755 = vpop.f32.mrb[0].mxu0
      %v7756 = vadd.f32 %v6549, %v7755
      %v7757 = vpop.f32.mrb[0].mxu0
      %v7758 = vadd.f32 %v6553, %v7757
      %v7759 = vpop.f32.mrb[0].mxu0
      %v7760 = vadd.f32 %v6549, %v7759
      %v7761 = vpop.f32.mrb[0].mxu0
      %v7762 = vadd.f32 %v6553, %v7761
      %7763 = vmatprep.mubr.bf16.mxu0 %v6377
      %7764 = vmatmul.mubr.bf16.gmra.mrb[0].mxu0 %v6376
      %v7765 = vpop.f32.mrb[0].mxu0
      %v7766 = vadd.f32 %v6549, %v7765
      %v7767 = vpop.f32.mrb[0].mxu0
      %v7768 = vadd.f32 %v6553, %v7767
      %v7769 = vpop.f32.mrb[0].mxu0
      %v7770 = vadd.f32 %v6549, %v7769
      %v7771 = vpop.f32.mrb[0].mxu0
      %v7772 = vadd.f32 %v6553, %v7771
      %7773 = vmatprep.mubr.bf16.mxu0 %v6379
      %7774 = vmatmul.mubr.bf16.gmra.mrb[0].mxu0 %v6378
      %v7775 = vpop.f32.mrb[0].mxu0
      %v7776 = vadd.f32 %v6549, %v7775
      %v7777 = vpop.f32.mrb[0].mxu0
      %v7778 = vadd.f32 %v6553, %v7777
      %v7779 = vpop.f32.mrb[0].mxu0
      %v7780 = vadd.f32 %v6549, %v7779
      %v7781 = vpop.f32.mrb[0].mxu0
      %v7782 = vadd.f32 %v6553, %v7781
      %7783 = vmatprep.mubr.bf16.mxu0 %v6381
      %7784 = vmatmul.mubr.bf16.gmra.mrb[0].mxu0 %v6380
      %v7785 = vpop.f32.mrb[0].mxu0
      %v7786 = vadd.f32 %v6549, %v7785
      %v7787 = vpop.f32.mrb[0].mxu0
      %v7788 = vadd.f32 %v6553, %v7787
      %v7789 = vpop.f32.mrb[0].mxu0
      %v7790 = vadd.f32 %v6549, %v7789
      %v7791 = vpop.f32.mrb[0].mxu0
      %v7792 = vadd.f32 %v6553, %v7791
      %7793 = vmatprep.mubr.bf16.mxu0 %v6383
      %7794 = vmatmul.mubr.bf16.gmra.mrb[0].mxu0 %v6382
      %v7795 = vpop.f32.mrb[0].mxu0
      %v7796 = vadd.f32 %v6549, %v7795
      %v7797 = vpop.f32.mrb[0].mxu0
      %v7798 = vadd.f32 %v6553, %v7797
      %v7799 = vpop.f32.mrb[0].mxu0
      %v7800 = vadd.f32 %v6549, %v7799
      %v7801 = vpop.f32.mrb[0].mxu0
      %v7802 = vadd.f32 %v6553, %v7801
      %7803 = vmatprep.mubr.bf16.mxu0 %v6385
      %7804 = vmatmul.mubr.bf16.gmra.mrb[0].mxu0 %v6384
      %v7805 = vpop.f32.mrb[0].mxu0
      %v7806 = vadd.f32 %v6549, %v7805
      %v7807 = vpop.f32.mrb[0].mxu0
      %v7808 = vadd.f32 %v6553, %v7807
      %v7809 = vpop.f32.mrb[0].mxu0
      %v7810 = vadd.f32 %v6549, %v7809
      %v7811 = vpop.f32.mrb[0].mxu0
      %v7812 = vadd.f32 %v6553, %v7811
      %7813 = vmatprep.mubr.bf16.mxu0 %v6387
      %7814 = vmatmul.mubr.bf16.gmra.mrb[0].mxu0 %v6386
      %v7815 = vpop.f32.mrb[0].mxu0
      %v7816 = vadd.f32 %v6549, %v7815
      %v7817 = vpop.f32.mrb[0].mxu0
      %v7818 = vadd.f32 %v6553, %v7817
      %v7819 = vpop.f32.mrb[0].mxu0
      %v7820 = vadd.f32 %v6549, %v7819
      %v7821 = vpop.f32.mrb[0].mxu0
      %v7822 = vadd.f32 %v6553, %v7821
      %7823 = vmatprep.mubr.bf16.mxu0 %v6389
      %7824 = vmatmul.mubr.bf16.gmra.mrb[0].mxu0 %v6388
      %v7825 = vpop.f32.mrb[0].mxu0
      %v7826 = vadd.f32 %v6549, %v7825
      %v7827 = vpop.f32.mrb[0].mxu0
      %v7828 = vadd.f32 %v6553, %v7827
      %v7829 = vpop.f32.mrb[0].mxu0
      %v7830 = vadd.f32 %v6549, %v7829
      %v7831 = vpop.f32.mrb[0].mxu0
      %v7832 = vadd.f32 %v6553, %v7831
      %7833 = vmatprep.mubr.bf16.mxu0 %v6391
      %7834 = vmatmul.mubr.bf16.gmra.mrb[0].mxu0 %v6390
      %v7835 = vpop.f32.mrb[0].mxu0
      %v7836 = vadd.f32 %v6549, %v7835
      %v7837 = vpop.f32.mrb[0].mxu0
      %v7838 = vadd.f32 %v6553, %v7837
      %v7839 = vpop.f32.mrb[0].mxu0
      %v7840 = vadd.f32 %v6549, %v7839
      %v7841 = vpop.f32.mrb[0].mxu0
      %v7842 = vadd.f32 %v6553, %v7841
      %7843 = vmatprep.mubr.bf16.mxu0 %v6393
      %7844 = vmatmul.mubr.bf16.gmra.mrb[0].mxu0 %v6392
      %v7845 = vpop.f32.mrb[0].mxu0
      %v7846 = vadd.f32 %v6549, %v7845
      %v7847 = vpop.f32.mrb[0].mxu0
      %v7848 = vadd.f32 %v6553, %v7847
      %v7849 = vpop.f32.mrb[0].mxu0
      %v7850 = vadd.f32 %v6549, %v7849
      %v7851 = vpop.f32.mrb[0].mxu0
      %v7852 = vadd.f32 %v6553, %v7851
      %7853 = vmatprep.mubr.bf16.mxu0 %v6395
      %7854 = vmatmul.mubr.bf16.gmra.mrb[0].mxu0 %v6394
      %v7855 = vpop.f32.mrb[0].mxu0
      %v7856 = vadd.f32 %v6549, %v7855
      %v7857 = vpop.f32.mrb[0].mxu0
      %v7858 = vadd.f32 %v6553, %v7857
      %v7859 = vpop.f32.mrb[0].mxu0
      %v7860 = vadd.f32 %v6549, %v7859
      %v7861 = vpop.f32.mrb[0].mxu0
      %v7862 = vadd.f32 %v6553, %v7861
      %7863 = vmatprep.mubr.bf16.mxu0 %v6397
      %7864 = vmatmul.mubr.bf16.gmra.mrb[0].mxu0 %v6396
      %v7865 = vpop.f32.mrb[0].mxu0
      %v7866 = vadd.f32 %v6549, %v7865
      %v7867 = vpop.f32.mrb[0].mxu0
      %v7868 = vadd.f32 %v6553, %v7867
      %v7869 = vpop.f32.mrb[0].mxu0
      %v7870 = vadd.f32 %v6549, %v7869
      %v7871 = vpop.f32.mrb[0].mxu0
      %v7872 = vadd.f32 %v6553, %v7871
      %7873 = vmatprep.mubr.bf16.mxu0 %v6399
      %7874 = vmatmul.mubr.bf16.gmra.mrb[0].mxu0 %v6398
      %v7875 = vpop.f32.mrb[0].mxu0
      %v7876 = vadd.f32 %v6549, %v7875
      %v7877 = vpop.f32.mrb[0].mxu0
      %v7878 = vadd.f32 %v6553, %v7877
      %v7879 = vpop.f32.mrb[0].mxu0
      %v7880 = vadd.f32 %v6549, %v7879
      %v7881 = vpop.f32.mrb[0].mxu0
      %v7882 = vadd.f32 %v6553, %v7881
      %7883 = vmatprep.mubr.bf16.mxu0 %v6401
      %7884 = vmatmul.mubr.bf16.gmra.mrb[0].mxu0 %v6400
      %v7885 = vpop.f32.mrb[0].mxu0
      %v7886 = vadd.f32 %v6549, %v7885
      %v7887 = vpop.f32.mrb[0].mxu0
      %v7888 = vadd.f32 %v6553, %v7887
      %v7889 = vpop.f32.mrb[0].mxu0
      %v7890 = vadd.f32 %v6549, %v7889
      %v7891 = vpop.f32.mrb[0].mxu0
      %v7892 = vadd.f32 %v6553, %v7891
      %7893 = vmatprep.mubr.bf16.mxu0 %v6403
      %7894 = vmatmul.mubr.bf16.gmra.mrb[0].mxu0 %v6402
      %v7895 = vpop.f32.mrb[0].mxu0
      %v7896 = vadd.f32 %v6549, %v7895
      %v7897 = vpop.f32.mrb[0].mxu0
      %v7898 = vadd.f32 %v6553, %v7897
      %v7899 = vpop.f32.mrb[0].mxu0
      %v7900 = vadd.f32 %v6549, %v7899
      %v7901 = vpop.f32.mrb[0].mxu0
      %v7902 = vadd.f32 %v6553, %v7901
      %7903 = vmatprep.mubr.bf16.mxu0 %v6405
      %7904 = vmatmul.mubr.bf16.gmra.mrb[0].mxu0 %v6404
      %v7905 = vpop.f32.mrb[0].mxu0
      %v7906 = vadd.f32 %v6549, %v7905
      %v7907 = vpop.f32.mrb[0].mxu0
      %v7908 = vadd.f32 %v6553, %v7907
      %v7909 = vpop.f32.mrb[0].mxu0
      %v7910 = vadd.f32 %v6549, %v7909
      %v7911 = vpop.f32.mrb[0].mxu0
      %v7912 = vadd.f32 %v6553, %v7911
      %7913 = vmatprep.mubr.bf16.mxu0 %v6407
      %7914 = vmatmul.mubr.bf16.gmra.mrb[0].mxu0 %v6406
      %v7915 = vpop.f32.mrb[0].mxu0
      %v7916 = vadd.f32 %v6549, %v7915
      %v7917 = vpop.f32.mrb[0].mxu0
      %v7918 = vadd.f32 %v6553, %v7917
      %v7919 = vpop.f32.mrb[0].mxu0
      %v7920 = vadd.f32 %v6549, %v7919
      %v7921 = vpop.f32.mrb[0].mxu0
      %v7922 = vadd.f32 %v6553, %v7921
      %7923 = vdwg.mxu0
      %7924 = vmatprep.subr.bf16.mxu0 %v6967
      %7925 = vmatpush1.bf16.msra.mxu0 %v6966
      %7926 = vmatprep.subr.bf16.mxu0 %v6975
      %7927 = vmatpush1.bf16.msra.mxu0 %v6974
      %7928 = vmatprep.subr.bf16.mxu0 %v6983
      %7929 = vmatpush1.bf16.msra.mxu0 %v6982
      %7930 = vmatprep.subr.bf16.mxu0 %v6991
      %7931 = vmatpush1.bf16.msra.mxu0 %v6990
      %7932 = vmatprep.subr.bf16.mxu0 %v6999
      %7933 = vmatpush1.bf16.msra.mxu0 %v6998
      %7934 = vmatprep.subr.bf16.mxu0 %v7007
      %7935 = vmatpush1.bf16.msra.mxu0 %v7006
      %7936 = vmatprep.subr.bf16.mxu0 %v7015
      %7937 = vmatpush1.bf16.msra.mxu0 %v7014
      %7938 = vmatprep.subr.bf16.mxu0 %v7023
      %7939 = vmatpush1.bf16.msra.mxu0 %v7022
      %7940 = vmatprep.subr.bf16.mxu0 %v7031
      %7941 = vmatpush1.bf16.msra.mxu0 %v7030
      %7942 = vmatprep.subr.bf16.mxu0 %v7039
      %7943 = vmatpush1.bf16.msra.mxu0 %v7038
      %7944 = vmatprep.subr.bf16.mxu0 %v7047
      %7945 = vmatpush1.bf16.msra.mxu0 %v7046
      %7946 = vmatprep.subr.bf16.mxu0 %v7055
      %7947 = vmatpush1.bf16.msra.mxu0 %v7054
      %7948 = vmatprep.subr.bf16.mxu0 %v7063
      %7949 = vmatpush1.bf16.msra.mxu0 %v7062
      %7950 = vmatprep.subr.bf16.mxu0 %v7071
      %7951 = vmatpush1.bf16.msra.mxu0 %v7070
      %7952 = vmatprep.subr.bf16.mxu0 %v7079
      %7953 = vmatpush1.bf16.msra.mxu0 %v7078
      %7954 = vmatprep.subr.bf16.mxu0 %v7087
      %7955 = vmatpush1.bf16.msra.mxu0 %v7086
      %7956 = vmatprep.mubr.bf16.mxu0 %v6345
      %7957 = vmatmul.mubr.bf16.gmra.mrb[0].mxu0 %v6344
      %v7958 = vpop.f32.mrb[0].mxu0
      %v7959 = vadd.f32 %v6557, %v7958
      %v7960 = vpop.f32.mrb[0].mxu0
      %v7961 = vadd.f32 %v6561, %v7960
      %v7962 = vpop.f32.mrb[0].mxu0
      %v7963 = vadd.f32 %v6557, %v7962
      %v7964 = vpop.f32.mrb[0].mxu0
      %v7965 = vadd.f32 %v6561, %v7964
      %7966 = vmatprep.mubr.bf16.mxu0 %v6347
      %7967 = vmatmul.mubr.bf16.gmra.mrb[0].mxu0 %v6346
      %v7968 = vpop.f32.mrb[0].mxu0
      %v7969 = vadd.f32 %v6557, %v7968
      %v7970 = vpop.f32.mrb[0].mxu0
      %v7971 = vadd.f32 %v6561, %v7970
      %v7972 = vpop.f32.mrb[0].mxu0
      %v7973 = vadd.f32 %v6557, %v7972
      %v7974 = vpop.f32.mrb[0].mxu0
      %v7975 = vadd.f32 %v6561, %v7974
      %7976 = vmatprep.mubr.bf16.mxu0 %v6349
      %7977 = vmatmul.mubr.bf16.gmra.mrb[0].mxu0 %v6348
      %v7978 = vpop.f32.mrb[0].mxu0
      %v7979 = vadd.f32 %v6557, %v7978
      %v7980 = vpop.f32.mrb[0].mxu0
      %v7981 = vadd.f32 %v6561, %v7980
      %v7982 = vpop.f32.mrb[0].mxu0
      %v7983 = vadd.f32 %v6557, %v7982
      %v7984 = vpop.f32.mrb[0].mxu0
      %v7985 = vadd.f32 %v6561, %v7984
      %7986 = vmatprep.mubr.bf16.mxu0 %v6351
      %7987 = vmatmul.mubr.bf16.gmra.mrb[0].mxu0 %v6350
      %v7988 = vpop.f32.mrb[0].mxu0
      %v7989 = vadd.f32 %v6557, %v7988
      %v7990 = vpop.f32.mrb[0].mxu0
      %v7991 = vadd.f32 %v6561, %v7990
      %v7992 = vpop.f32.mrb[0].mxu0
      %v7993 = vadd.f32 %v6557, %v7992
      %v7994 = vpop.f32.mrb[0].mxu0
      %v7995 = vadd.f32 %v6561, %v7994
      %7996 = vmatprep.mubr.bf16.mxu0 %v6353
      %7997 = vmatmul.mubr.bf16.gmra.mrb[0].mxu0 %v6352
      %v7998 = vpop.f32.mrb[0].mxu0
      %v7999 = vadd.f32 %v6557, %v7998
      %v8000 = vpop.f32.mrb[0].mxu0
      %v8001 = vadd.f32 %v6561, %v8000
      %v8002 = vpop.f32.mrb[0].mxu0
      %v8003 = vadd.f32 %v6557, %v8002
      %v8004 = vpop.f32.mrb[0].mxu0
      %v8005 = vadd.f32 %v6561, %v8004
      %8006 = vmatprep.mubr.bf16.mxu0 %v6355
      %8007 = vmatmul.mubr.bf16.gmra.mrb[0].mxu0 %v6354
      %v8008 = vpop.f32.mrb[0].mxu0
      %v8009 = vadd.f32 %v6557, %v8008
      %v8010 = vpop.f32.mrb[0].mxu0
      %v8011 = vadd.f32 %v6561, %v8010
      %v8012 = vpop.f32.mrb[0].mxu0
      %v8013 = vadd.f32 %v6557, %v8012
      %v8014 = vpop.f32.mrb[0].mxu0
      %v8015 = vadd.f32 %v6561, %v8014
      %8016 = vmatprep.mubr.bf16.mxu0 %v6357
      %8017 = vmatmul.mubr.bf16.gmra.mrb[0].mxu0 %v6356
      %v8018 = vpop.f32.mrb[0].mxu0
      %v8019 = vadd.f32 %v6557, %v8018
      %v8020 = vpop.f32.mrb[0].mxu0
      %v8021 = vadd.f32 %v6561, %v8020
      %v8022 = vpop.f32.mrb[0].mxu0
      %v8023 = vadd.f32 %v6557, %v8022
      %v8024 = vpop.f32.mrb[0].mxu0
      %v8025 = vadd.f32 %v6561, %v8024
      %8026 = vmatprep.mubr.bf16.mxu0 %v6359
      %8027 = vmatmul.mubr.bf16.gmra.mrb[0].mxu0 %v6358
      %v8028 = vpop.f32.mrb[0].mxu0
      %v8029 = vadd.f32 %v6557, %v8028
      %v8030 = vpop.f32.mrb[0].mxu0
      %v8031 = vadd.f32 %v6561, %v8030
      %v8032 = vpop.f32.mrb[0].mxu0
      %v8033 = vadd.f32 %v6557, %v8032
      %v8034 = vpop.f32.mrb[0].mxu0
      %v8035 = vadd.f32 %v6561, %v8034
      %8036 = vmatprep.mubr.bf16.mxu0 %v6361
      %8037 = vmatmul.mubr.bf16.gmra.mrb[0].mxu0 %v6360
      %v8038 = vpop.f32.mrb[0].mxu0
      %v8039 = vadd.f32 %v6557, %v8038
      %v8040 = vpop.f32.mrb[0].mxu0
      %v8041 = vadd.f32 %v6561, %v8040
      %v8042 = vpop.f32.mrb[0].mxu0
      %v8043 = vadd.f32 %v6557, %v8042
      %v8044 = vpop.f32.mrb[0].mxu0
      %v8045 = vadd.f32 %v6561, %v8044
      %8046 = vmatprep.mubr.bf16.mxu0 %v6363
      %8047 = vmatmul.mubr.bf16.gmra.mrb[0].mxu0 %v6362
      %v8048 = vpop.f32.mrb[0].mxu0
      %v8049 = vadd.f32 %v6557, %v8048
      %v8050 = vpop.f32.mrb[0].mxu0
      %v8051 = vadd.f32 %v6561, %v8050
      %v8052 = vpop.f32.mrb[0].mxu0
      %v8053 = vadd.f32 %v6557, %v8052
      %v8054 = vpop.f32.mrb[0].mxu0
      %v8055 = vadd.f32 %v6561, %v8054
      %8056 = vmatprep.mubr.bf16.mxu0 %v6365
      %8057 = vmatmul.mubr.bf16.gmra.mrb[0].mxu0 %v6364
      %v8058 = vpop.f32.mrb[0].mxu0
      %v8059 = vadd.f32 %v6557, %v8058
      %v8060 = vpop.f32.mrb[0].mxu0
      %v8061 = vadd.f32 %v6561, %v8060
      %v8062 = vpop.f32.mrb[0].mxu0
      %v8063 = vadd.f32 %v6557, %v8062
      %v8064 = vpop.f32.mrb[0].mxu0
      %v8065 = vadd.f32 %v6561, %v8064
      %8066 = vmatprep.mubr.bf16.mxu0 %v6367
      %8067 = vmatmul.mubr.bf16.gmra.mrb[0].mxu0 %v6366
      %v8068 = vpop.f32.mrb[0].mxu0
      %v8069 = vadd.f32 %v6557, %v8068
      %v8070 = vpop.f32.mrb[0].mxu0
      %v8071 = vadd.f32 %v6561, %v8070
      %v8072 = vpop.f32.mrb[0].mxu0
      %v8073 = vadd.f32 %v6557, %v8072
      %v8074 = vpop.f32.mrb[0].mxu0
      %v8075 = vadd.f32 %v6561, %v8074
      %8076 = vmatprep.mubr.bf16.mxu0 %v6369
      %8077 = vmatmul.mubr.bf16.gmra.mrb[0].mxu0 %v6368
      %v8078 = vpop.f32.mrb[0].mxu0
      %v8079 = vadd.f32 %v6557, %v8078
      %v8080 = vpop.f32.mrb[0].mxu0
      %v8081 = vadd.f32 %v6561, %v8080
      %v8082 = vpop.f32.mrb[0].mxu0
      %v8083 = vadd.f32 %v6557, %v8082
      %v8084 = vpop.f32.mrb[0].mxu0
      %v8085 = vadd.f32 %v6561, %v8084
      %8086 = vmatprep.mubr.bf16.mxu0 %v6371
      %8087 = vmatmul.mubr.bf16.gmra.mrb[0].mxu0 %v6370
      %v8088 = vpop.f32.mrb[0].mxu0
      %v8089 = vadd.f32 %v6557, %v8088
      %v8090 = vpop.f32.mrb[0].mxu0
      %v8091 = vadd.f32 %v6561, %v8090
      %v8092 = vpop.f32.mrb[0].mxu0
      %v8093 = vadd.f32 %v6557, %v8092
      %v8094 = vpop.f32.mrb[0].mxu0
      %v8095 = vadd.f32 %v6561, %v8094
      %8096 = vmatprep.mubr.bf16.mxu0 %v6373
      %8097 = vmatmul.mubr.bf16.gmra.mrb[0].mxu0 %v6372
      %v8098 = vpop.f32.mrb[0].mxu0
      %v8099 = vadd.f32 %v6557, %v8098
      %v8100 = vpop.f32.mrb[0].mxu0
      %v8101 = vadd.f32 %v6561, %v8100
      %v8102 = vpop.f32.mrb[0].mxu0
      %v8103 = vadd.f32 %v6557, %v8102
      %v8104 = vpop.f32.mrb[0].mxu0
      %v8105 = vadd.f32 %v6561, %v8104
      %8106 = vmatprep.mubr.bf16.mxu0 %v6375
      %8107 = vmatmul.mubr.bf16.gmra.mrb[0].mxu0 %v6374
      %v8108 = vpop.f32.mrb[0].mxu0
      %v8109 = vadd.f32 %v6557, %v8108
      %v8110 = vpop.f32.mrb[0].mxu0
      %v8111 = vadd.f32 %v6561, %v8110
      %v8112 = vpop.f32.mrb[0].mxu0
      %v8113 = vadd.f32 %v6557, %v8112
      %v8114 = vpop.f32.mrb[0].mxu0
      %v8115 = vadd.f32 %v6561, %v8114
      %8116 = vmatprep.mubr.bf16.mxu0 %v6377
      %8117 = vmatmul.mubr.bf16.gmra.mrb[0].mxu0 %v6376
      %v8118 = vpop.f32.mrb[0].mxu0
      %v8119 = vadd.f32 %v6557, %v8118
      %v8120 = vpop.f32.mrb[0].mxu0
      %v8121 = vadd.f32 %v6561, %v8120
      %v8122 = vpop.f32.mrb[0].mxu0
      %v8123 = vadd.f32 %v6557, %v8122
      %v8124 = vpop.f32.mrb[0].mxu0
      %v8125 = vadd.f32 %v6561, %v8124
      %8126 = vmatprep.mubr.bf16.mxu0 %v6379
      %8127 = vmatmul.mubr.bf16.gmra.mrb[0].mxu0 %v6378
      %v8128 = vpop.f32.mrb[0].mxu0
      %v8129 = vadd.f32 %v6557, %v8128
      %v8130 = vpop.f32.mrb[0].mxu0
      %v8131 = vadd.f32 %v6561, %v8130
      %v8132 = vpop.f32.mrb[0].mxu0
      %v8133 = vadd.f32 %v6557, %v8132
      %v8134 = vpop.f32.mrb[0].mxu0
      %v8135 = vadd.f32 %v6561, %v8134
      %8136 = vmatprep.mubr.bf16.mxu0 %v6381
      %8137 = vmatmul.mubr.bf16.gmra.mrb[0].mxu0 %v6380
      %v8138 = vpop.f32.mrb[0].mxu0
      %v8139 = vadd.f32 %v6557, %v8138
      %v8140 = vpop.f32.mrb[0].mxu0
      %v8141 = vadd.f32 %v6561, %v8140
      %v8142 = vpop.f32.mrb[0].mxu0
      %v8143 = vadd.f32 %v6557, %v8142
      %v8144 = vpop.f32.mrb[0].mxu0
      %v8145 = vadd.f32 %v6561, %v8144
      %8146 = vmatprep.mubr.bf16.mxu0 %v6383
      %8147 = vmatmul.mubr.bf16.gmra.mrb[0].mxu0 %v6382
      %v8148 = vpop.f32.mrb[0].mxu0
      %v8149 = vadd.f32 %v6557, %v8148
      %v8150 = vpop.f32.mrb[0].mxu0
      %v8151 = vadd.f32 %v6561, %v8150
      %v8152 = vpop.f32.mrb[0].mxu0
      %v8153 = vadd.f32 %v6557, %v8152
      %v8154 = vpop.f32.mrb[0].mxu0
      %v8155 = vadd.f32 %v6561, %v8154
      %8156 = vmatprep.mubr.bf16.mxu0 %v6385
      %8157 = vmatmul.mubr.bf16.gmra.mrb[0].mxu0 %v6384
      %v8158 = vpop.f32.mrb[0].mxu0
      %v8159 = vadd.f32 %v6557, %v8158
      %v8160 = vpop.f32.mrb[0].mxu0
      %v8161 = vadd.f32 %v6561, %v8160
      %v8162 = vpop.f32.mrb[0].mxu0
      %v8163 = vadd.f32 %v6557, %v8162
      %v8164 = vpop.f32.mrb[0].mxu0
      %v8165 = vadd.f32 %v6561, %v8164
      %8166 = vmatprep.mubr.bf16.mxu0 %v6387
      %8167 = vmatmul.mubr.bf16.gmra.mrb[0].mxu0 %v6386
      %v8168 = vpop.f32.mrb[0].mxu0
      %v8169 = vadd.f32 %v6557, %v8168
      %v8170 = vpop.f32.mrb[0].mxu0
      %v8171 = vadd.f32 %v6561, %v8170
      %v8172 = vpop.f32.mrb[0].mxu0
      %v8173 = vadd.f32 %v6557, %v8172
      %v8174 = vpop.f32.mrb[0].mxu0
      %v8175 = vadd.f32 %v6561, %v8174
      %8176 = vmatprep.mubr.bf16.mxu0 %v6389
      %8177 = vmatmul.mubr.bf16.gmra.mrb[0].mxu0 %v6388
      %v8178 = vpop.f32.mrb[0].mxu0
      %v8179 = vadd.f32 %v6557, %v8178
      %v8180 = vpop.f32.mrb[0].mxu0
      %v8181 = vadd.f32 %v6561, %v8180
      %v8182 = vpop.f32.mrb[0].mxu0
      %v8183 = vadd.f32 %v6557, %v8182
      %v8184 = vpop.f32.mrb[0].mxu0
      %v8185 = vadd.f32 %v6561, %v8184
      %8186 = vmatprep.mubr.bf16.mxu0 %v6391
      %8187 = vmatmul.mubr.bf16.gmra.mrb[0].mxu0 %v6390
      %v8188 = vpop.f32.mrb[0].mxu0
      %v8189 = vadd.f32 %v6557, %v8188
      %v8190 = vpop.f32.mrb[0].mxu0
      %v8191 = vadd.f32 %v6561, %v8190
      %v8192 = vpop.f32.mrb[0].mxu0
      %v8193 = vadd.f32 %v6557, %v8192
      %v8194 = vpop.f32.mrb[0].mxu0
      %v8195 = vadd.f32 %v6561, %v8194
      %8196 = vmatprep.mubr.bf16.mxu0 %v6393
      %8197 = vmatmul.mubr.bf16.gmra.mrb[0].mxu0 %v6392
      %v8198 = vpop.f32.mrb[0].mxu0
      %v8199 = vadd.f32 %v6557, %v8198
      %v8200 = vpop.f32.mrb[0].mxu0
      %v8201 = vadd.f32 %v6561, %v8200
      %v8202 = vpop.f32.mrb[0].mxu0
      %v8203 = vadd.f32 %v6557, %v8202
      %v8204 = vpop.f32.mrb[0].mxu0
      %v8205 = vadd.f32 %v6561, %v8204
      %8206 = vmatprep.mubr.bf16.mxu0 %v6395
      %8207 = vmatmul.mubr.bf16.gmra.mrb[0].mxu0 %v6394
      %v8208 = vpop.f32.mrb[0].mxu0
      %v8209 = vadd.f32 %v6557, %v8208
      %v8210 = vpop.f32.mrb[0].mxu0
      %v8211 = vadd.f32 %v6561, %v8210
      %v8212 = vpop.f32.mrb[0].mxu0
      %v8213 = vadd.f32 %v6557, %v8212
      %v8214 = vpop.f32.mrb[0].mxu0
      %v8215 = vadd.f32 %v6561, %v8214
      %8216 = vmatprep.mubr.bf16.mxu0 %v6397
      %8217 = vmatmul.mubr.bf16.gmra.mrb[0].mxu0 %v6396
      %v8218 = vpop.f32.mrb[0].mxu0
      %v8219 = vadd.f32 %v6557, %v8218
      %v8220 = vpop.f32.mrb[0].mxu0
      %v8221 = vadd.f32 %v6561, %v8220
      %v8222 = vpop.f32.mrb[0].mxu0
      %v8223 = vadd.f32 %v6557, %v8222
      %v8224 = vpop.f32.mrb[0].mxu0
      %v8225 = vadd.f32 %v6561, %v8224
      %8226 = vmatprep.mubr.bf16.mxu0 %v6399
      %8227 = vmatmul.mubr.bf16.gmra.mrb[0].mxu0 %v6398
      %v8228 = vpop.f32.mrb[0].mxu0
      %v8229 = vadd.f32 %v6557, %v8228
      %v8230 = vpop.f32.mrb[0].mxu0
      %v8231 = vadd.f32 %v6561, %v8230
      %v8232 = vpop.f32.mrb[0].mxu0
      %v8233 = vadd.f32 %v6557, %v8232
      %v8234 = vpop.f32.mrb[0].mxu0
      %v8235 = vadd.f32 %v6561, %v8234
      %8236 = vmatprep.mubr.bf16.mxu0 %v6401
      %8237 = vmatmul.mubr.bf16.gmra.mrb[0].mxu0 %v6400
      %v8238 = vpop.f32.mrb[0].mxu0
      %v8239 = vadd.f32 %v6557, %v8238
      %v8240 = vpop.f32.mrb[0].mxu0
      %v8241 = vadd.f32 %v6561, %v8240
      %v8242 = vpop.f32.mrb[0].mxu0
      %v8243 = vadd.f32 %v6557, %v8242
      %v8244 = vpop.f32.mrb[0].mxu0
      %v8245 = vadd.f32 %v6561, %v8244
      %8246 = vmatprep.mubr.bf16.mxu0 %v6403
      %8247 = vmatmul.mubr.bf16.gmra.mrb[0].mxu0 %v6402
      %v8248 = vpop.f32.mrb[0].mxu0
      %v8249 = vadd.f32 %v6557, %v8248
      %v8250 = vpop.f32.mrb[0].mxu0
      %v8251 = vadd.f32 %v6561, %v8250
      %v8252 = vpop.f32.mrb[0].mxu0
      %v8253 = vadd.f32 %v6557, %v8252
      %v8254 = vpop.f32.mrb[0].mxu0
      %v8255 = vadd.f32 %v6561, %v8254
      %8256 = vmatprep.mubr.bf16.mxu0 %v6405
      %8257 = vmatmul.mubr.bf16.gmra.mrb[0].mxu0 %v6404
      %v8258 = vpop.f32.mrb[0].mxu0
      %v8259 = vadd.f32 %v6557, %v8258
      %v8260 = vpop.f32.mrb[0].mxu0
      %v8261 = vadd.f32 %v6561, %v8260
      %v8262 = vpop.f32.mrb[0].mxu0
      %v8263 = vadd.f32 %v6557, %v8262
      %v8264 = vpop.f32.mrb[0].mxu0
      %v8265 = vadd.f32 %v6561, %v8264
      %8266 = vmatprep.mubr.bf16.mxu0 %v6407
      %8267 = vmatmul.mubr.bf16.gmra.mrb[0].mxu0 %v6406
      %v8268 = vpop.f32.mrb[0].mxu0
      %v8269 = vadd.f32 %v6557, %v8268
      %v8270 = vpop.f32.mrb[0].mxu0
      %v8271 = vadd.f32 %v6561, %v8270
      %v8272 = vpop.f32.mrb[0].mxu0
      %v8273 = vadd.f32 %v6557, %v8272
      %v8274 = vpop.f32.mrb[0].mxu0
      %v8275 = vadd.f32 %v6561, %v8274
      %8276 = vdwg.mxu0
      %8277 = vmatprep.subr.bf16.mxu0 %v6969
      %8278 = vmatpush1.bf16.msra.mxu0 %v6968
      %8279 = vmatprep.subr.bf16.mxu0 %v6977
      %8280 = vmatpush1.bf16.msra.mxu0 %v6976
      %8281 = vmatprep.subr.bf16.mxu0 %v6985
      %8282 = vmatpush1.bf16.msra.mxu0 %v6984
      %8283 = vmatprep.subr.bf16.mxu0 %v6993
      %8284 = vmatpush1.bf16.msra.mxu0 %v6992
      %8285 = vmatprep.subr.bf16.mxu0 %v7001
      %8286 = vmatpush1.bf16.msra.mxu0 %v7000
      %8287 = vmatprep.subr.bf16.mxu0 %v7009
      %8288 = vmatpush1.bf16.msra.mxu0 %v7008
      %8289 = vmatprep.subr.bf16.mxu0 %v7017
      %8290 = vmatpush1.bf16.msra.mxu0 %v7016
      %8291 = vmatprep.subr.bf16.mxu0 %v7025
      %8292 = vmatpush1.bf16.msra.mxu0 %v7024
      %8293 = vmatprep.subr.bf16.mxu0 %v7033
      %8294 = vmatpush1.bf16.msra.mxu0 %v7032
      %8295 = vmatprep.subr.bf16.mxu0 %v7041
      %8296 = vmatpush1.bf16.msra.mxu0 %v7040
      %8297 = vmatprep.subr.bf16.mxu0 %v7049
      %8298 = vmatpush1.bf16.msra.mxu0 %v7048
      %8299 = vmatprep.subr.bf16.mxu0 %v7057
      %8300 = vmatpush1.bf16.msra.mxu0 %v7056
      %8301 = vmatprep.subr.bf16.mxu0 %v7065
      %8302 = vmatpush1.bf16.msra.mxu0 %v7064
      %8303 = vmatprep.subr.bf16.mxu0 %v7073
      %8304 = vmatpush1.bf16.msra.mxu0 %v7072
      %8305 = vmatprep.subr.bf16.mxu0 %v7081
      %8306 = vmatpush1.bf16.msra.mxu0 %v7080
      %8307 = vmatprep.subr.bf16.mxu0 %v7089
      %8308 = vmatpush1.bf16.msra.mxu0 %v7088
      %8309 = vmatprep.mubr.bf16.mxu0 %v6345
      %8310 = vmatmul.mubr.bf16.gmra.mrb[0].mxu0 %v6344
      %v8311 = vpop.f32.mrb[0].mxu0
      %v8312 = vadd.f32 %v6565, %v8311
      %v8313 = vpop.f32.mrb[0].mxu0
      %v8314 = vadd.f32 %v6569, %v8313
      %v8315 = vpop.f32.mrb[0].mxu0
      %v8316 = vadd.f32 %v6565, %v8315
      %v8317 = vpop.f32.mrb[0].mxu0
      %v8318 = vadd.f32 %v6569, %v8317
      %8319 = vmatprep.mubr.bf16.mxu0 %v6347
      %8320 = vmatmul.mubr.bf16.gmra.mrb[0].mxu0 %v6346
      %v8321 = vpop.f32.mrb[0].mxu0
      %v8322 = vadd.f32 %v6565, %v8321
      %v8323 = vpop.f32.mrb[0].mxu0
      %v8324 = vadd.f32 %v6569, %v8323
      %v8325 = vpop.f32.mrb[0].mxu0
      %v8326 = vadd.f32 %v6565, %v8325
      %v8327 = vpop.f32.mrb[0].mxu0
      %v8328 = vadd.f32 %v6569, %v8327
      %8329 = vmatprep.mubr.bf16.mxu0 %v6349
      %8330 = vmatmul.mubr.bf16.gmra.mrb[0].mxu0 %v6348
      %v8331 = vpop.f32.mrb[0].mxu0
      %v8332 = vadd.f32 %v6565, %v8331
      %v8333 = vpop.f32.mrb[0].mxu0
      %v8334 = vadd.f32 %v6569, %v8333
      %v8335 = vpop.f32.mrb[0].mxu0
      %v8336 = vadd.f32 %v6565, %v8335
      %v8337 = vpop.f32.mrb[0].mxu0
      %v8338 = vadd.f32 %v6569, %v8337
      %8339 = vmatprep.mubr.bf16.mxu0 %v6351
      %8340 = vmatmul.mubr.bf16.gmra.mrb[0].mxu0 %v6350
      %v8341 = vpop.f32.mrb[0].mxu0
      %v8342 = vadd.f32 %v6565, %v8341
      %v8343 = vpop.f32.mrb[0].mxu0
      %v8344 = vadd.f32 %v6569, %v8343
      %v8345 = vpop.f32.mrb[0].mxu0
      %v8346 = vadd.f32 %v6565, %v8345
      %v8347 = vpop.f32.mrb[0].mxu0
      %v8348 = vadd.f32 %v6569, %v8347
      %8349 = vmatprep.mubr.bf16.mxu0 %v6353
      %8350 = vmatmul.mubr.bf16.gmra.mrb[0].mxu0 %v6352
      %v8351 = vpop.f32.mrb[0].mxu0
      %v8352 = vadd.f32 %v6565, %v8351
      %v8353 = vpop.f32.mrb[0].mxu0
      %v8354 = vadd.f32 %v6569, %v8353
      %v8355 = vpop.f32.mrb[0].mxu0
      %v8356 = vadd.f32 %v6565, %v8355
      %v8357 = vpop.f32.mrb[0].mxu0
      %v8358 = vadd.f32 %v6569, %v8357
      %8359 = vmatprep.mubr.bf16.mxu0 %v6355
      %8360 = vmatmul.mubr.bf16.gmra.mrb[0].mxu0 %v6354
      %v8361 = vpop.f32.mrb[0].mxu0
      %v8362 = vadd.f32 %v6565, %v8361
      %v8363 = vpop.f32.mrb[0].mxu0
      %v8364 = vadd.f32 %v6569, %v8363
      %v8365 = vpop.f32.mrb[0].mxu0
      %v8366 = vadd.f32 %v6565, %v8365
      %v8367 = vpop.f32.mrb[0].mxu0
      %v8368 = vadd.f32 %v6569, %v8367
      %8369 = vmatprep.mubr.bf16.mxu0 %v6357
      %8370 = vmatmul.mubr.bf16.gmra.mrb[0].mxu0 %v6356
      %v8371 = vpop.f32.mrb[0].mxu0
      %v8372 = vadd.f32 %v6565, %v8371
      %v8373 = vpop.f32.mrb[0].mxu0
      %v8374 = vadd.f32 %v6569, %v8373
      %v8375 = vpop.f32.mrb[0].mxu0
      %v8376 = vadd.f32 %v6565, %v8375
      %v8377 = vpop.f32.mrb[0].mxu0
      %v8378 = vadd.f32 %v6569, %v8377
      %8379 = vmatprep.mubr.bf16.mxu0 %v6359
      %8380 = vmatmul.mubr.bf16.gmra.mrb[0].mxu0 %v6358
      %v8381 = vpop.f32.mrb[0].mxu0
      %v8382 = vadd.f32 %v6565, %v8381
      %v8383 = vpop.f32.mrb[0].mxu0
      %v8384 = vadd.f32 %v6569, %v8383
      %v8385 = vpop.f32.mrb[0].mxu0
      %v8386 = vadd.f32 %v6565, %v8385
      %v8387 = vpop.f32.mrb[0].mxu0
      %v8388 = vadd.f32 %v6569, %v8387
      %8389 = vmatprep.mubr.bf16.mxu0 %v6361
      %8390 = vmatmul.mubr.bf16.gmra.mrb[0].mxu0 %v6360
      %v8391 = vpop.f32.mrb[0].mxu0
      %v8392 = vadd.f32 %v6565, %v8391
      %v8393 = vpop.f32.mrb[0].mxu0
      %v8394 = vadd.f32 %v6569, %v8393
      %v8395 = vpop.f32.mrb[0].mxu0
      %v8396 = vadd.f32 %v6565, %v8395
      %v8397 = vpop.f32.mrb[0].mxu0
      %v8398 = vadd.f32 %v6569, %v8397
      %8399 = vmatprep.mubr.bf16.mxu0 %v6363
      %8400 = vmatmul.mubr.bf16.gmra.mrb[0].mxu0 %v6362
      %v8401 = vpop.f32.mrb[0].mxu0
      %v8402 = vadd.f32 %v6565, %v8401
      %v8403 = vpop.f32.mrb[0].mxu0
      %v8404 = vadd.f32 %v6569, %v8403
      %v8405 = vpop.f32.mrb[0].mxu0
      %v8406 = vadd.f32 %v6565, %v8405
      %v8407 = vpop.f32.mrb[0].mxu0
      %v8408 = vadd.f32 %v6569, %v8407
      %8409 = vmatprep.mubr.bf16.mxu0 %v6365
      %8410 = vmatmul.mubr.bf16.gmra.mrb[0].mxu0 %v6364
      %v8411 = vpop.f32.mrb[0].mxu0
      %v8412 = vadd.f32 %v6565, %v8411
      %v8413 = vpop.f32.mrb[0].mxu0
      %v8414 = vadd.f32 %v6569, %v8413
      %v8415 = vpop.f32.mrb[0].mxu0
      %v8416 = vadd.f32 %v6565, %v8415
      %v8417 = vpop.f32.mrb[0].mxu0
      %v8418 = vadd.f32 %v6569, %v8417
      %8419 = vmatprep.mubr.bf16.mxu0 %v6367
      %8420 = vmatmul.mubr.bf16.gmra.mrb[0].mxu0 %v6366
      %v8421 = vpop.f32.mrb[0].mxu0
      %v8422 = vadd.f32 %v6565, %v8421
      %v8423 = vpop.f32.mrb[0].mxu0
      %v8424 = vadd.f32 %v6569, %v8423
      %v8425 = vpop.f32.mrb[0].mxu0
      %v8426 = vadd.f32 %v6565, %v8425
      %v8427 = vpop.f32.mrb[0].mxu0
      %v8428 = vadd.f32 %v6569, %v8427
      %8429 = vmatprep.mubr.bf16.mxu0 %v6369
      %8430 = vmatmul.mubr.bf16.gmra.mrb[0].mxu0 %v6368
      %v8431 = vpop.f32.mrb[0].mxu0
      %v8432 = vadd.f32 %v6565, %v8431
      %v8433 = vpop.f32.mrb[0].mxu0
      %v8434 = vadd.f32 %v6569, %v8433
      %v8435 = vpop.f32.mrb[0].mxu0
      %v8436 = vadd.f32 %v6565, %v8435
      %v8437 = vpop.f32.mrb[0].mxu0
      %v8438 = vadd.f32 %v6569, %v8437
      %8439 = vmatprep.mubr.bf16.mxu0 %v6371
      %8440 = vmatmul.mubr.bf16.gmra.mrb[0].mxu0 %v6370
      %v8441 = vpop.f32.mrb[0].mxu0
      %v8442 = vadd.f32 %v6565, %v8441
      %v8443 = vpop.f32.mrb[0].mxu0
      %v8444 = vadd.f32 %v6569, %v8443
      %v8445 = vpop.f32.mrb[0].mxu0
      %v8446 = vadd.f32 %v6565, %v8445
      %v8447 = vpop.f32.mrb[0].mxu0
      %v8448 = vadd.f32 %v6569, %v8447
      %8449 = vmatprep.mubr.bf16.mxu0 %v6373
      %8450 = vmatmul.mubr.bf16.gmra.mrb[0].mxu0 %v6372
      %v8451 = vpop.f32.mrb[0].mxu0
      %v8452 = vadd.f32 %v6565, %v8451
      %v8453 = vpop.f32.mrb[0].mxu0
      %v8454 = vadd.f32 %v6569, %v8453
      %v8455 = vpop.f32.mrb[0].mxu0
      %v8456 = vadd.f32 %v6565, %v8455
      %v8457 = vpop.f32.mrb[0].mxu0
      %v8458 = vadd.f32 %v6569, %v8457
      %8459 = vmatprep.mubr.bf16.mxu0 %v6375
      %8460 = vmatmul.mubr.bf16.gmra.mrb[0].mxu0 %v6374
      %v8461 = vpop.f32.mrb[0].mxu0
      %v8462 = vadd.f32 %v6565, %v8461
      %v8463 = vpop.f32.mrb[0].mxu0
      %v8464 = vadd.f32 %v6569, %v8463
      %v8465 = vpop.f32.mrb[0].mxu0
      %v8466 = vadd.f32 %v6565, %v8465
      %v8467 = vpop.f32.mrb[0].mxu0
      %v8468 = vadd.f32 %v6569, %v8467
      %8469 = vmatprep.mubr.bf16.mxu0 %v6377
      %8470 = vmatmul.mubr.bf16.gmra.mrb[0].mxu0 %v6376
      %v8471 = vpop.f32.mrb[0].mxu0
      %v8472 = vadd.f32 %v6565, %v8471
      %v8473 = vpop.f32.mrb[0].mxu0
      %v8474 = vadd.f32 %v6569, %v8473
      %v8475 = vpop.f32.mrb[0].mxu0
      %v8476 = vadd.f32 %v6565, %v8475
      %v8477 = vpop.f32.mrb[0].mxu0
      %v8478 = vadd.f32 %v6569, %v8477
      %8479 = vmatprep.mubr.bf16.mxu0 %v6379
      %8480 = vmatmul.mubr.bf16.gmra.mrb[0].mxu0 %v6378
      %v8481 = vpop.f32.mrb[0].mxu0
      %v8482 = vadd.f32 %v6565, %v8481
      %v8483 = vpop.f32.mrb[0].mxu0
      %v8484 = vadd.f32 %v6569, %v8483
      %v8485 = vpop.f32.mrb[0].mxu0
      %v8486 = vadd.f32 %v6565, %v8485
      %v8487 = vpop.f32.mrb[0].mxu0
      %v8488 = vadd.f32 %v6569, %v8487
      %8489 = vmatprep.mubr.bf16.mxu0 %v6381
      %8490 = vmatmul.mubr.bf16.gmra.mrb[0].mxu0 %v6380
      %v8491 = vpop.f32.mrb[0].mxu0
      %v8492 = vadd.f32 %v6565, %v8491
      %v8493 = vpop.f32.mrb[0].mxu0
      %v8494 = vadd.f32 %v6569, %v8493
      %v8495 = vpop.f32.mrb[0].mxu0
      %v8496 = vadd.f32 %v6565, %v8495
      %v8497 = vpop.f32.mrb[0].mxu0
      %v8498 = vadd.f32 %v6569, %v8497
      %8499 = vmatprep.mubr.bf16.mxu0 %v6383
      %8500 = vmatmul.mubr.bf16.gmra.mrb[0].mxu0 %v6382
      %v8501 = vpop.f32.mrb[0].mxu0
      %v8502 = vadd.f32 %v6565, %v8501
      %v8503 = vpop.f32.mrb[0].mxu0
      %v8504 = vadd.f32 %v6569, %v8503
      %v8505 = vpop.f32.mrb[0].mxu0
      %v8506 = vadd.f32 %v6565, %v8505
      %v8507 = vpop.f32.mrb[0].mxu0
      %v8508 = vadd.f32 %v6569, %v8507
      %8509 = vmatprep.mubr.bf16.mxu0 %v6385
      %8510 = vmatmul.mubr.bf16.gmra.mrb[0].mxu0 %v6384
      %v8511 = vpop.f32.mrb[0].mxu0
      %v8512 = vadd.f32 %v6565, %v8511
      %v8513 = vpop.f32.mrb[0].mxu0
      %v8514 = vadd.f32 %v6569, %v8513
      %v8515 = vpop.f32.mrb[0].mxu0
      %v8516 = vadd.f32 %v6565, %v8515
      %v8517 = vpop.f32.mrb[0].mxu0
      %v8518 = vadd.f32 %v6569, %v8517
      %8519 = vmatprep.mubr.bf16.mxu0 %v6387
      %8520 = vmatmul.mubr.bf16.gmra.mrb[0].mxu0 %v6386
      %v8521 = vpop.f32.mrb[0].mxu0
      %v8522 = vadd.f32 %v6565, %v8521
      %v8523 = vpop.f32.mrb[0].mxu0
      %v8524 = vadd.f32 %v6569, %v8523
      %v8525 = vpop.f32.mrb[0].mxu0
      %v8526 = vadd.f32 %v6565, %v8525
      %v8527 = vpop.f32.mrb[0].mxu0
      %v8528 = vadd.f32 %v6569, %v8527
      %8529 = vmatprep.mubr.bf16.mxu0 %v6389
      %8530 = vmatmul.mubr.bf16.gmra.mrb[0].mxu0 %v6388
      %v8531 = vpop.f32.mrb[0].mxu0
      %v8532 = vadd.f32 %v6565, %v8531
      %v8533 = vpop.f32.mrb[0].mxu0
      %v8534 = vadd.f32 %v6569, %v8533
      %v8535 = vpop.f32.mrb[0].mxu0
      %v8536 = vadd.f32 %v6565, %v8535
      %v8537 = vpop.f32.mrb[0].mxu0
      %v8538 = vadd.f32 %v6569, %v8537
      %8539 = vmatprep.mubr.bf16.mxu0 %v6391
      %8540 = vmatmul.mubr.bf16.gmra.mrb[0].mxu0 %v6390
      %v8541 = vpop.f32.mrb[0].mxu0
      %v8542 = vadd.f32 %v6565, %v8541
      %v8543 = vpop.f32.mrb[0].mxu0
      %v8544 = vadd.f32 %v6569, %v8543
      %v8545 = vpop.f32.mrb[0].mxu0
      %v8546 = vadd.f32 %v6565, %v8545
      %v8547 = vpop.f32.mrb[0].mxu0
      %v8548 = vadd.f32 %v6569, %v8547
      %8549 = vmatprep.mubr.bf16.mxu0 %v6393
      %8550 = vmatmul.mubr.bf16.gmra.mrb[0].mxu0 %v6392
      %v8551 = vpop.f32.mrb[0].mxu0
      %v8552 = vadd.f32 %v6565, %v8551
      %v8553 = vpop.f32.mrb[0].mxu0
      %v8554 = vadd.f32 %v6569, %v8553
      %v8555 = vpop.f32.mrb[0].mxu0
      %v8556 = vadd.f32 %v6565, %v8555
      %v8557 = vpop.f32.mrb[0].mxu0
      %v8558 = vadd.f32 %v6569, %v8557
      %8559 = vmatprep.mubr.bf16.mxu0 %v6395
      %8560 = vmatmul.mubr.bf16.gmra.mrb[0].mxu0 %v6394
      %v8561 = vpop.f32.mrb[0].mxu0
      %v8562 = vadd.f32 %v6565, %v8561
      %v8563 = vpop.f32.mrb[0].mxu0
      %v8564 = vadd.f32 %v6569, %v8563
      %v8565 = vpop.f32.mrb[0].mxu0
      %v8566 = vadd.f32 %v6565, %v8565
      %v8567 = vpop.f32.mrb[0].mxu0
      %v8568 = vadd.f32 %v6569, %v8567
      %8569 = vmatprep.mubr.bf16.mxu0 %v6397
      %8570 = vmatmul.mubr.bf16.gmra.mrb[0].mxu0 %v6396
      %v8571 = vpop.f32.mrb[0].mxu0
      %v8572 = vadd.f32 %v6565, %v8571
      %v8573 = vpop.f32.mrb[0].mxu0
      %v8574 = vadd.f32 %v6569, %v8573
      %v8575 = vpop.f32.mrb[0].mxu0
      %v8576 = vadd.f32 %v6565, %v8575
      %v8577 = vpop.f32.mrb[0].mxu0
      %v8578 = vadd.f32 %v6569, %v8577
      %8579 = vmatprep.mubr.bf16.mxu0 %v6399
      %8580 = vmatmul.mubr.bf16.gmra.mrb[0].mxu0 %v6398
      %v8581 = vpop.f32.mrb[0].mxu0
      %v8582 = vadd.f32 %v6565, %v8581
      %v8583 = vpop.f32.mrb[0].mxu0
      %v8584 = vadd.f32 %v6569, %v8583
      %v8585 = vpop.f32.mrb[0].mxu0
      %v8586 = vadd.f32 %v6565, %v8585
      %v8587 = vpop.f32.mrb[0].mxu0
      %v8588 = vadd.f32 %v6569, %v8587
      %8589 = vmatprep.mubr.bf16.mxu0 %v6401
      %8590 = vmatmul.mubr.bf16.gmra.mrb[0].mxu0 %v6400
      %v8591 = vpop.f32.mrb[0].mxu0
      %v8592 = vadd.f32 %v6565, %v8591
      %v8593 = vpop.f32.mrb[0].mxu0
      %v8594 = vadd.f32 %v6569, %v8593
      %v8595 = vpop.f32.mrb[0].mxu0
      %v8596 = vadd.f32 %v6565, %v8595
      %v8597 = vpop.f32.mrb[0].mxu0
      %v8598 = vadd.f32 %v6569, %v8597
      %8599 = vmatprep.mubr.bf16.mxu0 %v6403
      %8600 = vmatmul.mubr.bf16.gmra.mrb[0].mxu0 %v6402
      %v8601 = vpop.f32.mrb[0].mxu0
      %v8602 = vadd.f32 %v6565, %v8601
      %v8603 = vpop.f32.mrb[0].mxu0
      %v8604 = vadd.f32 %v6569, %v8603
      %v8605 = vpop.f32.mrb[0].mxu0
      %v8606 = vadd.f32 %v6565, %v8605
      %v8607 = vpop.f32.mrb[0].mxu0
      %v8608 = vadd.f32 %v6569, %v8607
      %8609 = vmatprep.mubr.bf16.mxu0 %v6405
      %8610 = vmatmul.mubr.bf16.gmra.mrb[0].mxu0 %v6404
      %v8611 = vpop.f32.mrb[0].mxu0
      %v8612 = vadd.f32 %v6565, %v8611
      %v8613 = vpop.f32.mrb[0].mxu0
      %v8614 = vadd.f32 %v6569, %v8613
      %v8615 = vpop.f32.mrb[0].mxu0
      %v8616 = vadd.f32 %v6565, %v8615
      %v8617 = vpop.f32.mrb[0].mxu0
      %v8618 = vadd.f32 %v6569, %v8617
      %8619 = vmatprep.mubr.bf16.mxu0 %v6407
      %8620 = vmatmul.mubr.bf16.gmra.mrb[0].mxu0 %v6406
      %v8621 = vpop.f32.mrb[0].mxu0
      %v8622 = vadd.f32 %v6565, %v8621
      %v8623 = vpop.f32.mrb[0].mxu0
      %v8624 = vadd.f32 %v6569, %v8623
      %v8625 = vpop.f32.mrb[0].mxu0
      %v8626 = vadd.f32 %v6565, %v8625
      %v8627 = vpop.f32.mrb[0].mxu0
      %v8628 = vadd.f32 %v6569, %v8627
      %8629 = vdwg.mxu0
      %v8630 = vmax.f32 %v7253, 0.0
      %v8631 = vmax.f32 %v7255, 0.0
      %v8632 = vmax.f32 %v7606, 0.0
      %v8633 = vmax.f32 %v7608, 0.0
      %v8634 = vmax.f32 %v7959, 0.0
      %v8635 = vmax.f32 %v7961, 0.0
      %v8636 = vmax.f32 %v8312, 0.0
      %v8637 = vmax.f32 %v8314, 0.0
      %v8638 = vmax.f32 %v7257, 0.0
      %v8639 = vmax.f32 %v7259, 0.0
      %v8640 = vmax.f32 %v7610, 0.0
      %v8641 = vmax.f32 %v7612, 0.0
      %v8642 = vmax.f32 %v7963, 0.0
      %v8643 = vmax.f32 %v7965, 0.0
      %v8644 = vmax.f32 %v8316, 0.0
      %v8645 = vmax.f32 %v8318, 0.0
      %v8646 = vmax.f32 %v7263, 0.0
      %v8647 = vmax.f32 %v7265, 0.0
      %v8648 = vmax.f32 %v7616, 0.0
      %v8649 = vmax.f32 %v7618, 0.0
      %v8650 = vmax.f32 %v7969, 0.0
      %v8651 = vmax.f32 %v7971, 0.0
      %v8652 = vmax.f32 %v8322, 0.0
      %v8653 = vmax.f32 %v8324, 0.0
      %v8654 = vmax.f32 %v7267, 0.0
      %v8655 = vmax.f32 %v7269, 0.0
      %v8656 = vmax.f32 %v7620, 0.0
      %v8657 = vmax.f32 %v7622, 0.0
      %v8658 = vmax.f32 %v7973, 0.0
      %v8659 = vmax.f32 %v7975, 0.0
      %v8660 = vmax.f32 %v8326, 0.0
      %v8661 = vmax.f32 %v8328, 0.0
      %v8662 = vmax.f32 %v7273, 0.0
      %v8663 = vmax.f32 %v7275, 0.0
      %v8664 = vmax.f32 %v7626, 0.0
      %v8665 = vmax.f32 %v7628, 0.0
      %v8666 = vmax.f32 %v7979, 0.0
      %v8667 = vmax.f32 %v7981, 0.0
      %v8668 = vmax.f32 %v8332, 0.0
      %v8669 = vmax.f32 %v8334, 0.0
      %v8670 = vmax.f32 %v7277, 0.0
      %v8671 = vmax.f32 %v7279, 0.0
      %v8672 = vmax.f32 %v7630, 0.0
      %v8673 = vmax.f32 %v7632, 0.0
      %v8674 = vmax.f32 %v7983, 0.0
      %v8675 = vmax.f32 %v7985, 0.0
      %v8676 = vmax.f32 %v8336, 0.0
      %v8677 = vmax.f32 %v8338, 0.0
      %v8678 = vmax.f32 %v7283, 0.0
      %v8679 = vmax.f32 %v7285, 0.0
      %v8680 = vmax.f32 %v7636, 0.0
      %v8681 = vmax.f32 %v7638, 0.0
      %v8682 = vmax.f32 %v7989, 0.0
      %v8683 = vmax.f32 %v7991, 0.0
      %v8684 = vmax.f32 %v8342, 0.0
      %v8685 = vmax.f32 %v8344, 0.0
      %v8686 = vmax.f32 %v7287, 0.0
      %v8687 = vmax.f32 %v7289, 0.0
      %v8688 = vmax.f32 %v7640, 0.0
      %v8689 = vmax.f32 %v7642, 0.0
      %v8690 = vmax.f32 %v7993, 0.0
      %v8691 = vmax.f32 %v7995, 0.0
      %v8692 = vmax.f32 %v8346, 0.0
      %v8693 = vmax.f32 %v8348, 0.0
      %v8694 = vmax.f32 %v7293, 0.0
      %v8695 = vmax.f32 %v7295, 0.0
      %v8696 = vmax.f32 %v7646, 0.0
      %v8697 = vmax.f32 %v7648, 0.0
      %v8698 = vmax.f32 %v7999, 0.0
      %v8699 = vmax.f32 %v8001, 0.0
      %v8700 = vmax.f32 %v8352, 0.0
      %v8701 = vmax.f32 %v8354, 0.0
      %v8702 = vmax.f32 %v7297, 0.0
      %v8703 = vmax.f32 %v7299, 0.0
      %v8704 = vmax.f32 %v7650, 0.0
      %v8705 = vmax.f32 %v7652, 0.0
      %v8706 = vmax.f32 %v8003, 0.0
      %v8707 = vmax.f32 %v8005, 0.0
      %v8708 = vmax.f32 %v8356, 0.0
      %v8709 = vmax.f32 %v8358, 0.0
      %v8710 = vmax.f32 %v7303, 0.0
      %v8711 = vmax.f32 %v7305, 0.0
      %v8712 = vmax.f32 %v7656, 0.0
      %v8713 = vmax.f32 %v7658, 0.0
      %v8714 = vmax.f32 %v8009, 0.0
      %v8715 = vmax.f32 %v8011, 0.0
      %v8716 = vmax.f32 %v8362, 0.0
      %v8717 = vmax.f32 %v8364, 0.0
      %v8718 = vmax.f32 %v7307, 0.0
      %v8719 = vmax.f32 %v7309, 0.0
      %v8720 = vmax.f32 %v7660, 0.0
      %v8721 = vmax.f32 %v7662, 0.0
      %v8722 = vmax.f32 %v8013, 0.0
      %v8723 = vmax.f32 %v8015, 0.0
      %v8724 = vmax.f32 %v8366, 0.0
      %v8725 = vmax.f32 %v8368, 0.0
      %v8726 = vmax.f32 %v7313, 0.0
      %v8727 = vmax.f32 %v7315, 0.0
      %v8728 = vmax.f32 %v7666, 0.0
      %v8729 = vmax.f32 %v7668, 0.0
      %v8730 = vmax.f32 %v8019, 0.0
      %v8731 = vmax.f32 %v8021, 0.0
      %v8732 = vmax.f32 %v8372, 0.0
      %v8733 = vmax.f32 %v8374, 0.0
      %v8734 = vmax.f32 %v7317, 0.0
      %v8735 = vmax.f32 %v7319, 0.0
      %v8736 = vmax.f32 %v7670, 0.0
      %v8737 = vmax.f32 %v7672, 0.0
      %v8738 = vmax.f32 %v8023, 0.0
      %v8739 = vmax.f32 %v8025, 0.0
      %v8740 = vmax.f32 %v8376, 0.0
      %v8741 = vmax.f32 %v8378, 0.0
      %v8742 = vmax.f32 %v7323, 0.0
      %v8743 = vmax.f32 %v7325, 0.0
      %v8744 = vmax.f32 %v7676, 0.0
      %v8745 = vmax.f32 %v7678, 0.0
      %v8746 = vmax.f32 %v8029, 0.0
      %v8747 = vmax.f32 %v8031, 0.0
      %v8748 = vmax.f32 %v8382, 0.0
      %v8749 = vmax.f32 %v8384, 0.0
      %v8750 = vmax.f32 %v7327, 0.0
      %v8751 = vmax.f32 %v7329, 0.0
      %v8752 = vmax.f32 %v7680, 0.0
      %v8753 = vmax.f32 %v7682, 0.0
      %v8754 = vmax.f32 %v8033, 0.0
      %v8755 = vmax.f32 %v8035, 0.0
      %v8756 = vmax.f32 %v8386, 0.0
      %v8757 = vmax.f32 %v8388, 0.0
      %v8758 = vmax.f32 %v7333, 0.0
      %v8759 = vmax.f32 %v7335, 0.0
      %v8760 = vmax.f32 %v7686, 0.0
      %v8761 = vmax.f32 %v7688, 0.0
      %v8762 = vmax.f32 %v8039, 0.0
      %v8763 = vmax.f32 %v8041, 0.0
      %v8764 = vmax.f32 %v8392, 0.0
      %v8765 = vmax.f32 %v8394, 0.0
      %v8766 = vmax.f32 %v7337, 0.0
      %v8767 = vmax.f32 %v7339, 0.0
      %v8768 = vmax.f32 %v7690, 0.0
      %v8769 = vmax.f32 %v7692, 0.0
      %v8770 = vmax.f32 %v8043, 0.0
      %v8771 = vmax.f32 %v8045, 0.0
      %v8772 = vmax.f32 %v8396, 0.0
      %v8773 = vmax.f32 %v8398, 0.0
      %v8774 = vmax.f32 %v7343, 0.0
      %v8775 = vmax.f32 %v7345, 0.0
      %v8776 = vmax.f32 %v7696, 0.0
      %v8777 = vmax.f32 %v7698, 0.0
      %v8778 = vmax.f32 %v8049, 0.0
      %v8779 = vmax.f32 %v8051, 0.0
      %v8780 = vmax.f32 %v8402, 0.0
      %v8781 = vmax.f32 %v8404, 0.0
      %v8782 = vmax.f32 %v7347, 0.0
      %v8783 = vmax.f32 %v7349, 0.0
      %v8784 = vmax.f32 %v7700, 0.0
      %v8785 = vmax.f32 %v7702, 0.0
      %v8786 = vmax.f32 %v8053, 0.0
      %v8787 = vmax.f32 %v8055, 0.0
      %v8788 = vmax.f32 %v8406, 0.0
      %v8789 = vmax.f32 %v8408, 0.0
      %v8790 = vmax.f32 %v7353, 0.0
      %v8791 = vmax.f32 %v7355, 0.0
      %v8792 = vmax.f32 %v7706, 0.0
      %v8793 = vmax.f32 %v7708, 0.0
      %v8794 = vmax.f32 %v8059, 0.0
      %v8795 = vmax.f32 %v8061, 0.0
      %v8796 = vmax.f32 %v8412, 0.0
      %v8797 = vmax.f32 %v8414, 0.0
      %v8798 = vmax.f32 %v7357, 0.0
      %v8799 = vmax.f32 %v7359, 0.0
      %v8800 = vmax.f32 %v7710, 0.0
      %v8801 = vmax.f32 %v7712, 0.0
      %v8802 = vmax.f32 %v8063, 0.0
      %v8803 = vmax.f32 %v8065, 0.0
      %v8804 = vmax.f32 %v8416, 0.0
      %v8805 = vmax.f32 %v8418, 0.0
      %v8806 = vmax.f32 %v7363, 0.0
      %v8807 = vmax.f32 %v7365, 0.0
      %v8808 = vmax.f32 %v7716, 0.0
      %v8809 = vmax.f32 %v7718, 0.0
      %v8810 = vmax.f32 %v8069, 0.0
      %v8811 = vmax.f32 %v8071, 0.0
      %v8812 = vmax.f32 %v8422, 0.0
      %v8813 = vmax.f32 %v8424, 0.0
      %v8814 = vmax.f32 %v7367, 0.0
      %v8815 = vmax.f32 %v7369, 0.0
      %v8816 = vmax.f32 %v7720, 0.0
      %v8817 = vmax.f32 %v7722, 0.0
      %v8818 = vmax.f32 %v8073, 0.0
      %v8819 = vmax.f32 %v8075, 0.0
      %v8820 = vmax.f32 %v8426, 0.0
      %v8821 = vmax.f32 %v8428, 0.0
      %v8822 = vmax.f32 %v7373, 0.0
      %v8823 = vmax.f32 %v7375, 0.0
      %v8824 = vmax.f32 %v7726, 0.0
      %v8825 = vmax.f32 %v7728, 0.0
      %v8826 = vmax.f32 %v8079, 0.0
      %v8827 = vmax.f32 %v8081, 0.0
      %v8828 = vmax.f32 %v8432, 0.0
      %v8829 = vmax.f32 %v8434, 0.0
      %v8830 = vmax.f32 %v7377, 0.0
      %v8831 = vmax.f32 %v7379, 0.0
      %v8832 = vmax.f32 %v7730, 0.0
      %v8833 = vmax.f32 %v7732, 0.0
      %v8834 = vmax.f32 %v8083, 0.0
      %v8835 = vmax.f32 %v8085, 0.0
      %v8836 = vmax.f32 %v8436, 0.0
      %v8837 = vmax.f32 %v8438, 0.0
      %v8838 = vmax.f32 %v7383, 0.0
      %v8839 = vmax.f32 %v7385, 0.0
      %v8840 = vmax.f32 %v7736, 0.0
      %v8841 = vmax.f32 %v7738, 0.0
      %v8842 = vmax.f32 %v8089, 0.0
      %v8843 = vmax.f32 %v8091, 0.0
      %v8844 = vmax.f32 %v8442, 0.0
      %v8845 = vmax.f32 %v8444, 0.0
      %v8846 = vmax.f32 %v7387, 0.0
      %v8847 = vmax.f32 %v7389, 0.0
      %v8848 = vmax.f32 %v7740, 0.0
      %v8849 = vmax.f32 %v7742, 0.0
      %v8850 = vmax.f32 %v8093, 0.0
      %v8851 = vmax.f32 %v8095, 0.0
      %v8852 = vmax.f32 %v8446, 0.0
      %v8853 = vmax.f32 %v8448, 0.0
      %v8854 = vmax.f32 %v7393, 0.0
      %v8855 = vmax.f32 %v7395, 0.0
      %v8856 = vmax.f32 %v7746, 0.0
      %v8857 = vmax.f32 %v7748, 0.0
      %v8858 = vmax.f32 %v8099, 0.0
      %v8859 = vmax.f32 %v8101, 0.0
      %v8860 = vmax.f32 %v8452, 0.0
      %v8861 = vmax.f32 %v8454, 0.0
      %v8862 = vmax.f32 %v7397, 0.0
      %v8863 = vmax.f32 %v7399, 0.0
      %v8864 = vmax.f32 %v7750, 0.0
      %v8865 = vmax.f32 %v7752, 0.0
      %v8866 = vmax.f32 %v8103, 0.0
      %v8867 = vmax.f32 %v8105, 0.0
      %v8868 = vmax.f32 %v8456, 0.0
      %v8869 = vmax.f32 %v8458, 0.0
      %v8870 = vmax.f32 %v7403, 0.0
      %v8871 = vmax.f32 %v7405, 0.0
      %v8872 = vmax.f32 %v7756, 0.0
      %v8873 = vmax.f32 %v7758, 0.0
      %v8874 = vmax.f32 %v8109, 0.0
      %v8875 = vmax.f32 %v8111, 0.0
      %v8876 = vmax.f32 %v8462, 0.0
      %v8877 = vmax.f32 %v8464, 0.0
      %v8878 = vmax.f32 %v7407, 0.0
      %v8879 = vmax.f32 %v7409, 0.0
      %v8880 = vmax.f32 %v7760, 0.0
      %v8881 = vmax.f32 %v7762, 0.0
      %v8882 = vmax.f32 %v8113, 0.0
      %v8883 = vmax.f32 %v8115, 0.0
      %v8884 = vmax.f32 %v8466, 0.0
      %v8885 = vmax.f32 %v8468, 0.0
      %v8886 = vmax.f32 %v7413, 0.0
      %v8887 = vmax.f32 %v7415, 0.0
      %v8888 = vmax.f32 %v7766, 0.0
      %v8889 = vmax.f32 %v7768, 0.0
      %v8890 = vmax.f32 %v8119, 0.0
      %v8891 = vmax.f32 %v8121, 0.0
      %v8892 = vmax.f32 %v8472, 0.0
      %v8893 = vmax.f32 %v8474, 0.0
      %v8894 = vmax.f32 %v7417, 0.0
      %v8895 = vmax.f32 %v7419, 0.0
      %v8896 = vmax.f32 %v7770, 0.0
      %v8897 = vmax.f32 %v7772, 0.0
      %v8898 = vmax.f32 %v8123, 0.0
      %v8899 = vmax.f32 %v8125, 0.0
      %v8900 = vmax.f32 %v8476, 0.0
      %v8901 = vmax.f32 %v8478, 0.0
      %v8902 = vmax.f32 %v7423, 0.0
      %v8903 = vmax.f32 %v7425, 0.0
      %v8904 = vmax.f32 %v7776, 0.0
      %v8905 = vmax.f32 %v7778, 0.0
      %v8906 = vmax.f32 %v8129, 0.0
      %v8907 = vmax.f32 %v8131, 0.0
      %v8908 = vmax.f32 %v8482, 0.0
      %v8909 = vmax.f32 %v8484, 0.0
      %v8910 = vmax.f32 %v7427, 0.0
      %v8911 = vmax.f32 %v7429, 0.0
      %v8912 = vmax.f32 %v7780, 0.0
      %v8913 = vmax.f32 %v7782, 0.0
      %v8914 = vmax.f32 %v8133, 0.0
      %v8915 = vmax.f32 %v8135, 0.0
      %v8916 = vmax.f32 %v8486, 0.0
      %v8917 = vmax.f32 %v8488, 0.0
      %v8918 = vmax.f32 %v7433, 0.0
      %v8919 = vmax.f32 %v7435, 0.0
      %v8920 = vmax.f32 %v7786, 0.0
      %v8921 = vmax.f32 %v7788, 0.0
      %v8922 = vmax.f32 %v8139, 0.0
      %v8923 = vmax.f32 %v8141, 0.0
      %v8924 = vmax.f32 %v8492, 0.0
      %v8925 = vmax.f32 %v8494, 0.0
      %v8926 = vmax.f32 %v7437, 0.0
      %v8927 = vmax.f32 %v7439, 0.0
      %v8928 = vmax.f32 %v7790, 0.0
      %v8929 = vmax.f32 %v7792, 0.0
      %v8930 = vmax.f32 %v8143, 0.0
      %v8931 = vmax.f32 %v8145, 0.0
      %v8932 = vmax.f32 %v8496, 0.0
      %v8933 = vmax.f32 %v8498, 0.0
      %v8934 = vmax.f32 %v7443, 0.0
      %v8935 = vmax.f32 %v7445, 0.0
      %v8936 = vmax.f32 %v7796, 0.0
      %v8937 = vmax.f32 %v7798, 0.0
      %v8938 = vmax.f32 %v8149, 0.0
      %v8939 = vmax.f32 %v8151, 0.0
      %v8940 = vmax.f32 %v8502, 0.0
      %v8941 = vmax.f32 %v8504, 0.0
      %v8942 = vmax.f32 %v7447, 0.0
      %v8943 = vmax.f32 %v7449, 0.0
      %v8944 = vmax.f32 %v7800, 0.0
      %v8945 = vmax.f32 %v7802, 0.0
      %v8946 = vmax.f32 %v8153, 0.0
      %v8947 = vmax.f32 %v8155, 0.0
      %v8948 = vmax.f32 %v8506, 0.0
      %v8949 = vmax.f32 %v8508, 0.0
      %v8950 = vmax.f32 %v7453, 0.0
      %v8951 = vmax.f32 %v7455, 0.0
      %v8952 = vmax.f32 %v7806, 0.0
      %v8953 = vmax.f32 %v7808, 0.0
      %v8954 = vmax.f32 %v8159, 0.0
      %v8955 = vmax.f32 %v8161, 0.0
      %v8956 = vmax.f32 %v8512, 0.0
      %v8957 = vmax.f32 %v8514, 0.0
      %v8958 = vmax.f32 %v7457, 0.0
      %v8959 = vmax.f32 %v7459, 0.0
      %v8960 = vmax.f32 %v7810, 0.0
      %v8961 = vmax.f32 %v7812, 0.0
      %v8962 = vmax.f32 %v8163, 0.0
      %v8963 = vmax.f32 %v8165, 0.0
      %v8964 = vmax.f32 %v8516, 0.0
      %v8965 = vmax.f32 %v8518, 0.0
      %v8966 = vmax.f32 %v7463, 0.0
      %v8967 = vmax.f32 %v7465, 0.0
      %v8968 = vmax.f32 %v7816, 0.0
      %v8969 = vmax.f32 %v7818, 0.0
      %v8970 = vmax.f32 %v8169, 0.0
      %v8971 = vmax.f32 %v8171, 0.0
      %v8972 = vmax.f32 %v8522, 0.0
      %v8973 = vmax.f32 %v8524, 0.0
      %v8974 = vmax.f32 %v7467, 0.0
      %v8975 = vmax.f32 %v7469, 0.0
      %v8976 = vmax.f32 %v7820, 0.0
      %v8977 = vmax.f32 %v7822, 0.0
      %v8978 = vmax.f32 %v8173, 0.0
      %v8979 = vmax.f32 %v8175, 0.0
      %v8980 = vmax.f32 %v8526, 0.0
      %v8981 = vmax.f32 %v8528, 0.0
      %v8982 = vmax.f32 %v7473, 0.0
      %v8983 = vmax.f32 %v7475, 0.0
      %v8984 = vmax.f32 %v7826, 0.0
      %v8985 = vmax.f32 %v7828, 0.0
      %v8986 = vmax.f32 %v8179, 0.0
      %v8987 = vmax.f32 %v8181, 0.0
      %v8988 = vmax.f32 %v8532, 0.0
      %v8989 = vmax.f32 %v8534, 0.0
      %v8990 = vmax.f32 %v7477, 0.0
      %v8991 = vmax.f32 %v7479, 0.0
      %v8992 = vmax.f32 %v7830, 0.0
      %v8993 = vmax.f32 %v7832, 0.0
      %v8994 = vmax.f32 %v8183, 0.0
      %v8995 = vmax.f32 %v8185, 0.0
      %v8996 = vmax.f32 %v8536, 0.0
      %v8997 = vmax.f32 %v8538, 0.0
      %v8998 = vmax.f32 %v7483, 0.0
      %v8999 = vmax.f32 %v7485, 0.0
      %v9000 = vmax.f32 %v7836, 0.0
      %v9001 = vmax.f32 %v7838, 0.0
      %v9002 = vmax.f32 %v8189, 0.0
      %v9003 = vmax.f32 %v8191, 0.0
      %v9004 = vmax.f32 %v8542, 0.0
      %v9005 = vmax.f32 %v8544, 0.0
      %v9006 = vmax.f32 %v7487, 0.0
      %v9007 = vmax.f32 %v7489, 0.0
      %v9008 = vmax.f32 %v7840, 0.0
      %v9009 = vmax.f32 %v7842, 0.0
      %v9010 = vmax.f32 %v8193, 0.0
      %v9011 = vmax.f32 %v8195, 0.0
      %v9012 = vmax.f32 %v8546, 0.0
      %v9013 = vmax.f32 %v8548, 0.0
      %v9014 = vmax.f32 %v7493, 0.0
      %v9015 = vmax.f32 %v7495, 0.0
      %v9016 = vmax.f32 %v7846, 0.0
      %v9017 = vmax.f32 %v7848, 0.0
      %v9018 = vmax.f32 %v8199, 0.0
      %v9019 = vmax.f32 %v8201, 0.0
      %v9020 = vmax.f32 %v8552, 0.0
      %v9021 = vmax.f32 %v8554, 0.0
      %v9022 = vmax.f32 %v7497, 0.0
      %v9023 = vmax.f32 %v7499, 0.0
      %v9024 = vmax.f32 %v7850, 0.0
      %v9025 = vmax.f32 %v7852, 0.0
      %v9026 = vmax.f32 %v8203, 0.0
      %v9027 = vmax.f32 %v8205, 0.0
      %v9028 = vmax.f32 %v8556, 0.0
      %v9029 = vmax.f32 %v8558, 0.0
      %v9030 = vmax.f32 %v7503, 0.0
      %v9031 = vmax.f32 %v7505, 0.0
      %v9032 = vmax.f32 %v7856, 0.0
      %v9033 = vmax.f32 %v7858, 0.0
      %v9034 = vmax.f32 %v8209, 0.0
      %v9035 = vmax.f32 %v8211, 0.0
      %v9036 = vmax.f32 %v8562, 0.0
      %v9037 = vmax.f32 %v8564, 0.0
      %v9038 = vmax.f32 %v7507, 0.0
      %v9039 = vmax.f32 %v7509, 0.0
      %v9040 = vmax.f32 %v7860, 0.0
      %v9041 = vmax.f32 %v7862, 0.0
      %v9042 = vmax.f32 %v8213, 0.0
      %v9043 = vmax.f32 %v8215, 0.0
      %v9044 = vmax.f32 %v8566, 0.0
      %v9045 = vmax.f32 %v8568, 0.0
      %v9046 = vmax.f32 %v7513, 0.0
      %v9047 = vmax.f32 %v7515, 0.0
      %v9048 = vmax.f32 %v7866, 0.0
      %v9049 = vmax.f32 %v7868, 0.0
      %v9050 = vmax.f32 %v8219, 0.0
      %v9051 = vmax.f32 %v8221, 0.0
      %v9052 = vmax.f32 %v8572, 0.0
      %v9053 = vmax.f32 %v8574, 0.0
      %v9054 = vmax.f32 %v7517, 0.0
      %v9055 = vmax.f32 %v7519, 0.0
      %v9056 = vmax.f32 %v7870, 0.0
      %v9057 = vmax.f32 %v7872, 0.0
      %v9058 = vmax.f32 %v8223, 0.0
      %v9059 = vmax.f32 %v8225, 0.0
      %v9060 = vmax.f32 %v8576, 0.0
      %v9061 = vmax.f32 %v8578, 0.0
      %v9062 = vmax.f32 %v7523, 0.0
      %v9063 = vmax.f32 %v7525, 0.0
      %v9064 = vmax.f32 %v7876, 0.0
      %v9065 = vmax.f32 %v7878, 0.0
      %v9066 = vmax.f32 %v8229, 0.0
      %v9067 = vmax.f32 %v8231, 0.0
      %v9068 = vmax.f32 %v8582, 0.0
      %v9069 = vmax.f32 %v8584, 0.0
      %v9070 = vmax.f32 %v7527, 0.0
      %v9071 = vmax.f32 %v7529, 0.0
      %v9072 = vmax.f32 %v7880, 0.0
      %v9073 = vmax.f32 %v7882, 0.0
      %v9074 = vmax.f32 %v8233, 0.0
      %v9075 = vmax.f32 %v8235, 0.0
      %v9076 = vmax.f32 %v8586, 0.0
      %v9077 = vmax.f32 %v8588, 0.0
      %v9078 = vmax.f32 %v7533, 0.0
      %v9079 = vmax.f32 %v7535, 0.0
      %v9080 = vmax.f32 %v7886, 0.0
      %v9081 = vmax.f32 %v7888, 0.0
      %v9082 = vmax.f32 %v8239, 0.0
      %v9083 = vmax.f32 %v8241, 0.0
      %v9084 = vmax.f32 %v8592, 0.0
      %v9085 = vmax.f32 %v8594, 0.0
      %v9086 = vmax.f32 %v7537, 0.0
      %v9087 = vmax.f32 %v7539, 0.0
      %v9088 = vmax.f32 %v7890, 0.0
      %v9089 = vmax.f32 %v7892, 0.0
      %v9090 = vmax.f32 %v8243, 0.0
      %v9091 = vmax.f32 %v8245, 0.0
      %v9092 = vmax.f32 %v8596, 0.0
      %v9093 = vmax.f32 %v8598, 0.0
      %v9094 = vmax.f32 %v7543, 0.0
      %v9095 = vmax.f32 %v7545, 0.0
      %v9096 = vmax.f32 %v7896, 0.0
      %v9097 = vmax.f32 %v7898, 0.0
      %v9098 = vmax.f32 %v8249, 0.0
      %v9099 = vmax.f32 %v8251, 0.0
      %v9100 = vmax.f32 %v8602, 0.0
      %v9101 = vmax.f32 %v8604, 0.0
      %v9102 = vmax.f32 %v7547, 0.0
      %v9103 = vmax.f32 %v7549, 0.0
      %v9104 = vmax.f32 %v7900, 0.0
      %v9105 = vmax.f32 %v7902, 0.0
      %v9106 = vmax.f32 %v8253, 0.0
      %v9107 = vmax.f32 %v8255, 0.0
      %v9108 = vmax.f32 %v8606, 0.0
      %v9109 = vmax.f32 %v8608, 0.0
      %v9110 = vmax.f32 %v7553, 0.0
      %v9111 = vmax.f32 %v7555, 0.0
      %v9112 = vmax.f32 %v7906, 0.0
      %v9113 = vmax.f32 %v7908, 0.0
      %v9114 = vmax.f32 %v8259, 0.0
      %v9115 = vmax.f32 %v8261, 0.0
      %v9116 = vmax.f32 %v8612, 0.0
      %v9117 = vmax.f32 %v8614, 0.0
      %v9118 = vmax.f32 %v7557, 0.0
      %v9119 = vmax.f32 %v7559, 0.0
      %v9120 = vmax.f32 %v7910, 0.0
      %v9121 = vmax.f32 %v7912, 0.0
      %v9122 = vmax.f32 %v8263, 0.0
      %v9123 = vmax.f32 %v8265, 0.0
      %v9124 = vmax.f32 %v8616, 0.0
      %v9125 = vmax.f32 %v8618, 0.0
      %v9126 = vmax.f32 %v7563, 0.0
      %v9127 = vmax.f32 %v7565, 0.0
      %v9128 = vmax.f32 %v7916, 0.0
      %v9129 = vmax.f32 %v7918, 0.0
      %v9130 = vmax.f32 %v8269, 0.0
      %v9131 = vmax.f32 %v8271, 0.0
      %v9132 = vmax.f32 %v8622, 0.0
      %v9133 = vmax.f32 %v8624, 0.0
      %v9134 = vmax.f32 %v7567, 0.0
      %v9135 = vmax.f32 %v7569, 0.0
      %v9136 = vmax.f32 %v7920, 0.0
      %v9137 = vmax.f32 %v7922, 0.0
      %v9138 = vmax.f32 %v8273, 0.0
      %v9139 = vmax.f32 %v8275, 0.0
      %v9140 = vmax.f32 %v8626, 0.0
      %v9141 = vmax.f32 %v8628, 0.0
      %v9142 = vpack.c.bf16 %v8638, %v8630
      %v9143 = vpack.c.bf16 %v8639, %v8631
      %v9144 = vpack.c.bf16 %v8640, %v8632
      %v9145 = vpack.c.bf16 %v8641, %v8633
      %v9146 = vpack.c.bf16 %v8642, %v8634
      %v9147 = vpack.c.bf16 %v8643, %v8635
      %v9148 = vpack.c.bf16 %v8644, %v8636
      %v9149 = vpack.c.bf16 %v8645, %v8637
      %v9150 = vpack.c.bf16 %v8654, %v8646
      %v9151 = vpack.c.bf16 %v8655, %v8647
      %v9152 = vpack.c.bf16 %v8656, %v8648
      %v9153 = vpack.c.bf16 %v8657, %v8649
      %v9154 = vpack.c.bf16 %v8658, %v8650
      %v9155 = vpack.c.bf16 %v8659, %v8651
      %v9156 = vpack.c.bf16 %v8660, %v8652
      %v9157 = vpack.c.bf16 %v8661, %v8653
      %v9158 = vpack.c.bf16 %v8670, %v8662
      %v9159 = vpack.c.bf16 %v8671, %v8663
      %v9160 = vpack.c.bf16 %v8672, %v8664
      %v9161 = vpack.c.bf16 %v8673, %v8665
      %v9162 = vpack.c.bf16 %v8674, %v8666
      %v9163 = vpack.c.bf16 %v8675, %v8667
      %v9164 = vpack.c.bf16 %v8676, %v8668
      %v9165 = vpack.c.bf16 %v8677, %v8669
      %v9166 = vpack.c.bf16 %v8686, %v8678
      %v9167 = vpack.c.bf16 %v8687, %v8679
      %v9168 = vpack.c.bf16 %v8688, %v8680
      %v9169 = vpack.c.bf16 %v8689, %v8681
      %v9170 = vpack.c.bf16 %v8690, %v8682
      %v9171 = vpack.c.bf16 %v8691, %v8683
      %v9172 = vpack.c.bf16 %v8692, %v8684
      %v9173 = vpack.c.bf16 %v8693, %v8685
      %v9174 = vpack.c.bf16 %v8702, %v8694
      %v9175 = vpack.c.bf16 %v8703, %v8695
      %v9176 = vpack.c.bf16 %v8704, %v8696
      %v9177 = vpack.c.bf16 %v8705, %v8697
      %v9178 = vpack.c.bf16 %v8706, %v8698
      %v9179 = vpack.c.bf16 %v8707, %v8699
      %v9180 = vpack.c.bf16 %v8708, %v8700
      %v9181 = vpack.c.bf16 %v8709, %v8701
      %v9182 = vpack.c.bf16 %v8718, %v8710
      %v9183 = vpack.c.bf16 %v8719, %v8711
      %v9184 = vpack.c.bf16 %v8720, %v8712
      %v9185 = vpack.c.bf16 %v8721, %v8713
      %v9186 = vpack.c.bf16 %v8722, %v8714
      %v9187 = vpack.c.bf16 %v8723, %v8715
      %v9188 = vpack.c.bf16 %v8724, %v8716
      %v9189 = vpack.c.bf16 %v8725, %v8717
      %v9190 = vpack.c.bf16 %v8734, %v8726
      %v9191 = vpack.c.bf16 %v8735, %v8727
      %v9192 = vpack.c.bf16 %v8736, %v8728
      %v9193 = vpack.c.bf16 %v8737, %v8729
      %v9194 = vpack.c.bf16 %v8738, %v8730
      %v9195 = vpack.c.bf16 %v8739, %v8731
      %v9196 = vpack.c.bf16 %v8740, %v8732
      %v9197 = vpack.c.bf16 %v8741, %v8733
      %v9198 = vpack.c.bf16 %v8750, %v8742
      %v9199 = vpack.c.bf16 %v8751, %v8743
      %v9200 = vpack.c.bf16 %v8752, %v8744
      %v9201 = vpack.c.bf16 %v8753, %v8745
      %v9202 = vpack.c.bf16 %v8754, %v8746
      %v9203 = vpack.c.bf16 %v8755, %v8747
      %v9204 = vpack.c.bf16 %v8756, %v8748
      %v9205 = vpack.c.bf16 %v8757, %v8749
      %v9206 = vpack.c.bf16 %v8766, %v8758
      %v9207 = vpack.c.bf16 %v8767, %v8759
      %v9208 = vpack.c.bf16 %v8768, %v8760
      %v9209 = vpack.c.bf16 %v8769, %v8761
      %v9210 = vpack.c.bf16 %v8770, %v8762
      %v9211 = vpack.c.bf16 %v8771, %v8763
      %v9212 = vpack.c.bf16 %v8772, %v8764
      %v9213 = vpack.c.bf16 %v8773, %v8765
      %v9214 = vpack.c.bf16 %v8782, %v8774
      %v9215 = vpack.c.bf16 %v8783, %v8775
      %v9216 = vpack.c.bf16 %v8784, %v8776
      %v9217 = vpack.c.bf16 %v8785, %v8777
      %v9218 = vpack.c.bf16 %v8786, %v8778
      %v9219 = vpack.c.bf16 %v8787, %v8779
      %v9220 = vpack.c.bf16 %v8788, %v8780
      %v9221 = vpack.c.bf16 %v8789, %v8781
      %v9222 = vpack.c.bf16 %v8798, %v8790
      %v9223 = vpack.c.bf16 %v8799, %v8791
      %v9224 = vpack.c.bf16 %v8800, %v8792
      %v9225 = vpack.c.bf16 %v8801, %v8793
      %v9226 = vpack.c.bf16 %v8802, %v8794
      %v9227 = vpack.c.bf16 %v8803, %v8795
      %v9228 = vpack.c.bf16 %v8804, %v8796
      %v9229 = vpack.c.bf16 %v8805, %v8797
      %v9230 = vpack.c.bf16 %v8814, %v8806
      %v9231 = vpack.c.bf16 %v8815, %v8807
      %v9232 = vpack.c.bf16 %v8816, %v8808
      %v9233 = vpack.c.bf16 %v8817, %v8809
      %v9234 = vpack.c.bf16 %v8818, %v8810
      %v9235 = vpack.c.bf16 %v8819, %v8811
      %v9236 = vpack.c.bf16 %v8820, %v8812
      %v9237 = vpack.c.bf16 %v8821, %v8813
      %v9238 = vpack.c.bf16 %v8830, %v8822
      %v9239 = vpack.c.bf16 %v8831, %v8823
      %v9240 = vpack.c.bf16 %v8832, %v8824
      %v9241 = vpack.c.bf16 %v8833, %v8825
      %v9242 = vpack.c.bf16 %v8834, %v8826
      %v9243 = vpack.c.bf16 %v8835, %v8827
      %v9244 = vpack.c.bf16 %v8836, %v8828
      %v9245 = vpack.c.bf16 %v8837, %v8829
      %v9246 = vpack.c.bf16 %v8846, %v8838
      %v9247 = vpack.c.bf16 %v8847, %v8839
      %v9248 = vpack.c.bf16 %v8848, %v8840
      %v9249 = vpack.c.bf16 %v8849, %v8841
      %v9250 = vpack.c.bf16 %v8850, %v8842
      %v9251 = vpack.c.bf16 %v8851, %v8843
      %v9252 = vpack.c.bf16 %v8852, %v8844
      %v9253 = vpack.c.bf16 %v8853, %v8845
      %v9254 = vpack.c.bf16 %v8862, %v8854
      %v9255 = vpack.c.bf16 %v8863, %v8855
      %v9256 = vpack.c.bf16 %v8864, %v8856
      %v9257 = vpack.c.bf16 %v8865, %v8857
      %v9258 = vpack.c.bf16 %v8866, %v8858
      %v9259 = vpack.c.bf16 %v8867, %v8859
      %v9260 = vpack.c.bf16 %v8868, %v8860
      %v9261 = vpack.c.bf16 %v8869, %v8861
      %v9262 = vpack.c.bf16 %v8878, %v8870
      %v9263 = vpack.c.bf16 %v8879, %v8871
      %v9264 = vpack.c.bf16 %v8880, %v8872
      %v9265 = vpack.c.bf16 %v8881, %v8873
      %v9266 = vpack.c.bf16 %v8882, %v8874
      %v9267 = vpack.c.bf16 %v8883, %v8875
      %v9268 = vpack.c.bf16 %v8884, %v8876
      %v9269 = vpack.c.bf16 %v8885, %v8877
      %v9270 = vpack.c.bf16 %v8894, %v8886
      %v9271 = vpack.c.bf16 %v8895, %v8887
      %v9272 = vpack.c.bf16 %v8896, %v8888
      %v9273 = vpack.c.bf16 %v8897, %v8889
      %v9274 = vpack.c.bf16 %v8898, %v8890
      %v9275 = vpack.c.bf16 %v8899, %v8891
      %v9276 = vpack.c.bf16 %v8900, %v8892
      %v9277 = vpack.c.bf16 %v8901, %v8893
      %v9278 = vpack.c.bf16 %v8910, %v8902
      %v9279 = vpack.c.bf16 %v8911, %v8903
      %v9280 = vpack.c.bf16 %v8912, %v8904
      %v9281 = vpack.c.bf16 %v8913, %v8905
      %v9282 = vpack.c.bf16 %v8914, %v8906
      %v9283 = vpack.c.bf16 %v8915, %v8907
      %v9284 = vpack.c.bf16 %v8916, %v8908
      %v9285 = vpack.c.bf16 %v8917, %v8909
      %v9286 = vpack.c.bf16 %v8926, %v8918
      %v9287 = vpack.c.bf16 %v8927, %v8919
      %v9288 = vpack.c.bf16 %v8928, %v8920
      %v9289 = vpack.c.bf16 %v8929, %v8921
      %v9290 = vpack.c.bf16 %v8930, %v8922
      %v9291 = vpack.c.bf16 %v8931, %v8923
      %v9292 = vpack.c.bf16 %v8932, %v8924
      %v9293 = vpack.c.bf16 %v8933, %v8925
      %v9294 = vpack.c.bf16 %v8942, %v8934
      %v9295 = vpack.c.bf16 %v8943, %v8935
      %v9296 = vpack.c.bf16 %v8944, %v8936
      %v9297 = vpack.c.bf16 %v8945, %v8937
      %v9298 = vpack.c.bf16 %v8946, %v8938
      %v9299 = vpack.c.bf16 %v8947, %v8939
      %v9300 = vpack.c.bf16 %v8948, %v8940
      %v9301 = vpack.c.bf16 %v8949, %v8941
      %v9302 = vpack.c.bf16 %v8958, %v8950
      %v9303 = vpack.c.bf16 %v8959, %v8951
      %v9304 = vpack.c.bf16 %v8960, %v8952
      %v9305 = vpack.c.bf16 %v8961, %v8953
      %v9306 = vpack.c.bf16 %v8962, %v8954
      %v9307 = vpack.c.bf16 %v8963, %v8955
      %v9308 = vpack.c.bf16 %v8964, %v8956
      %v9309 = vpack.c.bf16 %v8965, %v8957
      %v9310 = vpack.c.bf16 %v8974, %v8966
      %v9311 = vpack.c.bf16 %v8975, %v8967
      %v9312 = vpack.c.bf16 %v8976, %v8968
      %v9313 = vpack.c.bf16 %v8977, %v8969
      %v9314 = vpack.c.bf16 %v8978, %v8970
      %v9315 = vpack.c.bf16 %v8979, %v8971
      %v9316 = vpack.c.bf16 %v8980, %v8972
      %v9317 = vpack.c.bf16 %v8981, %v8973
      %v9318 = vpack.c.bf16 %v8990, %v8982
      %v9319 = vpack.c.bf16 %v8991, %v8983
      %v9320 = vpack.c.bf16 %v8992, %v8984
      %v9321 = vpack.c.bf16 %v8993, %v8985
      %v9322 = vpack.c.bf16 %v8994, %v8986
      %v9323 = vpack.c.bf16 %v8995, %v8987
      %v9324 = vpack.c.bf16 %v8996, %v8988
      %v9325 = vpack.c.bf16 %v8997, %v8989
      %v9326 = vpack.c.bf16 %v9006, %v8998
      %v9327 = vpack.c.bf16 %v9007, %v8999
      %v9328 = vpack.c.bf16 %v9008, %v9000
      %v9329 = vpack.c.bf16 %v9009, %v9001
      %v9330 = vpack.c.bf16 %v9010, %v9002
      %v9331 = vpack.c.bf16 %v9011, %v9003
      %v9332 = vpack.c.bf16 %v9012, %v9004
      %v9333 = vpack.c.bf16 %v9013, %v9005
      %v9334 = vpack.c.bf16 %v9022, %v9014
      %v9335 = vpack.c.bf16 %v9023, %v9015
      %v9336 = vpack.c.bf16 %v9024, %v9016
      %v9337 = vpack.c.bf16 %v9025, %v9017
      %v9338 = vpack.c.bf16 %v9026, %v9018
      %v9339 = vpack.c.bf16 %v9027, %v9019
      %v9340 = vpack.c.bf16 %v9028, %v9020
      %v9341 = vpack.c.bf16 %v9029, %v9021
      %v9342 = vpack.c.bf16 %v9038, %v9030
      %v9343 = vpack.c.bf16 %v9039, %v9031
      %v9344 = vpack.c.bf16 %v9040, %v9032
      %v9345 = vpack.c.bf16 %v9041, %v9033
      %v9346 = vpack.c.bf16 %v9042, %v9034
      %v9347 = vpack.c.bf16 %v9043, %v9035
      %v9348 = vpack.c.bf16 %v9044, %v9036
      %v9349 = vpack.c.bf16 %v9045, %v9037
      %v9350 = vpack.c.bf16 %v9054, %v9046
      %v9351 = vpack.c.bf16 %v9055, %v9047
      %v9352 = vpack.c.bf16 %v9056, %v9048
      %v9353 = vpack.c.bf16 %v9057, %v9049
      %v9354 = vpack.c.bf16 %v9058, %v9050
      %v9355 = vpack.c.bf16 %v9059, %v9051
      %v9356 = vpack.c.bf16 %v9060, %v9052
      %v9357 = vpack.c.bf16 %v9061, %v9053
      %v9358 = vpack.c.bf16 %v9070, %v9062
      %v9359 = vpack.c.bf16 %v9071, %v9063
      %v9360 = vpack.c.bf16 %v9072, %v9064
      %v9361 = vpack.c.bf16 %v9073, %v9065
      %v9362 = vpack.c.bf16 %v9074, %v9066
      %v9363 = vpack.c.bf16 %v9075, %v9067
      %v9364 = vpack.c.bf16 %v9076, %v9068
      %v9365 = vpack.c.bf16 %v9077, %v9069
      %v9366 = vpack.c.bf16 %v9086, %v9078
      %v9367 = vpack.c.bf16 %v9087, %v9079
      %v9368 = vpack.c.bf16 %v9088, %v9080
      %v9369 = vpack.c.bf16 %v9089, %v9081
      %v9370 = vpack.c.bf16 %v9090, %v9082
      %v9371 = vpack.c.bf16 %v9091, %v9083
      %v9372 = vpack.c.bf16 %v9092, %v9084
      %v9373 = vpack.c.bf16 %v9093, %v9085
      %v9374 = vpack.c.bf16 %v9102, %v9094
      %v9375 = vpack.c.bf16 %v9103, %v9095
      %v9376 = vpack.c.bf16 %v9104, %v9096
      %v9377 = vpack.c.bf16 %v9105, %v9097
      %v9378 = vpack.c.bf16 %v9106, %v9098
      %v9379 = vpack.c.bf16 %v9107, %v9099
      %v9380 = vpack.c.bf16 %v9108, %v9100
      %v9381 = vpack.c.bf16 %v9109, %v9101
      %v9382 = vpack.c.bf16 %v9118, %v9110
      %v9383 = vpack.c.bf16 %v9119, %v9111
      %v9384 = vpack.c.bf16 %v9120, %v9112
      %v9385 = vpack.c.bf16 %v9121, %v9113
      %v9386 = vpack.c.bf16 %v9122, %v9114
      %v9387 = vpack.c.bf16 %v9123, %v9115
      %v9388 = vpack.c.bf16 %v9124, %v9116
      %v9389 = vpack.c.bf16 %v9125, %v9117
      %v9390 = vpack.c.bf16 %v9134, %v9126
      %v9391 = vpack.c.bf16 %v9135, %v9127
      %v9392 = vpack.c.bf16 %v9136, %v9128
      %v9393 = vpack.c.bf16 %v9137, %v9129
      %v9394 = vpack.c.bf16 %v9138, %v9130
      %v9395 = vpack.c.bf16 %v9139, %v9131
      %v9396 = vpack.c.bf16 %v9140, %v9132
      %v9397 = vpack.c.bf16 %v9141, %v9133
      %v9398 = vld [vmem:[%s8] sm:$0xf]
      %v9399 = vld [vmem:[%s8 + $0x4] sm:$0xf]
      %v9400 = vld [vmem:[%s8 + $0x8] sm:$0xf]
      %v9401 = vld [vmem:[%s8 + $0xc] sm:$0xf]
      %v9402 = vld [vmem:[%s8 + $0x10] sm:$0xf]
      %v9403 = vld [vmem:[%s8 + $0x14] sm:$0xf]
      %v9404 = vld [vmem:[%s8 + $0x18] sm:$0xf]
      %v9405 = vld [vmem:[%s8 + $0x1c] sm:$0xf]
      %v9406 = vld [vmem:[%s8 + $0x20] sm:$0xf]
      %v9407 = vld [vmem:[%s8 + $0x24] sm:$0xf]
      %v9408 = vld [vmem:[%s8 + $0x28] sm:$0xf]
      %v9409 = vld [vmem:[%s8 + $0x2c] sm:$0xf]
      %v9410 = vld [vmem:[%s8 + $0x30] sm:$0xf]
      %v9411 = vld [vmem:[%s8 + $0x34] sm:$0xf]
      %v9412 = vld [vmem:[%s8 + $0x38] sm:$0xf]
      %v9413 = vld [vmem:[%s8 + $0x3c] sm:$0xf]
      %v9414 = vld [vmem:[%s8 + $0x40] sm:$0xf]
      %v9415 = vld [vmem:[%s8 + $0x44] sm:$0xf]
      %v9416 = vld [vmem:[%s8 + $0x48] sm:$0xf]
      %v9417 = vld [vmem:[%s8 + $0x4c] sm:$0xf]
      %v9418 = vld [vmem:[%s8 + $0x50] sm:$0xf]
      %v9419 = vld [vmem:[%s8 + $0x54] sm:$0xf]
      %v9420 = vld [vmem:[%s8 + $0x58] sm:$0xf]
      %v9421 = vld [vmem:[%s8 + $0x5c] sm:$0xf]
      %v9422 = vld [vmem:[%s8 + $0x60] sm:$0xf]
      %v9423 = vld [vmem:[%s8 + $0x64] sm:$0xf]
      %v9424 = vld [vmem:[%s8 + $0x68] sm:$0xf]
      %v9425 = vld [vmem:[%s8 + $0x6c] sm:$0xf]
      %v9426 = vld [vmem:[%s8 + $0x70] sm:$0xf]
      %v9427 = vld [vmem:[%s8 + $0x74] sm:$0xf]
      %v9428 = vld [vmem:[%s8 + $0x78] sm:$0xf]
      %v9429 = vld [vmem:[%s8 + $0x7c] sm:$0xf]
      %v9430 = vld [vmem:[%s8 + $0x80] sm:$0xf]
      %v9431 = vld [vmem:[%s8 + $0x84] sm:$0xf]
      %v9432 = vld [vmem:[%s8 + $0x88] sm:$0xf]
      %v9433 = vld [vmem:[%s8 + $0x8c] sm:$0xf]
      %v9434 = vld [vmem:[%s8 + $0x90] sm:$0xf]
      %v9435 = vld [vmem:[%s8 + $0x94] sm:$0xf]
      %v9436 = vld [vmem:[%s8 + $0x98] sm:$0xf]
      %v9437 = vld [vmem:[%s8 + $0x9c] sm:$0xf]
      %v9438 = vld [vmem:[%s8 + $0xa0] sm:$0xf]
      %v9439 = vld [vmem:[%s8 + $0xa4] sm:$0xf]
      %v9440 = vld [vmem:[%s8 + $0xa8] sm:$0xf]
      %v9441 = vld [vmem:[%s8 + $0xac] sm:$0xf]
      %v9442 = vld [vmem:[%s8 + $0xb0] sm:$0xf]
      %v9443 = vld [vmem:[%s8 + $0xb4] sm:$0xf]
      %v9444 = vld [vmem:[%s8 + $0xb8] sm:$0xf]
      %v9445 = vld [vmem:[%s8 + $0xbc] sm:$0xf]
      %v9446 = vld [vmem:[%s8 + $0xc0] sm:$0xf]
      %v9447 = vld [vmem:[%s8 + $0xc4] sm:$0xf]
      %v9448 = vld [vmem:[%s8 + $0xc8] sm:$0xf]
      %v9449 = vld [vmem:[%s8 + $0xcc] sm:$0xf]
      %v9450 = vld [vmem:[%s8 + $0xd0] sm:$0xf]
      %v9451 = vld [vmem:[%s8 + $0xd4] sm:$0xf]
      %v9452 = vld [vmem:[%s8 + $0xd8] sm:$0xf]
      %v9453 = vld [vmem:[%s8 + $0xdc] sm:$0xf]
      %v9454 = vld [vmem:[%s8 + $0xe0] sm:$0xf]
      %v9455 = vld [vmem:[%s8 + $0xe4] sm:$0xf]
      %v9456 = vld [vmem:[%s8 + $0xe8] sm:$0xf]
      %v9457 = vld [vmem:[%s8 + $0xec] sm:$0xf]
      %v9458 = vld [vmem:[%s8 + $0xf0] sm:$0xf]
      %v9459 = vld [vmem:[%s8 + $0xf4] sm:$0xf]
      %v9460 = vld [vmem:[%s8 + $0xf8] sm:$0xf]
      %v9461 = vld [vmem:[%s8 + $0xfc] sm:$0xf]
      %v9462 = vld [vmem:[%s8 + $0x100] sm:$0xf]
      %v9463 = vld [vmem:[%s8 + $0x104] sm:$0xf]
      %v9464 = vld [vmem:[%s8 + $0x108] sm:$0xf]
      %v9465 = vld [vmem:[%s8 + $0x10c] sm:$0xf]
      %v9466 = vld [vmem:[%s8 + $0x110] sm:$0xf]
      %v9467 = vld [vmem:[%s8 + $0x114] sm:$0xf]
      %v9468 = vld [vmem:[%s8 + $0x118] sm:$0xf]
      %v9469 = vld [vmem:[%s8 + $0x11c] sm:$0xf]
      %v9470 = vld [vmem:[%s8 + $0x120] sm:$0xf]
      %v9471 = vld [vmem:[%s8 + $0x124] sm:$0xf]
      %v9472 = vld [vmem:[%s8 + $0x128] sm:$0xf]
      %v9473 = vld [vmem:[%s8 + $0x12c] sm:$0xf]
      %v9474 = vld [vmem:[%s8 + $0x130] sm:$0xf]
      %v9475 = vld [vmem:[%s8 + $0x134] sm:$0xf]
      %v9476 = vld [vmem:[%s8 + $0x138] sm:$0xf]
      %v9477 = vld [vmem:[%s8 + $0x13c] sm:$0xf]
      %v9478 = vld [vmem:[%s8 + $0x140] sm:$0xf]
      %v9479 = vld [vmem:[%s8 + $0x144] sm:$0xf]
      %v9480 = vld [vmem:[%s8 + $0x148] sm:$0xf]
      %v9481 = vld [vmem:[%s8 + $0x14c] sm:$0xf]
      %v9482 = vld [vmem:[%s8 + $0x150] sm:$0xf]
      %v9483 = vld [vmem:[%s8 + $0x154] sm:$0xf]
      %v9484 = vld [vmem:[%s8 + $0x158] sm:$0xf]
      %v9485 = vld [vmem:[%s8 + $0x15c] sm:$0xf]
      %v9486 = vld [vmem:[%s8 + $0x160] sm:$0xf]
      %v9487 = vld [vmem:[%s8 + $0x164] sm:$0xf]
      %v9488 = vld [vmem:[%s8 + $0x168] sm:$0xf]
      %v9489 = vld [vmem:[%s8 + $0x16c] sm:$0xf]
      %v9490 = vld [vmem:[%s8 + $0x170] sm:$0xf]
      %v9491 = vld [vmem:[%s8 + $0x174] sm:$0xf]
      %v9492 = vld [vmem:[%s8 + $0x178] sm:$0xf]
      %v9493 = vld [vmem:[%s8 + $0x17c] sm:$0xf]
      %v9494 = vld [vmem:[%s8 + $0x180] sm:$0xf]
      %v9495 = vld [vmem:[%s8 + $0x184] sm:$0xf]
      %v9496 = vld [vmem:[%s8 + $0x188] sm:$0xf]
      %v9497 = vld [vmem:[%s8 + $0x18c] sm:$0xf]
      %v9498 = vld [vmem:[%s8 + $0x190] sm:$0xf]
      %v9499 = vld [vmem:[%s8 + $0x194] sm:$0xf]
      %v9500 = vld [vmem:[%s8 + $0x198] sm:$0xf]
      %v9501 = vld [vmem:[%s8 + $0x19c] sm:$0xf]
      %v9502 = vld [vmem:[%s8 + $0x1a0] sm:$0xf]
      %v9503 = vld [vmem:[%s8 + $0x1a4] sm:$0xf]
      %v9504 = vld [vmem:[%s8 + $0x1a8] sm:$0xf]
      %v9505 = vld [vmem:[%s8 + $0x1ac] sm:$0xf]
      %v9506 = vld [vmem:[%s8 + $0x1b0] sm:$0xf]
      %v9507 = vld [vmem:[%s8 + $0x1b4] sm:$0xf]
      %v9508 = vld [vmem:[%s8 + $0x1b8] sm:$0xf]
      %v9509 = vld [vmem:[%s8 + $0x1bc] sm:$0xf]
      %v9510 = vld [vmem:[%s8 + $0x1c0] sm:$0xf]
      %v9511 = vld [vmem:[%s8 + $0x1c4] sm:$0xf]
      %v9512 = vld [vmem:[%s8 + $0x1c8] sm:$0xf]
      %v9513 = vld [vmem:[%s8 + $0x1cc] sm:$0xf]
      %v9514 = vld [vmem:[%s8 + $0x1d0] sm:$0xf]
      %v9515 = vld [vmem:[%s8 + $0x1d4] sm:$0xf]
      %v9516 = vld [vmem:[%s8 + $0x1d8] sm:$0xf]
      %v9517 = vld [vmem:[%s8 + $0x1dc] sm:$0xf]
      %v9518 = vld [vmem:[%s8 + $0x1e0] sm:$0xf]
      %v9519 = vld [vmem:[%s8 + $0x1e4] sm:$0xf]
      %v9520 = vld [vmem:[%s8 + $0x1e8] sm:$0xf]
      %v9521 = vld [vmem:[%s8 + $0x1ec] sm:$0xf]
      %v9522 = vld [vmem:[%s8 + $0x1f0] sm:$0xf]
      %v9523 = vld [vmem:[%s8 + $0x1f4] sm:$0xf]
      %v9524 = vld [vmem:[%s8 + $0x1f8] sm:$0xf]
      %v9525 = vld [vmem:[%s8 + $0x1fc] sm:$0xf]
      %v9526 = vld [vmem:[%s9] sm:$0x1]
      %v9528 = vlaneseq
      %v9529 = vshrl.u32 %v9528, 7
      %v9530 = vsub.s32 0, %v9529
      %v9531 = vrot.slane %v9526, %v9530
      %v9661 = vunpack.c.l.b16 %v9398
      %v9662 = vunpack.c.l.b16 %v9399
      %v9663 = vunpack.c.l.b16 %v9400
      %v9664 = vunpack.c.l.b16 %v9401
      %v9665 = vunpack.c.l.b16 %v9402
      %v9666 = vunpack.c.l.b16 %v9403
      %v9667 = vunpack.c.l.b16 %v9404
      %v9668 = vunpack.c.l.b16 %v9405
      %v9669 = vunpack.c.l.b16 %v9406
      %v9670 = vunpack.c.l.b16 %v9407
      %v9671 = vunpack.c.l.b16 %v9408
      %v9672 = vunpack.c.l.b16 %v9409
      %v9673 = vunpack.c.l.b16 %v9410
      %v9674 = vunpack.c.l.b16 %v9411
      %v9675 = vunpack.c.l.b16 %v9412
      %v9676 = vunpack.c.l.b16 %v9413
      %v9677 = vunpack.c.l.b16 %v9414
      %v9678 = vunpack.c.l.b16 %v9415
      %v9679 = vunpack.c.l.b16 %v9416
      %v9680 = vunpack.c.l.b16 %v9417
      %v9681 = vunpack.c.l.b16 %v9418
      %v9682 = vunpack.c.l.b16 %v9419
      %v9683 = vunpack.c.l.b16 %v9420
      %v9684 = vunpack.c.l.b16 %v9421
      %v9685 = vunpack.c.l.b16 %v9422
      %v9686 = vunpack.c.l.b16 %v9423
      %v9687 = vunpack.c.l.b16 %v9424
      %v9688 = vunpack.c.l.b16 %v9425
      %v9689 = vunpack.c.l.b16 %v9426
      %v9690 = vunpack.c.l.b16 %v9427
      %v9691 = vunpack.c.l.b16 %v9428
      %v9692 = vunpack.c.l.b16 %v9429
      %v9693 = vunpack.c.l.b16 %v9430
      %v9694 = vunpack.c.l.b16 %v9431
      %v9695 = vunpack.c.l.b16 %v9432
      %v9696 = vunpack.c.l.b16 %v9433
      %v9697 = vunpack.c.l.b16 %v9434
      %v9698 = vunpack.c.l.b16 %v9435
      %v9699 = vunpack.c.l.b16 %v9436
      %v9700 = vunpack.c.l.b16 %v9437
      %v9701 = vunpack.c.l.b16 %v9438
      %v9702 = vunpack.c.l.b16 %v9439
      %v9703 = vunpack.c.l.b16 %v9440
      %v9704 = vunpack.c.l.b16 %v9441
      %v9705 = vunpack.c.l.b16 %v9442
      %v9706 = vunpack.c.l.b16 %v9443
      %v9707 = vunpack.c.l.b16 %v9444
      %v9708 = vunpack.c.l.b16 %v9445
      %v9709 = vunpack.c.l.b16 %v9446
      %v9710 = vunpack.c.l.b16 %v9447
      %v9711 = vunpack.c.l.b16 %v9448
      %v9712 = vunpack.c.l.b16 %v9449
      %v9713 = vunpack.c.l.b16 %v9450
      %v9714 = vunpack.c.l.b16 %v9451
      %v9715 = vunpack.c.l.b16 %v9452
      %v9716 = vunpack.c.l.b16 %v9453
      %v9717 = vunpack.c.l.b16 %v9454
      %v9718 = vunpack.c.l.b16 %v9455
      %v9719 = vunpack.c.l.b16 %v9456
      %v9720 = vunpack.c.l.b16 %v9457
      %v9721 = vunpack.c.l.b16 %v9458
      %v9722 = vunpack.c.l.b16 %v9459
      %v9723 = vunpack.c.l.b16 %v9460
      %v9724 = vunpack.c.l.b16 %v9461
      %v9725 = vunpack.c.l.b16 %v9462
      %v9726 = vunpack.c.l.b16 %v9463
      %v9727 = vunpack.c.l.b16 %v9464
      %v9728 = vunpack.c.l.b16 %v9465
      %v9729 = vunpack.c.l.b16 %v9466
      %v9730 = vunpack.c.l.b16 %v9467
      %v9731 = vunpack.c.l.b16 %v9468
      %v9732 = vunpack.c.l.b16 %v9469
      %v9733 = vunpack.c.l.b16 %v9470
      %v9734 = vunpack.c.l.b16 %v9471
      %v9735 = vunpack.c.l.b16 %v9472
      %v9736 = vunpack.c.l.b16 %v9473
      %v9737 = vunpack.c.l.b16 %v9474
      %v9738 = vunpack.c.l.b16 %v9475
      %v9739 = vunpack.c.l.b16 %v9476
      %v9740 = vunpack.c.l.b16 %v9477
      %v9741 = vunpack.c.l.b16 %v9478
      %v9742 = vunpack.c.l.b16 %v9479
      %v9743 = vunpack.c.l.b16 %v9480
      %v9744 = vunpack.c.l.b16 %v9481
      %v9745 = vunpack.c.l.b16 %v9482
      %v9746 = vunpack.c.l.b16 %v9483
      %v9747 = vunpack.c.l.b16 %v9484
      %v9748 = vunpack.c.l.b16 %v9485
      %v9749 = vunpack.c.l.b16 %v9486
      %v9750 = vunpack.c.l.b16 %v9487
      %v9751 = vunpack.c.l.b16 %v9488
      %v9752 = vunpack.c.l.b16 %v9489
      %v9753 = vunpack.c.l.b16 %v9490
      %v9754 = vunpack.c.l.b16 %v9491
      %v9755 = vunpack.c.l.b16 %v9492
      %v9756 = vunpack.c.l.b16 %v9493
      %v9757 = vunpack.c.l.b16 %v9494
      %v9758 = vunpack.c.l.b16 %v9495
      %v9759 = vunpack.c.l.b16 %v9496
      %v9760 = vunpack.c.l.b16 %v9497
      %v9761 = vunpack.c.l.b16 %v9498
      %v9762 = vunpack.c.l.b16 %v9499
      %v9763 = vunpack.c.l.b16 %v9500
      %v9764 = vunpack.c.l.b16 %v9501
      %v9765 = vunpack.c.l.b16 %v9502
      %v9766 = vunpack.c.l.b16 %v9503
      %v9767 = vunpack.c.l.b16 %v9504
      %v9768 = vunpack.c.l.b16 %v9505
      %v9769 = vunpack.c.l.b16 %v9506
      %v9770 = vunpack.c.l.b16 %v9507
      %v9771 = vunpack.c.l.b16 %v9508
      %v9772 = vunpack.c.l.b16 %v9509
      %v9773 = vunpack.c.l.b16 %v9510
      %v9774 = vunpack.c.l.b16 %v9511
      %v9775 = vunpack.c.l.b16 %v9512
      %v9776 = vunpack.c.l.b16 %v9513
      %v9777 = vunpack.c.l.b16 %v9514
      %v9778 = vunpack.c.l.b16 %v9515
      %v9779 = vunpack.c.l.b16 %v9516
      %v9780 = vunpack.c.l.b16 %v9517
      %v9781 = vunpack.c.l.b16 %v9518
      %v9782 = vunpack.c.l.b16 %v9519
      %v9783 = vunpack.c.l.b16 %v9520
      %v9784 = vunpack.c.l.b16 %v9521
      %v9785 = vunpack.c.l.b16 %v9522
      %v9786 = vunpack.c.l.b16 %v9523
      %v9787 = vunpack.c.l.b16 %v9524
      %v9788 = vunpack.c.l.b16 %v9525
      %v9789 = vpack.c.b16 %v9662, %v9661
      %v9790 = vpack.c.b16 %v9664, %v9663
      %v9791 = vpack.c.b16 %v9666, %v9665
      %v9792 = vpack.c.b16 %v9668, %v9667
      %v9793 = vpack.c.b16 %v9670, %v9669
      %v9794 = vpack.c.b16 %v9672, %v9671
      %v9795 = vpack.c.b16 %v9674, %v9673
      %v9796 = vpack.c.b16 %v9676, %v9675
      %v9797 = vpack.c.b16 %v9678, %v9677
      %v9798 = vpack.c.b16 %v9680, %v9679
      %v9799 = vpack.c.b16 %v9682, %v9681
      %v9800 = vpack.c.b16 %v9684, %v9683
      %v9801 = vpack.c.b16 %v9686, %v9685
      %v9802 = vpack.c.b16 %v9688, %v9687
      %v9803 = vpack.c.b16 %v9690, %v9689
      %v9804 = vpack.c.b16 %v9692, %v9691
      %v9805 = vpack.c.b16 %v9694, %v9693
      %v9806 = vpack.c.b16 %v9696, %v9695
      %v9807 = vpack.c.b16 %v9698, %v9697
      %v9808 = vpack.c.b16 %v9700, %v9699
      %v9809 = vpack.c.b16 %v9702, %v9701
      %v9810 = vpack.c.b16 %v9704, %v9703
      %v9811 = vpack.c.b16 %v9706, %v9705
      %v9812 = vpack.c.b16 %v9708, %v9707
      %v9813 = vpack.c.b16 %v9710, %v9709
      %v9814 = vpack.c.b16 %v9712, %v9711
      %v9815 = vpack.c.b16 %v9714, %v9713
      %v9816 = vpack.c.b16 %v9716, %v9715
      %v9817 = vpack.c.b16 %v9718, %v9717
      %v9818 = vpack.c.b16 %v9720, %v9719
      %v9819 = vpack.c.b16 %v9722, %v9721
      %v9820 = vpack.c.b16 %v9724, %v9723
      %v9821 = vpack.c.b16 %v9726, %v9725
      %v9822 = vpack.c.b16 %v9728, %v9727
      %v9823 = vpack.c.b16 %v9730, %v9729
      %v9824 = vpack.c.b16 %v9732, %v9731
      %v9825 = vpack.c.b16 %v9734, %v9733
      %v9826 = vpack.c.b16 %v9736, %v9735
      %v9827 = vpack.c.b16 %v9738, %v9737
      %v9828 = vpack.c.b16 %v9740, %v9739
      %v9829 = vpack.c.b16 %v9742, %v9741
      %v9830 = vpack.c.b16 %v9744, %v9743
      %v9831 = vpack.c.b16 %v9746, %v9745
      %v9832 = vpack.c.b16 %v9748, %v9747
      %v9833 = vpack.c.b16 %v9750, %v9749
      %v9834 = vpack.c.b16 %v9752, %v9751
      %v9835 = vpack.c.b16 %v9754, %v9753
      %v9836 = vpack.c.b16 %v9756, %v9755
      %v9837 = vpack.c.b16 %v9758, %v9757
      %v9838 = vpack.c.b16 %v9760, %v9759
      %v9839 = vpack.c.b16 %v9762, %v9761
      %v9840 = vpack.c.b16 %v9764, %v9763
      %v9841 = vpack.c.b16 %v9766, %v9765
      %v9842 = vpack.c.b16 %v9768, %v9767
      %v9843 = vpack.c.b16 %v9770, %v9769
      %v9844 = vpack.c.b16 %v9772, %v9771
      %v9845 = vpack.c.b16 %v9774, %v9773
      %v9846 = vpack.c.b16 %v9776, %v9775
      %v9847 = vpack.c.b16 %v9778, %v9777
      %v9848 = vpack.c.b16 %v9780, %v9779
      %v9849 = vpack.c.b16 %v9782, %v9781
      %v9850 = vpack.c.b16 %v9784, %v9783
      %v9851 = vpack.c.b16 %v9786, %v9785
      %v9852 = vpack.c.b16 %v9788, %v9787
      %9917 = vmatprep.subr.bf16.mxu0 0
      %9918 = vmatpush1.bf16.msra.mxu0 %v9789
      %9919 = vmatprep.subr.bf16.mxu0 0
      %9920 = vmatpush1.bf16.msra.mxu0 %v9790
      %9921 = vmatprep.subr.bf16.mxu0 0
      %9922 = vmatpush1.bf16.msra.mxu0 %v9791
      %9923 = vmatprep.subr.bf16.mxu0 0
      %9924 = vmatpush1.bf16.msra.mxu0 %v9792
      %9925 = vmatprep.subr.bf16.mxu0 0
      %9926 = vmatpush1.bf16.msra.mxu0 %v9793
      %9927 = vmatprep.subr.bf16.mxu0 0
      %9928 = vmatpush1.bf16.msra.mxu0 %v9794
      %9929 = vmatprep.subr.bf16.mxu0 0
      %9930 = vmatpush1.bf16.msra.mxu0 %v9795
      %9931 = vmatprep.subr.bf16.mxu0 0
      %9932 = vmatpush1.bf16.msra.mxu0 %v9796
      %9933 = vmatprep.subr.bf16.mxu0 0
      %9934 = vmatpush1.bf16.msra.mxu0 %v9797
      %9935 = vmatprep.subr.bf16.mxu0 0
      %9936 = vmatpush1.bf16.msra.mxu0 %v9798
      %9937 = vmatprep.subr.bf16.mxu0 0
      %9938 = vmatpush1.bf16.msra.mxu0 %v9799
      %9939 = vmatprep.subr.bf16.mxu0 0
      %9940 = vmatpush1.bf16.msra.mxu0 %v9800
      %9941 = vmatprep.subr.bf16.mxu0 0
      %9942 = vmatpush1.bf16.msra.mxu0 %v9801
      %9943 = vmatprep.subr.bf16.mxu0 0
      %9944 = vmatpush1.bf16.msra.mxu0 %v9802
      %9945 = vmatprep.subr.bf16.mxu0 0
      %9946 = vmatpush1.bf16.msra.mxu0 %v9803
      %9947 = vmatprep.subr.bf16.mxu0 0
      %9948 = vmatpush1.bf16.msra.mxu0 %v9804
      %9949 = vmatprep.mubr.bf16.mxu0 %v9143
      %9950 = vmatmul.mubr.bf16.gmra.mrb[0].mxu0 %v9142
      %v9951 = vpop.f32.mrb[0].mxu0
      %v9952 = vadd.f32 %v9531, %v9951
      %v9953 = vpop.f32.mrb[0].mxu0
      %v9954 = vpop.f32.mrb[0].mxu0
      %v9955 = vadd.f32 %v9531, %v9954
      %v9956 = vpop.f32.mrb[0].mxu0
      %9957 = vmatprep.mubr.bf16.mxu0 %v9151
      %9958 = vmatmul.mubr.bf16.gmra.mrb[0].mxu0 %v9150
      %v9959 = vpop.f32.mrb[0].mxu0
      %v9960 = vadd.f32 %v9531, %v9959
      %v9961 = vpop.f32.mrb[0].mxu0
      %v9962 = vpop.f32.mrb[0].mxu0
      %v9963 = vadd.f32 %v9531, %v9962
      %v9964 = vpop.f32.mrb[0].mxu0
      %9965 = vmatprep.mubr.bf16.mxu0 %v9159
      %9966 = vmatmul.mubr.bf16.gmra.mrb[0].mxu0 %v9158
      %v9967 = vpop.f32.mrb[0].mxu0
      %v9968 = vadd.f32 %v9531, %v9967
      %v9969 = vpop.f32.mrb[0].mxu0
      %v9970 = vpop.f32.mrb[0].mxu0
      %v9971 = vadd.f32 %v9531, %v9970
      %v9972 = vpop.f32.mrb[0].mxu0
      %9973 = vmatprep.mubr.bf16.mxu0 %v9167
      %9974 = vmatmul.mubr.bf16.gmra.mrb[0].mxu0 %v9166
      %v9975 = vpop.f32.mrb[0].mxu0
      %v9976 = vadd.f32 %v9531, %v9975
      %v9977 = vpop.f32.mrb[0].mxu0
      %v9978 = vpop.f32.mrb[0].mxu0
      %v9979 = vadd.f32 %v9531, %v9978
      %v9980 = vpop.f32.mrb[0].mxu0
      %9981 = vmatprep.mubr.bf16.mxu0 %v9175
      %9982 = vmatmul.mubr.bf16.gmra.mrb[0].mxu0 %v9174
      %v9983 = vpop.f32.mrb[0].mxu0
      %v9984 = vadd.f32 %v9531, %v9983
      %v9985 = vpop.f32.mrb[0].mxu0
      %v9986 = vpop.f32.mrb[0].mxu0
      %v9987 = vadd.f32 %v9531, %v9986
      %v9988 = vpop.f32.mrb[0].mxu0
      %9989 = vmatprep.mubr.bf16.mxu0 %v9183
      %9990 = vmatmul.mubr.bf16.gmra.mrb[0].mxu0 %v9182
      %v9991 = vpop.f32.mrb[0].mxu0
      %v9992 = vadd.f32 %v9531, %v9991
      %v9993 = vpop.f32.mrb[0].mxu0
      %v9994 = vpop.f32.mrb[0].mxu0
      %v9995 = vadd.f32 %v9531, %v9994
      %v9996 = vpop.f32.mrb[0].mxu0
      %9997 = vmatprep.mubr.bf16.mxu0 %v9191
      %9998 = vmatmul.mubr.bf16.gmra.mrb[0].mxu0 %v9190
      %v9999 = vpop.f32.mrb[0].mxu0
      %v10000 = vadd.f32 %v9531, %v9999
      %v10001 = vpop.f32.mrb[0].mxu0
      %v10002 = vpop.f32.mrb[0].mxu0
      %v10003 = vadd.f32 %v9531, %v10002
      %v10004 = vpop.f32.mrb[0].mxu0
      %10005 = vmatprep.mubr.bf16.mxu0 %v9199
      %10006 = vmatmul.mubr.bf16.gmra.mrb[0].mxu0 %v9198
      %v10007 = vpop.f32.mrb[0].mxu0
      %v10008 = vadd.f32 %v9531, %v10007
      %v10009 = vpop.f32.mrb[0].mxu0
      %v10010 = vpop.f32.mrb[0].mxu0
      %v10011 = vadd.f32 %v9531, %v10010
      %v10012 = vpop.f32.mrb[0].mxu0
      %10013 = vmatprep.mubr.bf16.mxu0 %v9207
      %10014 = vmatmul.mubr.bf16.gmra.mrb[0].mxu0 %v9206
      %v10015 = vpop.f32.mrb[0].mxu0
      %v10016 = vadd.f32 %v9531, %v10015
      %v10017 = vpop.f32.mrb[0].mxu0
      %v10018 = vpop.f32.mrb[0].mxu0
      %v10019 = vadd.f32 %v9531, %v10018
      %v10020 = vpop.f32.mrb[0].mxu0
      %10021 = vmatprep.mubr.bf16.mxu0 %v9215
      %10022 = vmatmul.mubr.bf16.gmra.mrb[0].mxu0 %v9214
      %v10023 = vpop.f32.mrb[0].mxu0
      %v10024 = vadd.f32 %v9531, %v10023
      %v10025 = vpop.f32.mrb[0].mxu0
      %v10026 = vpop.f32.mrb[0].mxu0
      %v10027 = vadd.f32 %v9531, %v10026
      %v10028 = vpop.f32.mrb[0].mxu0
      %10029 = vmatprep.mubr.bf16.mxu0 %v9223
      %10030 = vmatmul.mubr.bf16.gmra.mrb[0].mxu0 %v9222
      %v10031 = vpop.f32.mrb[0].mxu0
      %v10032 = vadd.f32 %v9531, %v10031
      %v10033 = vpop.f32.mrb[0].mxu0
      %v10034 = vpop.f32.mrb[0].mxu0
      %v10035 = vadd.f32 %v9531, %v10034
      %v10036 = vpop.f32.mrb[0].mxu0
      %10037 = vmatprep.mubr.bf16.mxu0 %v9231
      %10038 = vmatmul.mubr.bf16.gmra.mrb[0].mxu0 %v9230
      %v10039 = vpop.f32.mrb[0].mxu0
      %v10040 = vadd.f32 %v9531, %v10039
      %v10041 = vpop.f32.mrb[0].mxu0
      %v10042 = vpop.f32.mrb[0].mxu0
      %v10043 = vadd.f32 %v9531, %v10042
      %v10044 = vpop.f32.mrb[0].mxu0
      %10045 = vmatprep.mubr.bf16.mxu0 %v9239
      %10046 = vmatmul.mubr.bf16.gmra.mrb[0].mxu0 %v9238
      %v10047 = vpop.f32.mrb[0].mxu0
      %v10048 = vadd.f32 %v9531, %v10047
      %v10049 = vpop.f32.mrb[0].mxu0
      %v10050 = vpop.f32.mrb[0].mxu0
      %v10051 = vadd.f32 %v9531, %v10050
      %v10052 = vpop.f32.mrb[0].mxu0
      %10053 = vmatprep.mubr.bf16.mxu0 %v9247
      %10054 = vmatmul.mubr.bf16.gmra.mrb[0].mxu0 %v9246
      %v10055 = vpop.f32.mrb[0].mxu0
      %v10056 = vadd.f32 %v9531, %v10055
      %v10057 = vpop.f32.mrb[0].mxu0
      %v10058 = vpop.f32.mrb[0].mxu0
      %v10059 = vadd.f32 %v9531, %v10058
      %v10060 = vpop.f32.mrb[0].mxu0
      %10061 = vmatprep.mubr.bf16.mxu0 %v9255
      %10062 = vmatmul.mubr.bf16.gmra.mrb[0].mxu0 %v9254
      %v10063 = vpop.f32.mrb[0].mxu0
      %v10064 = vadd.f32 %v9531, %v10063
      %v10065 = vpop.f32.mrb[0].mxu0
      %v10066 = vpop.f32.mrb[0].mxu0
      %v10067 = vadd.f32 %v9531, %v10066
      %v10068 = vpop.f32.mrb[0].mxu0
      %10069 = vmatprep.mubr.bf16.mxu0 %v9263
      %10070 = vmatmul.mubr.bf16.gmra.mrb[0].mxu0 %v9262
      %v10071 = vpop.f32.mrb[0].mxu0
      %v10072 = vadd.f32 %v9531, %v10071
      %v10073 = vpop.f32.mrb[0].mxu0
      %v10074 = vpop.f32.mrb[0].mxu0
      %v10075 = vadd.f32 %v9531, %v10074
      %v10076 = vpop.f32.mrb[0].mxu0
      %10077 = vmatprep.mubr.bf16.mxu0 %v9271
      %10078 = vmatmul.mubr.bf16.gmra.mrb[0].mxu0 %v9270
      %v10079 = vpop.f32.mrb[0].mxu0
      %v10080 = vadd.f32 %v9531, %v10079
      %v10081 = vpop.f32.mrb[0].mxu0
      %v10082 = vpop.f32.mrb[0].mxu0
      %v10083 = vadd.f32 %v9531, %v10082
      %v10084 = vpop.f32.mrb[0].mxu0
      %10085 = vmatprep.mubr.bf16.mxu0 %v9279
      %10086 = vmatmul.mubr.bf16.gmra.mrb[0].mxu0 %v9278
      %v10087 = vpop.f32.mrb[0].mxu0
      %v10088 = vadd.f32 %v9531, %v10087
      %v10089 = vpop.f32.mrb[0].mxu0
      %v10090 = vpop.f32.mrb[0].mxu0
      %v10091 = vadd.f32 %v9531, %v10090
      %v10092 = vpop.f32.mrb[0].mxu0
      %10093 = vmatprep.mubr.bf16.mxu0 %v9287
      %10094 = vmatmul.mubr.bf16.gmra.mrb[0].mxu0 %v9286
      %v10095 = vpop.f32.mrb[0].mxu0
      %v10096 = vadd.f32 %v9531, %v10095
      %v10097 = vpop.f32.mrb[0].mxu0
      %v10098 = vpop.f32.mrb[0].mxu0
      %v10099 = vadd.f32 %v9531, %v10098
      %v10100 = vpop.f32.mrb[0].mxu0
      %10101 = vmatprep.mubr.bf16.mxu0 %v9295
      %10102 = vmatmul.mubr.bf16.gmra.mrb[0].mxu0 %v9294
      %v10103 = vpop.f32.mrb[0].mxu0
      %v10104 = vadd.f32 %v9531, %v10103
      %v10105 = vpop.f32.mrb[0].mxu0
      %v10106 = vpop.f32.mrb[0].mxu0
      %v10107 = vadd.f32 %v9531, %v10106
      %v10108 = vpop.f32.mrb[0].mxu0
      %10109 = vmatprep.mubr.bf16.mxu0 %v9303
      %10110 = vmatmul.mubr.bf16.gmra.mrb[0].mxu0 %v9302
      %v10111 = vpop.f32.mrb[0].mxu0
      %v10112 = vadd.f32 %v9531, %v10111
      %v10113 = vpop.f32.mrb[0].mxu0
      %v10114 = vpop.f32.mrb[0].mxu0
      %v10115 = vadd.f32 %v9531, %v10114
      %v10116 = vpop.f32.mrb[0].mxu0
      %10117 = vmatprep.mubr.bf16.mxu0 %v9311
      %10118 = vmatmul.mubr.bf16.gmra.mrb[0].mxu0 %v9310
      %v10119 = vpop.f32.mrb[0].mxu0
      %v10120 = vadd.f32 %v9531, %v10119
      %v10121 = vpop.f32.mrb[0].mxu0
      %v10122 = vpop.f32.mrb[0].mxu0
      %v10123 = vadd.f32 %v9531, %v10122
      %v10124 = vpop.f32.mrb[0].mxu0
      %10125 = vmatprep.mubr.bf16.mxu0 %v9319
      %10126 = vmatmul.mubr.bf16.gmra.mrb[0].mxu0 %v9318
      %v10127 = vpop.f32.mrb[0].mxu0
      %v10128 = vadd.f32 %v9531, %v10127
      %v10129 = vpop.f32.mrb[0].mxu0
      %v10130 = vpop.f32.mrb[0].mxu0
      %v10131 = vadd.f32 %v9531, %v10130
      %v10132 = vpop.f32.mrb[0].mxu0
      %10133 = vmatprep.mubr.bf16.mxu0 %v9327
      %10134 = vmatmul.mubr.bf16.gmra.mrb[0].mxu0 %v9326
      %v10135 = vpop.f32.mrb[0].mxu0
      %v10136 = vadd.f32 %v9531, %v10135
      %v10137 = vpop.f32.mrb[0].mxu0
      %v10138 = vpop.f32.mrb[0].mxu0
      %v10139 = vadd.f32 %v9531, %v10138
      %v10140 = vpop.f32.mrb[0].mxu0
      %10141 = vmatprep.mubr.bf16.mxu0 %v9335
      %10142 = vmatmul.mubr.bf16.gmra.mrb[0].mxu0 %v9334
      %v10143 = vpop.f32.mrb[0].mxu0
      %v10144 = vadd.f32 %v9531, %v10143
      %v10145 = vpop.f32.mrb[0].mxu0
      %v10146 = vpop.f32.mrb[0].mxu0
      %v10147 = vadd.f32 %v9531, %v10146
      %v10148 = vpop.f32.mrb[0].mxu0
      %10149 = vmatprep.mubr.bf16.mxu0 %v9343
      %10150 = vmatmul.mubr.bf16.gmra.mrb[0].mxu0 %v9342
      %v10151 = vpop.f32.mrb[0].mxu0
      %v10152 = vadd.f32 %v9531, %v10151
      %v10153 = vpop.f32.mrb[0].mxu0
      %v10154 = vpop.f32.mrb[0].mxu0
      %v10155 = vadd.f32 %v9531, %v10154
      %v10156 = vpop.f32.mrb[0].mxu0
      %10157 = vmatprep.mubr.bf16.mxu0 %v9351
      %10158 = vmatmul.mubr.bf16.gmra.mrb[0].mxu0 %v9350
      %v10159 = vpop.f32.mrb[0].mxu0
      %v10160 = vadd.f32 %v9531, %v10159
      %v10161 = vpop.f32.mrb[0].mxu0
      %v10162 = vpop.f32.mrb[0].mxu0
      %v10163 = vadd.f32 %v9531, %v10162
      %v10164 = vpop.f32.mrb[0].mxu0
      %10165 = vmatprep.mubr.bf16.mxu0 %v9359
      %10166 = vmatmul.mubr.bf16.gmra.mrb[0].mxu0 %v9358
      %v10167 = vpop.f32.mrb[0].mxu0
      %v10168 = vadd.f32 %v9531, %v10167
      %v10169 = vpop.f32.mrb[0].mxu0
      %v10170 = vpop.f32.mrb[0].mxu0
      %v10171 = vadd.f32 %v9531, %v10170
      %v10172 = vpop.f32.mrb[0].mxu0
      %10173 = vmatprep.mubr.bf16.mxu0 %v9367
      %10174 = vmatmul.mubr.bf16.gmra.mrb[0].mxu0 %v9366
      %v10175 = vpop.f32.mrb[0].mxu0
      %v10176 = vadd.f32 %v9531, %v10175
      %v10177 = vpop.f32.mrb[0].mxu0
      %v10178 = vpop.f32.mrb[0].mxu0
      %v10179 = vadd.f32 %v9531, %v10178
      %v10180 = vpop.f32.mrb[0].mxu0
      %10181 = vmatprep.mubr.bf16.mxu0 %v9375
      %10182 = vmatmul.mubr.bf16.gmra.mrb[0].mxu0 %v9374
      %v10183 = vpop.f32.mrb[0].mxu0
      %v10184 = vadd.f32 %v9531, %v10183
      %v10185 = vpop.f32.mrb[0].mxu0
      %v10186 = vpop.f32.mrb[0].mxu0
      %v10187 = vadd.f32 %v9531, %v10186
      %v10188 = vpop.f32.mrb[0].mxu0
      %10189 = vmatprep.mubr.bf16.mxu0 %v9383
      %10190 = vmatmul.mubr.bf16.gmra.mrb[0].mxu0 %v9382
      %v10191 = vpop.f32.mrb[0].mxu0
      %v10192 = vadd.f32 %v9531, %v10191
      %v10193 = vpop.f32.mrb[0].mxu0
      %v10194 = vpop.f32.mrb[0].mxu0
      %v10195 = vadd.f32 %v9531, %v10194
      %v10196 = vpop.f32.mrb[0].mxu0
      %10197 = vmatprep.mubr.bf16.mxu0 %v9391
      %10198 = vmatmul.mubr.bf16.gmra.mrb[0].mxu0 %v9390
      %v10199 = vpop.f32.mrb[0].mxu0
      %v10200 = vadd.f32 %v9531, %v10199
      %v10201 = vpop.f32.mrb[0].mxu0
      %v10202 = vpop.f32.mrb[0].mxu0
      %v10203 = vadd.f32 %v9531, %v10202
      %v10204 = vpop.f32.mrb[0].mxu0
      %10205 = vdwg.mxu0
      %10206 = vmatprep.subr.bf16.mxu0 0
      %10207 = vmatpush1.bf16.msra.mxu0 %v9805
      %10208 = vmatprep.subr.bf16.mxu0 0
      %10209 = vmatpush1.bf16.msra.mxu0 %v9806
      %10210 = vmatprep.subr.bf16.mxu0 0
      %10211 = vmatpush1.bf16.msra.mxu0 %v9807
      %10212 = vmatprep.subr.bf16.mxu0 0
      %10213 = vmatpush1.bf16.msra.mxu0 %v9808
      %10214 = vmatprep.subr.bf16.mxu0 0
      %10215 = vmatpush1.bf16.msra.mxu0 %v9809
      %10216 = vmatprep.subr.bf16.mxu0 0
      %10217 = vmatpush1.bf16.msra.mxu0 %v9810
      %10218 = vmatprep.subr.bf16.mxu0 0
      %10219 = vmatpush1.bf16.msra.mxu0 %v9811
      %10220 = vmatprep.subr.bf16.mxu0 0
      %10221 = vmatpush1.bf16.msra.mxu0 %v9812
      %10222 = vmatprep.subr.bf16.mxu0 0
      %10223 = vmatpush1.bf16.msra.mxu0 %v9813
      %10224 = vmatprep.subr.bf16.mxu0 0
      %10225 = vmatpush1.bf16.msra.mxu0 %v9814
      %10226 = vmatprep.subr.bf16.mxu0 0
      %10227 = vmatpush1.bf16.msra.mxu0 %v9815
      %10228 = vmatprep.subr.bf16.mxu0 0
      %10229 = vmatpush1.bf16.msra.mxu0 %v9816
      %10230 = vmatprep.subr.bf16.mxu0 0
      %10231 = vmatpush1.bf16.msra.mxu0 %v9817
      %10232 = vmatprep.subr.bf16.mxu0 0
      %10233 = vmatpush1.bf16.msra.mxu0 %v9818
      %10234 = vmatprep.subr.bf16.mxu0 0
      %10235 = vmatpush1.bf16.msra.mxu0 %v9819
      %10236 = vmatprep.subr.bf16.mxu0 0
      %10237 = vmatpush1.bf16.msra.mxu0 %v9820
      %10238 = vmatprep.mubr.bf16.mxu0 %v9145
      %10239 = vmatmul.mubr.bf16.gmra.mrb[0].mxu0 %v9144
      %v10240 = vpop.f32.mrb[0].mxu0
      %v10241 = vadd.f32 %v9952, %v10240
      %v10242 = vpop.f32.mrb[0].mxu0
      %v10243 = vpop.f32.mrb[0].mxu0
      %v10244 = vadd.f32 %v9955, %v10243
      %v10245 = vpop.f32.mrb[0].mxu0
      %10246 = vmatprep.mubr.bf16.mxu0 %v9153
      %10247 = vmatmul.mubr.bf16.gmra.mrb[0].mxu0 %v9152
      %v10248 = vpop.f32.mrb[0].mxu0
      %v10249 = vadd.f32 %v9960, %v10248
      %v10250 = vpop.f32.mrb[0].mxu0
      %v10251 = vpop.f32.mrb[0].mxu0
      %v10252 = vadd.f32 %v9963, %v10251
      %v10253 = vpop.f32.mrb[0].mxu0
      %10254 = vmatprep.mubr.bf16.mxu0 %v9161
      %10255 = vmatmul.mubr.bf16.gmra.mrb[0].mxu0 %v9160
      %v10256 = vpop.f32.mrb[0].mxu0
      %v10257 = vadd.f32 %v9968, %v10256
      %v10258 = vpop.f32.mrb[0].mxu0
      %v10259 = vpop.f32.mrb[0].mxu0
      %v10260 = vadd.f32 %v9971, %v10259
      %v10261 = vpop.f32.mrb[0].mxu0
      %10262 = vmatprep.mubr.bf16.mxu0 %v9169
      %10263 = vmatmul.mubr.bf16.gmra.mrb[0].mxu0 %v9168
      %v10264 = vpop.f32.mrb[0].mxu0
      %v10265 = vadd.f32 %v9976, %v10264
      %v10266 = vpop.f32.mrb[0].mxu0
      %v10267 = vpop.f32.mrb[0].mxu0
      %v10268 = vadd.f32 %v9979, %v10267
      %v10269 = vpop.f32.mrb[0].mxu0
      %10270 = vmatprep.mubr.bf16.mxu0 %v9177
      %10271 = vmatmul.mubr.bf16.gmra.mrb[0].mxu0 %v9176
      %v10272 = vpop.f32.mrb[0].mxu0
      %v10273 = vadd.f32 %v9984, %v10272
      %v10274 = vpop.f32.mrb[0].mxu0
      %v10275 = vpop.f32.mrb[0].mxu0
      %v10276 = vadd.f32 %v9987, %v10275
      %v10277 = vpop.f32.mrb[0].mxu0
      %10278 = vmatprep.mubr.bf16.mxu0 %v9185
      %10279 = vmatmul.mubr.bf16.gmra.mrb[0].mxu0 %v9184
      %v10280 = vpop.f32.mrb[0].mxu0
      %v10281 = vadd.f32 %v9992, %v10280
      %v10282 = vpop.f32.mrb[0].mxu0
      %v10283 = vpop.f32.mrb[0].mxu0
      %v10284 = vadd.f32 %v9995, %v10283
      %v10285 = vpop.f32.mrb[0].mxu0
      %10286 = vmatprep.mubr.bf16.mxu0 %v9193
      %10287 = vmatmul.mubr.bf16.gmra.mrb[0].mxu0 %v9192
      %v10288 = vpop.f32.mrb[0].mxu0
      %v10289 = vadd.f32 %v10000, %v10288
      %v10290 = vpop.f32.mrb[0].mxu0
      %v10291 = vpop.f32.mrb[0].mxu0
      %v10292 = vadd.f32 %v10003, %v10291
      %v10293 = vpop.f32.mrb[0].mxu0
      %10294 = vmatprep.mubr.bf16.mxu0 %v9201
      %10295 = vmatmul.mubr.bf16.gmra.mrb[0].mxu0 %v9200
      %v10296 = vpop.f32.mrb[0].mxu0
      %v10297 = vadd.f32 %v10008, %v10296
      %v10298 = vpop.f32.mrb[0].mxu0
      %v10299 = vpop.f32.mrb[0].mxu0
      %v10300 = vadd.f32 %v10011, %v10299
      %v10301 = vpop.f32.mrb[0].mxu0
      %10302 = vmatprep.mubr.bf16.mxu0 %v9209
      %10303 = vmatmul.mubr.bf16.gmra.mrb[0].mxu0 %v9208
      %v10304 = vpop.f32.mrb[0].mxu0
      %v10305 = vadd.f32 %v10016, %v10304
      %v10306 = vpop.f32.mrb[0].mxu0
      %v10307 = vpop.f32.mrb[0].mxu0
      %v10308 = vadd.f32 %v10019, %v10307
      %v10309 = vpop.f32.mrb[0].mxu0
      %10310 = vmatprep.mubr.bf16.mxu0 %v9217
      %10311 = vmatmul.mubr.bf16.gmra.mrb[0].mxu0 %v9216
      %v10312 = vpop.f32.mrb[0].mxu0
      %v10313 = vadd.f32 %v10024, %v10312
      %v10314 = vpop.f32.mrb[0].mxu0
      %v10315 = vpop.f32.mrb[0].mxu0
      %v10316 = vadd.f32 %v10027, %v10315
      %v10317 = vpop.f32.mrb[0].mxu0
      %10318 = vmatprep.mubr.bf16.mxu0 %v9225
      %10319 = vmatmul.mubr.bf16.gmra.mrb[0].mxu0 %v9224
      %v10320 = vpop.f32.mrb[0].mxu0
      %v10321 = vadd.f32 %v10032, %v10320
      %v10322 = vpop.f32.mrb[0].mxu0
      %v10323 = vpop.f32.mrb[0].mxu0
      %v10324 = vadd.f32 %v10035, %v10323
      %v10325 = vpop.f32.mrb[0].mxu0
      %10326 = vmatprep.mubr.bf16.mxu0 %v9233
      %10327 = vmatmul.mubr.bf16.gmra.mrb[0].mxu0 %v9232
      %v10328 = vpop.f32.mrb[0].mxu0
      %v10329 = vadd.f32 %v10040, %v10328
      %v10330 = vpop.f32.mrb[0].mxu0
      %v10331 = vpop.f32.mrb[0].mxu0
      %v10332 = vadd.f32 %v10043, %v10331
      %v10333 = vpop.f32.mrb[0].mxu0
      %10334 = vmatprep.mubr.bf16.mxu0 %v9241
      %10335 = vmatmul.mubr.bf16.gmra.mrb[0].mxu0 %v9240
      %v10336 = vpop.f32.mrb[0].mxu0
      %v10337 = vadd.f32 %v10048, %v10336
      %v10338 = vpop.f32.mrb[0].mxu0
      %v10339 = vpop.f32.mrb[0].mxu0
      %v10340 = vadd.f32 %v10051, %v10339
      %v10341 = vpop.f32.mrb[0].mxu0
      %10342 = vmatprep.mubr.bf16.mxu0 %v9249
      %10343 = vmatmul.mubr.bf16.gmra.mrb[0].mxu0 %v9248
      %v10344 = vpop.f32.mrb[0].mxu0
      %v10345 = vadd.f32 %v10056, %v10344
      %v10346 = vpop.f32.mrb[0].mxu0
      %v10347 = vpop.f32.mrb[0].mxu0
      %v10348 = vadd.f32 %v10059, %v10347
      %v10349 = vpop.f32.mrb[0].mxu0
      %10350 = vmatprep.mubr.bf16.mxu0 %v9257
      %10351 = vmatmul.mubr.bf16.gmra.mrb[0].mxu0 %v9256
      %v10352 = vpop.f32.mrb[0].mxu0
      %v10353 = vadd.f32 %v10064, %v10352
      %v10354 = vpop.f32.mrb[0].mxu0
      %v10355 = vpop.f32.mrb[0].mxu0
      %v10356 = vadd.f32 %v10067, %v10355
      %v10357 = vpop.f32.mrb[0].mxu0
      %10358 = vmatprep.mubr.bf16.mxu0 %v9265
      %10359 = vmatmul.mubr.bf16.gmra.mrb[0].mxu0 %v9264
      %v10360 = vpop.f32.mrb[0].mxu0
      %v10361 = vadd.f32 %v10072, %v10360
      %v10362 = vpop.f32.mrb[0].mxu0
      %v10363 = vpop.f32.mrb[0].mxu0
      %v10364 = vadd.f32 %v10075, %v10363
      %v10365 = vpop.f32.mrb[0].mxu0
      %10366 = vmatprep.mubr.bf16.mxu0 %v9273
      %10367 = vmatmul.mubr.bf16.gmra.mrb[0].mxu0 %v9272
      %v10368 = vpop.f32.mrb[0].mxu0
      %v10369 = vadd.f32 %v10080, %v10368
      %v10370 = vpop.f32.mrb[0].mxu0
      %v10371 = vpop.f32.mrb[0].mxu0
      %v10372 = vadd.f32 %v10083, %v10371
      %v10373 = vpop.f32.mrb[0].mxu0
      %10374 = vmatprep.mubr.bf16.mxu0 %v9281
      %10375 = vmatmul.mubr.bf16.gmra.mrb[0].mxu0 %v9280
      %v10376 = vpop.f32.mrb[0].mxu0
      %v10377 = vadd.f32 %v10088, %v10376
      %v10378 = vpop.f32.mrb[0].mxu0
      %v10379 = vpop.f32.mrb[0].mxu0
      %v10380 = vadd.f32 %v10091, %v10379
      %v10381 = vpop.f32.mrb[0].mxu0
      %10382 = vmatprep.mubr.bf16.mxu0 %v9289
      %10383 = vmatmul.mubr.bf16.gmra.mrb[0].mxu0 %v9288
      %v10384 = vpop.f32.mrb[0].mxu0
      %v10385 = vadd.f32 %v10096, %v10384
      %v10386 = vpop.f32.mrb[0].mxu0
      %v10387 = vpop.f32.mrb[0].mxu0
      %v10388 = vadd.f32 %v10099, %v10387
      %v10389 = vpop.f32.mrb[0].mxu0
      %10390 = vmatprep.mubr.bf16.mxu0 %v9297
      %10391 = vmatmul.mubr.bf16.gmra.mrb[0].mxu0 %v9296
      %v10392 = vpop.f32.mrb[0].mxu0
      %v10393 = vadd.f32 %v10104, %v10392
      %v10394 = vpop.f32.mrb[0].mxu0
      %v10395 = vpop.f32.mrb[0].mxu0
      %v10396 = vadd.f32 %v10107, %v10395
      %v10397 = vpop.f32.mrb[0].mxu0
      %10398 = vmatprep.mubr.bf16.mxu0 %v9305
      %10399 = vmatmul.mubr.bf16.gmra.mrb[0].mxu0 %v9304
      %v10400 = vpop.f32.mrb[0].mxu0
      %v10401 = vadd.f32 %v10112, %v10400
      %v10402 = vpop.f32.mrb[0].mxu0
      %v10403 = vpop.f32.mrb[0].mxu0
      %v10404 = vadd.f32 %v10115, %v10403
      %v10405 = vpop.f32.mrb[0].mxu0
      %10406 = vmatprep.mubr.bf16.mxu0 %v9313
      %10407 = vmatmul.mubr.bf16.gmra.mrb[0].mxu0 %v9312
      %v10408 = vpop.f32.mrb[0].mxu0
      %v10409 = vadd.f32 %v10120, %v10408
      %v10410 = vpop.f32.mrb[0].mxu0
      %v10411 = vpop.f32.mrb[0].mxu0
      %v10412 = vadd.f32 %v10123, %v10411
      %v10413 = vpop.f32.mrb[0].mxu0
      %10414 = vmatprep.mubr.bf16.mxu0 %v9321
      %10415 = vmatmul.mubr.bf16.gmra.mrb[0].mxu0 %v9320
      %v10416 = vpop.f32.mrb[0].mxu0
      %v10417 = vadd.f32 %v10128, %v10416
      %v10418 = vpop.f32.mrb[0].mxu0
      %v10419 = vpop.f32.mrb[0].mxu0
      %v10420 = vadd.f32 %v10131, %v10419
      %v10421 = vpop.f32.mrb[0].mxu0
      %10422 = vmatprep.mubr.bf16.mxu0 %v9329
      %10423 = vmatmul.mubr.bf16.gmra.mrb[0].mxu0 %v9328
      %v10424 = vpop.f32.mrb[0].mxu0
      %v10425 = vadd.f32 %v10136, %v10424
      %v10426 = vpop.f32.mrb[0].mxu0
      %v10427 = vpop.f32.mrb[0].mxu0
      %v10428 = vadd.f32 %v10139, %v10427
      %v10429 = vpop.f32.mrb[0].mxu0
      %10430 = vmatprep.mubr.bf16.mxu0 %v9337
      %10431 = vmatmul.mubr.bf16.gmra.mrb[0].mxu0 %v9336
      %v10432 = vpop.f32.mrb[0].mxu0
      %v10433 = vadd.f32 %v10144, %v10432
      %v10434 = vpop.f32.mrb[0].mxu0
      %v10435 = vpop.f32.mrb[0].mxu0
      %v10436 = vadd.f32 %v10147, %v10435
      %v10437 = vpop.f32.mrb[0].mxu0
      %10438 = vmatprep.mubr.bf16.mxu0 %v9345
      %10439 = vmatmul.mubr.bf16.gmra.mrb[0].mxu0 %v9344
      %v10440 = vpop.f32.mrb[0].mxu0
      %v10441 = vadd.f32 %v10152, %v10440
      %v10442 = vpop.f32.mrb[0].mxu0
      %v10443 = vpop.f32.mrb[0].mxu0
      %v10444 = vadd.f32 %v10155, %v10443
      %v10445 = vpop.f32.mrb[0].mxu0
      %10446 = vmatprep.mubr.bf16.mxu0 %v9353
      %10447 = vmatmul.mubr.bf16.gmra.mrb[0].mxu0 %v9352
      %v10448 = vpop.f32.mrb[0].mxu0
      %v10449 = vadd.f32 %v10160, %v10448
      %v10450 = vpop.f32.mrb[0].mxu0
      %v10451 = vpop.f32.mrb[0].mxu0
      %v10452 = vadd.f32 %v10163, %v10451
      %v10453 = vpop.f32.mrb[0].mxu0
      %10454 = vmatprep.mubr.bf16.mxu0 %v9361
      %10455 = vmatmul.mubr.bf16.gmra.mrb[0].mxu0 %v9360
      %v10456 = vpop.f32.mrb[0].mxu0
      %v10457 = vadd.f32 %v10168, %v10456
      %v10458 = vpop.f32.mrb[0].mxu0
      %v10459 = vpop.f32.mrb[0].mxu0
      %v10460 = vadd.f32 %v10171, %v10459
      %v10461 = vpop.f32.mrb[0].mxu0
      %10462 = vmatprep.mubr.bf16.mxu0 %v9369
      %10463 = vmatmul.mubr.bf16.gmra.mrb[0].mxu0 %v9368
      %v10464 = vpop.f32.mrb[0].mxu0
      %v10465 = vadd.f32 %v10176, %v10464
      %v10466 = vpop.f32.mrb[0].mxu0
      %v10467 = vpop.f32.mrb[0].mxu0
      %v10468 = vadd.f32 %v10179, %v10467
      %v10469 = vpop.f32.mrb[0].mxu0
      %10470 = vmatprep.mubr.bf16.mxu0 %v9377
      %10471 = vmatmul.mubr.bf16.gmra.mrb[0].mxu0 %v9376
      %v10472 = vpop.f32.mrb[0].mxu0
      %v10473 = vadd.f32 %v10184, %v10472
      %v10474 = vpop.f32.mrb[0].mxu0
      %v10475 = vpop.f32.mrb[0].mxu0
      %v10476 = vadd.f32 %v10187, %v10475
      %v10477 = vpop.f32.mrb[0].mxu0
      %10478 = vmatprep.mubr.bf16.mxu0 %v9385
      %10479 = vmatmul.mubr.bf16.gmra.mrb[0].mxu0 %v9384
      %v10480 = vpop.f32.mrb[0].mxu0
      %v10481 = vadd.f32 %v10192, %v10480
      %v10482 = vpop.f32.mrb[0].mxu0
      %v10483 = vpop.f32.mrb[0].mxu0
      %v10484 = vadd.f32 %v10195, %v10483
      %v10485 = vpop.f32.mrb[0].mxu0
      %10486 = vmatprep.mubr.bf16.mxu0 %v9393
      %10487 = vmatmul.mubr.bf16.gmra.mrb[0].mxu0 %v9392
      %v10488 = vpop.f32.mrb[0].mxu0
      %v10489 = vadd.f32 %v10200, %v10488
      %v10490 = vpop.f32.mrb[0].mxu0
      %v10491 = vpop.f32.mrb[0].mxu0
      %v10492 = vadd.f32 %v10203, %v10491
      %v10493 = vpop.f32.mrb[0].mxu0
      %10494 = vdwg.mxu0
      %10495 = vmatprep.subr.bf16.mxu0 0
      %10496 = vmatpush1.bf16.msra.mxu0 %v9821
      %10497 = vmatprep.subr.bf16.mxu0 0
      %10498 = vmatpush1.bf16.msra.mxu0 %v9822
      %10499 = vmatprep.subr.bf16.mxu0 0
      %10500 = vmatpush1.bf16.msra.mxu0 %v9823
      %10501 = vmatprep.subr.bf16.mxu0 0
      %10502 = vmatpush1.bf16.msra.mxu0 %v9824
      %10503 = vmatprep.subr.bf16.mxu0 0
      %10504 = vmatpush1.bf16.msra.mxu0 %v9825
      %10505 = vmatprep.subr.bf16.mxu0 0
      %10506 = vmatpush1.bf16.msra.mxu0 %v9826
      %10507 = vmatprep.subr.bf16.mxu0 0
      %10508 = vmatpush1.bf16.msra.mxu0 %v9827
      %10509 = vmatprep.subr.bf16.mxu0 0
      %10510 = vmatpush1.bf16.msra.mxu0 %v9828
      %10511 = vmatprep.subr.bf16.mxu0 0
      %10512 = vmatpush1.bf16.msra.mxu0 %v9829
      %10513 = vmatprep.subr.bf16.mxu0 0
      %10514 = vmatpush1.bf16.msra.mxu0 %v9830
      %10515 = vmatprep.subr.bf16.mxu0 0
      %10516 = vmatpush1.bf16.msra.mxu0 %v9831
      %10517 = vmatprep.subr.bf16.mxu0 0
      %10518 = vmatpush1.bf16.msra.mxu0 %v9832
      %10519 = vmatprep.subr.bf16.mxu0 0
      %10520 = vmatpush1.bf16.msra.mxu0 %v9833
      %10521 = vmatprep.subr.bf16.mxu0 0
      %10522 = vmatpush1.bf16.msra.mxu0 %v9834
      %10523 = vmatprep.subr.bf16.mxu0 0
      %10524 = vmatpush1.bf16.msra.mxu0 %v9835
      %10525 = vmatprep.subr.bf16.mxu0 0
      %10526 = vmatpush1.bf16.msra.mxu0 %v9836
      %10527 = vmatprep.mubr.bf16.mxu0 %v9147
      %10528 = vmatmul.mubr.bf16.gmra.mrb[0].mxu0 %v9146
      %v10529 = vpop.f32.mrb[0].mxu0
      %v10530 = vadd.f32 %v10241, %v10529
      %v10531 = vpop.f32.mrb[0].mxu0
      %v10532 = vpop.f32.mrb[0].mxu0
      %v10533 = vadd.f32 %v10244, %v10532
      %v10534 = vpop.f32.mrb[0].mxu0
      %10535 = vmatprep.mubr.bf16.mxu0 %v9155
      %10536 = vmatmul.mubr.bf16.gmra.mrb[0].mxu0 %v9154
      %v10537 = vpop.f32.mrb[0].mxu0
      %v10538 = vadd.f32 %v10249, %v10537
      %v10539 = vpop.f32.mrb[0].mxu0
      %v10540 = vpop.f32.mrb[0].mxu0
      %v10541 = vadd.f32 %v10252, %v10540
      %v10542 = vpop.f32.mrb[0].mxu0
      %10543 = vmatprep.mubr.bf16.mxu0 %v9163
      %10544 = vmatmul.mubr.bf16.gmra.mrb[0].mxu0 %v9162
      %v10545 = vpop.f32.mrb[0].mxu0
      %v10546 = vadd.f32 %v10257, %v10545
      %v10547 = vpop.f32.mrb[0].mxu0
      %v10548 = vpop.f32.mrb[0].mxu0
      %v10549 = vadd.f32 %v10260, %v10548
      %v10550 = vpop.f32.mrb[0].mxu0
      %10551 = vmatprep.mubr.bf16.mxu0 %v9171
      %10552 = vmatmul.mubr.bf16.gmra.mrb[0].mxu0 %v9170
      %v10553 = vpop.f32.mrb[0].mxu0
      %v10554 = vadd.f32 %v10265, %v10553
      %v10555 = vpop.f32.mrb[0].mxu0
      %v10556 = vpop.f32.mrb[0].mxu0
      %v10557 = vadd.f32 %v10268, %v10556
      %v10558 = vpop.f32.mrb[0].mxu0
      %10559 = vmatprep.mubr.bf16.mxu0 %v9179
      %10560 = vmatmul.mubr.bf16.gmra.mrb[0].mxu0 %v9178
      %v10561 = vpop.f32.mrb[0].mxu0
      %v10562 = vadd.f32 %v10273, %v10561
      %v10563 = vpop.f32.mrb[0].mxu0
      %v10564 = vpop.f32.mrb[0].mxu0
      %v10565 = vadd.f32 %v10276, %v10564
      %v10566 = vpop.f32.mrb[0].mxu0
      %10567 = vmatprep.mubr.bf16.mxu0 %v9187
      %10568 = vmatmul.mubr.bf16.gmra.mrb[0].mxu0 %v9186
      %v10569 = vpop.f32.mrb[0].mxu0
      %v10570 = vadd.f32 %v10281, %v10569
      %v10571 = vpop.f32.mrb[0].mxu0
      %v10572 = vpop.f32.mrb[0].mxu0
      %v10573 = vadd.f32 %v10284, %v10572
      %v10574 = vpop.f32.mrb[0].mxu0
      %10575 = vmatprep.mubr.bf16.mxu0 %v9195
      %10576 = vmatmul.mubr.bf16.gmra.mrb[0].mxu0 %v9194
      %v10577 = vpop.f32.mrb[0].mxu0
      %v10578 = vadd.f32 %v10289, %v10577
      %v10579 = vpop.f32.mrb[0].mxu0
      %v10580 = vpop.f32.mrb[0].mxu0
      %v10581 = vadd.f32 %v10292, %v10580
      %v10582 = vpop.f32.mrb[0].mxu0
      %10583 = vmatprep.mubr.bf16.mxu0 %v9203
      %10584 = vmatmul.mubr.bf16.gmra.mrb[0].mxu0 %v9202
      %v10585 = vpop.f32.mrb[0].mxu0
      %v10586 = vadd.f32 %v10297, %v10585
      %v10587 = vpop.f32.mrb[0].mxu0
      %v10588 = vpop.f32.mrb[0].mxu0
      %v10589 = vadd.f32 %v10300, %v10588
      %v10590 = vpop.f32.mrb[0].mxu0
      %10591 = vmatprep.mubr.bf16.mxu0 %v9211
      %10592 = vmatmul.mubr.bf16.gmra.mrb[0].mxu0 %v9210
      %v10593 = vpop.f32.mrb[0].mxu0
      %v10594 = vadd.f32 %v10305, %v10593
      %v10595 = vpop.f32.mrb[0].mxu0
      %v10596 = vpop.f32.mrb[0].mxu0
      %v10597 = vadd.f32 %v10308, %v10596
      %v10598 = vpop.f32.mrb[0].mxu0
      %10599 = vmatprep.mubr.bf16.mxu0 %v9219
      %10600 = vmatmul.mubr.bf16.gmra.mrb[0].mxu0 %v9218
      %v10601 = vpop.f32.mrb[0].mxu0
      %v10602 = vadd.f32 %v10313, %v10601
      %v10603 = vpop.f32.mrb[0].mxu0
      %v10604 = vpop.f32.mrb[0].mxu0
      %v10605 = vadd.f32 %v10316, %v10604
      %v10606 = vpop.f32.mrb[0].mxu0
      %10607 = vmatprep.mubr.bf16.mxu0 %v9227
      %10608 = vmatmul.mubr.bf16.gmra.mrb[0].mxu0 %v9226
      %v10609 = vpop.f32.mrb[0].mxu0
      %v10610 = vadd.f32 %v10321, %v10609
      %v10611 = vpop.f32.mrb[0].mxu0
      %v10612 = vpop.f32.mrb[0].mxu0
      %v10613 = vadd.f32 %v10324, %v10612
      %v10614 = vpop.f32.mrb[0].mxu0
      %10615 = vmatprep.mubr.bf16.mxu0 %v9235
      %10616 = vmatmul.mubr.bf16.gmra.mrb[0].mxu0 %v9234
      %v10617 = vpop.f32.mrb[0].mxu0
      %v10618 = vadd.f32 %v10329, %v10617
      %v10619 = vpop.f32.mrb[0].mxu0
      %v10620 = vpop.f32.mrb[0].mxu0
      %v10621 = vadd.f32 %v10332, %v10620
      %v10622 = vpop.f32.mrb[0].mxu0
      %10623 = vmatprep.mubr.bf16.mxu0 %v9243
      %10624 = vmatmul.mubr.bf16.gmra.mrb[0].mxu0 %v9242
      %v10625 = vpop.f32.mrb[0].mxu0
      %v10626 = vadd.f32 %v10337, %v10625
      %v10627 = vpop.f32.mrb[0].mxu0
      %v10628 = vpop.f32.mrb[0].mxu0
      %v10629 = vadd.f32 %v10340, %v10628
      %v10630 = vpop.f32.mrb[0].mxu0
      %10631 = vmatprep.mubr.bf16.mxu0 %v9251
      %10632 = vmatmul.mubr.bf16.gmra.mrb[0].mxu0 %v9250
      %v10633 = vpop.f32.mrb[0].mxu0
      %v10634 = vadd.f32 %v10345, %v10633
      %v10635 = vpop.f32.mrb[0].mxu0
      %v10636 = vpop.f32.mrb[0].mxu0
      %v10637 = vadd.f32 %v10348, %v10636
      %v10638 = vpop.f32.mrb[0].mxu0
      %10639 = vmatprep.mubr.bf16.mxu0 %v9259
      %10640 = vmatmul.mubr.bf16.gmra.mrb[0].mxu0 %v9258
      %v10641 = vpop.f32.mrb[0].mxu0
      %v10642 = vadd.f32 %v10353, %v10641
      %v10643 = vpop.f32.mrb[0].mxu0
      %v10644 = vpop.f32.mrb[0].mxu0
      %v10645 = vadd.f32 %v10356, %v10644
      %v10646 = vpop.f32.mrb[0].mxu0
      %10647 = vmatprep.mubr.bf16.mxu0 %v9267
      %10648 = vmatmul.mubr.bf16.gmra.mrb[0].mxu0 %v9266
      %v10649 = vpop.f32.mrb[0].mxu0
      %v10650 = vadd.f32 %v10361, %v10649
      %v10651 = vpop.f32.mrb[0].mxu0
      %v10652 = vpop.f32.mrb[0].mxu0
      %v10653 = vadd.f32 %v10364, %v10652
      %v10654 = vpop.f32.mrb[0].mxu0
      %10655 = vmatprep.mubr.bf16.mxu0 %v9275
      %10656 = vmatmul.mubr.bf16.gmra.mrb[0].mxu0 %v9274
      %v10657 = vpop.f32.mrb[0].mxu0
      %v10658 = vadd.f32 %v10369, %v10657
      %v10659 = vpop.f32.mrb[0].mxu0
      %v10660 = vpop.f32.mrb[0].mxu0
      %v10661 = vadd.f32 %v10372, %v10660
      %v10662 = vpop.f32.mrb[0].mxu0
      %10663 = vmatprep.mubr.bf16.mxu0 %v9283
      %10664 = vmatmul.mubr.bf16.gmra.mrb[0].mxu0 %v9282
      %v10665 = vpop.f32.mrb[0].mxu0
      %v10666 = vadd.f32 %v10377, %v10665
      %v10667 = vpop.f32.mrb[0].mxu0
      %v10668 = vpop.f32.mrb[0].mxu0
      %v10669 = vadd.f32 %v10380, %v10668
      %v10670 = vpop.f32.mrb[0].mxu0
      %10671 = vmatprep.mubr.bf16.mxu0 %v9291
      %10672 = vmatmul.mubr.bf16.gmra.mrb[0].mxu0 %v9290
      %v10673 = vpop.f32.mrb[0].mxu0
      %v10674 = vadd.f32 %v10385, %v10673
      %v10675 = vpop.f32.mrb[0].mxu0
      %v10676 = vpop.f32.mrb[0].mxu0
      %v10677 = vadd.f32 %v10388, %v10676
      %v10678 = vpop.f32.mrb[0].mxu0
      %10679 = vmatprep.mubr.bf16.mxu0 %v9299
      %10680 = vmatmul.mubr.bf16.gmra.mrb[0].mxu0 %v9298
      %v10681 = vpop.f32.mrb[0].mxu0
      %v10682 = vadd.f32 %v10393, %v10681
      %v10683 = vpop.f32.mrb[0].mxu0
      %v10684 = vpop.f32.mrb[0].mxu0
      %v10685 = vadd.f32 %v10396, %v10684
      %v10686 = vpop.f32.mrb[0].mxu0
      %10687 = vmatprep.mubr.bf16.mxu0 %v9307
      %10688 = vmatmul.mubr.bf16.gmra.mrb[0].mxu0 %v9306
      %v10689 = vpop.f32.mrb[0].mxu0
      %v10690 = vadd.f32 %v10401, %v10689
      %v10691 = vpop.f32.mrb[0].mxu0
      %v10692 = vpop.f32.mrb[0].mxu0
      %v10693 = vadd.f32 %v10404, %v10692
      %v10694 = vpop.f32.mrb[0].mxu0
      %10695 = vmatprep.mubr.bf16.mxu0 %v9315
      %10696 = vmatmul.mubr.bf16.gmra.mrb[0].mxu0 %v9314
      %v10697 = vpop.f32.mrb[0].mxu0
      %v10698 = vadd.f32 %v10409, %v10697
      %v10699 = vpop.f32.mrb[0].mxu0
      %v10700 = vpop.f32.mrb[0].mxu0
      %v10701 = vadd.f32 %v10412, %v10700
      %v10702 = vpop.f32.mrb[0].mxu0
      %10703 = vmatprep.mubr.bf16.mxu0 %v9323
      %10704 = vmatmul.mubr.bf16.gmra.mrb[0].mxu0 %v9322
      %v10705 = vpop.f32.mrb[0].mxu0
      %v10706 = vadd.f32 %v10417, %v10705
      %v10707 = vpop.f32.mrb[0].mxu0
      %v10708 = vpop.f32.mrb[0].mxu0
      %v10709 = vadd.f32 %v10420, %v10708
      %v10710 = vpop.f32.mrb[0].mxu0
      %10711 = vmatprep.mubr.bf16.mxu0 %v9331
      %10712 = vmatmul.mubr.bf16.gmra.mrb[0].mxu0 %v9330
      %v10713 = vpop.f32.mrb[0].mxu0
      %v10714 = vadd.f32 %v10425, %v10713
      %v10715 = vpop.f32.mrb[0].mxu0
      %v10716 = vpop.f32.mrb[0].mxu0
      %v10717 = vadd.f32 %v10428, %v10716
      %v10718 = vpop.f32.mrb[0].mxu0
      %10719 = vmatprep.mubr.bf16.mxu0 %v9339
      %10720 = vmatmul.mubr.bf16.gmra.mrb[0].mxu0 %v9338
      %v10721 = vpop.f32.mrb[0].mxu0
      %v10722 = vadd.f32 %v10433, %v10721
      %v10723 = vpop.f32.mrb[0].mxu0
      %v10724 = vpop.f32.mrb[0].mxu0
      %v10725 = vadd.f32 %v10436, %v10724
      %v10726 = vpop.f32.mrb[0].mxu0
      %10727 = vmatprep.mubr.bf16.mxu0 %v9347
      %10728 = vmatmul.mubr.bf16.gmra.mrb[0].mxu0 %v9346
      %v10729 = vpop.f32.mrb[0].mxu0
      %v10730 = vadd.f32 %v10441, %v10729
      %v10731 = vpop.f32.mrb[0].mxu0
      %v10732 = vpop.f32.mrb[0].mxu0
      %v10733 = vadd.f32 %v10444, %v10732
      %v10734 = vpop.f32.mrb[0].mxu0
      %10735 = vmatprep.mubr.bf16.mxu0 %v9355
      %10736 = vmatmul.mubr.bf16.gmra.mrb[0].mxu0 %v9354
      %v10737 = vpop.f32.mrb[0].mxu0
      %v10738 = vadd.f32 %v10449, %v10737
      %v10739 = vpop.f32.mrb[0].mxu0
      %v10740 = vpop.f32.mrb[0].mxu0
      %v10741 = vadd.f32 %v10452, %v10740
      %v10742 = vpop.f32.mrb[0].mxu0
      %10743 = vmatprep.mubr.bf16.mxu0 %v9363
      %10744 = vmatmul.mubr.bf16.gmra.mrb[0].mxu0 %v9362
      %v10745 = vpop.f32.mrb[0].mxu0
      %v10746 = vadd.f32 %v10457, %v10745
      %v10747 = vpop.f32.mrb[0].mxu0
      %v10748 = vpop.f32.mrb[0].mxu0
      %v10749 = vadd.f32 %v10460, %v10748
      %v10750 = vpop.f32.mrb[0].mxu0
      %10751 = vmatprep.mubr.bf16.mxu0 %v9371
      %10752 = vmatmul.mubr.bf16.gmra.mrb[0].mxu0 %v9370
      %v10753 = vpop.f32.mrb[0].mxu0
      %v10754 = vadd.f32 %v10465, %v10753
      %v10755 = vpop.f32.mrb[0].mxu0
      %v10756 = vpop.f32.mrb[0].mxu0
      %v10757 = vadd.f32 %v10468, %v10756
      %v10758 = vpop.f32.mrb[0].mxu0
      %10759 = vmatprep.mubr.bf16.mxu0 %v9379
      %10760 = vmatmul.mubr.bf16.gmra.mrb[0].mxu0 %v9378
      %v10761 = vpop.f32.mrb[0].mxu0
      %v10762 = vadd.f32 %v10473, %v10761
      %v10763 = vpop.f32.mrb[0].mxu0
      %v10764 = vpop.f32.mrb[0].mxu0
      %v10765 = vadd.f32 %v10476, %v10764
      %v10766 = vpop.f32.mrb[0].mxu0
      %10767 = vmatprep.mubr.bf16.mxu0 %v9387
      %10768 = vmatmul.mubr.bf16.gmra.mrb[0].mxu0 %v9386
      %v10769 = vpop.f32.mrb[0].mxu0
      %v10770 = vadd.f32 %v10481, %v10769
      %v10771 = vpop.f32.mrb[0].mxu0
      %v10772 = vpop.f32.mrb[0].mxu0
      %v10773 = vadd.f32 %v10484, %v10772
      %v10774 = vpop.f32.mrb[0].mxu0
      %10775 = vmatprep.mubr.bf16.mxu0 %v9395
      %10776 = vmatmul.mubr.bf16.gmra.mrb[0].mxu0 %v9394
      %v10777 = vpop.f32.mrb[0].mxu0
      %v10778 = vadd.f32 %v10489, %v10777
      %v10779 = vpop.f32.mrb[0].mxu0
      %v10780 = vpop.f32.mrb[0].mxu0
      %v10781 = vadd.f32 %v10492, %v10780
      %v10782 = vpop.f32.mrb[0].mxu0
      %10783 = vdwg.mxu0
      %10784 = vmatprep.subr.bf16.mxu0 0
      %10785 = vmatpush1.bf16.msra.mxu0 %v9837
      %10786 = vmatprep.subr.bf16.mxu0 0
      %10787 = vmatpush1.bf16.msra.mxu0 %v9838
      %10788 = vmatprep.subr.bf16.mxu0 0
      %10789 = vmatpush1.bf16.msra.mxu0 %v9839
      %10790 = vmatprep.subr.bf16.mxu0 0
      %10791 = vmatpush1.bf16.msra.mxu0 %v9840
      %10792 = vmatprep.subr.bf16.mxu0 0
      %10793 = vmatpush1.bf16.msra.mxu0 %v9841
      %10794 = vmatprep.subr.bf16.mxu0 0
      %10795 = vmatpush1.bf16.msra.mxu0 %v9842
      %10796 = vmatprep.subr.bf16.mxu0 0
      %10797 = vmatpush1.bf16.msra.mxu0 %v9843
      %10798 = vmatprep.subr.bf16.mxu0 0
      %10799 = vmatpush1.bf16.msra.mxu0 %v9844
      %10800 = vmatprep.subr.bf16.mxu0 0
      %10801 = vmatpush1.bf16.msra.mxu0 %v9845
      %10802 = vmatprep.subr.bf16.mxu0 0
      %10803 = vmatpush1.bf16.msra.mxu0 %v9846
      %10804 = vmatprep.subr.bf16.mxu0 0
      %10805 = vmatpush1.bf16.msra.mxu0 %v9847
      %10806 = vmatprep.subr.bf16.mxu0 0
      %10807 = vmatpush1.bf16.msra.mxu0 %v9848
      %10808 = vmatprep.subr.bf16.mxu0 0
      %10809 = vmatpush1.bf16.msra.mxu0 %v9849
      %10810 = vmatprep.subr.bf16.mxu0 0
      %10811 = vmatpush1.bf16.msra.mxu0 %v9850
      %10812 = vmatprep.subr.bf16.mxu0 0
      %10813 = vmatpush1.bf16.msra.mxu0 %v9851
      %10814 = vmatprep.subr.bf16.mxu0 0
      %10815 = vmatpush1.bf16.msra.mxu0 %v9852
      %10816 = vmatprep.mubr.bf16.mxu0 %v9149
      %10817 = vmatmul.mubr.bf16.gmra.mrb[0].mxu0 %v9148
      %v10818 = vpop.f32.mrb[0].mxu0
      %v10819 = vadd.f32 %v10530, %v10818
      %v10820 = vpop.f32.mrb[0].mxu0
      %v10821 = vpop.f32.mrb[0].mxu0
      %v10822 = vadd.f32 %v10533, %v10821
      %v10823 = vpop.f32.mrb[0].mxu0
      %10824 = vmatprep.mubr.bf16.mxu0 %v9157
      %10825 = vmatmul.mubr.bf16.gmra.mrb[0].mxu0 %v9156
      %v10826 = vpop.f32.mrb[0].mxu0
      %v10827 = vadd.f32 %v10538, %v10826
      %v10828 = vpop.f32.mrb[0].mxu0
      %v10829 = vpop.f32.mrb[0].mxu0
      %v10830 = vadd.f32 %v10541, %v10829
      %v10831 = vpop.f32.mrb[0].mxu0
      %10832 = vmatprep.mubr.bf16.mxu0 %v9165
      %10833 = vmatmul.mubr.bf16.gmra.mrb[0].mxu0 %v9164
      %v10834 = vpop.f32.mrb[0].mxu0
      %v10835 = vadd.f32 %v10546, %v10834
      %v10836 = vpop.f32.mrb[0].mxu0
      %v10837 = vpop.f32.mrb[0].mxu0
      %v10838 = vadd.f32 %v10549, %v10837
      %v10839 = vpop.f32.mrb[0].mxu0
      %10840 = vmatprep.mubr.bf16.mxu0 %v9173
      %10841 = vmatmul.mubr.bf16.gmra.mrb[0].mxu0 %v9172
      %v10842 = vpop.f32.mrb[0].mxu0
      %v10843 = vadd.f32 %v10554, %v10842
      %v10844 = vpop.f32.mrb[0].mxu0
      %v10845 = vpop.f32.mrb[0].mxu0
      %v10846 = vadd.f32 %v10557, %v10845
      %v10847 = vpop.f32.mrb[0].mxu0
      %10848 = vmatprep.mubr.bf16.mxu0 %v9181
      %10849 = vmatmul.mubr.bf16.gmra.mrb[0].mxu0 %v9180
      %v10850 = vpop.f32.mrb[0].mxu0
      %v10851 = vadd.f32 %v10562, %v10850
      %v10852 = vpop.f32.mrb[0].mxu0
      %v10853 = vpop.f32.mrb[0].mxu0
      %v10854 = vadd.f32 %v10565, %v10853
      %v10855 = vpop.f32.mrb[0].mxu0
      %10856 = vmatprep.mubr.bf16.mxu0 %v9189
      %10857 = vmatmul.mubr.bf16.gmra.mrb[0].mxu0 %v9188
      %v10858 = vpop.f32.mrb[0].mxu0
      %v10859 = vadd.f32 %v10570, %v10858
      %v10860 = vpop.f32.mrb[0].mxu0
      %v10861 = vpop.f32.mrb[0].mxu0
      %v10862 = vadd.f32 %v10573, %v10861
      %v10863 = vpop.f32.mrb[0].mxu0
      %10864 = vmatprep.mubr.bf16.mxu0 %v9197
      %10865 = vmatmul.mubr.bf16.gmra.mrb[0].mxu0 %v9196
      %v10866 = vpop.f32.mrb[0].mxu0
      %v10867 = vadd.f32 %v10578, %v10866
      %v10868 = vpop.f32.mrb[0].mxu0
      %v10869 = vpop.f32.mrb[0].mxu0
      %v10870 = vadd.f32 %v10581, %v10869
      %v10871 = vpop.f32.mrb[0].mxu0
      %10872 = vmatprep.mubr.bf16.mxu0 %v9205
      %10873 = vmatmul.mubr.bf16.gmra.mrb[0].mxu0 %v9204
      %v10874 = vpop.f32.mrb[0].mxu0
      %v10875 = vadd.f32 %v10586, %v10874
      %v10876 = vpop.f32.mrb[0].mxu0
      %v10877 = vpop.f32.mrb[0].mxu0
      %v10878 = vadd.f32 %v10589, %v10877
      %v10879 = vpop.f32.mrb[0].mxu0
      %10880 = vmatprep.mubr.bf16.mxu0 %v9213
      %10881 = vmatmul.mubr.bf16.gmra.mrb[0].mxu0 %v9212
      %v10882 = vpop.f32.mrb[0].mxu0
      %v10883 = vadd.f32 %v10594, %v10882
      %v10884 = vpop.f32.mrb[0].mxu0
      %v10885 = vpop.f32.mrb[0].mxu0
      %v10886 = vadd.f32 %v10597, %v10885
      %v10887 = vpop.f32.mrb[0].mxu0
      %10888 = vmatprep.mubr.bf16.mxu0 %v9221
      %10889 = vmatmul.mubr.bf16.gmra.mrb[0].mxu0 %v9220
      %v10890 = vpop.f32.mrb[0].mxu0
      %v10891 = vadd.f32 %v10602, %v10890
      %v10892 = vpop.f32.mrb[0].mxu0
      %v10893 = vpop.f32.mrb[0].mxu0
      %v10894 = vadd.f32 %v10605, %v10893
      %v10895 = vpop.f32.mrb[0].mxu0
      %10896 = vmatprep.mubr.bf16.mxu0 %v9229
      %10897 = vmatmul.mubr.bf16.gmra.mrb[0].mxu0 %v9228
      %v10898 = vpop.f32.mrb[0].mxu0
      %v10899 = vadd.f32 %v10610, %v10898
      %v10900 = vpop.f32.mrb[0].mxu0
      %v10901 = vpop.f32.mrb[0].mxu0
      %v10902 = vadd.f32 %v10613, %v10901
      %v10903 = vpop.f32.mrb[0].mxu0
      %10904 = vmatprep.mubr.bf16.mxu0 %v9237
      %10905 = vmatmul.mubr.bf16.gmra.mrb[0].mxu0 %v9236
      %v10906 = vpop.f32.mrb[0].mxu0
      %v10907 = vadd.f32 %v10618, %v10906
      %v10908 = vpop.f32.mrb[0].mxu0
      %v10909 = vpop.f32.mrb[0].mxu0
      %v10910 = vadd.f32 %v10621, %v10909
      %v10911 = vpop.f32.mrb[0].mxu0
      %10912 = vmatprep.mubr.bf16.mxu0 %v9245
      %10913 = vmatmul.mubr.bf16.gmra.mrb[0].mxu0 %v9244
      %v10914 = vpop.f32.mrb[0].mxu0
      %v10915 = vadd.f32 %v10626, %v10914
      %v10916 = vpop.f32.mrb[0].mxu0
      %v10917 = vpop.f32.mrb[0].mxu0
      %v10918 = vadd.f32 %v10629, %v10917
      %v10919 = vpop.f32.mrb[0].mxu0
      %10920 = vmatprep.mubr.bf16.mxu0 %v9253
      %10921 = vmatmul.mubr.bf16.gmra.mrb[0].mxu0 %v9252
      %v10922 = vpop.f32.mrb[0].mxu0
      %v10923 = vadd.f32 %v10634, %v10922
      %v10924 = vpop.f32.mrb[0].mxu0
      %v10925 = vpop.f32.mrb[0].mxu0
      %v10926 = vadd.f32 %v10637, %v10925
      %v10927 = vpop.f32.mrb[0].mxu0
      %10928 = vmatprep.mubr.bf16.mxu0 %v9261
      %10929 = vmatmul.mubr.bf16.gmra.mrb[0].mxu0 %v9260
      %v10930 = vpop.f32.mrb[0].mxu0
      %v10931 = vadd.f32 %v10642, %v10930
      %v10932 = vpop.f32.mrb[0].mxu0
      %v10933 = vpop.f32.mrb[0].mxu0
      %v10934 = vadd.f32 %v10645, %v10933
      %v10935 = vpop.f32.mrb[0].mxu0
      %10936 = vmatprep.mubr.bf16.mxu0 %v9269
      %10937 = vmatmul.mubr.bf16.gmra.mrb[0].mxu0 %v9268
      %v10938 = vpop.f32.mrb[0].mxu0
      %v10939 = vadd.f32 %v10650, %v10938
      %v10940 = vpop.f32.mrb[0].mxu0
      %v10941 = vpop.f32.mrb[0].mxu0
      %v10942 = vadd.f32 %v10653, %v10941
      %v10943 = vpop.f32.mrb[0].mxu0
      %10944 = vmatprep.mubr.bf16.mxu0 %v9277
      %10945 = vmatmul.mubr.bf16.gmra.mrb[0].mxu0 %v9276
      %v10946 = vpop.f32.mrb[0].mxu0
      %v10947 = vadd.f32 %v10658, %v10946
      %v10948 = vpop.f32.mrb[0].mxu0
      %v10949 = vpop.f32.mrb[0].mxu0
      %v10950 = vadd.f32 %v10661, %v10949
      %v10951 = vpop.f32.mrb[0].mxu0
      %10952 = vmatprep.mubr.bf16.mxu0 %v9285
      %10953 = vmatmul.mubr.bf16.gmra.mrb[0].mxu0 %v9284
      %v10954 = vpop.f32.mrb[0].mxu0
      %v10955 = vadd.f32 %v10666, %v10954
      %v10956 = vpop.f32.mrb[0].mxu0
      %v10957 = vpop.f32.mrb[0].mxu0
      %v10958 = vadd.f32 %v10669, %v10957
      %v10959 = vpop.f32.mrb[0].mxu0
      %10960 = vmatprep.mubr.bf16.mxu0 %v9293
      %10961 = vmatmul.mubr.bf16.gmra.mrb[0].mxu0 %v9292
      %v10962 = vpop.f32.mrb[0].mxu0
      %v10963 = vadd.f32 %v10674, %v10962
      %v10964 = vpop.f32.mrb[0].mxu0
      %v10965 = vpop.f32.mrb[0].mxu0
      %v10966 = vadd.f32 %v10677, %v10965
      %v10967 = vpop.f32.mrb[0].mxu0
      %10968 = vmatprep.mubr.bf16.mxu0 %v9301
      %10969 = vmatmul.mubr.bf16.gmra.mrb[0].mxu0 %v9300
      %v10970 = vpop.f32.mrb[0].mxu0
      %v10971 = vadd.f32 %v10682, %v10970
      %v10972 = vpop.f32.mrb[0].mxu0
      %v10973 = vpop.f32.mrb[0].mxu0
      %v10974 = vadd.f32 %v10685, %v10973
      %v10975 = vpop.f32.mrb[0].mxu0
      %10976 = vmatprep.mubr.bf16.mxu0 %v9309
      %10977 = vmatmul.mubr.bf16.gmra.mrb[0].mxu0 %v9308
      %v10978 = vpop.f32.mrb[0].mxu0
      %v10979 = vadd.f32 %v10690, %v10978
      %v10980 = vpop.f32.mrb[0].mxu0
      %v10981 = vpop.f32.mrb[0].mxu0
      %v10982 = vadd.f32 %v10693, %v10981
      %v10983 = vpop.f32.mrb[0].mxu0
      %10984 = vmatprep.mubr.bf16.mxu0 %v9317
      %10985 = vmatmul.mubr.bf16.gmra.mrb[0].mxu0 %v9316
      %v10986 = vpop.f32.mrb[0].mxu0
      %v10987 = vadd.f32 %v10698, %v10986
      %v10988 = vpop.f32.mrb[0].mxu0
      %v10989 = vpop.f32.mrb[0].mxu0
      %v10990 = vadd.f32 %v10701, %v10989
      %v10991 = vpop.f32.mrb[0].mxu0
      %10992 = vmatprep.mubr.bf16.mxu0 %v9325
      %10993 = vmatmul.mubr.bf16.gmra.mrb[0].mxu0 %v9324
      %v10994 = vpop.f32.mrb[0].mxu0
      %v10995 = vadd.f32 %v10706, %v10994
      %v10996 = vpop.f32.mrb[0].mxu0
      %v10997 = vpop.f32.mrb[0].mxu0
      %v10998 = vadd.f32 %v10709, %v10997
      %v10999 = vpop.f32.mrb[0].mxu0
      %11000 = vmatprep.mubr.bf16.mxu0 %v9333
      %11001 = vmatmul.mubr.bf16.gmra.mrb[0].mxu0 %v9332
      %v11002 = vpop.f32.mrb[0].mxu0
      %v11003 = vadd.f32 %v10714, %v11002
      %v11004 = vpop.f32.mrb[0].mxu0
      %v11005 = vpop.f32.mrb[0].mxu0
      %v11006 = vadd.f32 %v10717, %v11005
      %v11007 = vpop.f32.mrb[0].mxu0
      %11008 = vmatprep.mubr.bf16.mxu0 %v9341
      %11009 = vmatmul.mubr.bf16.gmra.mrb[0].mxu0 %v9340
      %v11010 = vpop.f32.mrb[0].mxu0
      %v11011 = vadd.f32 %v10722, %v11010
      %v11012 = vpop.f32.mrb[0].mxu0
      %v11013 = vpop.f32.mrb[0].mxu0
      %v11014 = vadd.f32 %v10725, %v11013
      %v11015 = vpop.f32.mrb[0].mxu0
      %11016 = vmatprep.mubr.bf16.mxu0 %v9349
      %11017 = vmatmul.mubr.bf16.gmra.mrb[0].mxu0 %v9348
      %v11018 = vpop.f32.mrb[0].mxu0
      %v11019 = vadd.f32 %v10730, %v11018
      %v11020 = vpop.f32.mrb[0].mxu0
      %v11021 = vpop.f32.mrb[0].mxu0
      %v11022 = vadd.f32 %v10733, %v11021
      %v11023 = vpop.f32.mrb[0].mxu0
      %11024 = vmatprep.mubr.bf16.mxu0 %v9357
      %11025 = vmatmul.mubr.bf16.gmra.mrb[0].mxu0 %v9356
      %v11026 = vpop.f32.mrb[0].mxu0
      %v11027 = vadd.f32 %v10738, %v11026
      %v11028 = vpop.f32.mrb[0].mxu0
      %v11029 = vpop.f32.mrb[0].mxu0
      %v11030 = vadd.f32 %v10741, %v11029
      %v11031 = vpop.f32.mrb[0].mxu0
      %11032 = vmatprep.mubr.bf16.mxu0 %v9365
      %11033 = vmatmul.mubr.bf16.gmra.mrb[0].mxu0 %v9364
      %v11034 = vpop.f32.mrb[0].mxu0
      %v11035 = vadd.f32 %v10746, %v11034
      %v11036 = vpop.f32.mrb[0].mxu0
      %v11037 = vpop.f32.mrb[0].mxu0
      %v11038 = vadd.f32 %v10749, %v11037
      %v11039 = vpop.f32.mrb[0].mxu0
      %11040 = vmatprep.mubr.bf16.mxu0 %v9373
      %11041 = vmatmul.mubr.bf16.gmra.mrb[0].mxu0 %v9372
      %v11042 = vpop.f32.mrb[0].mxu0
      %v11043 = vadd.f32 %v10754, %v11042
      %v11044 = vpop.f32.mrb[0].mxu0
      %v11045 = vpop.f32.mrb[0].mxu0
      %v11046 = vadd.f32 %v10757, %v11045
      %v11047 = vpop.f32.mrb[0].mxu0
      %11048 = vmatprep.mubr.bf16.mxu0 %v9381
      %11049 = vmatmul.mubr.bf16.gmra.mrb[0].mxu0 %v9380
      %v11050 = vpop.f32.mrb[0].mxu0
      %v11051 = vadd.f32 %v10762, %v11050
      %v11052 = vpop.f32.mrb[0].mxu0
      %v11053 = vpop.f32.mrb[0].mxu0
      %v11054 = vadd.f32 %v10765, %v11053
      %v11055 = vpop.f32.mrb[0].mxu0
      %11056 = vmatprep.mubr.bf16.mxu0 %v9389
      %11057 = vmatmul.mubr.bf16.gmra.mrb[0].mxu0 %v9388
      %v11058 = vpop.f32.mrb[0].mxu0
      %v11059 = vadd.f32 %v10770, %v11058
      %v11060 = vpop.f32.mrb[0].mxu0
      %v11061 = vpop.f32.mrb[0].mxu0
      %v11062 = vadd.f32 %v10773, %v11061
      %v11063 = vpop.f32.mrb[0].mxu0
      %11064 = vmatprep.mubr.bf16.mxu0 %v9397
      %11065 = vmatmul.mubr.bf16.gmra.mrb[0].mxu0 %v9396
      %v11066 = vpop.f32.mrb[0].mxu0
      %v11067 = vadd.f32 %v10778, %v11066
      %v11068 = vpop.f32.mrb[0].mxu0
      %v11069 = vpop.f32.mrb[0].mxu0
      %v11070 = vadd.f32 %v10781, %v11069
      %v11071 = vpop.f32.mrb[0].mxu0
      %11072 = vdwg.mxu0
      %v11073 = vld [vmem:[%s377] sm:$0xff]
      %v11074 = vld [vmem:[%s377 + $0x8] sm:$0xff]
      %v11075 = vld [vmem:[%s377 + $0x10] sm:$0xff]
      %v11076 = vld [vmem:[%s377 + $0x18] sm:$0xff]
      %v11077 = vld [vmem:[%s377 + $0x20] sm:$0xff]
      %v11078 = vld [vmem:[%s377 + $0x28] sm:$0xff]
      %v11079 = vld [vmem:[%s377 + $0x30] sm:$0xff]
      %v11080 = vld [vmem:[%s377 + $0x38] sm:$0xff]
      %v11081 = vld [vmem:[%s377 + $0x40] sm:$0xff]
      %v11082 = vld [vmem:[%s377 + $0x48] sm:$0xff]
      %v11083 = vld [vmem:[%s377 + $0x50] sm:$0xff]
      %v11084 = vld [vmem:[%s377 + $0x58] sm:$0xff]
      %v11085 = vld [vmem:[%s377 + $0x60] sm:$0xff]
      %v11086 = vld [vmem:[%s377 + $0x68] sm:$0xff]
      %v11087 = vld [vmem:[%s377 + $0x70] sm:$0xff]
      %v11088 = vld [vmem:[%s377 + $0x78] sm:$0xff]
      %v11089 = vld [vmem:[%s377 + $0x80] sm:$0xff]
      %v11090 = vld [vmem:[%s377 + $0x88] sm:$0xff]
      %v11091 = vld [vmem:[%s377 + $0x90] sm:$0xff]
      %v11092 = vld [vmem:[%s377 + $0x98] sm:$0xff]
      %v11093 = vld [vmem:[%s377 + $0xa0] sm:$0xff]
      %v11094 = vld [vmem:[%s377 + $0xa8] sm:$0xff]
      %v11095 = vld [vmem:[%s377 + $0xb0] sm:$0xff]
      %v11096 = vld [vmem:[%s377 + $0xb8] sm:$0xff]
      %v11097 = vld [vmem:[%s377 + $0xc0] sm:$0xff]
      %v11098 = vld [vmem:[%s377 + $0xc8] sm:$0xff]
      %v11099 = vld [vmem:[%s377 + $0xd0] sm:$0xff]
      %v11100 = vld [vmem:[%s377 + $0xd8] sm:$0xff]
      %v11101 = vld [vmem:[%s377 + $0xe0] sm:$0xff]
      %v11102 = vld [vmem:[%s377 + $0xe8] sm:$0xff]
      %v11103 = vld [vmem:[%s377 + $0xf0] sm:$0xff]
      %v11104 = vld [vmem:[%s377 + $0xf8] sm:$0xff]
      %v11105 = vld [vmem:[%s377 + $0x100] sm:$0xff]
      %v11106 = vld [vmem:[%s377 + $0x108] sm:$0xff]
      %v11107 = vld [vmem:[%s377 + $0x110] sm:$0xff]
      %v11108 = vld [vmem:[%s377 + $0x118] sm:$0xff]
      %v11109 = vld [vmem:[%s377 + $0x120] sm:$0xff]
      %v11110 = vld [vmem:[%s377 + $0x128] sm:$0xff]
      %v11111 = vld [vmem:[%s377 + $0x130] sm:$0xff]
      %v11112 = vld [vmem:[%s377 + $0x138] sm:$0xff]
      %v11113 = vld [vmem:[%s377 + $0x140] sm:$0xff]
      %v11114 = vld [vmem:[%s377 + $0x148] sm:$0xff]
      %v11115 = vld [vmem:[%s377 + $0x150] sm:$0xff]
      %v11116 = vld [vmem:[%s377 + $0x158] sm:$0xff]
      %v11117 = vld [vmem:[%s377 + $0x160] sm:$0xff]
      %v11118 = vld [vmem:[%s377 + $0x168] sm:$0xff]
      %v11119 = vld [vmem:[%s377 + $0x170] sm:$0xff]
      %v11120 = vld [vmem:[%s377 + $0x178] sm:$0xff]
      %v11121 = vld [vmem:[%s377 + $0x180] sm:$0xff]
      %v11122 = vld [vmem:[%s377 + $0x188] sm:$0xff]
      %v11123 = vld [vmem:[%s377 + $0x190] sm:$0xff]
      %v11124 = vld [vmem:[%s377 + $0x198] sm:$0xff]
      %v11125 = vld [vmem:[%s377 + $0x1a0] sm:$0xff]
      %v11126 = vld [vmem:[%s377 + $0x1a8] sm:$0xff]
      %v11127 = vld [vmem:[%s377 + $0x1b0] sm:$0xff]
      %v11128 = vld [vmem:[%s377 + $0x1b8] sm:$0xff]
      %v11129 = vld [vmem:[%s377 + $0x1c0] sm:$0xff]
      %v11130 = vld [vmem:[%s377 + $0x1c8] sm:$0xff]
      %v11131 = vld [vmem:[%s377 + $0x1d0] sm:$0xff]
      %v11132 = vld [vmem:[%s377 + $0x1d8] sm:$0xff]
      %v11133 = vld [vmem:[%s377 + $0x1e0] sm:$0xff]
      %v11134 = vld [vmem:[%s377 + $0x1e8] sm:$0xff]
      %v11135 = vld [vmem:[%s377 + $0x1f0] sm:$0xff]
      %v11136 = vld [vmem:[%s377 + $0x1f8] sm:$0xff]
      %v11137 = vadd.f32 %v11073, %v10819
      %v11138 = vadd.f32 %v11074, %v10822
      %v11139 = vadd.f32 %v11075, %v10827
      %v11140 = vadd.f32 %v11076, %v10830
      %v11141 = vadd.f32 %v11077, %v10835
      %v11142 = vadd.f32 %v11078, %v10838
      %v11143 = vadd.f32 %v11079, %v10843
      %v11144 = vadd.f32 %v11080, %v10846
      %v11145 = vadd.f32 %v11081, %v10851
      %v11146 = vadd.f32 %v11082, %v10854
      %v11147 = vadd.f32 %v11083, %v10859
      %v11148 = vadd.f32 %v11084, %v10862
      %v11149 = vadd.f32 %v11085, %v10867
      %v11150 = vadd.f32 %v11086, %v10870
      %v11151 = vadd.f32 %v11087, %v10875
      %v11152 = vadd.f32 %v11088, %v10878
      %v11153 = vadd.f32 %v11089, %v10883
      %v11154 = vadd.f32 %v11090, %v10886
      %v11155 = vadd.f32 %v11091, %v10891
      %v11156 = vadd.f32 %v11092, %v10894
      %v11157 = vadd.f32 %v11093, %v10899
      %v11158 = vadd.f32 %v11094, %v10902
      %v11159 = vadd.f32 %v11095, %v10907
      %v11160 = vadd.f32 %v11096, %v10910
      %v11161 = vadd.f32 %v11097, %v10915
      %v11162 = vadd.f32 %v11098, %v10918
      %v11163 = vadd.f32 %v11099, %v10923
      %v11164 = vadd.f32 %v11100, %v10926
      %v11165 = vadd.f32 %v11101, %v10931
      %v11166 = vadd.f32 %v11102, %v10934
      %v11167 = vadd.f32 %v11103, %v10939
      %v11168 = vadd.f32 %v11104, %v10942
      %v11169 = vadd.f32 %v11105, %v10947
      %v11170 = vadd.f32 %v11106, %v10950
      %v11171 = vadd.f32 %v11107, %v10955
      %v11172 = vadd.f32 %v11108, %v10958
      %v11173 = vadd.f32 %v11109, %v10963
      %v11174 = vadd.f32 %v11110, %v10966
      %v11175 = vadd.f32 %v11111, %v10971
      %v11176 = vadd.f32 %v11112, %v10974
      %v11177 = vadd.f32 %v11113, %v10979
      %v11178 = vadd.f32 %v11114, %v10982
      %v11179 = vadd.f32 %v11115, %v10987
      %v11180 = vadd.f32 %v11116, %v10990
      %v11181 = vadd.f32 %v11117, %v10995
      %v11182 = vadd.f32 %v11118, %v10998
      %v11183 = vadd.f32 %v11119, %v11003
      %v11184 = vadd.f32 %v11120, %v11006
      %v11185 = vadd.f32 %v11121, %v11011
      %v11186 = vadd.f32 %v11122, %v11014
      %v11187 = vadd.f32 %v11123, %v11019
      %v11188 = vadd.f32 %v11124, %v11022
      %v11189 = vadd.f32 %v11125, %v11027
      %v11190 = vadd.f32 %v11126, %v11030
      %v11191 = vadd.f32 %v11127, %v11035
      %v11192 = vadd.f32 %v11128, %v11038
      %v11193 = vadd.f32 %v11129, %v11043
      %v11194 = vadd.f32 %v11130, %v11046
      %v11195 = vadd.f32 %v11131, %v11051
      %v11196 = vadd.f32 %v11132, %v11054
      %v11197 = vadd.f32 %v11133, %v11059
      %v11198 = vadd.f32 %v11134, %v11062
      %v11199 = vadd.f32 %v11135, %v11067
      %v11200 = vadd.f32 %v11136, %v11070
      %vm11201 = vcmask 130048
      %11202 = vst.msk [vmem:[%s383] sm:$0xff] %vm11201, %v11137
      %11203 = vst.msk [vmem:[%s383 + $0x8] sm:$0xff] %vm11201, %v11138
      %11204 = vst.msk [vmem:[%s383 + $0x10] sm:$0xff] %vm11201, %v11139
      %11205 = vst.msk [vmem:[%s383 + $0x18] sm:$0xff] %vm11201, %v11140
      %11206 = vst.msk [vmem:[%s383 + $0x20] sm:$0xff] %vm11201, %v11141
      %11207 = vst.msk [vmem:[%s383 + $0x28] sm:$0xff] %vm11201, %v11142
      %11208 = vst.msk [vmem:[%s383 + $0x30] sm:$0xff] %vm11201, %v11143
      %11209 = vst.msk [vmem:[%s383 + $0x38] sm:$0xff] %vm11201, %v11144
      %11210 = vst.msk [vmem:[%s383 + $0x40] sm:$0xff] %vm11201, %v11145
      %11211 = vst.msk [vmem:[%s383 + $0x48] sm:$0xff] %vm11201, %v11146
      %11212 = vst.msk [vmem:[%s383 + $0x50] sm:$0xff] %vm11201, %v11147
      %11213 = vst.msk [vmem:[%s383 + $0x58] sm:$0xff] %vm11201, %v11148
      %11214 = vst.msk [vmem:[%s383 + $0x60] sm:$0xff] %vm11201, %v11149
      %11215 = vst.msk [vmem:[%s383 + $0x68] sm:$0xff] %vm11201, %v11150
      %11216 = vst.msk [vmem:[%s383 + $0x70] sm:$0xff] %vm11201, %v11151
      %11217 = vst.msk [vmem:[%s383 + $0x78] sm:$0xff] %vm11201, %v11152
      %11218 = vst.msk [vmem:[%s383 + $0x80] sm:$0xff] %vm11201, %v11153
      %11219 = vst.msk [vmem:[%s383 + $0x88] sm:$0xff] %vm11201, %v11154
      %11220 = vst.msk [vmem:[%s383 + $0x90] sm:$0xff] %vm11201, %v11155
      %11221 = vst.msk [vmem:[%s383 + $0x98] sm:$0xff] %vm11201, %v11156
      %11222 = vst.msk [vmem:[%s383 + $0xa0] sm:$0xff] %vm11201, %v11157
      %11223 = vst.msk [vmem:[%s383 + $0xa8] sm:$0xff] %vm11201, %v11158
      %11224 = vst.msk [vmem:[%s383 + $0xb0] sm:$0xff] %vm11201, %v11159
      %11225 = vst.msk [vmem:[%s383 + $0xb8] sm:$0xff] %vm11201, %v11160
      %11226 = vst.msk [vmem:[%s383 + $0xc0] sm:$0xff] %vm11201, %v11161
      %11227 = vst.msk [vmem:[%s383 + $0xc8] sm:$0xff] %vm11201, %v11162
      %11228 = vst.msk [vmem:[%s383 + $0xd0] sm:$0xff] %vm11201, %v11163
      %11229 = vst.msk [vmem:[%s383 + $0xd8] sm:$0xff] %vm11201, %v11164
      %11230 = vst.msk [vmem:[%s383 + $0xe0] sm:$0xff] %vm11201, %v11165
      %11231 = vst.msk [vmem:[%s383 + $0xe8] sm:$0xff] %vm11201, %v11166
      %11232 = vst.msk [vmem:[%s383 + $0xf0] sm:$0xff] %vm11201, %v11167
      %11233 = vst.msk [vmem:[%s383 + $0xf8] sm:$0xff] %vm11201, %v11168
      %11234 = vst.msk [vmem:[%s383 + $0x100] sm:$0xff] %vm11201, %v11169
      %11235 = vst.msk [vmem:[%s383 + $0x108] sm:$0xff] %vm11201, %v11170
      %11236 = vst.msk [vmem:[%s383 + $0x110] sm:$0xff] %vm11201, %v11171
      %11237 = vst.msk [vmem:[%s383 + $0x118] sm:$0xff] %vm11201, %v11172
      %11238 = vst.msk [vmem:[%s383 + $0x120] sm:$0xff] %vm11201, %v11173
      %11239 = vst.msk [vmem:[%s383 + $0x128] sm:$0xff] %vm11201, %v11174
      %11240 = vst.msk [vmem:[%s383 + $0x130] sm:$0xff] %vm11201, %v11175
      %11241 = vst.msk [vmem:[%s383 + $0x138] sm:$0xff] %vm11201, %v11176
      %11242 = vst.msk [vmem:[%s383 + $0x140] sm:$0xff] %vm11201, %v11177
      %11243 = vst.msk [vmem:[%s383 + $0x148] sm:$0xff] %vm11201, %v11178
      %11244 = vst.msk [vmem:[%s383 + $0x150] sm:$0xff] %vm11201, %v11179
      %11245 = vst.msk [vmem:[%s383 + $0x158] sm:$0xff] %vm11201, %v11180
      %11246 = vst.msk [vmem:[%s383 + $0x160] sm:$0xff] %vm11201, %v11181
      %11247 = vst.msk [vmem:[%s383 + $0x168] sm:$0xff] %vm11201, %v11182
      %11248 = vst.msk [vmem:[%s383 + $0x170] sm:$0xff] %vm11201, %v11183
      %11249 = vst.msk [vmem:[%s383 + $0x178] sm:$0xff] %vm11201, %v11184
      %11250 = vst.msk [vmem:[%s383 + $0x180] sm:$0xff] %vm11201, %v11185
      %11251 = vst.msk [vmem:[%s383 + $0x188] sm:$0xff] %vm11201, %v11186
      %11252 = vst.msk [vmem:[%s383 + $0x190] sm:$0xff] %vm11201, %v11187
      %11253 = vst.msk [vmem:[%s383 + $0x198] sm:$0xff] %vm11201, %v11188
      %11254 = vst.msk [vmem:[%s383 + $0x1a0] sm:$0xff] %vm11201, %v11189
      %11255 = vst.msk [vmem:[%s383 + $0x1a8] sm:$0xff] %vm11201, %v11190
      %11256 = vst.msk [vmem:[%s383 + $0x1b0] sm:$0xff] %vm11201, %v11191
      %11257 = vst.msk [vmem:[%s383 + $0x1b8] sm:$0xff] %vm11201, %v11192
      %11258 = vst.msk [vmem:[%s383 + $0x1c0] sm:$0xff] %vm11201, %v11193
      %11259 = vst.msk [vmem:[%s383 + $0x1c8] sm:$0xff] %vm11201, %v11194
      %11260 = vst.msk [vmem:[%s383 + $0x1d0] sm:$0xff] %vm11201, %v11195
      %11261 = vst.msk [vmem:[%s383 + $0x1d8] sm:$0xff] %vm11201, %v11196
      %11262 = vst.msk [vmem:[%s383 + $0x1e0] sm:$0xff] %vm11201, %v11197
      %11263 = vst.msk [vmem:[%s383 + $0x1e8] sm:$0xff] %vm11201, %v11198
      %11264 = vst.msk [vmem:[%s383 + $0x1f0] sm:$0xff] %vm11201, %v11199
      %11265 = vst.msk [vmem:[%s383 + $0x1f8] sm:$0xff] %vm11201, %v11200
      %s11266 = smul.u32 64, %s21
      %p11267 = scmp.lt.s32.totalorder %s11266, 127
      %s11268 = scalar_select %p11267, %s11266, 127
      %s11269 = smul.addr %s11268, 8
      %s11270 = scalar_lea.vmem %s10, %s11269
      // Predicated region
      $region61: #{gaussian_deformation_forward.1} parent=59 // pred_check
        %p11271 = pneg %p259
      $region62: #{gaussian_deformation_forward.1} parent=59 // pred_check_branch
        %11273 = sbr.rel (%p11271) target = $region64
      $region63: #{gaussian_deformation_forward.1} parent=59 // pred_region
        %s11274 = smul.u32 64, %s21
      $region64: #{gaussian_deformation_forward.1} parent=59 // pred_fallthru
        _
    $region60: #{gaussian_deformation_forward.1} parent=5 // pred_fallthru
      _
    %p11275 = scmp.le.s32.totalorder 2, %s16
    // Predicated region
    $region65: #{gaussian_deformation_forward.1} parent=5 // pred_check
      %p11276 = pneg %p11275
    $region66: #{gaussian_deformation_forward.1} parent=5 // pred_check_branch
      %11278 = sbr.rel (%p11276) target = $region68
    $region67: #{gaussian_deformation_forward.1} parent=5 // pred_region
      %s11279 = ssub.s32 %s16, 2
      // Predicated region
      $region69: #{gaussian_deformation_forward.1} parent=67 // pred_check
        %p11280 = pneg %p265
      $region70: #{gaussian_deformation_forward.1} parent=67 // pred_check_branch
        %11282 = sbr.rel (%p11280) target = $region72
      $region71: #{gaussian_deformation_forward.1} parent=67 // pred_region
        %s11283 = smul.u32 64, %s22
        %p11284 = scmp.lt.s32.totalorder %s11283, 127
        %s11285 = scalar_select %p11284, %s11283, 127
        %s11286 = smul.addr %s11285, 8
        %s11287 = scalar_lea.vmem %s10, %s11286
      $region72: #{gaussian_deformation_forward.1} parent=67 // pred_fallthru
        _
    $region68: #{gaussian_deformation_forward.1} parent=5 // pred_fallthru
      _
  $region6: #{gaussian_deformation_forward.1} parent=0 // loop_footer
    %s20 = sadd.s32 1, %s16
  $region7: #{gaussian_deformation_forward.1} parent=0 // loop_footer_branch
    %15 = sbr.rel target = $region3
  $region8: #{gaussian_deformation_forward.1} parent=0 // loop_exit
    _

</llo_original>
